<compile_context>
chip_gen: v7x
topology: tpu7x:2x2x1
jax: 0.10.0
libtpu: 0.0.40
codegen_flags: <defaults>
</compile_context>

<pallas_src>
import functools
import numpy as np
import jax
import jax.numpy as jnp
from jax import lax
from jax.experimental import pallas as pl
from jax.experimental.pallas import tpu as pltpu


# ----------------------------- Pallas head kernel -----------------------------

def make_head_kernel(Hc, Wc, HC, WC, Cin0):
    """Hc, Wc: compute block (= HC+4, WC+4); HC, WC: kept (original) spatial size."""
    P = Hc * Wc          # compute-block pixels (kept region + 4-px halo)
    P0 = HC * WC         # kept output pixels

    def head_kernel(x_ref, w_ref, sh_ref, w5t_ref, b5_ref,
                    seg_ref, det_ref, xpad_ref, col_ref):
        # ---- zero only what must be zero (no full-scratch fill per step) -----------
        # 1-px border = the 'same' zero padding seen by every 3x3 conv.
        xpad_ref[0:1, :, :] = jnp.zeros((1, Wc + 2, 32), jnp.float32)
        xpad_ref[Hc + 1:Hc + 2, :, :] = jnp.zeros((1, Wc + 2, 32), jnp.float32)
        xpad_ref[1:Hc + 1, 0:1, :] = jnp.zeros((Hc, 1, 32), jnp.float32)
        xpad_ref[1:Hc + 1, Wc + 1:Wc + 2, :] = jnp.zeros((Hc, 1, 32), jnp.float32)
        # Layer-1 channel pad (Cin0..31): zeroed explicitly because uninitialised VMEM
        # may hold NaN/Inf (zero weight rows would not annihilate NaN*0).
        xpad_ref[1:Hc + 1, 1:Wc + 1, Cin0:32] = jnp.zeros((Hc, Wc, 32 - Cin0),
                                                          jnp.float32)
        # Real input channels into the interior.
        xpad_ref[1:Hc + 1, 1:Wc + 1, 0:Cin0] = x_ref[0]

        # ---- 4 x (3x3 conv + folded BN + ReLU), one fused im2col matmul each -------
        # (For large frames on v6e/v7x a channels-on-rows layout, W^T @ col^T -> (32,P),
        #  fills the MXU columns better; the NHWC path is kept for these small frames.)
        for l in range(4):
            # 9 shift taps written straight into the persistent col scratch
            # (no jnp.concatenate copy; live range bounded by VMEM, not vregs).
            for dy in range(3):
                for dx in range(3):
                    t = dy * 3 + dx
                    col_ref[:, t * 32:(t + 1) * 32] = (
                        xpad_ref[dy:dy + Hc, dx:dx + Wc, :].reshape(P, 32))
            # bf16 MXU operands, f32 accumulation.  BN scale is pre-folded into the
            # weight columns, so only shift + ReLU remain on the VPU.
            # (v7x note: split-K (3 accumulated K=96 dots) is cheap there via the MRB;
            #  keep the single fused K=288 dot on v5e/v6e.)
            acc = jnp.dot(col_ref[...].astype(jnp.bfloat16), w_ref[l],
                          preferred_element_type=jnp.float32)            # (P, 32)
            acc = jnp.maximum(acc + sh_ref[l], 0.0)
            xpad_ref[1:Hc + 1, 1:Wc + 1, :] = acc.reshape(Hc, Wc, 32)

        # ---- final 1x1 conv, transposed so spatial sits on lanes --------------------
        # Crop to the kept region first (the 4-px halo rows/cols are discarded).
        h = xpad_ref[1:HC + 1, 1:WC + 1, :].reshape(P0, 32)               # (P0, 32)
        y = lax.dot_general(w5t_ref[...], h,
                            dimension_numbers=(((1,), (1,)), ((), ())),
                            preferred_element_type=jnp.float32)           # (4, P0)
        y = jax.nn.sigmoid(y + b5_ref[...])                               # lane-dense
        seg_ref[0] = y[0:2, :]                                            # (2, P0) store
        det_ref[0] = jnp.mean(y[2:4, :], axis=1).reshape(1, 2)            # lane-axis mean

    return head_kernel


def head_pallas(xcat, params, HC, WC):
    # xcat: (B, HC+4, WC+4, 19) f32 — already cropped to output region + 4-px halo
    B, Hc, Wc, Cin0 = xcat.shape
    Wp, SH = params["W_packed"], params["SH_packed"]
    w5t, b5c = params["w5t"], params["b5c"]
    P0 = HC * WC

    seg, det = pl.pallas_call(
        make_head_kernel(Hc, Wc, HC, WC, Cin0),
        # TODO(synk): when B grows (or per-image work stays tiny) fold Bt images per
        # grid step along the im2col M axis; keep >=2 grid steps for the v7x megacore.
        grid=(B,),
        in_specs=[
            pl.BlockSpec((1, Hc, Wc, Cin0), lambda b: (b, 0, 0, 0)),
            pl.BlockSpec(Wp.shape, lambda b: (0, 0, 0)),
            pl.BlockSpec(SH.shape, lambda b: (0, 0, 0)),
            pl.BlockSpec(w5t.shape, lambda b: (0, 0)),
            pl.BlockSpec(b5c.shape, lambda b: (0, 0)),
        ],
        out_specs=[
            pl.BlockSpec((1, 2, P0), lambda b: (b, 0, 0)),   # lane-dense seg slab
            pl.BlockSpec((1, 1, 2), lambda b: (b, 0, 0)),
        ],
        out_shape=[
            jax.ShapeDtypeStruct((B, 2, P0), jnp.float32),
            jax.ShapeDtypeStruct((B, 1, 2), jnp.float32),
        ],
        # VMEM: the col scratch dominates at ~1.15 KB/px (f32); with a 32 MiB limit this
        # caps Hc*Wc at ~20-25K px before H-tiling (4-px halo) is needed.  v5e/v6e
        # (128 MiB physical) can raise vmem_limit_bytes instead; v7x has 64 MiB physical.
        scratch_shapes=[
            pltpu.VMEM((Hc + 2, Wc + 2, 32), jnp.float32),   # padded activations
            pltpu.VMEM((Hc * Wc, 9 * 32), jnp.float32),      # im2col staging
        ],
        compiler_params=pltpu.CompilerParams(
            dimension_semantics=("parallel",),
            vmem_limit_bytes=32 * 1024 * 1024),
    )(xcat, Wp, SH, w5t, b5c)
    return seg, det


# ------------------------------- JAX glue --------------------------------------

def upsample_bilinear_x2_align_corners(x):
    # x: (B, H, W, C) -> (B, 2H, 2W, C); matches torch Upsample(align_corners=True)
    def interp(arr, axis):
        n_in = arr.shape[axis]
        n_out = 2 * n_in
        coords = jnp.linspace(0.0, n_in - 1.0, n_out)
        lo = jnp.floor(coords).astype(jnp.int32)
        hi = jnp.minimum(lo + 1, n_in - 1)
        frac = coords - lo.astype(jnp.float32)
        a = jnp.take(arr, lo, axis=axis)
        b = jnp.take(arr, hi, axis=axis)
        shp = [1] * arr.ndim
        shp[axis] = n_out
        frac = frac.reshape(shp)
        return a * (1.0 - frac) + b * frac

    x = interp(x, 1)
    x = interp(x, 2)
    return x


def insane_boa_forward(x_nchw, params):
    # x_nchw: (B, 3, H0, W0) float32 (PyTorch layout)
    x = jnp.transpose(x_nchw, (0, 2, 3, 1))               # -> NHWC
    B, H0, W0, C0 = x.shape
    # F.pad(x, (0, 36, 0, 56, 0, 0, 0, 0)): +36 right on W, +56 bottom on H
    xp = jnp.pad(x, ((0, 0), (0, 56), (0, 36), (0, 0)))
    H, W = H0 + 56, W0 + 36
    # einops.reduce 'b c (h 2) (w 2) -> b c h w', mean  (2x2 average pool)
    reduced = xp.reshape(B, H // 2, 2, W // 2, 2, C0).mean(axis=(2, 4))
    # TODO(synk): self.snake = torch.load('BraveSnake_v3.pt') encoder/decoder is an
    # external pretrained model with unknown architecture; stand-in is a deterministic
    # tanh(1x1 conv) producing the required 16-channel decoder feature map.
    dec = jnp.tanh(jnp.einsum('bhwc,cd->bhwd', reduced, params["w_stub"])
                   + params["b_stub"])
    dec_up = upsample_bilinear_x2_align_corners(dec)       # (B, H, W, 16)
    # Crop to the output region + 4-px conv halo BEFORE the head: the +56/+36 pad is
    # discarded by the final crop and only a 4-px halo of it can reach the kept output.
    Hc, Wc = H0 + 4, W0 + 4
    xcat = jnp.concatenate([xp[:, :Hc, :Wc, :], dec_up[:, :Hc, :Wc, :]], axis=-1)
    seg, det = head_pallas(xcat, params, HC=H0, WC=W0)     # Pallas hot path
    seg_t = jnp.transpose(seg.reshape(B, 2, H0, W0), (1, 0, 2, 3))   # (2, B, H0, W0)
    det_t = jnp.transpose(det.reshape(B, 2), (1, 0))                  # (2, B)
    return seg_t, det_t


# ------------------------- deterministic parameters ----------------------------

def init_params(key):
    eps = 1e-5
    ks = jax.random.split(key, 32)
    ki = iter(ks)

    def conv_w(k, kh, kw, cin, cout):
        return jax.random.normal(k, (kh, kw, cin, cout), jnp.float32) / np.sqrt(kh * kw * cin)

    def bn_fold(kg, kb, km, kv, conv_bias, cout):
        gamma = 1.0 + 0.1 * jax.random.normal(kg, (cout,), jnp.float32)
        beta = 0.1 * jax.random.normal(kb, (cout,), jnp.float32)
        mean = 0.1 * jax.random.normal(km, (cout,), jnp.float32)
        var = jax.random.uniform(kv, (cout,), jnp.float32, minval=0.5, maxval=1.5)
        scale = gamma / jnp.sqrt(var + eps)
        shift = beta + (conv_bias - mean) * scale
        return scale, shift                                   # (cout,), (cout,)

    recipie = [16 + 3, 32, 32, 32, 32]
    layers, wpack, shpack = [], [], []
    for i in range(4):
        cin, cout = recipie[i], recipie[i + 1]
        w = conv_w(next(ki), 3, 3, cin, cout)
        cb = 0.1 * jax.random.normal(next(ki), (cout,), jnp.float32)
        s, sh = bn_fold(next(ki), next(ki), next(ki), next(ki), cb, cout)
        layers.append((w, s, sh))                              # f32 unpacked, for reference
        w32 = jnp.pad(w, ((0, 0), (0, 0), (0, 32 - cin), (0, 0))) if cin < 32 else w
        # (dy, dx, cin) row order; BN scale folded into the output columns; bf16 for MXU
        wpack.append((w32.reshape(9 * 32, cout) * s[None, :]).astype(jnp.bfloat16))
        shpack.append(sh.reshape(1, cout))
    W_packed = jnp.stack(wpack, axis=0)                        # (4, 288, 32) bf16
    SH_packed = jnp.stack(shpack, axis=0)                      # (4, 1, 32)   f32
    w5 = conv_w(next(ki), 1, 1, 32, 4).reshape(32, 4)
    b5 = 0.1 * jax.random.normal(next(ki), (4,), jnp.float32)
    w_stub = jax.random.normal(next(ki), (3, 16), jnp.float32) / np.sqrt(3.0)
    b_stub = 0.1 * jax.random.normal(next(ki), (16,), jnp.float32)
    return {"layers": layers, "W_packed": W_packed, "SH_packed": SH_packed,
            "w5": w5, "b5": b5.reshape(1, 4),                  # reference layout
            "w5t": w5.T, "b5c": b5.reshape(4, 1),              # kernel layout (transposed)
            "w_stub": w_stub, "b_stub": b_stub}


# ---------------------------- plain-JAX reference -------------------------------

def head_reference(xcat_full, params, HC, WC):
    # xcat_full: (B, H, W, 19) full padded frame — reference computes on the full
    # frame in f32 and crops at the end, exactly like the PyTorch module.
    h = xcat_full
    for (w, s, b) in params["layers"]:
        h = lax.conv_general_dilated(h, w, (1, 1), "SAME",
                                     dimension_numbers=("NHWC", "HWIO", "NHWC"))
        h = jnp.maximum(h * s.reshape(1, 1, 1, -1) + b.reshape(1, 1, 1, -1), 0.0)
    y = jnp.einsum('bhwc,cd->bhwd', h, params["w5"]) + params["b5"].reshape(1, 1, 1, -1)
    y = jax.nn.sigmoid(y)
    yc = y[:, :HC, :WC, :]
    return yc[..., :2], jnp.mean(yc[..., 2:4], axis=(1, 2))


# ------------------------------------ main --------------------------------------

if __name__ == "__main__":
    x = jax.random.normal(jax.random.PRNGKey(0), (2, 3, 8, 12), jnp.float32)  # NCHW
    params = init_params(jax.random.PRNGKey(42))

    fwd = jax.jit(functools.partial(insane_boa_forward, params=params))
    seg, det = fwd(x)
    seg = jax.block_until_ready(seg)
    det = jax.block_until_ready(det)
    assert seg.shape == (2, 2, 8, 12), seg.shape
    assert det.shape == (2, 2), det.shape

    # Cross-check the cropped-window Pallas head against a full-frame f32 JAX reference.
    # Tolerance 2e-2: the kernel uses bf16 MXU operands across 4 stacked convs (f32
    # accumulation); real layout/halo/indexing bugs produce O(0.1-1) errors.
    xn = jnp.transpose(x, (0, 2, 3, 1))
    xpad = jnp.pad(xn, ((0, 0), (0, 56), (0, 36), (0, 0)))
    B, H, W, C0 = xpad.shape
    reduced = xpad.reshape(B, H // 2, 2, W // 2, 2, C0).mean(axis=(2, 4))
    dec = jnp.tanh(jnp.einsum('bhwc,cd->bhwd', reduced, params["w_stub"]) + params["b_stub"])
    dec_up = upsample_bilinear_x2_align_corners(dec)
    xcat_full = jnp.concatenate([xpad, dec_up], axis=-1)           # (B, H, W, 19)
    seg_ref, det_ref = head_reference(xcat_full, params, HC=8, WC=12)
    np.testing.assert_allclose(np.asarray(seg),
                               np.asarray(jnp.transpose(seg_ref, (3, 0, 1, 2))),
                               atol=2e-2, rtol=2e-2)
    np.testing.assert_allclose(np.asarray(det), np.asarray(det_ref.T),
                               atol=2e-2, rtol=2e-2)
    print("KERNEL_OK")
</pallas_src>

<mosaic_0001>
module attributes {stable_mosaic.version = 11 : i64} {
  func.func @head_kernel(%arg0: i32, %arg1: memref<1x12x16x19xf32, #tpu.memory_space<vmem>>, %arg2: memref<4x288x32xbf16, #tpu.memory_space<vmem>>, %arg3: memref<4x1x32xf32, #tpu.memory_space<vmem>>, %arg4: memref<4x32xf32, #tpu.memory_space<vmem>>, %arg5: memref<4x1xf32, #tpu.memory_space<vmem>>, %arg6: memref<1x2x96xf32, #tpu.memory_space<vmem>>, %arg7: memref<1x1x2xf32, #tpu.memory_space<vmem>>, %arg8: memref<14x18x32xf32, #tpu.memory_space<vmem>>, %arg9: memref<192x288xf32, #tpu.memory_space<vmem>>) attributes {dimension_semantics = [#tpu.dimension_semantics<parallel>], iteration_bounds = array<i64: 2>, scalar_prefetch = 0 : i64, scratch_operands = 2 : i64, tpu.core_type = #tpu.core_type<tc>, window_params = [{transform_indices = @transform_0, window_bounds = array<i64: 1, 12, 16, 19>}, {pipeline_mode = #tpu.pipeline_mode<synchronous>, transform_indices = @transform_1, window_bounds = array<i64: 4, 288, 32>}, {pipeline_mode = #tpu.pipeline_mode<synchronous>, transform_indices = @transform_2, window_bounds = array<i64: 4, 1, 32>}, {pipeline_mode = #tpu.pipeline_mode<synchronous>, transform_indices = @transform_3, window_bounds = array<i64: 4, 32>}, {pipeline_mode = #tpu.pipeline_mode<synchronous>, transform_indices = @transform_4, window_bounds = array<i64: 4, 1>}, {transform_indices = @transform_5, window_bounds = array<i64: 1, 2, 96>}, {transform_indices = @transform_6, window_bounds = array<i64: 1, 1, 2>}]} {
    %cst = arith.constant 0.000000e+00 : f32
    %0 = vector.broadcast %cst : f32 to vector<1x18x32xf32>
    %c0 = arith.constant 0 : index
    %c0_0 = arith.constant 0 : index
    %c0_1 = arith.constant 0 : index
    %1 = vector.load %arg8[%c0, %c0_0, %c0_1] : memref<14x18x32xf32, #tpu.memory_space<vmem>>, vector<1x18x32xf32>
    tpu.vector_store %arg8[%c0, %c0_0, %c0_1], %0 {strides = array<i32>} : memref<14x18x32xf32, #tpu.memory_space<vmem>>, vector<1x18x32xf32>,
    %cst_2 = arith.constant 0.000000e+00 : f32
    %2 = vector.broadcast %cst_2 : f32 to vector<1x18x32xf32>
    %c13 = arith.constant 13 : index
    %c0_3 = arith.constant 0 : index
    %c0_4 = arith.constant 0 : index
    %3 = vector.load %arg8[%c13, %c0_3, %c0_4] : memref<14x18x32xf32, #tpu.memory_space<vmem>>, vector<1x18x32xf32>
    tpu.vector_store %arg8[%c13, %c0_3, %c0_4], %2 {strides = array<i32>} : memref<14x18x32xf32, #tpu.memory_space<vmem>>, vector<1x18x32xf32>,
    %cst_5 = arith.constant 0.000000e+00 : f32
    %4 = vector.broadcast %cst_5 : f32 to vector<12x1x32xf32>
    %c1 = arith.constant 1 : index
    %c0_6 = arith.constant 0 : index
    %c0_7 = arith.constant 0 : index
    %5 = vector.load %arg8[%c1, %c0_6, %c0_7] : memref<14x18x32xf32, #tpu.memory_space<vmem>>, vector<12x1x32xf32>
    tpu.vector_store %arg8[%c1, %c0_6, %c0_7], %4 {strides = array<i32>} : memref<14x18x32xf32, #tpu.memory_space<vmem>>, vector<12x1x32xf32>,
    %cst_8 = arith.constant 0.000000e+00 : f32
    %6 = vector.broadcast %cst_8 : f32 to vector<12x1x32xf32>
    %c1_9 = arith.constant 1 : index
    %c17 = arith.constant 17 : index
    %c0_10 = arith.constant 0 : index
    %7 = vector.load %arg8[%c1_9, %c17, %c0_10] : memref<14x18x32xf32, #tpu.memory_space<vmem>>, vector<12x1x32xf32>
    tpu.vector_store %arg8[%c1_9, %c17, %c0_10], %6 {strides = array<i32>} : memref<14x18x32xf32, #tpu.memory_space<vmem>>, vector<12x1x32xf32>,
    %cst_11 = arith.constant 0.000000e+00 : f32
    %8 = vector.broadcast %cst_11 : f32 to vector<12x16x13xf32>
    %c1_12 = arith.constant 1 : index
    %c1_13 = arith.constant 1 : index
    %c19 = arith.constant 19 : index
    %9 = vector.load %arg8[%c1_12, %c1_13, %c19] : memref<14x18x32xf32, #tpu.memory_space<vmem>>, vector<12x16x13xf32>
    tpu.vector_store %arg8[%c1_12, %c1_13, %c19], %8 {strides = array<i32>} : memref<14x18x32xf32, #tpu.memory_space<vmem>>, vector<12x16x13xf32>,
    %c0_14 = arith.constant 0 : index
    %c0_15 = arith.constant 0 : index
    %c0_16 = arith.constant 0 : index
    %c0_17 = arith.constant 0 : index
    %10 = vector.load %arg1[%c0_14, %c0_15, %c0_16, %c0_17] : memref<1x12x16x19xf32, #tpu.memory_space<vmem>>, vector<1x12x16x19xf32>
    %11 = vector.shape_cast %10 : vector<1x12x16x19xf32> to vector<12x16x19xf32>
    %c1_18 = arith.constant 1 : index
    %c1_19 = arith.constant 1 : index
    %c0_20 = arith.constant 0 : index
    %12 = vector.load %arg8[%c1_18, %c1_19, %c0_20] : memref<14x18x32xf32, #tpu.memory_space<vmem>>, vector<12x16x19xf32>
    tpu.vector_store %arg8[%c1_18, %c1_19, %c0_20], %11 {strides = array<i32>} : memref<14x18x32xf32, #tpu.memory_space<vmem>>, vector<12x16x19xf32>,
    %c0_21 = arith.constant 0 : index
    %c0_22 = arith.constant 0 : index
    %c0_23 = arith.constant 0 : index
    %13 = vector.load %arg8[%c0_21, %c0_22, %c0_23] : memref<14x18x32xf32, #tpu.memory_space<vmem>>, vector<12x16x32xf32>
    %14 = vector.shape_cast %13 : vector<12x16x32xf32> to vector<192x32xf32>
    %c0_24 = arith.constant 0 : index
    %c0_25 = arith.constant 0 : index
    %15 = vector.load %arg9[%c0_24, %c0_25] : memref<192x288xf32, #tpu.memory_space<vmem>>, vector<192x32xf32>
    tpu.vector_store %arg9[%c0_24, %c0_25], %14 {strides = array<i32>} : memref<192x288xf32, #tpu.memory_space<vmem>>, vector<192x32xf32>,
    %c0_26 = arith.constant 0 : index
    %c1_27 = arith.constant 1 : index
    %c0_28 = arith.constant 0 : index
    %16 = vector.load %arg8[%c0_26, %c1_27, %c0_28] : memref<14x18x32xf32, #tpu.memory_space<vmem>>, vector<12x16x32xf32>
    %17 = vector.shape_cast %16 : vector<12x16x32xf32> to vector<192x32xf32>
    %c0_29 = arith.constant 0 : index
    %c32 = arith.constant 32 : index
    %18 = vector.load %arg9[%c0_29, %c32] : memref<192x288xf32, #tpu.memory_space<vmem>>, vector<192x32xf32>
    tpu.vector_store %arg9[%c0_29, %c32], %17 {strides = array<i32>} : memref<192x288xf32, #tpu.memory_space<vmem>>, vector<192x32xf32>,
    %c0_30 = arith.constant 0 : index
    %c2 = arith.constant 2 : index
    %c0_31 = arith.constant 0 : index
    %19 = vector.load %arg8[%c0_30, %c2, %c0_31] : memref<14x18x32xf32, #tpu.memory_space<vmem>>, vector<12x16x32xf32>
    %20 = vector.shape_cast %19 : vector<12x16x32xf32> to vector<192x32xf32>
    %c0_32 = arith.constant 0 : index
    %c64 = arith.constant 64 : index
    %21 = vector.load %arg9[%c0_32, %c64] : memref<192x288xf32, #tpu.memory_space<vmem>>, vector<192x32xf32>
    tpu.vector_store %arg9[%c0_32, %c64], %20 {strides = array<i32>} : memref<192x288xf32, #tpu.memory_space<vmem>>, vector<192x32xf32>,
    %c1_33 = arith.constant 1 : index
    %c0_34 = arith.constant 0 : index
    %c0_35 = arith.constant 0 : index
    %22 = vector.load %arg8[%c1_33, %c0_34, %c0_35] : memref<14x18x32xf32, #tpu.memory_space<vmem>>, vector<12x16x32xf32>
    %23 = vector.shape_cast %22 : vector<12x16x32xf32> to vector<192x32xf32>
    %c0_36 = arith.constant 0 : index
    %c96 = arith.constant 96 : index
    %24 = vector.load %arg9[%c0_36, %c96] : memref<192x288xf32, #tpu.memory_space<vmem>>, vector<192x32xf32>
    tpu.vector_store %arg9[%c0_36, %c96], %23 {strides = array<i32>} : memref<192x288xf32, #tpu.memory_space<vmem>>, vector<192x32xf32>,
    %c1_37 = arith.constant 1 : index
    %c1_38 = arith.constant 1 : index
    %c0_39 = arith.constant 0 : index
    %25 = vector.load %arg8[%c1_37, %c1_38, %c0_39] : memref<14x18x32xf32, #tpu.memory_space<vmem>>, vector<12x16x32xf32>
    %26 = vector.shape_cast %25 : vector<12x16x32xf32> to vector<192x32xf32>
    %c0_40 = arith.constant 0 : index
    %c128 = arith.constant 128 : index
    %27 = vector.load %arg9[%c0_40, %c128] : memref<192x288xf32, #tpu.memory_space<vmem>>, vector<192x32xf32>
    tpu.vector_store %arg9[%c0_40, %c128], %26 {strides = array<i32>} : memref<192x288xf32, #tpu.memory_space<vmem>>, vector<192x32xf32>,
    %c1_41 = arith.constant 1 : index
    %c2_42 = arith.constant 2 : index
    %c0_43 = arith.constant 0 : index
    %28 = vector.load %arg8[%c1_41, %c2_42, %c0_43] : memref<14x18x32xf32, #tpu.memory_space<vmem>>, vector<12x16x32xf32>
    %29 = vector.shape_cast %28 : vector<12x16x32xf32> to vector<192x32xf32>
    %c0_44 = arith.constant 0 : index
    %c160 = arith.constant 160 : index
    %30 = vector.load %arg9[%c0_44, %c160] : memref<192x288xf32, #tpu.memory_space<vmem>>, vector<192x32xf32>
    tpu.vector_store %arg9[%c0_44, %c160], %29 {strides = array<i32>} : memref<192x288xf32, #tpu.memory_space<vmem>>, vector<192x32xf32>,
    %c2_45 = arith.constant 2 : index
    %c0_46 = arith.constant 0 : index
    %c0_47 = arith.constant 0 : index
    %31 = vector.load %arg8[%c2_45, %c0_46, %c0_47] : memref<14x18x32xf32, #tpu.memory_space<vmem>>, vector<12x16x32xf32>
    %32 = vector.shape_cast %31 : vector<12x16x32xf32> to vector<192x32xf32>
    %c0_48 = arith.constant 0 : index
    %c192 = arith.constant 192 : index
    %33 = vector.load %arg9[%c0_48, %c192] : memref<192x288xf32, #tpu.memory_space<vmem>>, vector<192x32xf32>
    tpu.vector_store %arg9[%c0_48, %c192], %32 {strides = array<i32>} : memref<192x288xf32, #tpu.memory_space<vmem>>, vector<192x32xf32>,
    %c2_49 = arith.constant 2 : index
    %c1_50 = arith.constant 1 : index
    %c0_51 = arith.constant 0 : index
    %34 = vector.load %arg8[%c2_49, %c1_50, %c0_51] : memref<14x18x32xf32, #tpu.memory_space<vmem>>, vector<12x16x32xf32>
    %35 = vector.shape_cast %34 : vector<12x16x32xf32> to vector<192x32xf32>
    %c0_52 = arith.constant 0 : index
    %c224 = arith.constant 224 : index
    %36 = vector.load %arg9[%c0_52, %c224] : memref<192x288xf32, #tpu.memory_space<vmem>>, vector<192x32xf32>
    tpu.vector_store %arg9[%c0_52, %c224], %35 {strides = array<i32>} : memref<192x288xf32, #tpu.memory_space<vmem>>, vector<192x32xf32>,
    %c2_53 = arith.constant 2 : index
    %c2_54 = arith.constant 2 : index
    %c0_55 = arith.constant 0 : index
    %37 = vector.load %arg8[%c2_53, %c2_54, %c0_55] : memref<14x18x32xf32, #tpu.memory_space<vmem>>, vector<12x16x32xf32>
    %38 = vector.shape_cast %37 : vector<12x16x32xf32> to vector<192x32xf32>
    %c0_56 = arith.constant 0 : index
    %c256 = arith.constant 256 : index
    %39 = vector.load %arg9[%c0_56, %c256] : memref<192x288xf32, #tpu.memory_space<vmem>>, vector<192x32xf32>
    tpu.vector_store %arg9[%c0_56, %c256], %38 {strides = array<i32>} : memref<192x288xf32, #tpu.memory_space<vmem>>, vector<192x32xf32>,
    %c0_57 = arith.constant 0 : index
    %c0_58 = arith.constant 0 : index
    %40 = vector.load %arg9[%c0_57, %c0_58] : memref<192x288xf32, #tpu.memory_space<vmem>>, vector<192x288xf32>
    %41 = arith.truncf %40 : vector<192x288xf32> to vector<192x288xbf16>
    %c0_59 = arith.constant 0 : index
    %c0_60 = arith.constant 0 : index
    %c0_61 = arith.constant 0 : index
    %42 = vector.load %arg2[%c0_59, %c0_60, %c0_61] : memref<4x288x32xbf16, #tpu.memory_space<vmem>>, vector<1x288x32xbf16>
    %43 = vector.shape_cast %42 : vector<1x288x32xbf16> to vector<288x32xbf16>
    %cst_62 = arith.constant dense<0.000000e+00> : vector<192x32xf32>
    %44 = tpu.matmul %41, %43, %cst_62 {dimension_numbers = #tpu.dot_dimension_numbers<[1], [0], [0], [1], [0, 0, 1, 1], [], []>} : vector<192x288xbf16>, vector<288x32xbf16>, vector<192x32xf32> -> vector<192x32xf32>
    %c0_63 = arith.constant 0 : index
    %c0_64 = arith.constant 0 : index
    %c0_65 = arith.constant 0 : index
    %45 = vector.load %arg3[%c0_63, %c0_64, %c0_65] : memref<4x1x32xf32, #tpu.memory_space<vmem>>, vector<1x1x32xf32>
    %46 = vector.shape_cast %45 : vector<1x1x32xf32> to vector<1x32xf32>
    %47 = vector.broadcast %46 : vector<1x32xf32> to vector<192x32xf32>
    %48 = arith.addf %44, %47 : vector<192x32xf32>
    %cst_66 = arith.constant 0.000000e+00 : f32
    %49 = vector.broadcast %cst_66 : f32 to vector<192x32xf32>
    %50 = arith.maximumf %48, %49 : vector<192x32xf32>
    %51 = vector.shape_cast %50 : vector<192x32xf32> to vector<12x16x32xf32>
    %c1_67 = arith.constant 1 : index
    %c1_68 = arith.constant 1 : index
    %c0_69 = arith.constant 0 : index
    %52 = vector.load %arg8[%c1_67, %c1_68, %c0_69] : memref<14x18x32xf32, #tpu.memory_space<vmem>>, vector<12x16x32xf32>
    tpu.vector_store %arg8[%c1_67, %c1_68, %c0_69], %51 {strides = array<i32>} : memref<14x18x32xf32, #tpu.memory_space<vmem>>, vector<12x16x32xf32>,
    %c0_70 = arith.constant 0 : index
    %c0_71 = arith.constant 0 : index
    %c0_72 = arith.constant 0 : index
    %53 = vector.load %arg8[%c0_70, %c0_71, %c0_72] : memref<14x18x32xf32, #tpu.memory_space<vmem>>, vector<12x16x32xf32>
    %54 = vector.shape_cast %53 : vector<12x16x32xf32> to vector<192x32xf32>
    %c0_73 = arith.constant 0 : index
    %c0_74 = arith.constant 0 : index
    %55 = vector.load %arg9[%c0_73, %c0_74] : memref<192x288xf32, #tpu.memory_space<vmem>>, vector<192x32xf32>
    tpu.vector_store %arg9[%c0_73, %c0_74], %54 {strides = array<i32>} : memref<192x288xf32, #tpu.memory_space<vmem>>, vector<192x32xf32>,
    %c0_75 = arith.constant 0 : index
    %c1_76 = arith.constant 1 : index
    %c0_77 = arith.constant 0 : index
    %56 = vector.load %arg8[%c0_75, %c1_76, %c0_77] : memref<14x18x32xf32, #tpu.memory_space<vmem>>, vector<12x16x32xf32>
    %57 = vector.shape_cast %56 : vector<12x16x32xf32> to vector<192x32xf32>
    %c0_78 = arith.constant 0 : index
    %c32_79 = arith.constant 32 : index
    %58 = vector.load %arg9[%c0_78, %c32_79] : memref<192x288xf32, #tpu.memory_space<vmem>>, vector<192x32xf32>
    tpu.vector_store %arg9[%c0_78, %c32_79], %57 {strides = array<i32>} : memref<192x288xf32, #tpu.memory_space<vmem>>, vector<192x32xf32>,
    %c0_80 = arith.constant 0 : index
    %c2_81 = arith.constant 2 : index
    %c0_82 = arith.constant 0 : index
    %59 = vector.load %arg8[%c0_80, %c2_81, %c0_82] : memref<14x18x32xf32, #tpu.memory_space<vmem>>, vector<12x16x32xf32>
    %60 = vector.shape_cast %59 : vector<12x16x32xf32> to vector<192x32xf32>
    %c0_83 = arith.constant 0 : index
    %c64_84 = arith.constant 64 : index
    %61 = vector.load %arg9[%c0_83, %c64_84] : memref<192x288xf32, #tpu.memory_space<vmem>>, vector<192x32xf32>
    tpu.vector_store %arg9[%c0_83, %c64_84], %60 {strides = array<i32>} : memref<192x288xf32, #tpu.memory_space<vmem>>, vector<192x32xf32>,
    %c1_85 = arith.constant 1 : index
    %c0_86 = arith.constant 0 : index
    %c0_87 = arith.constant 0 : index
    %62 = vector.load %arg8[%c1_85, %c0_86, %c0_87] : memref<14x18x32xf32, #tpu.memory_space<vmem>>, vector<12x16x32xf32>
    %63 = vector.shape_cast %62 : vector<12x16x32xf32> to vector<192x32xf32>
    %c0_88 = arith.constant 0 : index
    %c96_89 = arith.constant 96 : index
    %64 = vector.load %arg9[%c0_88, %c96_89] : memref<192x288xf32, #tpu.memory_space<vmem>>, vector<192x32xf32>
    tpu.vector_store %arg9[%c0_88, %c96_89], %63 {strides = array<i32>} : memref<192x288xf32, #tpu.memory_space<vmem>>, vector<192x32xf32>,
    %c1_90 = arith.constant 1 : index
    %c1_91 = arith.constant 1 : index
    %c0_92 = arith.constant 0 : index
    %65 = vector.load %arg8[%c1_90, %c1_91, %c0_92] : memref<14x18x32xf32, #tpu.memory_space<vmem>>, vector<12x16x32xf32>
    %66 = vector.shape_cast %65 : vector<12x16x32xf32> to vector<192x32xf32>
    %c0_93 = arith.constant 0 : index
    %c128_94 = arith.constant 128 : index
    %67 = vector.load %arg9[%c0_93, %c128_94] : memref<192x288xf32, #tpu.memory_space<vmem>>, vector<192x32xf32>
    tpu.vector_store %arg9[%c0_93, %c128_94], %66 {strides = array<i32>} : memref<192x288xf32, #tpu.memory_space<vmem>>, vector<192x32xf32>,
    %c1_95 = arith.constant 1 : index
    %c2_96 = arith.constant 2 : index
    %c0_97 = arith.constant 0 : index
    %68 = vector.load %arg8[%c1_95, %c2_96, %c0_97] : memref<14x18x32xf32, #tpu.memory_space<vmem>>, vector<12x16x32xf32>
    %69 = vector.shape_cast %68 : vector<12x16x32xf32> to vector<192x32xf32>
    %c0_98 = arith.constant 0 : index
    %c160_99 = arith.constant 160 : index
    %70 = vector.load %arg9[%c0_98, %c160_99] : memref<192x288xf32, #tpu.memory_space<vmem>>, vector<192x32xf32>
    tpu.vector_store %arg9[%c0_98, %c160_99], %69 {strides = array<i32>} : memref<192x288xf32, #tpu.memory_space<vmem>>, vector<192x32xf32>,
    %c2_100 = arith.constant 2 : index
    %c0_101 = arith.constant 0 : index
    %c0_102 = arith.constant 0 : index
    %71 = vector.load %arg8[%c2_100, %c0_101, %c0_102] : memref<14x18x32xf32, #tpu.memory_space<vmem>>, vector<12x16x32xf32>
    %72 = vector.shape_cast %71 : vector<12x16x32xf32> to vector<192x32xf32>
    %c0_103 = arith.constant 0 : index
    %c192_104 = arith.constant 192 : index
    %73 = vector.load %arg9[%c0_103, %c192_104] : memref<192x288xf32, #tpu.memory_space<vmem>>, vector<192x32xf32>
    tpu.vector_store %arg9[%c0_103, %c192_104], %72 {strides = array<i32>} : memref<192x288xf32, #tpu.memory_space<vmem>>, vector<192x32xf32>,
    %c2_105 = arith.constant 2 : index
    %c1_106 = arith.constant 1 : index
    %c0_107 = arith.constant 0 : index
    %74 = vector.load %arg8[%c2_105, %c1_106, %c0_107] : memref<14x18x32xf32, #tpu.memory_space<vmem>>, vector<12x16x32xf32>
    %75 = vector.shape_cast %74 : vector<12x16x32xf32> to vector<192x32xf32>
    %c0_108 = arith.constant 0 : index
    %c224_109 = arith.constant 224 : index
    %76 = vector.load %arg9[%c0_108, %c224_109] : memref<192x288xf32, #tpu.memory_space<vmem>>, vector<192x32xf32>
    tpu.vector_store %arg9[%c0_108, %c224_109], %75 {strides = array<i32>} : memref<192x288xf32, #tpu.memory_space<vmem>>, vector<192x32xf32>,
    %c2_110 = arith.constant 2 : index
    %c2_111 = arith.constant 2 : index
    %c0_112 = arith.constant 0 : index
    %77 = vector.load %arg8[%c2_110, %c2_111, %c0_112] : memref<14x18x32xf32, #tpu.memory_space<vmem>>, vector<12x16x32xf32>
    %78 = vector.shape_cast %77 : vector<12x16x32xf32> to vector<192x32xf32>
    %c0_113 = arith.constant 0 : index
    %c256_114 = arith.constant 256 : index
    %79 = vector.load %arg9[%c0_113, %c256_114] : memref<192x288xf32, #tpu.memory_space<vmem>>, vector<192x32xf32>
    tpu.vector_store %arg9[%c0_113, %c256_114], %78 {strides = array<i32>} : memref<192x288xf32, #tpu.memory_space<vmem>>, vector<192x32xf32>,
    %c0_115 = arith.constant 0 : index
    %c0_116 = arith.constant 0 : index
    %80 = vector.load %arg9[%c0_115, %c0_116] : memref<192x288xf32, #tpu.memory_space<vmem>>, vector<192x288xf32>
    %81 = arith.truncf %80 : vector<192x288xf32> to vector<192x288xbf16>
    %c1_117 = arith.constant 1 : index
    %c0_118 = arith.constant 0 : index
    %c0_119 = arith.constant 0 : index
    %82 = vector.load %arg2[%c1_117, %c0_118, %c0_119] : memref<4x288x32xbf16, #tpu.memory_space<vmem>>, vector<1x288x32xbf16>
    %83 = vector.shape_cast %82 : vector<1x288x32xbf16> to vector<288x32xbf16>
    %cst_120 = arith.constant dense<0.000000e+00> : vector<192x32xf32>
    %84 = tpu.matmul %81, %83, %cst_120 {dimension_numbers = #tpu.dot_dimension_numbers<[1], [0], [0], [1], [0, 0, 1, 1], [], []>} : vector<192x288xbf16>, vector<288x32xbf16>, vector<192x32xf32> -> vector<192x32xf32>
    %c1_121 = arith.constant 1 : index
    %c0_122 = arith.constant 0 : index
    %c0_123 = arith.constant 0 : index
    %85 = vector.load %arg3[%c1_121, %c0_122, %c0_123] : memref<4x1x32xf32, #tpu.memory_space<vmem>>, vector<1x1x32xf32>
    %86 = vector.shape_cast %85 : vector<1x1x32xf32> to vector<1x32xf32>
    %87 = vector.broadcast %86 : vector<1x32xf32> to vector<192x32xf32>
    %88 = arith.addf %84, %87 : vector<192x32xf32>
    %cst_124 = arith.constant 0.000000e+00 : f32
    %89 = vector.broadcast %cst_124 : f32 to vector<192x32xf32>
    %90 = arith.maximumf %88, %89 : vector<192x32xf32>
    %91 = vector.shape_cast %90 : vector<192x32xf32> to vector<12x16x32xf32>
    %c1_125 = arith.constant 1 : index
    %c1_126 = arith.constant 1 : index
    %c0_127 = arith.constant 0 : index
    %92 = vector.load %arg8[%c1_125, %c1_126, %c0_127] : memref<14x18x32xf32, #tpu.memory_space<vmem>>, vector<12x16x32xf32>
    tpu.vector_store %arg8[%c1_125, %c1_126, %c0_127], %91 {strides = array<i32>} : memref<14x18x32xf32, #tpu.memory_space<vmem>>, vector<12x16x32xf32>,
    %c0_128 = arith.constant 0 : index
    %c0_129 = arith.constant 0 : index
    %c0_130 = arith.constant 0 : index
    %93 = vector.load %arg8[%c0_128, %c0_129, %c0_130] : memref<14x18x32xf32, #tpu.memory_space<vmem>>, vector<12x16x32xf32>
    %94 = vector.shape_cast %93 : vector<12x16x32xf32> to vector<192x32xf32>
    %c0_131 = arith.constant 0 : index
    %c0_132 = arith.constant 0 : index
    %95 = vector.load %arg9[%c0_131, %c0_132] : memref<192x288xf32, #tpu.memory_space<vmem>>, vector<192x32xf32>
    tpu.vector_store %arg9[%c0_131, %c0_132], %94 {strides = array<i32>} : memref<192x288xf32, #tpu.memory_space<vmem>>, vector<192x32xf32>,
    %c0_133 = arith.constant 0 : index
    %c1_134 = arith.constant 1 : index
    %c0_135 = arith.constant 0 : index
    %96 = vector.load %arg8[%c0_133, %c1_134, %c0_135] : memref<14x18x32xf32, #tpu.memory_space<vmem>>, vector<12x16x32xf32>
    %97 = vector.shape_cast %96 : vector<12x16x32xf32> to vector<192x32xf32>
    %c0_136 = arith.constant 0 : index
    %c32_137 = arith.constant 32 : index
    %98 = vector.load %arg9[%c0_136, %c32_137] : memref<192x288xf32, #tpu.memory_space<vmem>>, vector<192x32xf32>
    tpu.vector_store %arg9[%c0_136, %c32_137], %97 {strides = array<i32>} : memref<192x288xf32, #tpu.memory_space<vmem>>, vector<192x32xf32>,
    %c0_138 = arith.constant 0 : index
    %c2_139 = arith.constant 2 : index
    %c0_140 = arith.constant 0 : index
    %99 = vector.load %arg8[%c0_138, %c2_139, %c0_140] : memref<14x18x32xf32, #tpu.memory_space<vmem>>, vector<12x16x32xf32>
    %100 = vector.shape_cast %99 : vector<12x16x32xf32> to vector<192x32xf32>
    %c0_141 = arith.constant 0 : index
    %c64_142 = arith.constant 64 : index
    %101 = vector.load %arg9[%c0_141, %c64_142] : memref<192x288xf32, #tpu.memory_space<vmem>>, vector<192x32xf32>
    tpu.vector_store %arg9[%c0_141, %c64_142], %100 {strides = array<i32>} : memref<192x288xf32, #tpu.memory_space<vmem>>, vector<192x32xf32>,
    %c1_143 = arith.constant 1 : index
    %c0_144 = arith.constant 0 : index
    %c0_145 = arith.constant 0 : index
    %102 = vector.load %arg8[%c1_143, %c0_144, %c0_145] : memref<14x18x32xf32, #tpu.memory_space<vmem>>, vector<12x16x32xf32>
    %103 = vector.shape_cast %102 : vector<12x16x32xf32> to vector<192x32xf32>
    %c0_146 = arith.constant 0 : index
    %c96_147 = arith.constant 96 : index
    %104 = vector.load %arg9[%c0_146, %c96_147] : memref<192x288xf32, #tpu.memory_space<vmem>>, vector<192x32xf32>
    tpu.vector_store %arg9[%c0_146, %c96_147], %103 {strides = array<i32>} : memref<192x288xf32, #tpu.memory_space<vmem>>, vector<192x32xf32>,
    %c1_148 = arith.constant 1 : index
    %c1_149 = arith.constant 1 : index
    %c0_150 = arith.constant 0 : index
    %105 = vector.load %arg8[%c1_148, %c1_149, %c0_150] : memref<14x18x32xf32, #tpu.memory_space<vmem>>, vector<12x16x32xf32>
    %106 = vector.shape_cast %105 : vector<12x16x32xf32> to vector<192x32xf32>
    %c0_151 = arith.constant 0 : index
    %c128_152 = arith.constant 128 : index
    %107 = vector.load %arg9[%c0_151, %c128_152] : memref<192x288xf32, #tpu.memory_space<vmem>>, vector<192x32xf32>
    tpu.vector_store %arg9[%c0_151, %c128_152], %106 {strides = array<i32>} : memref<192x288xf32, #tpu.memory_space<vmem>>, vector<192x32xf32>,
    %c1_153 = arith.constant 1 : index
    %c2_154 = arith.constant 2 : index
    %c0_155 = arith.constant 0 : index
    %108 = vector.load %arg8[%c1_153, %c2_154, %c0_155] : memref<14x18x32xf32, #tpu.memory_space<vmem>>, vector<12x16x32xf32>
    %109 = vector.shape_cast %108 : vector<12x16x32xf32> to vector<192x32xf32>
    %c0_156 = arith.constant 0 : index
    %c160_157 = arith.constant 160 : index
    %110 = vector.load %arg9[%c0_156, %c160_157] : memref<192x288xf32, #tpu.memory_space<vmem>>, vector<192x32xf32>
    tpu.vector_store %arg9[%c0_156, %c160_157], %109 {strides = array<i32>} : memref<192x288xf32, #tpu.memory_space<vmem>>, vector<192x32xf32>,
    %c2_158 = arith.constant 2 : index
    %c0_159 = arith.constant 0 : index
    %c0_160 = arith.constant 0 : index
    %111 = vector.load %arg8[%c2_158, %c0_159, %c0_160] : memref<14x18x32xf32, #tpu.memory_space<vmem>>, vector<12x16x32xf32>
    %112 = vector.shape_cast %111 : vector<12x16x32xf32> to vector<192x32xf32>
    %c0_161 = arith.constant 0 : index
    %c192_162 = arith.constant 192 : index
    %113 = vector.load %arg9[%c0_161, %c192_162] : memref<192x288xf32, #tpu.memory_space<vmem>>, vector<192x32xf32>
    tpu.vector_store %arg9[%c0_161, %c192_162], %112 {strides = array<i32>} : memref<192x288xf32, #tpu.memory_space<vmem>>, vector<192x32xf32>,
    %c2_163 = arith.constant 2 : index
    %c1_164 = arith.constant 1 : index
    %c0_165 = arith.constant 0 : index
    %114 = vector.load %arg8[%c2_163, %c1_164, %c0_165] : memref<14x18x32xf32, #tpu.memory_space<vmem>>, vector<12x16x32xf32>
    %115 = vector.shape_cast %114 : vector<12x16x32xf32> to vector<192x32xf32>
    %c0_166 = arith.constant 0 : index
    %c224_167 = arith.constant 224 : index
    %116 = vector.load %arg9[%c0_166, %c224_167] : memref<192x288xf32, #tpu.memory_space<vmem>>, vector<192x32xf32>
    tpu.vector_store %arg9[%c0_166, %c224_167], %115 {strides = array<i32>} : memref<192x288xf32, #tpu.memory_space<vmem>>, vector<192x32xf32>,
    %c2_168 = arith.constant 2 : index
    %c2_169 = arith.constant 2 : index
    %c0_170 = arith.constant 0 : index
    %117 = vector.load %arg8[%c2_168, %c2_169, %c0_170] : memref<14x18x32xf32, #tpu.memory_space<vmem>>, vector<12x16x32xf32>
    %118 = vector.shape_cast %117 : vector<12x16x32xf32> to vector<192x32xf32>
    %c0_171 = arith.constant 0 : index
    %c256_172 = arith.constant 256 : index
    %119 = vector.load %arg9[%c0_171, %c256_172] : memref<192x288xf32, #tpu.memory_space<vmem>>, vector<192x32xf32>
    tpu.vector_store %arg9[%c0_171, %c256_172], %118 {strides = array<i32>} : memref<192x288xf32, #tpu.memory_space<vmem>>, vector<192x32xf32>,
    %c0_173 = arith.constant 0 : index
    %c0_174 = arith.constant 0 : index
    %120 = vector.load %arg9[%c0_173, %c0_174] : memref<192x288xf32, #tpu.memory_space<vmem>>, vector<192x288xf32>
    %121 = arith.truncf %120 : vector<192x288xf32> to vector<192x288xbf16>
    %c2_175 = arith.constant 2 : index
    %c0_176 = arith.constant 0 : index
    %c0_177 = arith.constant 0 : index
    %122 = vector.load %arg2[%c2_175, %c0_176, %c0_177] : memref<4x288x32xbf16, #tpu.memory_space<vmem>>, vector<1x288x32xbf16>
    %123 = vector.shape_cast %122 : vector<1x288x32xbf16> to vector<288x32xbf16>
    %cst_178 = arith.constant dense<0.000000e+00> : vector<192x32xf32>
    %124 = tpu.matmul %121, %123, %cst_178 {dimension_numbers = #tpu.dot_dimension_numbers<[1], [0], [0], [1], [0, 0, 1, 1], [], []>} : vector<192x288xbf16>, vector<288x32xbf16>, vector<192x32xf32> -> vector<192x32xf32>
    %c2_179 = arith.constant 2 : index
    %c0_180 = arith.constant 0 : index
    %c0_181 = arith.constant 0 : index
    %125 = vector.load %arg3[%c2_179, %c0_180, %c0_181] : memref<4x1x32xf32, #tpu.memory_space<vmem>>, vector<1x1x32xf32>
    %126 = vector.shape_cast %125 : vector<1x1x32xf32> to vector<1x32xf32>
    %127 = vector.broadcast %126 : vector<1x32xf32> to vector<192x32xf32>
    %128 = arith.addf %124, %127 : vector<192x32xf32>
    %cst_182 = arith.constant 0.000000e+00 : f32
    %129 = vector.broadcast %cst_182 : f32 to vector<192x32xf32>
    %130 = arith.maximumf %128, %129 : vector<192x32xf32>
    %131 = vector.shape_cast %130 : vector<192x32xf32> to vector<12x16x32xf32>
    %c1_183 = arith.constant 1 : index
    %c1_184 = arith.constant 1 : index
    %c0_185 = arith.constant 0 : index
    %132 = vector.load %arg8[%c1_183, %c1_184, %c0_185] : memref<14x18x32xf32, #tpu.memory_space<vmem>>, vector<12x16x32xf32>
    tpu.vector_store %arg8[%c1_183, %c1_184, %c0_185], %131 {strides = array<i32>} : memref<14x18x32xf32, #tpu.memory_space<vmem>>, vector<12x16x32xf32>,
    %c0_186 = arith.constant 0 : index
    %c0_187 = arith.constant 0 : index
    %c0_188 = arith.constant 0 : index
    %133 = vector.load %arg8[%c0_186, %c0_187, %c0_188] : memref<14x18x32xf32, #tpu.memory_space<vmem>>, vector<12x16x32xf32>
    %134 = vector.shape_cast %133 : vector<12x16x32xf32> to vector<192x32xf32>
    %c0_189 = arith.constant 0 : index
    %c0_190 = arith.constant 0 : index
    %135 = vector.load %arg9[%c0_189, %c0_190] : memref<192x288xf32, #tpu.memory_space<vmem>>, vector<192x32xf32>
    tpu.vector_store %arg9[%c0_189, %c0_190], %134 {strides = array<i32>} : memref<192x288xf32, #tpu.memory_space<vmem>>, vector<192x32xf32>,
    %c0_191 = arith.constant 0 : index
    %c1_192 = arith.constant 1 : index
    %c0_193 = arith.constant 0 : index
    %136 = vector.load %arg8[%c0_191, %c1_192, %c0_193] : memref<14x18x32xf32, #tpu.memory_space<vmem>>, vector<12x16x32xf32>
    %137 = vector.shape_cast %136 : vector<12x16x32xf32> to vector<192x32xf32>
    %c0_194 = arith.constant 0 : index
    %c32_195 = arith.constant 32 : index
    %138 = vector.load %arg9[%c0_194, %c32_195] : memref<192x288xf32, #tpu.memory_space<vmem>>, vector<192x32xf32>
    tpu.vector_store %arg9[%c0_194, %c32_195], %137 {strides = array<i32>} : memref<192x288xf32, #tpu.memory_space<vmem>>, vector<192x32xf32>,
    %c0_196 = arith.constant 0 : index
    %c2_197 = arith.constant 2 : index
    %c0_198 = arith.constant 0 : index
    %139 = vector.load %arg8[%c0_196, %c2_197, %c0_198] : memref<14x18x32xf32, #tpu.memory_space<vmem>>, vector<12x16x32xf32>
    %140 = vector.shape_cast %139 : vector<12x16x32xf32> to vector<192x32xf32>
    %c0_199 = arith.constant 0 : index
    %c64_200 = arith.constant 64 : index
    %141 = vector.load %arg9[%c0_199, %c64_200] : memref<192x288xf32, #tpu.memory_space<vmem>>, vector<192x32xf32>
    tpu.vector_store %arg9[%c0_199, %c64_200], %140 {strides = array<i32>} : memref<192x288xf32, #tpu.memory_space<vmem>>, vector<192x32xf32>,
    %c1_201 = arith.constant 1 : index
    %c0_202 = arith.constant 0 : index
    %c0_203 = arith.constant 0 : index
    %142 = vector.load %arg8[%c1_201, %c0_202, %c0_203] : memref<14x18x32xf32, #tpu.memory_space<vmem>>, vector<12x16x32xf32>
    %143 = vector.shape_cast %142 : vector<12x16x32xf32> to vector<192x32xf32>
    %c0_204 = arith.constant 0 : index
    %c96_205 = arith.constant 96 : index
    %144 = vector.load %arg9[%c0_204, %c96_205] : memref<192x288xf32, #tpu.memory_space<vmem>>, vector<192x32xf32>
    tpu.vector_store %arg9[%c0_204, %c96_205], %143 {strides = array<i32>} : memref<192x288xf32, #tpu.memory_space<vmem>>, vector<192x32xf32>,
    %c1_206 = arith.constant 1 : index
    %c1_207 = arith.constant 1 : index
    %c0_208 = arith.constant 0 : index
    %145 = vector.load %arg8[%c1_206, %c1_207, %c0_208] : memref<14x18x32xf32, #tpu.memory_space<vmem>>, vector<12x16x32xf32>
    %146 = vector.shape_cast %145 : vector<12x16x32xf32> to vector<192x32xf32>
    %c0_209 = arith.constant 0 : index
    %c128_210 = arith.constant 128 : index
    %147 = vector.load %arg9[%c0_209, %c128_210] : memref<192x288xf32, #tpu.memory_space<vmem>>, vector<192x32xf32>
    tpu.vector_store %arg9[%c0_209, %c128_210], %146 {strides = array<i32>} : memref<192x288xf32, #tpu.memory_space<vmem>>, vector<192x32xf32>,
    %c1_211 = arith.constant 1 : index
    %c2_212 = arith.constant 2 : index
    %c0_213 = arith.constant 0 : index
    %148 = vector.load %arg8[%c1_211, %c2_212, %c0_213] : memref<14x18x32xf32, #tpu.memory_space<vmem>>, vector<12x16x32xf32>
    %149 = vector.shape_cast %148 : vector<12x16x32xf32> to vector<192x32xf32>
    %c0_214 = arith.constant 0 : index
    %c160_215 = arith.constant 160 : index
    %150 = vector.load %arg9[%c0_214, %c160_215] : memref<192x288xf32, #tpu.memory_space<vmem>>, vector<192x32xf32>
    tpu.vector_store %arg9[%c0_214, %c160_215], %149 {strides = array<i32>} : memref<192x288xf32, #tpu.memory_space<vmem>>, vector<192x32xf32>,
    %c2_216 = arith.constant 2 : index
    %c0_217 = arith.constant 0 : index
    %c0_218 = arith.constant 0 : index
    %151 = vector.load %arg8[%c2_216, %c0_217, %c0_218] : memref<14x18x32xf32, #tpu.memory_space<vmem>>, vector<12x16x32xf32>
    %152 = vector.shape_cast %151 : vector<12x16x32xf32> to vector<192x32xf32>
    %c0_219 = arith.constant 0 : index
    %c192_220 = arith.constant 192 : index
    %153 = vector.load %arg9[%c0_219, %c192_220] : memref<192x288xf32, #tpu.memory_space<vmem>>, vector<192x32xf32>
    tpu.vector_store %arg9[%c0_219, %c192_220], %152 {strides = array<i32>} : memref<192x288xf32, #tpu.memory_space<vmem>>, vector<192x32xf32>,
    %c2_221 = arith.constant 2 : index
    %c1_222 = arith.constant 1 : index
    %c0_223 = arith.constant 0 : index
    %154 = vector.load %arg8[%c2_221, %c1_222, %c0_223] : memref<14x18x32xf32, #tpu.memory_space<vmem>>, vector<12x16x32xf32>
    %155 = vector.shape_cast %154 : vector<12x16x32xf32> to vector<192x32xf32>
    %c0_224 = arith.constant 0 : index
    %c224_225 = arith.constant 224 : index
    %156 = vector.load %arg9[%c0_224, %c224_225] : memref<192x288xf32, #tpu.memory_space<vmem>>, vector<192x32xf32>
    tpu.vector_store %arg9[%c0_224, %c224_225], %155 {strides = array<i32>} : memref<192x288xf32, #tpu.memory_space<vmem>>, vector<192x32xf32>,
    %c2_226 = arith.constant 2 : index
    %c2_227 = arith.constant 2 : index
    %c0_228 = arith.constant 0 : index
    %157 = vector.load %arg8[%c2_226, %c2_227, %c0_228] : memref<14x18x32xf32, #tpu.memory_space<vmem>>, vector<12x16x32xf32>
    %158 = vector.shape_cast %157 : vector<12x16x32xf32> to vector<192x32xf32>
    %c0_229 = arith.constant 0 : index
    %c256_230 = arith.constant 256 : index
    %159 = vector.load %arg9[%c0_229, %c256_230] : memref<192x288xf32, #tpu.memory_space<vmem>>, vector<192x32xf32>
    tpu.vector_store %arg9[%c0_229, %c256_230], %158 {strides = array<i32>} : memref<192x288xf32, #tpu.memory_space<vmem>>, vector<192x32xf32>,
    %c0_231 = arith.constant 0 : index
    %c0_232 = arith.constant 0 : index
    %160 = vector.load %arg9[%c0_231, %c0_232] : memref<192x288xf32, #tpu.memory_space<vmem>>, vector<192x288xf32>
    %161 = arith.truncf %160 : vector<192x288xf32> to vector<192x288xbf16>
    %c3 = arith.constant 3 : index
    %c0_233 = arith.constant 0 : index
    %c0_234 = arith.constant 0 : index
    %162 = vector.load %arg2[%c3, %c0_233, %c0_234] : memref<4x288x32xbf16, #tpu.memory_space<vmem>>, vector<1x288x32xbf16>
    %163 = vector.shape_cast %162 : vector<1x288x32xbf16> to vector<288x32xbf16>
    %cst_235 = arith.constant dense<0.000000e+00> : vector<192x32xf32>
    %164 = tpu.matmul %161, %163, %cst_235 {dimension_numbers = #tpu.dot_dimension_numbers<[1], [0], [0], [1], [0, 0, 1, 1], [], []>} : vector<192x288xbf16>, vector<288x32xbf16>, vector<192x32xf32> -> vector<192x32xf32>
    %c3_236 = arith.constant 3 : index
    %c0_237 = arith.constant 0 : index
    %c0_238 = arith.constant 0 : index
    %165 = vector.load %arg3[%c3_236, %c0_237, %c0_238] : memref<4x1x32xf32, #tpu.memory_space<vmem>>, vector<1x1x32xf32>
    %166 = vector.shape_cast %165 : vector<1x1x32xf32> to vector<1x32xf32>
    %167 = vector.broadcast %166 : vector<1x32xf32> to vector<192x32xf32>
    %168 = arith.addf %164, %167 : vector<192x32xf32>
    %cst_239 = arith.constant 0.000000e+00 : f32
    %169 = vector.broadcast %cst_239 : f32 to vector<192x32xf32>
    %170 = arith.maximumf %168, %169 : vector<192x32xf32>
    %171 = vector.shape_cast %170 : vector<192x32xf32> to vector<12x16x32xf32>
    %c1_240 = arith.constant 1 : index
    %c1_241 = arith.constant 1 : index
    %c0_242 = arith.constant 0 : index
    %172 = vector.load %arg8[%c1_240, %c1_241, %c0_242] : memref<14x18x32xf32, #tpu.memory_space<vmem>>, vector<12x16x32xf32>
    tpu.vector_store %arg8[%c1_240, %c1_241, %c0_242], %171 {strides = array<i32>} : memref<14x18x32xf32, #tpu.memory_space<vmem>>, vector<12x16x32xf32>,
    %c1_243 = arith.constant 1 : index
    %c1_244 = arith.constant 1 : index
    %c0_245 = arith.constant 0 : index
    %173 = vector.load %arg8[%c1_243, %c1_244, %c0_245] : memref<14x18x32xf32, #tpu.memory_space<vmem>>, vector<8x12x32xf32>
    %174 = vector.shape_cast %173 : vector<8x12x32xf32> to vector<96x32xf32>
    %c0_246 = arith.constant 0 : index
    %c0_247 = arith.constant 0 : index
    %175 = vector.load %arg4[%c0_246, %c0_247] : memref<4x32xf32, #tpu.memory_space<vmem>>, vector<4x32xf32>
    %cst_248 = arith.constant dense<0.000000e+00> : vector<4x96xf32>
    %176 = tpu.matmul %175, %174, %cst_248 {dimension_numbers = #tpu.dot_dimension_numbers<[1], [1], [0], [0], [0, 0, 1, 0], [], []>} : vector<4x32xf32>, vector<96x32xf32>, vector<4x96xf32> -> vector<4x96xf32>
    %c0_249 = arith.constant 0 : index
    %c0_250 = arith.constant 0 : index
    %177 = vector.load %arg5[%c0_249, %c0_250] : memref<4x1xf32, #tpu.memory_space<vmem>>, vector<4x1xf32>
    %178 = vector.broadcast %177 : vector<4x1xf32> to vector<4x96xf32>
    %179 = arith.addf %176, %178 : vector<4x96xf32>
    %180 = arith.negf %179 : vector<4x96xf32>
    %181 = math.exp %180 : vector<4x96xf32>
    %cst_251 = arith.constant 1.000000e+00 : f32
    %182 = vector.broadcast %cst_251 : f32 to vector<4x96xf32>
    %183 = arith.addf %182, %181 : vector<4x96xf32>
    %184 = arith.divf %182, %183 : vector<4x96xf32>
    %185 = vector.extract_strided_slice %184 {offsets = [0, 0], sizes = [2, 96], strides = [1, 1]} : vector<4x96xf32> to vector<2x96xf32>
    %c0_252 = arith.constant 0 : index
    %c0_253 = arith.constant 0 : index
    %c0_254 = arith.constant 0 : index
    %186 = vector.load %arg6[%c0_252, %c0_253, %c0_254] : memref<1x2x96xf32, #tpu.memory_space<vmem>>, vector<1x2x96xf32>
    %187 = vector.shape_cast %186 : vector<1x2x96xf32> to vector<2x96xf32>
    %188 = vector.shape_cast %185 : vector<2x96xf32> to vector<1x2x96xf32>
    tpu.vector_store %arg6[%c0_252, %c0_253, %c0_254], %188 {strides = array<i32>} : memref<1x2x96xf32, #tpu.memory_space<vmem>>, vector<1x2x96xf32>,
    %189 = vector.extract_strided_slice %184 {offsets = [2, 0], sizes = [2, 96], strides = [1, 1]} : vector<4x96xf32> to vector<2x96xf32>
    %cst_255 = arith.constant dense<0.000000e+00> : vector<2xf32>
    %190 = vector.multi_reduction <add>, %189, %cst_255 [1] : vector<2x96xf32> to vector<2xf32>
    %cst_256 = arith.constant 9.600000e+01 : f32
    %191 = vector.broadcast %cst_256 : f32 to vector<2xf32>
    %192 = arith.divf %190, %191 : vector<2xf32>
    %193 = vector.shape_cast %192 : vector<2xf32> to vector<1x2xf32>
    %c0_257 = arith.constant 0 : index
    %c0_258 = arith.constant 0 : index
    %c0_259 = arith.constant 0 : index
    %194 = vector.load %arg7[%c0_257, %c0_258, %c0_259] : memref<1x1x2xf32, #tpu.memory_space<vmem>>, vector<1x1x2xf32>
    %195 = vector.shape_cast %194 : vector<1x1x2xf32> to vector<1x2xf32>
    %196 = vector.shape_cast %193 : vector<1x2xf32> to vector<1x1x2xf32>
    tpu.vector_store %arg7[%c0_257, %c0_258, %c0_259], %196 {strides = array<i32>} : memref<1x1x2xf32, #tpu.memory_space<vmem>>, vector<1x1x2xf32>,
    return
  }
  func.func @transform_0(%arg0: i32) -> (i32, i32, i32, i32) {
    %c0_i32 = arith.constant 0 : i32
    %c0_i32_0 = arith.constant 0 : i32
    %c0_i32_1 = arith.constant 0 : i32
    %c0_i32_2 = arith.constant 0 : i32
    return %arg0, %c0_i32, %c0_i32_0, %c0_i32_1 : i32, i32, i32, i32
  }
  func.func @transform_1(%arg0: i32) -> (i32, i32, i32) {
    %c0_i32 = arith.constant 0 : i32
    %c0_i32_0 = arith.constant 0 : i32
    %c0_i32_1 = arith.constant 0 : i32
    %c0_i32_2 = arith.constant 0 : i32
    return %c0_i32, %c0_i32_0, %c0_i32_1 : i32, i32, i32
  }
  func.func @transform_2(%arg0: i32) -> (i32, i32, i32) {
    %c0_i32 = arith.constant 0 : i32
    %c0_i32_0 = arith.constant 0 : i32
    %c0_i32_1 = arith.constant 0 : i32
    %c0_i32_2 = arith.constant 0 : i32
    return %c0_i32, %c0_i32_0, %c0_i32_1 : i32, i32, i32
  }
  func.func @transform_3(%arg0: i32) -> (i32, i32) {
    %c0_i32 = arith.constant 0 : i32
    %c0_i32_0 = arith.constant 0 : i32
    %c0_i32_1 = arith.constant 0 : i32
    return %c0_i32, %c0_i32_0 : i32, i32
  }
  func.func @transform_4(%arg0: i32) -> (i32, i32) {
    %c0_i32 = arith.constant 0 : i32
    %c0_i32_0 = arith.constant 0 : i32
    %c0_i32_1 = arith.constant 0 : i32
    return %c0_i32, %c0_i32_0 : i32, i32
  }
  func.func @transform_5(%arg0: i32) -> (i32, i32, i32) {
    %c0_i32 = arith.constant 0 : i32
    %c0_i32_0 = arith.constant 0 : i32
    %c0_i32_1 = arith.constant 0 : i32
    return %arg0, %c0_i32, %c0_i32_0 : i32, i32, i32
  }
  func.func @transform_6(%arg0: i32) -> (i32, i32, i32) {
    %c0_i32 = arith.constant 0 : i32
    %c0_i32_0 = arith.constant 0 : i32
    %c0_i32_1 = arith.constant 0 : i32
    return %arg0, %c0_i32, %c0_i32_0 : i32, i32, i32
  }
}

</mosaic_0001>

<llo_original>
// kernel: insane_boa_forward.1
$region0: #{insane_boa_forward.1}
  #allocation0 [shape = 'u32[]', space=smem, size = 0x4, offset = 0x4, fixed_abs, tag = 'smem constant byte address 0x4 - core index']
  #allocation1 [shape = 'u32[144,128]{1,0:T(1,128)}', space=vmem, size = 0x12000, scoped, tag = 'internal scratch']
  #allocation2 [shape = 'f32[14,18,32]{2,1,0:T(8,128)}', space=vmem, size = 0x2a000, scoped, tag = 'scratch operand']
  #allocation3 [shape = 'f32[192,288]{1,0:T(8,128)}', space=vmem, size = 0x48000, scoped, tag = 'scratch operand']
  %s0 = inlined_call_operand.vmem [shape: f32[2,12,16,19], index: 0, kind: input, shape index: {}]
  %s1 = inlined_call_operand.vmem [shape: bf16[4,288,32], index: 1, kind: input, shape index: {}]
  %s2 = inlined_call_operand.vmem [shape: f32[4,1,32], index: 2, kind: input, shape index: {}]
  %s3 = inlined_call_operand.vmem [shape: f32[4,32], index: 3, kind: input, shape index: {}]
  %s4 = inlined_call_operand.vmem [shape: f32[4,1], index: 4, kind: input, shape index: {}]
  %s5 = inlined_call_operand.vmem [shape: f32[2,2,96], index: 5, kind: output, shape index: {0}]
  %s6 = inlined_call_operand.vmem [shape: f32[2,1,2], index: 6, kind: output, shape index: {1}]
  %7 = xla_tuple %s5, %s6
  %s8 = sld [smem:[#allocation0]]
  $region61: #{insane_boa_forward.1} parent=0
    _
  %s10 = ssub.s32 1, %s8
  %s11 = scalar_select 0, %s10, %s8
  loop: start=0, step=1, limit=4
  $region2: #{insane_boa_forward.1} parent=0 // loop_pre_header
    _
  $region3: #{insane_boa_forward.1} parent=0 // loop_header
    %s13 = sphi 0, %s17
    %p14 = scmp.ge.s32.totalorder %s13, 4
    %s23 = sphi 0, %s25
    %s26 = sphi 0, %s23
    %s27 = sphi 0, %s26
    %s43 = sphi 0, %s27
    %s47 = sphi 0, %s47
    %s49 = sphi 0, %s47
    %s50 = sphi 0, %s49
    %s64 = sphi 0, %s50
    %s68 = sphi 0, %s68
    %s70 = sphi 0, %s68
    %s71 = sphi 0, %s70
    %s85 = sphi 0, %s71
    %s89 = sphi 0, %s89
    %s91 = sphi 0, %s89
    %s92 = sphi 0, %s91
    %s106 = sphi 0, %s92
    %s110 = sphi 0, %s110
    %s112 = sphi 0, %s110
    %s113 = sphi 0, %s112
    %s127 = sphi 0, %s113
    %s133 = sphi 0, %s135
    %s136 = sphi 0, %s133
    %s137 = sphi 0, %s136
    %s153 = sphi 0, %s137
    %s159 = sphi 0, %s161
    %s162 = sphi 0, %s159
    %s163 = sphi 0, %s162
    %s179 = sphi 0, %s163
  $region4: #{insane_boa_forward.1} parent=0 // loop_header_branch
    %16 = sbr.rel (%p14) target = $region8
  $region5: #{insane_boa_forward.1} parent=0 // loop_body
    %s18 = ssub.s32 %s13, 1
    %s19 = ssub.s32 %s13, 2
    %s20 = sadd.s32 %s13, 1
    %s21 = ssub.s32 %s13, %s20
    %p22 = scmp.eq.s32.totalorder %s21, 0
    %s24 = sadd.s32 %s23, 1
    %s25 = scalar_select %p22, %s23, %s24
    %p28 = pneg %p22
    %p29 = scmp.eq.s32.totalorder %s13, 1
    %p30 = por %p28, %p29
    %p31 = scmp.ne.s32.totalorder %s23, %s26
    %p32 = scmp.eq.s32.totalorder %s13, 0
    %p33 = por %p31, %p32
    %p34 = scmp.ne.s32.totalorder %s23, %s26
    %p35 = scmp.eq.s32.totalorder %s18, 1
    %p36 = por %p34, %p35
    %p37 = scmp.ne.s32.totalorder %s26, %s27
    %p38 = scmp.eq.s32.totalorder %s18, 0
    %p39 = por %p37, %p38
    %p40 = scmp.ne.s32.totalorder %s26, %s27
    %p41 = scmp.eq.s32.totalorder %s19, 1
    %p42 = por %p40, %p41
    %p44 = scmp.ne.s32.totalorder %s27, %s43
    %p45 = scmp.eq.s32.totalorder %s19, 0
    %p46 = por %p44, %p45
    %s48 = sadd.s32 %s47, 1
    %p51 = scmp.eq.s32.totalorder %s13, 1
    %p52 = scmp.ne.s32.totalorder %s47, %s49
    %p53 = scmp.eq.s32.totalorder %s13, 0
    %p54 = por %p52, %p53
    %p55 = scmp.ne.s32.totalorder %s47, %s49
    %p56 = scmp.eq.s32.totalorder %s18, 1
    %p57 = por %p55, %p56
    %p58 = scmp.ne.s32.totalorder %s49, %s50
    %p59 = scmp.eq.s32.totalorder %s18, 0
    %p60 = por %p58, %p59
    %p61 = scmp.ne.s32.totalorder %s49, %s50
    %p62 = scmp.eq.s32.totalorder %s19, 1
    %p63 = por %p61, %p62
    %p65 = scmp.ne.s32.totalorder %s50, %s64
    %p66 = scmp.eq.s32.totalorder %s19, 0
    %p67 = por %p65, %p66
    %s69 = sadd.s32 %s68, 1
    %p72 = scmp.eq.s32.totalorder %s13, 1
    %p73 = scmp.ne.s32.totalorder %s68, %s70
    %p74 = scmp.eq.s32.totalorder %s13, 0
    %p75 = por %p73, %p74
    %p76 = scmp.ne.s32.totalorder %s68, %s70
    %p77 = scmp.eq.s32.totalorder %s18, 1
    %p78 = por %p76, %p77
    %p79 = scmp.ne.s32.totalorder %s70, %s71
    %p80 = scmp.eq.s32.totalorder %s18, 0
    %p81 = por %p79, %p80
    %p82 = scmp.ne.s32.totalorder %s70, %s71
    %p83 = scmp.eq.s32.totalorder %s19, 1
    %p84 = por %p82, %p83
    %p86 = scmp.ne.s32.totalorder %s71, %s85
    %p87 = scmp.eq.s32.totalorder %s19, 0
    %p88 = por %p86, %p87
    %s90 = sadd.s32 %s89, 1
    %p93 = scmp.eq.s32.totalorder %s13, 1
    %p94 = scmp.ne.s32.totalorder %s89, %s91
    %p95 = scmp.eq.s32.totalorder %s13, 0
    %p96 = por %p94, %p95
    %p97 = scmp.ne.s32.totalorder %s89, %s91
    %p98 = scmp.eq.s32.totalorder %s18, 1
    %p99 = por %p97, %p98
    %p100 = scmp.ne.s32.totalorder %s91, %s92
    %p101 = scmp.eq.s32.totalorder %s18, 0
    %p102 = por %p100, %p101
    %p103 = scmp.ne.s32.totalorder %s91, %s92
    %p104 = scmp.eq.s32.totalorder %s19, 1
    %p105 = por %p103, %p104
    %p107 = scmp.ne.s32.totalorder %s92, %s106
    %p108 = scmp.eq.s32.totalorder %s19, 0
    %p109 = por %p107, %p108
    %s111 = sadd.s32 %s110, 1
    %p114 = scmp.eq.s32.totalorder %s13, 1
    %p115 = scmp.ne.s32.totalorder %s110, %s112
    %p116 = scmp.eq.s32.totalorder %s13, 0
    %p117 = por %p115, %p116
    %p118 = scmp.ne.s32.totalorder %s110, %s112
    %p119 = scmp.eq.s32.totalorder %s18, 1
    %p120 = por %p118, %p119
    %p121 = scmp.ne.s32.totalorder %s112, %s113
    %p122 = scmp.eq.s32.totalorder %s18, 0
    %p123 = por %p121, %p122
    %p124 = scmp.ne.s32.totalorder %s112, %s113
    %p125 = scmp.eq.s32.totalorder %s19, 1
    %p126 = por %p124, %p125
    %p128 = scmp.ne.s32.totalorder %s113, %s127
    %p129 = scmp.eq.s32.totalorder %s19, 0
    %p130 = por %p128, %p129
    %s131 = ssub.s32 %s13, %s20
    %p132 = scmp.eq.s32.totalorder %s131, 0
    %s134 = sadd.s32 %s133, 1
    %s135 = scalar_select %p132, %s133, %s134
    %p138 = pneg %p132
    %p139 = scmp.eq.s32.totalorder %s13, 1
    %p140 = por %p138, %p139
    %p141 = scmp.ne.s32.totalorder %s133, %s136
    %p142 = scmp.eq.s32.totalorder %s13, 0
    %p143 = por %p141, %p142
    %p144 = scmp.ne.s32.totalorder %s133, %s136
    %p145 = scmp.eq.s32.totalorder %s18, 1
    %p146 = por %p144, %p145
    %p147 = scmp.ne.s32.totalorder %s136, %s137
    %p148 = scmp.eq.s32.totalorder %s18, 0
    %p149 = por %p147, %p148
    %p150 = scmp.ne.s32.totalorder %s136, %s137
    %p151 = scmp.eq.s32.totalorder %s19, 1
    %p152 = por %p150, %p151
    %p154 = scmp.ne.s32.totalorder %s137, %s153
    %p155 = scmp.eq.s32.totalorder %s19, 0
    %p156 = por %p154, %p155
    %s157 = ssub.s32 %s13, %s20
    %p158 = scmp.eq.s32.totalorder %s157, 0
    %s160 = sadd.s32 %s159, 1
    %s161 = scalar_select %p158, %s159, %s160
    %p164 = pneg %p158
    %p165 = scmp.eq.s32.totalorder %s13, 1
    %p166 = por %p164, %p165
    %p167 = scmp.ne.s32.totalorder %s159, %s162
    %p168 = scmp.eq.s32.totalorder %s13, 0
    %p169 = por %p167, %p168
    %p170 = scmp.ne.s32.totalorder %s159, %s162
    %p171 = scmp.eq.s32.totalorder %s18, 1
    %p172 = por %p170, %p171
    %p173 = scmp.ne.s32.totalorder %s162, %s163
    %p174 = scmp.eq.s32.totalorder %s18, 0
    %p175 = por %p173, %p174
    %p176 = scmp.ne.s32.totalorder %s162, %s163
    %p177 = scmp.eq.s32.totalorder %s19, 1
    %p178 = por %p176, %p177
    %p180 = scmp.ne.s32.totalorder %s163, %s179
    %p181 = scmp.eq.s32.totalorder %s19, 0
    %p182 = por %p180, %p181
    %p183 = scmp.le.s32.totalorder 1, %s13
    %p184 = scmp.lt.s32.totalorder %s13, 3
    %p185 = pnand %p183, %p184
    %p186 = pneg %p185
    // Predicated region
    $region9: #{insane_boa_forward.1} parent=5 // pred_check
      _
    $region10: #{insane_boa_forward.1} parent=5 // pred_check_branch
      %188 = sbr.rel (%p185) target = $region12
    $region11: #{insane_boa_forward.1} parent=5 // pred_region
      %s189 = ssub.s32 %s13, 1
      // Predicated region
      $region13: #{insane_boa_forward.1} parent=11 // pred_check
        %p190 = pneg %p60
      $region14: #{insane_boa_forward.1} parent=11 // pred_check_branch
        %192 = sbr.rel (%p190) target = $region16
      $region15: #{insane_boa_forward.1} parent=11 // pred_region
        _
      $region16: #{insane_boa_forward.1} parent=11 // pred_fallthru
        _
      // Predicated region
      $region17: #{insane_boa_forward.1} parent=11 // pred_check
        %p193 = pneg %p81
      $region18: #{insane_boa_forward.1} parent=11 // pred_check_branch
        %195 = sbr.rel (%p193) target = $region20
      $region19: #{insane_boa_forward.1} parent=11 // pred_region
        _
      $region20: #{insane_boa_forward.1} parent=11 // pred_fallthru
        _
      // Predicated region
      $region21: #{insane_boa_forward.1} parent=11 // pred_check
        %p196 = pneg %p102
      $region22: #{insane_boa_forward.1} parent=11 // pred_check_branch
        %198 = sbr.rel (%p196) target = $region24
      $region23: #{insane_boa_forward.1} parent=11 // pred_region
        _
      $region24: #{insane_boa_forward.1} parent=11 // pred_fallthru
        _
      // Predicated region
      $region25: #{insane_boa_forward.1} parent=11 // pred_check
        %p199 = pneg %p123
      $region26: #{insane_boa_forward.1} parent=11 // pred_check_branch
        %201 = sbr.rel (%p199) target = $region28
      $region27: #{insane_boa_forward.1} parent=11 // pred_region
        _
      $region28: #{insane_boa_forward.1} parent=11 // pred_fallthru
        _
    $region12: #{insane_boa_forward.1} parent=5 // pred_fallthru
      _
    %p202 = scmp.lt.s32.totalorder %s13, 2
    // Predicated region
    $region29: #{insane_boa_forward.1} parent=5 // pred_check
      %p203 = pneg %p202
    $region30: #{insane_boa_forward.1} parent=5 // pred_check_branch
      %205 = sbr.rel (%p203) target = $region32
    $region31: #{insane_boa_forward.1} parent=5 // pred_region
      // Predicated region
      $region33: #{insane_boa_forward.1} parent=31 // pred_check
        %p206 = pneg %p33
      $region34: #{insane_boa_forward.1} parent=31 // pred_check_branch
        %208 = sbr.rel (%p206) target = $region36
      $region35: #{insane_boa_forward.1} parent=31 // pred_region
        %p209 = scmp.lt.s32.totalorder %s13, 1
        %s210 = scalar_select %p209, %s13, 1
        %s211 = smul.addr %s210, 24
        %s212 = smul.addr %s211, 8
        %s213 = scalar_lea.vmem %s0, %s212
      $region36: #{insane_boa_forward.1} parent=31 // pred_fallthru
        _
    $region32: #{insane_boa_forward.1} parent=5 // pred_fallthru
      _
    %p214 = scmp.le.s32.totalorder 1, %s13
    %p215 = scmp.lt.s32.totalorder %s13, 3
    %p216 = pnand %p214, %p215
    %p217 = pneg %p216
    // Predicated region
    $region37: #{insane_boa_forward.1} parent=5 // pred_check
      _
    $region38: #{insane_boa_forward.1} parent=5 // pred_check_branch
      %219 = sbr.rel (%p216) target = $region40
    $region39: #{insane_boa_forward.1} parent=5 // pred_region
      %s220 = ssub.s32 %s13, 1
      %p221 = scmp.lt.s32.totalorder %s18, 1
      %s222 = scalar_select %p221, %s18, 1
      %s223 = smul.addr %s222, 24
      %s224 = smul.addr %s223, 8
      %s225 = scalar_lea.vmem %s0, %s224
      %p226 = pneg %p39
      %p227 = pneg %p36
      %p228 = pneg %p60
      %p229 = pneg %p57
      %p230 = pneg %p81
      %p231 = pneg %p78
      %p232 = pneg %p102
      %p233 = pneg %p99
      %p234 = pneg %p123
      %p235 = pneg %p120
      %p236 = pneg %p149
      %p237 = pneg %p146
      %p238 = scmp.lt.s32.totalorder %s18, 1
      %s239 = scalar_select %p238, %s18, 1
      %s240 = smul.addr %s239, 2
      %s241 = scalar_lea.vmem %s5, %s240
      %p242 = pneg %p175
      %p243 = pneg %p172
      %p244 = scmp.lt.s32.totalorder %s18, 1
      %s245 = scalar_select %p244, %s18, 1
      %s246 = scalar_lea.vmem %s6, %s245
      %p247 = scmp.lt.s32.totalorder %s18, 1
      %s248 = scalar_select %p247, %s18, 1
      %s249 = smul.addr %s248, 24
      %s250 = smul.addr %s249, 8
      %s251 = scalar_lea.vmem %s0, %s250
      %p252 = scmp.lt.s32.totalorder %s18, 1
      %s253 = scalar_select %p252, %s18, 1
      %s254 = smul.addr %s253, 2
      %s255 = scalar_lea.vmem %s5, %s254
      %p256 = scmp.lt.s32.totalorder %s18, 1
      %s257 = scalar_select %p256, %s18, 1
      %s258 = scalar_lea.vmem %s6, %s257
      %vm260 = vcmask 261120
      %261 = vst.msk [vmem:[#allocation2] sm:$0xff] %vm260, 0.0
      %262 = vst.msk [vmem:[#allocation2 + $0x8] sm:$0xff] %vm260, 0.0
      %vm263 = vcmask 254976
      %264 = vst.msk [vmem:[#allocation2 + $0x10] sm:$0x3] %vm263, 0.0
      %s265 = scalar_lea.vmem [#allocation2], 312
      %266 = vst.msk [vmem:[%s265] sm:$0xff] %vm260, 0.0
      %267 = vst.msk [vmem:[%s265 + $0x8] sm:$0xff] %vm260, 0.0
      %268 = vst.msk [vmem:[%s265 + $0x10] sm:$0x3] %vm263, 0.0
      %s269 = scalar_lea.vmem [#allocation2], 24
      %vm270 = vcmask 253952
      %271 = vst.msk [vmem:[%s269] sm:$0x1] %vm270, 0.0
      %272 = vst.msk [vmem:[%s269 + $0x18] sm:$0x1] %vm270, 0.0
      %273 = vst.msk [vmem:[%s269 + $0x30] sm:$0x1] %vm270, 0.0
      %274 = vst.msk [vmem:[%s269 + $0x48] sm:$0x1] %vm270, 0.0
      %275 = vst.msk [vmem:[%s269 + $0x60] sm:$0x1] %vm270, 0.0
      %276 = vst.msk [vmem:[%s269 + $0x78] sm:$0x1] %vm270, 0.0
      %277 = vst.msk [vmem:[%s269 + $0x90] sm:$0x1] %vm270, 0.0
      %278 = vst.msk [vmem:[%s269 + $0xa8] sm:$0x1] %vm270, 0.0
      %279 = vst.msk [vmem:[%s269 + $0xc0] sm:$0x1] %vm270, 0.0
      %280 = vst.msk [vmem:[%s269 + $0xd8] sm:$0x1] %vm270, 0.0
      %281 = vst.msk [vmem:[%s269 + $0xf0] sm:$0x1] %vm270, 0.0
      %282 = vst.msk [vmem:[%s269 + $0x108] sm:$0x1] %vm270, 0.0
      %283 = vst.msk [vmem:[%s269 + $0x11] sm:$0x1] %vm270, 0.0
      %284 = vst.msk [vmem:[%s269 + $0x29] sm:$0x1] %vm270, 0.0
      %285 = vst.msk [vmem:[%s269 + $0x41] sm:$0x1] %vm270, 0.0
      %286 = vst.msk [vmem:[%s269 + $0x59] sm:$0x1] %vm270, 0.0
      %287 = vst.msk [vmem:[%s269 + $0x71] sm:$0x1] %vm270, 0.0
      %288 = vst.msk [vmem:[%s269 + $0x89] sm:$0x1] %vm270, 0.0
      %289 = vst.msk [vmem:[%s269 + $0xa1] sm:$0x1] %vm270, 0.0
      %290 = vst.msk [vmem:[%s269 + $0xb9] sm:$0x1] %vm270, 0.0
      %291 = vst.msk [vmem:[%s269 + $0xd1] sm:$0x1] %vm270, 0.0
      %292 = vst.msk [vmem:[%s269 + $0xe9] sm:$0x1] %vm270, 0.0
      %293 = vst.msk [vmem:[%s269 + $0x101] sm:$0x1] %vm270, 0.0
      %294 = vst.msk [vmem:[%s269 + $0x119] sm:$0x1] %vm270, 0.0
      %vm295 = vcmask 261272
      %296 = vst.msk [vmem:[%s269 + $0x1] sm:$0xff] %vm295, 0.0
      %297 = vst.msk [vmem:[%s269 + $0x9] sm:$0xff] %vm295, 0.0
      %298 = vst.msk [vmem:[%s269 + $0x19] sm:$0xff] %vm295, 0.0
      %299 = vst.msk [vmem:[%s269 + $0x21] sm:$0xff] %vm295, 0.0
      %300 = vst.msk [vmem:[%s269 + $0x31] sm:$0xff] %vm295, 0.0
      %301 = vst.msk [vmem:[%s269 + $0x39] sm:$0xff] %vm295, 0.0
      %302 = vst.msk [vmem:[%s269 + $0x49] sm:$0xff] %vm295, 0.0
      %303 = vst.msk [vmem:[%s269 + $0x51] sm:$0xff] %vm295, 0.0
      %304 = vst.msk [vmem:[%s269 + $0x61] sm:$0xff] %vm295, 0.0
      %305 = vst.msk [vmem:[%s269 + $0x69] sm:$0xff] %vm295, 0.0
      %306 = vst.msk [vmem:[%s269 + $0x79] sm:$0xff] %vm295, 0.0
      %307 = vst.msk [vmem:[%s269 + $0x81] sm:$0xff] %vm295, 0.0
      %308 = vst.msk [vmem:[%s269 + $0x91] sm:$0xff] %vm295, 0.0
      %309 = vst.msk [vmem:[%s269 + $0x99] sm:$0xff] %vm295, 0.0
      %310 = vst.msk [vmem:[%s269 + $0xa9] sm:$0xff] %vm295, 0.0
      %311 = vst.msk [vmem:[%s269 + $0xb1] sm:$0xff] %vm295, 0.0
      %312 = vst.msk [vmem:[%s269 + $0xc1] sm:$0xff] %vm295, 0.0
      %313 = vst.msk [vmem:[%s269 + $0xc9] sm:$0xff] %vm295, 0.0
      %314 = vst.msk [vmem:[%s269 + $0xd9] sm:$0xff] %vm295, 0.0
      %315 = vst.msk [vmem:[%s269 + $0xe1] sm:$0xff] %vm295, 0.0
      %316 = vst.msk [vmem:[%s269 + $0xf1] sm:$0xff] %vm295, 0.0
      %317 = vst.msk [vmem:[%s269 + $0xf9] sm:$0xff] %vm295, 0.0
      %318 = vst.msk [vmem:[%s269 + $0x109] sm:$0xff] %vm295, 0.0
      %319 = vst.msk [vmem:[%s269 + $0x111] sm:$0xff] %vm295, 0.0
      %v320 = vld [vmem:[%s251] sm:$0xff]
      %v321 = vld [vmem:[%s251 + $0x8] sm:$0xff]
      %v322 = vld [vmem:[%s251 + $0x10] sm:$0xff]
      %v323 = vld [vmem:[%s251 + $0x18] sm:$0xff]
      %v324 = vld [vmem:[%s251 + $0x20] sm:$0xff]
      %v325 = vld [vmem:[%s251 + $0x28] sm:$0xff]
      %v326 = vld [vmem:[%s251 + $0x30] sm:$0xff]
      %v327 = vld [vmem:[%s251 + $0x38] sm:$0xff]
      %v328 = vld [vmem:[%s251 + $0x40] sm:$0xff]
      %v329 = vld [vmem:[%s251 + $0x48] sm:$0xff]
      %v330 = vld [vmem:[%s251 + $0x50] sm:$0xff]
      %v331 = vld [vmem:[%s251 + $0x58] sm:$0xff]
      %v332 = vld [vmem:[%s251 + $0x60] sm:$0xff]
      %v333 = vld [vmem:[%s251 + $0x68] sm:$0xff]
      %v334 = vld [vmem:[%s251 + $0x70] sm:$0xff]
      %v335 = vld [vmem:[%s251 + $0x78] sm:$0xff]
      %v336 = vld [vmem:[%s251 + $0x80] sm:$0xff]
      %v337 = vld [vmem:[%s251 + $0x88] sm:$0xff]
      %v338 = vld [vmem:[%s251 + $0x90] sm:$0xff]
      %v339 = vld [vmem:[%s251 + $0x98] sm:$0xff]
      %v340 = vld [vmem:[%s251 + $0xa0] sm:$0xff]
      %v341 = vld [vmem:[%s251 + $0xa8] sm:$0xff]
      %v342 = vld [vmem:[%s251 + $0xb0] sm:$0xff]
      %v343 = vld [vmem:[%s251 + $0xb8] sm:$0xff]
      %vm344 = vcmask 154624
      %345 = vst.msk [vmem:[%s269 + $0x1] sm:$0xff] %vm344, %v320
      %346 = vst.msk [vmem:[%s269 + $0x9] sm:$0xff] %vm344, %v321
      %347 = vst.msk [vmem:[%s269 + $0x19] sm:$0xff] %vm344, %v322
      %348 = vst.msk [vmem:[%s269 + $0x21] sm:$0xff] %vm344, %v323
      %349 = vst.msk [vmem:[%s269 + $0x31] sm:$0xff] %vm344, %v324
      %350 = vst.msk [vmem:[%s269 + $0x39] sm:$0xff] %vm344, %v325
      %351 = vst.msk [vmem:[%s269 + $0x49] sm:$0xff] %vm344, %v326
      %352 = vst.msk [vmem:[%s269 + $0x51] sm:$0xff] %vm344, %v327
      %353 = vst.msk [vmem:[%s269 + $0x61] sm:$0xff] %vm344, %v328
      %354 = vst.msk [vmem:[%s269 + $0x69] sm:$0xff] %vm344, %v329
      %355 = vst.msk [vmem:[%s269 + $0x79] sm:$0xff] %vm344, %v330
      %356 = vst.msk [vmem:[%s269 + $0x81] sm:$0xff] %vm344, %v331
      %357 = vst.msk [vmem:[%s269 + $0x91] sm:$0xff] %vm344, %v332
      %358 = vst.msk [vmem:[%s269 + $0x99] sm:$0xff] %vm344, %v333
      %359 = vst.msk [vmem:[%s269 + $0xa9] sm:$0xff] %vm344, %v334
      %360 = vst.msk [vmem:[%s269 + $0xb1] sm:$0xff] %vm344, %v335
      %361 = vst.msk [vmem:[%s269 + $0xc1] sm:$0xff] %vm344, %v336
      %362 = vst.msk [vmem:[%s269 + $0xc9] sm:$0xff] %vm344, %v337
      %363 = vst.msk [vmem:[%s269 + $0xd9] sm:$0xff] %vm344, %v338
      %364 = vst.msk [vmem:[%s269 + $0xe1] sm:$0xff] %vm344, %v339
      %365 = vst.msk [vmem:[%s269 + $0xf1] sm:$0xff] %vm344, %v340
      %366 = vst.msk [vmem:[%s269 + $0xf9] sm:$0xff] %vm344, %v341
      %367 = vst.msk [vmem:[%s269 + $0x109] sm:$0xff] %vm344, %v342
      %368 = vst.msk [vmem:[%s269 + $0x111] sm:$0xff] %vm344, %v343
      %v369 = vld [vmem:[#allocation2] sm:$0xff]
      %v370 = vld [vmem:[#allocation2 + $0x8] sm:$0xff]
      %v371 = vld [vmem:[#allocation2 + $0x18] sm:$0xff]
      %v372 = vld [vmem:[#allocation2 + $0x20] sm:$0xff]
      %v373 = vld [vmem:[#allocation2 + $0x30] sm:$0xff]
      %v374 = vld [vmem:[#allocation2 + $0x38] sm:$0xff]
      %v375 = vld [vmem:[#allocation2 + $0x48] sm:$0xff]
      %v376 = vld [vmem:[#allocation2 + $0x50] sm:$0xff]
      %v377 = vld [vmem:[#allocation2 + $0x60] sm:$0xff]
      %v378 = vld [vmem:[#allocation2 + $0x68] sm:$0xff]
      %v379 = vld [vmem:[#allocation2 + $0x78] sm:$0xff]
      %v380 = vld [vmem:[#allocation2 + $0x80] sm:$0xff]
      %v381 = vld [vmem:[#allocation2 + $0x90] sm:$0xff]
      %v382 = vld [vmem:[#allocation2 + $0x98] sm:$0xff]
      %v383 = vld [vmem:[#allocation2 + $0xa8] sm:$0xff]
      %v384 = vld [vmem:[#allocation2 + $0xb0] sm:$0xff]
      %v385 = vld [vmem:[#allocation2 + $0xc0] sm:$0xff]
      %v386 = vld [vmem:[#allocation2 + $0xc8] sm:$0xff]
      %v387 = vld [vmem:[#allocation2 + $0xd8] sm:$0xff]
      %v388 = vld [vmem:[#allocation2 + $0xe0] sm:$0xff]
      %v389 = vld [vmem:[#allocation2 + $0xf0] sm:$0xff]
      %v390 = vld [vmem:[#allocation2 + $0xf8] sm:$0xff]
      %v391 = vld [vmem:[#allocation2 + $0x108] sm:$0xff]
      %v392 = vld [vmem:[#allocation2 + $0x110] sm:$0xff]
      %393 = vst.msk [vmem:[#allocation3] sm:$0xff] %vm260, %v369
      %394 = vst.msk [vmem:[#allocation3 + $0x18] sm:$0xff] %vm260, %v370
      %395 = vst.msk [vmem:[#allocation3 + $0x30] sm:$0xff] %vm260, %v371
      %396 = vst.msk [vmem:[#allocation3 + $0x48] sm:$0xff] %vm260, %v372
      %397 = vst.msk [vmem:[#allocation3 + $0x60] sm:$0xff] %vm260, %v373
      %398 = vst.msk [vmem:[#allocation3 + $0x78] sm:$0xff] %vm260, %v374
      %399 = vst.msk [vmem:[#allocation3 + $0x90] sm:$0xff] %vm260, %v375
      %400 = vst.msk [vmem:[#allocation3 + $0xa8] sm:$0xff] %vm260, %v376
      %401 = vst.msk [vmem:[#allocation3 + $0xc0] sm:$0xff] %vm260, %v377
      %402 = vst.msk [vmem:[#allocation3 + $0xd8] sm:$0xff] %vm260, %v378
      %403 = vst.msk [vmem:[#allocation3 + $0xf0] sm:$0xff] %vm260, %v379
      %404 = vst.msk [vmem:[#allocation3 + $0x108] sm:$0xff] %vm260, %v380
      %405 = vst.msk [vmem:[#allocation3 + $0x120] sm:$0xff] %vm260, %v381
      %406 = vst.msk [vmem:[#allocation3 + $0x138] sm:$0xff] %vm260, %v382
      %407 = vst.msk [vmem:[#allocation3 + $0x150] sm:$0xff] %vm260, %v383
      %408 = vst.msk [vmem:[#allocation3 + $0x168] sm:$0xff] %vm260, %v384
      %409 = vst.msk [vmem:[#allocation3 + $0x180] sm:$0xff] %vm260, %v385
      %410 = vst.msk [vmem:[#allocation3 + $0x198] sm:$0xff] %vm260, %v386
      %411 = vst.msk [vmem:[#allocation3 + $0x1b0] sm:$0xff] %vm260, %v387
      %412 = vst.msk [vmem:[#allocation3 + $0x1c8] sm:$0xff] %vm260, %v388
      %413 = vst.msk [vmem:[#allocation3 + $0x1e0] sm:$0xff] %vm260, %v389
      %414 = vst.msk [vmem:[#allocation3 + $0x1f8] sm:$0xff] %vm260, %v390
      %415 = vst.msk [vmem:[#allocation3 + $0x210] sm:$0xff] %vm260, %v391
      %416 = vst.msk [vmem:[#allocation3 + $0x228] sm:$0xff] %vm260, %v392
      %v417 = vld [vmem:[#allocation2 + $0x1] sm:$0xff]
      %v418 = vld [vmem:[#allocation2 + $0x9] sm:$0xff]
      %v419 = vld [vmem:[#allocation2 + $0x19] sm:$0xff]
      %v420 = vld [vmem:[#allocation2 + $0x21] sm:$0xff]
      %v421 = vld [vmem:[#allocation2 + $0x31] sm:$0xff]
      %v422 = vld [vmem:[#allocation2 + $0x39] sm:$0xff]
      %v423 = vld [vmem:[#allocation2 + $0x49] sm:$0xff]
      %v424 = vld [vmem:[#allocation2 + $0x51] sm:$0xff]
      %v425 = vld [vmem:[#allocation2 + $0x61] sm:$0xff]
      %v426 = vld [vmem:[#allocation2 + $0x69] sm:$0xff]
      %v427 = vld [vmem:[#allocation2 + $0x79] sm:$0xff]
      %v428 = vld [vmem:[#allocation2 + $0x81] sm:$0xff]
      %v429 = vld [vmem:[#allocation2 + $0x91] sm:$0xff]
      %v430 = vld [vmem:[#allocation2 + $0x99] sm:$0xff]
      %v431 = vld [vmem:[#allocation2 + $0xa9] sm:$0xff]
      %v432 = vld [vmem:[#allocation2 + $0xb1] sm:$0xff]
      %v433 = vld [vmem:[#allocation2 + $0xc1] sm:$0xff]
      %v434 = vld [vmem:[#allocation2 + $0xc9] sm:$0xff]
      %v435 = vld [vmem:[#allocation2 + $0xd9] sm:$0xff]
      %v436 = vld [vmem:[#allocation2 + $0xe1] sm:$0xff]
      %v437 = vld [vmem:[#allocation2 + $0xf1] sm:$0xff]
      %v438 = vld [vmem:[#allocation2 + $0xf9] sm:$0xff]
      %v439 = vld [vmem:[#allocation2 + $0x109] sm:$0xff]
      %v440 = vld [vmem:[#allocation2 + $0x111] sm:$0xff]
      %465 = vrot.lane.b32.xlu0 %v417, 32
      %v466 = vpop.permute.xlu0 %465
      %467 = vrot.lane.b32.xlu0 %v418, 32
      %v468 = vpop.permute.xlu0 %467
      %469 = vrot.lane.b32.xlu0 %v419, 32
      %v470 = vpop.permute.xlu0 %469
      %471 = vrot.lane.b32.xlu0 %v420, 32
      %v472 = vpop.permute.xlu0 %471
      %473 = vrot.lane.b32.xlu0 %v421, 32
      %v474 = vpop.permute.xlu0 %473
      %475 = vrot.lane.b32.xlu0 %v422, 32
      %v476 = vpop.permute.xlu0 %475
      %477 = vrot.lane.b32.xlu0 %v423, 32
      %v478 = vpop.permute.xlu0 %477
      %479 = vrot.lane.b32.xlu0 %v424, 32
      %v480 = vpop.permute.xlu0 %479
      %481 = vrot.lane.b32.xlu0 %v425, 32
      %v482 = vpop.permute.xlu0 %481
      %483 = vrot.lane.b32.xlu0 %v426, 32
      %v484 = vpop.permute.xlu0 %483
      %485 = vrot.lane.b32.xlu0 %v427, 32
      %v486 = vpop.permute.xlu0 %485
      %487 = vrot.lane.b32.xlu0 %v428, 32
      %v488 = vpop.permute.xlu0 %487
      %489 = vrot.lane.b32.xlu0 %v429, 32
      %v490 = vpop.permute.xlu0 %489
      %491 = vrot.lane.b32.xlu0 %v430, 32
      %v492 = vpop.permute.xlu0 %491
      %493 = vrot.lane.b32.xlu0 %v431, 32
      %v494 = vpop.permute.xlu0 %493
      %495 = vrot.lane.b32.xlu0 %v432, 32
      %v496 = vpop.permute.xlu0 %495
      %497 = vrot.lane.b32.xlu0 %v433, 32
      %v498 = vpop.permute.xlu0 %497
      %499 = vrot.lane.b32.xlu0 %v434, 32
      %v500 = vpop.permute.xlu0 %499
      %501 = vrot.lane.b32.xlu0 %v435, 32
      %v502 = vpop.permute.xlu0 %501
      %503 = vrot.lane.b32.xlu0 %v436, 32
      %v504 = vpop.permute.xlu0 %503
      %505 = vrot.lane.b32.xlu0 %v437, 32
      %v506 = vpop.permute.xlu0 %505
      %507 = vrot.lane.b32.xlu0 %v438, 32
      %v508 = vpop.permute.xlu0 %507
      %509 = vrot.lane.b32.xlu0 %v439, 32
      %v510 = vpop.permute.xlu0 %509
      %511 = vrot.lane.b32.xlu0 %v440, 32
      %v512 = vpop.permute.xlu0 %511
      %vm537 = vcmask 523520
      %538 = vst.msk [vmem:[#allocation3] sm:$0xff] %vm537, %v466
      %539 = vst.msk [vmem:[#allocation3 + $0x18] sm:$0xff] %vm537, %v468
      %540 = vst.msk [vmem:[#allocation3 + $0x30] sm:$0xff] %vm537, %v470
      %541 = vst.msk [vmem:[#allocation3 + $0x48] sm:$0xff] %vm537, %v472
      %542 = vst.msk [vmem:[#allocation3 + $0x60] sm:$0xff] %vm537, %v474
      %543 = vst.msk [vmem:[#allocation3 + $0x78] sm:$0xff] %vm537, %v476
      %544 = vst.msk [vmem:[#allocation3 + $0x90] sm:$0xff] %vm537, %v478
      %545 = vst.msk [vmem:[#allocation3 + $0xa8] sm:$0xff] %vm537, %v480
      %546 = vst.msk [vmem:[#allocation3 + $0xc0] sm:$0xff] %vm537, %v482
      %547 = vst.msk [vmem:[#allocation3 + $0xd8] sm:$0xff] %vm537, %v484
      %548 = vst.msk [vmem:[#allocation3 + $0xf0] sm:$0xff] %vm537, %v486
      %549 = vst.msk [vmem:[#allocation3 + $0x108] sm:$0xff] %vm537, %v488
      %550 = vst.msk [vmem:[#allocation3 + $0x120] sm:$0xff] %vm537, %v490
      %551 = vst.msk [vmem:[#allocation3 + $0x138] sm:$0xff] %vm537, %v492
      %552 = vst.msk [vmem:[#allocation3 + $0x150] sm:$0xff] %vm537, %v494
      %553 = vst.msk [vmem:[#allocation3 + $0x168] sm:$0xff] %vm537, %v496
      %554 = vst.msk [vmem:[#allocation3 + $0x180] sm:$0xff] %vm537, %v498
      %555 = vst.msk [vmem:[#allocation3 + $0x198] sm:$0xff] %vm537, %v500
      %556 = vst.msk [vmem:[#allocation3 + $0x1b0] sm:$0xff] %vm537, %v502
      %557 = vst.msk [vmem:[#allocation3 + $0x1c8] sm:$0xff] %vm537, %v504
      %558 = vst.msk [vmem:[#allocation3 + $0x1e0] sm:$0xff] %vm537, %v506
      %559 = vst.msk [vmem:[#allocation3 + $0x1f8] sm:$0xff] %vm537, %v508
      %560 = vst.msk [vmem:[#allocation3 + $0x210] sm:$0xff] %vm537, %v510
      %561 = vst.msk [vmem:[#allocation3 + $0x228] sm:$0xff] %vm537, %v512
      %v562 = vld [vmem:[#allocation2 + $0x2] sm:$0xff]
      %v563 = vld [vmem:[#allocation2 + $0xa] sm:$0xff]
      %v564 = vld [vmem:[#allocation2 + $0x1a] sm:$0xff]
      %v565 = vld [vmem:[#allocation2 + $0x22] sm:$0xff]
      %v566 = vld [vmem:[#allocation2 + $0x32] sm:$0xff]
      %v567 = vld [vmem:[#allocation2 + $0x3a] sm:$0xff]
      %v568 = vld [vmem:[#allocation2 + $0x4a] sm:$0xff]
      %v569 = vld [vmem:[#allocation2 + $0x52] sm:$0xff]
      %v570 = vld [vmem:[#allocation2 + $0x62] sm:$0xff]
      %v571 = vld [vmem:[#allocation2 + $0x6a] sm:$0xff]
      %v572 = vld [vmem:[#allocation2 + $0x7a] sm:$0xff]
      %v573 = vld [vmem:[#allocation2 + $0x82] sm:$0xff]
      %v574 = vld [vmem:[#allocation2 + $0x92] sm:$0xff]
      %v575 = vld [vmem:[#allocation2 + $0x9a] sm:$0xff]
      %v576 = vld [vmem:[#allocation2 + $0xaa] sm:$0xff]
      %v577 = vld [vmem:[#allocation2 + $0xb2] sm:$0xff]
      %v578 = vld [vmem:[#allocation2 + $0xc2] sm:$0xff]
      %v579 = vld [vmem:[#allocation2 + $0xca] sm:$0xff]
      %v580 = vld [vmem:[#allocation2 + $0xda] sm:$0xff]
      %v581 = vld [vmem:[#allocation2 + $0xe2] sm:$0xff]
      %v582 = vld [vmem:[#allocation2 + $0xf2] sm:$0xff]
      %v583 = vld [vmem:[#allocation2 + $0xfa] sm:$0xff]
      %v584 = vld [vmem:[#allocation2 + $0x10a] sm:$0xff]
      %v585 = vld [vmem:[#allocation2 + $0x112] sm:$0xff]
      %610 = vrot.lane.b32.xlu0 %v562, 64
      %v611 = vpop.permute.xlu0 %610
      %612 = vrot.lane.b32.xlu0 %v563, 64
      %v613 = vpop.permute.xlu0 %612
      %614 = vrot.lane.b32.xlu0 %v564, 64
      %v615 = vpop.permute.xlu0 %614
      %616 = vrot.lane.b32.xlu0 %v565, 64
      %v617 = vpop.permute.xlu0 %616
      %618 = vrot.lane.b32.xlu0 %v566, 64
      %v619 = vpop.permute.xlu0 %618
      %620 = vrot.lane.b32.xlu0 %v567, 64
      %v621 = vpop.permute.xlu0 %620
      %622 = vrot.lane.b32.xlu0 %v568, 64
      %v623 = vpop.permute.xlu0 %622
      %624 = vrot.lane.b32.xlu0 %v569, 64
      %v625 = vpop.permute.xlu0 %624
      %626 = vrot.lane.b32.xlu0 %v570, 64
      %v627 = vpop.permute.xlu0 %626
      %628 = vrot.lane.b32.xlu0 %v571, 64
      %v629 = vpop.permute.xlu0 %628
      %630 = vrot.lane.b32.xlu0 %v572, 64
      %v631 = vpop.permute.xlu0 %630
      %632 = vrot.lane.b32.xlu0 %v573, 64
      %v633 = vpop.permute.xlu0 %632
      %634 = vrot.lane.b32.xlu0 %v574, 64
      %v635 = vpop.permute.xlu0 %634
      %636 = vrot.lane.b32.xlu0 %v575, 64
      %v637 = vpop.permute.xlu0 %636
      %638 = vrot.lane.b32.xlu0 %v576, 64
      %v639 = vpop.permute.xlu0 %638
      %640 = vrot.lane.b32.xlu0 %v577, 64
      %v641 = vpop.permute.xlu0 %640
      %642 = vrot.lane.b32.xlu0 %v578, 64
      %v643 = vpop.permute.xlu0 %642
      %644 = vrot.lane.b32.xlu0 %v579, 64
      %v645 = vpop.permute.xlu0 %644
      %646 = vrot.lane.b32.xlu0 %v580, 64
      %v647 = vpop.permute.xlu0 %646
      %648 = vrot.lane.b32.xlu0 %v581, 64
      %v649 = vpop.permute.xlu0 %648
      %650 = vrot.lane.b32.xlu0 %v582, 64
      %v651 = vpop.permute.xlu0 %650
      %652 = vrot.lane.b32.xlu0 %v583, 64
      %v653 = vpop.permute.xlu0 %652
      %654 = vrot.lane.b32.xlu0 %v584, 64
      %v655 = vpop.permute.xlu0 %654
      %656 = vrot.lane.b32.xlu0 %v585, 64
      %v657 = vpop.permute.xlu0 %656
      %vm682 = vcmask 785920
      %683 = vst.msk [vmem:[#allocation3] sm:$0xff] %vm682, %v611
      %684 = vst.msk [vmem:[#allocation3 + $0x18] sm:$0xff] %vm682, %v613
      %685 = vst.msk [vmem:[#allocation3 + $0x30] sm:$0xff] %vm682, %v615
      %686 = vst.msk [vmem:[#allocation3 + $0x48] sm:$0xff] %vm682, %v617
      %687 = vst.msk [vmem:[#allocation3 + $0x60] sm:$0xff] %vm682, %v619
      %688 = vst.msk [vmem:[#allocation3 + $0x78] sm:$0xff] %vm682, %v621
      %689 = vst.msk [vmem:[#allocation3 + $0x90] sm:$0xff] %vm682, %v623
      %690 = vst.msk [vmem:[#allocation3 + $0xa8] sm:$0xff] %vm682, %v625
      %691 = vst.msk [vmem:[#allocation3 + $0xc0] sm:$0xff] %vm682, %v627
      %692 = vst.msk [vmem:[#allocation3 + $0xd8] sm:$0xff] %vm682, %v629
      %693 = vst.msk [vmem:[#allocation3 + $0xf0] sm:$0xff] %vm682, %v631
      %694 = vst.msk [vmem:[#allocation3 + $0x108] sm:$0xff] %vm682, %v633
      %695 = vst.msk [vmem:[#allocation3 + $0x120] sm:$0xff] %vm682, %v635
      %696 = vst.msk [vmem:[#allocation3 + $0x138] sm:$0xff] %vm682, %v637
      %697 = vst.msk [vmem:[#allocation3 + $0x150] sm:$0xff] %vm682, %v639
      %698 = vst.msk [vmem:[#allocation3 + $0x168] sm:$0xff] %vm682, %v641
      %699 = vst.msk [vmem:[#allocation3 + $0x180] sm:$0xff] %vm682, %v643
      %700 = vst.msk [vmem:[#allocation3 + $0x198] sm:$0xff] %vm682, %v645
      %701 = vst.msk [vmem:[#allocation3 + $0x1b0] sm:$0xff] %vm682, %v647
      %702 = vst.msk [vmem:[#allocation3 + $0x1c8] sm:$0xff] %vm682, %v649
      %703 = vst.msk [vmem:[#allocation3 + $0x1e0] sm:$0xff] %vm682, %v651
      %704 = vst.msk [vmem:[#allocation3 + $0x1f8] sm:$0xff] %vm682, %v653
      %705 = vst.msk [vmem:[#allocation3 + $0x210] sm:$0xff] %vm682, %v655
      %706 = vst.msk [vmem:[#allocation3 + $0x228] sm:$0xff] %vm682, %v657
      %v707 = vld [vmem:[%s269] sm:$0xff]
      %v708 = vld [vmem:[%s269 + $0x8] sm:$0xff]
      %v709 = vld [vmem:[%s269 + $0x18] sm:$0xff]
      %v710 = vld [vmem:[%s269 + $0x20] sm:$0xff]
      %v711 = vld [vmem:[%s269 + $0x30] sm:$0xff]
      %v712 = vld [vmem:[%s269 + $0x38] sm:$0xff]
      %v713 = vld [vmem:[%s269 + $0x48] sm:$0xff]
      %v714 = vld [vmem:[%s269 + $0x50] sm:$0xff]
      %v715 = vld [vmem:[%s269 + $0x60] sm:$0xff]
      %v716 = vld [vmem:[%s269 + $0x68] sm:$0xff]
      %v717 = vld [vmem:[%s269 + $0x78] sm:$0xff]
      %v718 = vld [vmem:[%s269 + $0x80] sm:$0xff]
      %v719 = vld [vmem:[%s269 + $0x90] sm:$0xff]
      %v720 = vld [vmem:[%s269 + $0x98] sm:$0xff]
      %v721 = vld [vmem:[%s269 + $0xa8] sm:$0xff]
      %v722 = vld [vmem:[%s269 + $0xb0] sm:$0xff]
      %v723 = vld [vmem:[%s269 + $0xc0] sm:$0xff]
      %v724 = vld [vmem:[%s269 + $0xc8] sm:$0xff]
      %v725 = vld [vmem:[%s269 + $0xd8] sm:$0xff]
      %v726 = vld [vmem:[%s269 + $0xe0] sm:$0xff]
      %v727 = vld [vmem:[%s269 + $0xf0] sm:$0xff]
      %v728 = vld [vmem:[%s269 + $0xf8] sm:$0xff]
      %v729 = vld [vmem:[%s269 + $0x108] sm:$0xff]
      %v730 = vld [vmem:[%s269 + $0x110] sm:$0xff]
      %755 = vrot.lane.b32.xlu0 %v707, 96
      %v756 = vpop.permute.xlu0 %755
      %757 = vrot.lane.b32.xlu0 %v708, 96
      %v758 = vpop.permute.xlu0 %757
      %759 = vrot.lane.b32.xlu0 %v709, 96
      %v760 = vpop.permute.xlu0 %759
      %761 = vrot.lane.b32.xlu0 %v710, 96
      %v762 = vpop.permute.xlu0 %761
      %763 = vrot.lane.b32.xlu0 %v711, 96
      %v764 = vpop.permute.xlu0 %763
      %765 = vrot.lane.b32.xlu0 %v712, 96
      %v766 = vpop.permute.xlu0 %765
      %767 = vrot.lane.b32.xlu0 %v713, 96
      %v768 = vpop.permute.xlu0 %767
      %769 = vrot.lane.b32.xlu0 %v714, 96
      %v770 = vpop.permute.xlu0 %769
      %771 = vrot.lane.b32.xlu0 %v715, 96
      %v772 = vpop.permute.xlu0 %771
      %773 = vrot.lane.b32.xlu0 %v716, 96
      %v774 = vpop.permute.xlu0 %773
      %775 = vrot.lane.b32.xlu0 %v717, 96
      %v776 = vpop.permute.xlu0 %775
      %777 = vrot.lane.b32.xlu0 %v718, 96
      %v778 = vpop.permute.xlu0 %777
      %779 = vrot.lane.b32.xlu0 %v719, 96
      %v780 = vpop.permute.xlu0 %779
      %781 = vrot.lane.b32.xlu0 %v720, 96
      %v782 = vpop.permute.xlu0 %781
      %783 = vrot.lane.b32.xlu0 %v721, 96
      %v784 = vpop.permute.xlu0 %783
      %785 = vrot.lane.b32.xlu0 %v722, 96
      %v786 = vpop.permute.xlu0 %785
      %787 = vrot.lane.b32.xlu0 %v723, 96
      %v788 = vpop.permute.xlu0 %787
      %789 = vrot.lane.b32.xlu0 %v724, 96
      %v790 = vpop.permute.xlu0 %789
      %791 = vrot.lane.b32.xlu0 %v725, 96
      %v792 = vpop.permute.xlu0 %791
      %793 = vrot.lane.b32.xlu0 %v726, 96
      %v794 = vpop.permute.xlu0 %793
      %795 = vrot.lane.b32.xlu0 %v727, 96
      %v796 = vpop.permute.xlu0 %795
      %797 = vrot.lane.b32.xlu0 %v728, 96
      %v798 = vpop.permute.xlu0 %797
      %799 = vrot.lane.b32.xlu0 %v729, 96
      %v800 = vpop.permute.xlu0 %799
      %801 = vrot.lane.b32.xlu0 %v730, 96
      %v802 = vpop.permute.xlu0 %801
      %vm827 = vcmask 1048320
      %828 = vst.msk [vmem:[#allocation3] sm:$0xff] %vm827, %v756
      %829 = vst.msk [vmem:[#allocation3 + $0x18] sm:$0xff] %vm827, %v758
      %830 = vst.msk [vmem:[#allocation3 + $0x30] sm:$0xff] %vm827, %v760
      %831 = vst.msk [vmem:[#allocation3 + $0x48] sm:$0xff] %vm827, %v762
      %832 = vst.msk [vmem:[#allocation3 + $0x60] sm:$0xff] %vm827, %v764
      %833 = vst.msk [vmem:[#allocation3 + $0x78] sm:$0xff] %vm827, %v766
      %834 = vst.msk [vmem:[#allocation3 + $0x90] sm:$0xff] %vm827, %v768
      %835 = vst.msk [vmem:[#allocation3 + $0xa8] sm:$0xff] %vm827, %v770
      %836 = vst.msk [vmem:[#allocation3 + $0xc0] sm:$0xff] %vm827, %v772
      %837 = vst.msk [vmem:[#allocation3 + $0xd8] sm:$0xff] %vm827, %v774
      %838 = vst.msk [vmem:[#allocation3 + $0xf0] sm:$0xff] %vm827, %v776
      %839 = vst.msk [vmem:[#allocation3 + $0x108] sm:$0xff] %vm827, %v778
      %840 = vst.msk [vmem:[#allocation3 + $0x120] sm:$0xff] %vm827, %v780
      %841 = vst.msk [vmem:[#allocation3 + $0x138] sm:$0xff] %vm827, %v782
      %842 = vst.msk [vmem:[#allocation3 + $0x150] sm:$0xff] %vm827, %v784
      %843 = vst.msk [vmem:[#allocation3 + $0x168] sm:$0xff] %vm827, %v786
      %844 = vst.msk [vmem:[#allocation3 + $0x180] sm:$0xff] %vm827, %v788
      %845 = vst.msk [vmem:[#allocation3 + $0x198] sm:$0xff] %vm827, %v790
      %846 = vst.msk [vmem:[#allocation3 + $0x1b0] sm:$0xff] %vm827, %v792
      %847 = vst.msk [vmem:[#allocation3 + $0x1c8] sm:$0xff] %vm827, %v794
      %848 = vst.msk [vmem:[#allocation3 + $0x1e0] sm:$0xff] %vm827, %v796
      %849 = vst.msk [vmem:[#allocation3 + $0x1f8] sm:$0xff] %vm827, %v798
      %850 = vst.msk [vmem:[#allocation3 + $0x210] sm:$0xff] %vm827, %v800
      %851 = vst.msk [vmem:[#allocation3 + $0x228] sm:$0xff] %vm827, %v802
      %v852 = vld [vmem:[%s269 + $0x1] sm:$0xff]
      %v853 = vld [vmem:[%s269 + $0x9] sm:$0xff]
      %v854 = vld [vmem:[%s269 + $0x19] sm:$0xff]
      %v855 = vld [vmem:[%s269 + $0x21] sm:$0xff]
      %v856 = vld [vmem:[%s269 + $0x31] sm:$0xff]
      %v857 = vld [vmem:[%s269 + $0x39] sm:$0xff]
      %v858 = vld [vmem:[%s269 + $0x49] sm:$0xff]
      %v859 = vld [vmem:[%s269 + $0x51] sm:$0xff]
      %v860 = vld [vmem:[%s269 + $0x61] sm:$0xff]
      %v861 = vld [vmem:[%s269 + $0x69] sm:$0xff]
      %v862 = vld [vmem:[%s269 + $0x79] sm:$0xff]
      %v863 = vld [vmem:[%s269 + $0x81] sm:$0xff]
      %v864 = vld [vmem:[%s269 + $0x91] sm:$0xff]
      %v865 = vld [vmem:[%s269 + $0x99] sm:$0xff]
      %v866 = vld [vmem:[%s269 + $0xa9] sm:$0xff]
      %v867 = vld [vmem:[%s269 + $0xb1] sm:$0xff]
      %v868 = vld [vmem:[%s269 + $0xc1] sm:$0xff]
      %v869 = vld [vmem:[%s269 + $0xc9] sm:$0xff]
      %v870 = vld [vmem:[%s269 + $0xd9] sm:$0xff]
      %v871 = vld [vmem:[%s269 + $0xe1] sm:$0xff]
      %v872 = vld [vmem:[%s269 + $0xf1] sm:$0xff]
      %v873 = vld [vmem:[%s269 + $0xf9] sm:$0xff]
      %v874 = vld [vmem:[%s269 + $0x109] sm:$0xff]
      %v875 = vld [vmem:[%s269 + $0x111] sm:$0xff]
      %876 = vst.msk [vmem:[#allocation3 + $0x8] sm:$0xff] %vm260, %v852
      %877 = vst.msk [vmem:[#allocation3 + $0x20] sm:$0xff] %vm260, %v853
      %878 = vst.msk [vmem:[#allocation3 + $0x38] sm:$0xff] %vm260, %v854
      %879 = vst.msk [vmem:[#allocation3 + $0x50] sm:$0xff] %vm260, %v855
      %880 = vst.msk [vmem:[#allocation3 + $0x68] sm:$0xff] %vm260, %v856
      %881 = vst.msk [vmem:[#allocation3 + $0x80] sm:$0xff] %vm260, %v857
      %882 = vst.msk [vmem:[#allocation3 + $0x98] sm:$0xff] %vm260, %v858
      %883 = vst.msk [vmem:[#allocation3 + $0xb0] sm:$0xff] %vm260, %v859
      %884 = vst.msk [vmem:[#allocation3 + $0xc8] sm:$0xff] %vm260, %v860
      %885 = vst.msk [vmem:[#allocation3 + $0xe0] sm:$0xff] %vm260, %v861
      %886 = vst.msk [vmem:[#allocation3 + $0xf8] sm:$0xff] %vm260, %v862
      %887 = vst.msk [vmem:[#allocation3 + $0x110] sm:$0xff] %vm260, %v863
      %888 = vst.msk [vmem:[#allocation3 + $0x128] sm:$0xff] %vm260, %v864
      %889 = vst.msk [vmem:[#allocation3 + $0x140] sm:$0xff] %vm260, %v865
      %890 = vst.msk [vmem:[#allocation3 + $0x158] sm:$0xff] %vm260, %v866
      %891 = vst.msk [vmem:[#allocation3 + $0x170] sm:$0xff] %vm260, %v867
      %892 = vst.msk [vmem:[#allocation3 + $0x188] sm:$0xff] %vm260, %v868
      %893 = vst.msk [vmem:[#allocation3 + $0x1a0] sm:$0xff] %vm260, %v869
      %894 = vst.msk [vmem:[#allocation3 + $0x1b8] sm:$0xff] %vm260, %v870
      %895 = vst.msk [vmem:[#allocation3 + $0x1d0] sm:$0xff] %vm260, %v871
      %896 = vst.msk [vmem:[#allocation3 + $0x1e8] sm:$0xff] %vm260, %v872
      %897 = vst.msk [vmem:[#allocation3 + $0x200] sm:$0xff] %vm260, %v873
      %898 = vst.msk [vmem:[#allocation3 + $0x218] sm:$0xff] %vm260, %v874
      %899 = vst.msk [vmem:[#allocation3 + $0x230] sm:$0xff] %vm260, %v875
      %v900 = vld [vmem:[%s269 + $0x2] sm:$0xff]
      %v901 = vld [vmem:[%s269 + $0xa] sm:$0xff]
      %v902 = vld [vmem:[%s269 + $0x1a] sm:$0xff]
      %v903 = vld [vmem:[%s269 + $0x22] sm:$0xff]
      %v904 = vld [vmem:[%s269 + $0x32] sm:$0xff]
      %v905 = vld [vmem:[%s269 + $0x3a] sm:$0xff]
      %v906 = vld [vmem:[%s269 + $0x4a] sm:$0xff]
      %v907 = vld [vmem:[%s269 + $0x52] sm:$0xff]
      %v908 = vld [vmem:[%s269 + $0x62] sm:$0xff]
      %v909 = vld [vmem:[%s269 + $0x6a] sm:$0xff]
      %v910 = vld [vmem:[%s269 + $0x7a] sm:$0xff]
      %v911 = vld [vmem:[%s269 + $0x82] sm:$0xff]
      %v912 = vld [vmem:[%s269 + $0x92] sm:$0xff]
      %v913 = vld [vmem:[%s269 + $0x9a] sm:$0xff]
      %v914 = vld [vmem:[%s269 + $0xaa] sm:$0xff]
      %v915 = vld [vmem:[%s269 + $0xb2] sm:$0xff]
      %v916 = vld [vmem:[%s269 + $0xc2] sm:$0xff]
      %v917 = vld [vmem:[%s269 + $0xca] sm:$0xff]
      %v918 = vld [vmem:[%s269 + $0xda] sm:$0xff]
      %v919 = vld [vmem:[%s269 + $0xe2] sm:$0xff]
      %v920 = vld [vmem:[%s269 + $0xf2] sm:$0xff]
      %v921 = vld [vmem:[%s269 + $0xfa] sm:$0xff]
      %v922 = vld [vmem:[%s269 + $0x10a] sm:$0xff]
      %v923 = vld [vmem:[%s269 + $0x112] sm:$0xff]
      %948 = vrot.lane.b32.xlu0 %v900, 32
      %v949 = vpop.permute.xlu0 %948
      %950 = vrot.lane.b32.xlu0 %v901, 32
      %v951 = vpop.permute.xlu0 %950
      %952 = vrot.lane.b32.xlu0 %v902, 32
      %v953 = vpop.permute.xlu0 %952
      %954 = vrot.lane.b32.xlu0 %v903, 32
      %v955 = vpop.permute.xlu0 %954
      %956 = vrot.lane.b32.xlu0 %v904, 32
      %v957 = vpop.permute.xlu0 %956
      %958 = vrot.lane.b32.xlu0 %v905, 32
      %v959 = vpop.permute.xlu0 %958
      %960 = vrot.lane.b32.xlu0 %v906, 32
      %v961 = vpop.permute.xlu0 %960
      %962 = vrot.lane.b32.xlu0 %v907, 32
      %v963 = vpop.permute.xlu0 %962
      %964 = vrot.lane.b32.xlu0 %v908, 32
      %v965 = vpop.permute.xlu0 %964
      %966 = vrot.lane.b32.xlu0 %v909, 32
      %v967 = vpop.permute.xlu0 %966
      %968 = vrot.lane.b32.xlu0 %v910, 32
      %v969 = vpop.permute.xlu0 %968
      %970 = vrot.lane.b32.xlu0 %v911, 32
      %v971 = vpop.permute.xlu0 %970
      %972 = vrot.lane.b32.xlu0 %v912, 32
      %v973 = vpop.permute.xlu0 %972
      %974 = vrot.lane.b32.xlu0 %v913, 32
      %v975 = vpop.permute.xlu0 %974
      %976 = vrot.lane.b32.xlu0 %v914, 32
      %v977 = vpop.permute.xlu0 %976
      %978 = vrot.lane.b32.xlu0 %v915, 32
      %v979 = vpop.permute.xlu0 %978
      %980 = vrot.lane.b32.xlu0 %v916, 32
      %v981 = vpop.permute.xlu0 %980
      %982 = vrot.lane.b32.xlu0 %v917, 32
      %v983 = vpop.permute.xlu0 %982
      %984 = vrot.lane.b32.xlu0 %v918, 32
      %v985 = vpop.permute.xlu0 %984
      %986 = vrot.lane.b32.xlu0 %v919, 32
      %v987 = vpop.permute.xlu0 %986
      %988 = vrot.lane.b32.xlu0 %v920, 32
      %v989 = vpop.permute.xlu0 %988
      %990 = vrot.lane.b32.xlu0 %v921, 32
      %v991 = vpop.permute.xlu0 %990
      %992 = vrot.lane.b32.xlu0 %v922, 32
      %v993 = vpop.permute.xlu0 %992
      %994 = vrot.lane.b32.xlu0 %v923, 32
      %v995 = vpop.permute.xlu0 %994
      %1020 = vst.msk [vmem:[#allocation3 + $0x8] sm:$0xff] %vm537, %v949
      %1021 = vst.msk [vmem:[#allocation3 + $0x20] sm:$0xff] %vm537, %v951
      %1022 = vst.msk [vmem:[#allocation3 + $0x38] sm:$0xff] %vm537, %v953
      %1023 = vst.msk [vmem:[#allocation3 + $0x50] sm:$0xff] %vm537, %v955
      %1024 = vst.msk [vmem:[#allocation3 + $0x68] sm:$0xff] %vm537, %v957
      %1025 = vst.msk [vmem:[#allocation3 + $0x80] sm:$0xff] %vm537, %v959
      %1026 = vst.msk [vmem:[#allocation3 + $0x98] sm:$0xff] %vm537, %v961
      %1027 = vst.msk [vmem:[#allocation3 + $0xb0] sm:$0xff] %vm537, %v963
      %1028 = vst.msk [vmem:[#allocation3 + $0xc8] sm:$0xff] %vm537, %v965
      %1029 = vst.msk [vmem:[#allocation3 + $0xe0] sm:$0xff] %vm537, %v967
      %1030 = vst.msk [vmem:[#allocation3 + $0xf8] sm:$0xff] %vm537, %v969
      %1031 = vst.msk [vmem:[#allocation3 + $0x110] sm:$0xff] %vm537, %v971
      %1032 = vst.msk [vmem:[#allocation3 + $0x128] sm:$0xff] %vm537, %v973
      %1033 = vst.msk [vmem:[#allocation3 + $0x140] sm:$0xff] %vm537, %v975
      %1034 = vst.msk [vmem:[#allocation3 + $0x158] sm:$0xff] %vm537, %v977
      %1035 = vst.msk [vmem:[#allocation3 + $0x170] sm:$0xff] %vm537, %v979
      %1036 = vst.msk [vmem:[#allocation3 + $0x188] sm:$0xff] %vm537, %v981
      %1037 = vst.msk [vmem:[#allocation3 + $0x1a0] sm:$0xff] %vm537, %v983
      %1038 = vst.msk [vmem:[#allocation3 + $0x1b8] sm:$0xff] %vm537, %v985
      %1039 = vst.msk [vmem:[#allocation3 + $0x1d0] sm:$0xff] %vm537, %v987
      %1040 = vst.msk [vmem:[#allocation3 + $0x1e8] sm:$0xff] %vm537, %v989
      %1041 = vst.msk [vmem:[#allocation3 + $0x200] sm:$0xff] %vm537, %v991
      %1042 = vst.msk [vmem:[#allocation3 + $0x218] sm:$0xff] %vm537, %v993
      %1043 = vst.msk [vmem:[#allocation3 + $0x230] sm:$0xff] %vm537, %v995
      %s1044 = scalar_lea.vmem [#allocation2], 48
      %v1045 = vld [vmem:[%s1044] sm:$0xff]
      %v1046 = vld [vmem:[%s1044 + $0x8] sm:$0xff]
      %v1047 = vld [vmem:[%s1044 + $0x18] sm:$0xff]
      %v1048 = vld [vmem:[%s1044 + $0x20] sm:$0xff]
      %v1049 = vld [vmem:[%s1044 + $0x30] sm:$0xff]
      %v1050 = vld [vmem:[%s1044 + $0x38] sm:$0xff]
      %v1051 = vld [vmem:[%s1044 + $0x48] sm:$0xff]
      %v1052 = vld [vmem:[%s1044 + $0x50] sm:$0xff]
      %v1053 = vld [vmem:[%s1044 + $0x60] sm:$0xff]
      %v1054 = vld [vmem:[%s1044 + $0x68] sm:$0xff]
      %v1055 = vld [vmem:[%s1044 + $0x78] sm:$0xff]
      %v1056 = vld [vmem:[%s1044 + $0x80] sm:$0xff]
      %v1057 = vld [vmem:[%s1044 + $0x90] sm:$0xff]
      %v1058 = vld [vmem:[%s1044 + $0x98] sm:$0xff]
      %v1059 = vld [vmem:[%s1044 + $0xa8] sm:$0xff]
      %v1060 = vld [vmem:[%s1044 + $0xb0] sm:$0xff]
      %v1061 = vld [vmem:[%s1044 + $0xc0] sm:$0xff]
      %v1062 = vld [vmem:[%s1044 + $0xc8] sm:$0xff]
      %v1063 = vld [vmem:[%s1044 + $0xd8] sm:$0xff]
      %v1064 = vld [vmem:[%s1044 + $0xe0] sm:$0xff]
      %v1065 = vld [vmem:[%s1044 + $0xf0] sm:$0xff]
      %v1066 = vld [vmem:[%s1044 + $0xf8] sm:$0xff]
      %v1067 = vld [vmem:[%s1044 + $0x108] sm:$0xff]
      %v1068 = vld [vmem:[%s1044 + $0x110] sm:$0xff]
      %1093 = vrot.lane.b32.xlu0 %v1045, 64
      %v1094 = vpop.permute.xlu0 %1093
      %1095 = vrot.lane.b32.xlu0 %v1046, 64
      %v1096 = vpop.permute.xlu0 %1095
      %1097 = vrot.lane.b32.xlu0 %v1047, 64
      %v1098 = vpop.permute.xlu0 %1097
      %1099 = vrot.lane.b32.xlu0 %v1048, 64
      %v1100 = vpop.permute.xlu0 %1099
      %1101 = vrot.lane.b32.xlu0 %v1049, 64
      %v1102 = vpop.permute.xlu0 %1101
      %1103 = vrot.lane.b32.xlu0 %v1050, 64
      %v1104 = vpop.permute.xlu0 %1103
      %1105 = vrot.lane.b32.xlu0 %v1051, 64
      %v1106 = vpop.permute.xlu0 %1105
      %1107 = vrot.lane.b32.xlu0 %v1052, 64
      %v1108 = vpop.permute.xlu0 %1107
      %1109 = vrot.lane.b32.xlu0 %v1053, 64
      %v1110 = vpop.permute.xlu0 %1109
      %1111 = vrot.lane.b32.xlu0 %v1054, 64
      %v1112 = vpop.permute.xlu0 %1111
      %1113 = vrot.lane.b32.xlu0 %v1055, 64
      %v1114 = vpop.permute.xlu0 %1113
      %1115 = vrot.lane.b32.xlu0 %v1056, 64
      %v1116 = vpop.permute.xlu0 %1115
      %1117 = vrot.lane.b32.xlu0 %v1057, 64
      %v1118 = vpop.permute.xlu0 %1117
      %1119 = vrot.lane.b32.xlu0 %v1058, 64
      %v1120 = vpop.permute.xlu0 %1119
      %1121 = vrot.lane.b32.xlu0 %v1059, 64
      %v1122 = vpop.permute.xlu0 %1121
      %1123 = vrot.lane.b32.xlu0 %v1060, 64
      %v1124 = vpop.permute.xlu0 %1123
      %1125 = vrot.lane.b32.xlu0 %v1061, 64
      %v1126 = vpop.permute.xlu0 %1125
      %1127 = vrot.lane.b32.xlu0 %v1062, 64
      %v1128 = vpop.permute.xlu0 %1127
      %1129 = vrot.lane.b32.xlu0 %v1063, 64
      %v1130 = vpop.permute.xlu0 %1129
      %1131 = vrot.lane.b32.xlu0 %v1064, 64
      %v1132 = vpop.permute.xlu0 %1131
      %1133 = vrot.lane.b32.xlu0 %v1065, 64
      %v1134 = vpop.permute.xlu0 %1133
      %1135 = vrot.lane.b32.xlu0 %v1066, 64
      %v1136 = vpop.permute.xlu0 %1135
      %1137 = vrot.lane.b32.xlu0 %v1067, 64
      %v1138 = vpop.permute.xlu0 %1137
      %1139 = vrot.lane.b32.xlu0 %v1068, 64
      %v1140 = vpop.permute.xlu0 %1139
      %1165 = vst.msk [vmem:[#allocation3 + $0x8] sm:$0xff] %vm682, %v1094
      %1166 = vst.msk [vmem:[#allocation3 + $0x20] sm:$0xff] %vm682, %v1096
      %1167 = vst.msk [vmem:[#allocation3 + $0x38] sm:$0xff] %vm682, %v1098
      %1168 = vst.msk [vmem:[#allocation3 + $0x50] sm:$0xff] %vm682, %v1100
      %1169 = vst.msk [vmem:[#allocation3 + $0x68] sm:$0xff] %vm682, %v1102
      %1170 = vst.msk [vmem:[#allocation3 + $0x80] sm:$0xff] %vm682, %v1104
      %1171 = vst.msk [vmem:[#allocation3 + $0x98] sm:$0xff] %vm682, %v1106
      %1172 = vst.msk [vmem:[#allocation3 + $0xb0] sm:$0xff] %vm682, %v1108
      %1173 = vst.msk [vmem:[#allocation3 + $0xc8] sm:$0xff] %vm682, %v1110
      %1174 = vst.msk [vmem:[#allocation3 + $0xe0] sm:$0xff] %vm682, %v1112
      %1175 = vst.msk [vmem:[#allocation3 + $0xf8] sm:$0xff] %vm682, %v1114
      %1176 = vst.msk [vmem:[#allocation3 + $0x110] sm:$0xff] %vm682, %v1116
      %1177 = vst.msk [vmem:[#allocation3 + $0x128] sm:$0xff] %vm682, %v1118
      %1178 = vst.msk [vmem:[#allocation3 + $0x140] sm:$0xff] %vm682, %v1120
      %1179 = vst.msk [vmem:[#allocation3 + $0x158] sm:$0xff] %vm682, %v1122
      %1180 = vst.msk [vmem:[#allocation3 + $0x170] sm:$0xff] %vm682, %v1124
      %1181 = vst.msk [vmem:[#allocation3 + $0x188] sm:$0xff] %vm682, %v1126
      %1182 = vst.msk [vmem:[#allocation3 + $0x1a0] sm:$0xff] %vm682, %v1128
      %1183 = vst.msk [vmem:[#allocation3 + $0x1b8] sm:$0xff] %vm682, %v1130
      %1184 = vst.msk [vmem:[#allocation3 + $0x1d0] sm:$0xff] %vm682, %v1132
      %1185 = vst.msk [vmem:[#allocation3 + $0x1e8] sm:$0xff] %vm682, %v1134
      %1186 = vst.msk [vmem:[#allocation3 + $0x200] sm:$0xff] %vm682, %v1136
      %1187 = vst.msk [vmem:[#allocation3 + $0x218] sm:$0xff] %vm682, %v1138
      %1188 = vst.msk [vmem:[#allocation3 + $0x230] sm:$0xff] %vm682, %v1140
      %v1189 = vld [vmem:[%s1044 + $0x1] sm:$0xff]
      %v1190 = vld [vmem:[%s1044 + $0x9] sm:$0xff]
      %v1191 = vld [vmem:[%s1044 + $0x19] sm:$0xff]
      %v1192 = vld [vmem:[%s1044 + $0x21] sm:$0xff]
      %v1193 = vld [vmem:[%s1044 + $0x31] sm:$0xff]
      %v1194 = vld [vmem:[%s1044 + $0x39] sm:$0xff]
      %v1195 = vld [vmem:[%s1044 + $0x49] sm:$0xff]
      %v1196 = vld [vmem:[%s1044 + $0x51] sm:$0xff]
      %v1197 = vld [vmem:[%s1044 + $0x61] sm:$0xff]
      %v1198 = vld [vmem:[%s1044 + $0x69] sm:$0xff]
      %v1199 = vld [vmem:[%s1044 + $0x79] sm:$0xff]
      %v1200 = vld [vmem:[%s1044 + $0x81] sm:$0xff]
      %v1201 = vld [vmem:[%s1044 + $0x91] sm:$0xff]
      %v1202 = vld [vmem:[%s1044 + $0x99] sm:$0xff]
      %v1203 = vld [vmem:[%s1044 + $0xa9] sm:$0xff]
      %v1204 = vld [vmem:[%s1044 + $0xb1] sm:$0xff]
      %v1205 = vld [vmem:[%s1044 + $0xc1] sm:$0xff]
      %v1206 = vld [vmem:[%s1044 + $0xc9] sm:$0xff]
      %v1207 = vld [vmem:[%s1044 + $0xd9] sm:$0xff]
      %v1208 = vld [vmem:[%s1044 + $0xe1] sm:$0xff]
      %v1209 = vld [vmem:[%s1044 + $0xf1] sm:$0xff]
      %v1210 = vld [vmem:[%s1044 + $0xf9] sm:$0xff]
      %v1211 = vld [vmem:[%s1044 + $0x109] sm:$0xff]
      %v1212 = vld [vmem:[%s1044 + $0x111] sm:$0xff]
      %1237 = vrot.lane.b32.xlu0 %v1189, 96
      %v1238 = vpop.permute.xlu0 %1237
      %1239 = vrot.lane.b32.xlu0 %v1190, 96
      %v1240 = vpop.permute.xlu0 %1239
      %1241 = vrot.lane.b32.xlu0 %v1191, 96
      %v1242 = vpop.permute.xlu0 %1241
      %1243 = vrot.lane.b32.xlu0 %v1192, 96
      %v1244 = vpop.permute.xlu0 %1243
      %1245 = vrot.lane.b32.xlu0 %v1193, 96
      %v1246 = vpop.permute.xlu0 %1245
      %1247 = vrot.lane.b32.xlu0 %v1194, 96
      %v1248 = vpop.permute.xlu0 %1247
      %1249 = vrot.lane.b32.xlu0 %v1195, 96
      %v1250 = vpop.permute.xlu0 %1249
      %1251 = vrot.lane.b32.xlu0 %v1196, 96
      %v1252 = vpop.permute.xlu0 %1251
      %1253 = vrot.lane.b32.xlu0 %v1197, 96
      %v1254 = vpop.permute.xlu0 %1253
      %1255 = vrot.lane.b32.xlu0 %v1198, 96
      %v1256 = vpop.permute.xlu0 %1255
      %1257 = vrot.lane.b32.xlu0 %v1199, 96
      %v1258 = vpop.permute.xlu0 %1257
      %1259 = vrot.lane.b32.xlu0 %v1200, 96
      %v1260 = vpop.permute.xlu0 %1259
      %1261 = vrot.lane.b32.xlu0 %v1201, 96
      %v1262 = vpop.permute.xlu0 %1261
      %1263 = vrot.lane.b32.xlu0 %v1202, 96
      %v1264 = vpop.permute.xlu0 %1263
      %1265 = vrot.lane.b32.xlu0 %v1203, 96
      %v1266 = vpop.permute.xlu0 %1265
      %1267 = vrot.lane.b32.xlu0 %v1204, 96
      %v1268 = vpop.permute.xlu0 %1267
      %1269 = vrot.lane.b32.xlu0 %v1205, 96
      %v1270 = vpop.permute.xlu0 %1269
      %1271 = vrot.lane.b32.xlu0 %v1206, 96
      %v1272 = vpop.permute.xlu0 %1271
      %1273 = vrot.lane.b32.xlu0 %v1207, 96
      %v1274 = vpop.permute.xlu0 %1273
      %1275 = vrot.lane.b32.xlu0 %v1208, 96
      %v1276 = vpop.permute.xlu0 %1275
      %1277 = vrot.lane.b32.xlu0 %v1209, 96
      %v1278 = vpop.permute.xlu0 %1277
      %1279 = vrot.lane.b32.xlu0 %v1210, 96
      %v1280 = vpop.permute.xlu0 %1279
      %1281 = vrot.lane.b32.xlu0 %v1211, 96
      %v1282 = vpop.permute.xlu0 %1281
      %1283 = vrot.lane.b32.xlu0 %v1212, 96
      %v1284 = vpop.permute.xlu0 %1283
      %1309 = vst.msk [vmem:[#allocation3 + $0x8] sm:$0xff] %vm827, %v1238
      %1310 = vst.msk [vmem:[#allocation3 + $0x20] sm:$0xff] %vm827, %v1240
      %1311 = vst.msk [vmem:[#allocation3 + $0x38] sm:$0xff] %vm827, %v1242
      %1312 = vst.msk [vmem:[#allocation3 + $0x50] sm:$0xff] %vm827, %v1244
      %1313 = vst.msk [vmem:[#allocation3 + $0x68] sm:$0xff] %vm827, %v1246
      %1314 = vst.msk [vmem:[#allocation3 + $0x80] sm:$0xff] %vm827, %v1248
      %1315 = vst.msk [vmem:[#allocation3 + $0x98] sm:$0xff] %vm827, %v1250
      %1316 = vst.msk [vmem:[#allocation3 + $0xb0] sm:$0xff] %vm827, %v1252
      %1317 = vst.msk [vmem:[#allocation3 + $0xc8] sm:$0xff] %vm827, %v1254
      %1318 = vst.msk [vmem:[#allocation3 + $0xe0] sm:$0xff] %vm827, %v1256
      %1319 = vst.msk [vmem:[#allocation3 + $0xf8] sm:$0xff] %vm827, %v1258
      %1320 = vst.msk [vmem:[#allocation3 + $0x110] sm:$0xff] %vm827, %v1260
      %1321 = vst.msk [vmem:[#allocation3 + $0x128] sm:$0xff] %vm827, %v1262
      %1322 = vst.msk [vmem:[#allocation3 + $0x140] sm:$0xff] %vm827, %v1264
      %1323 = vst.msk [vmem:[#allocation3 + $0x158] sm:$0xff] %vm827, %v1266
      %1324 = vst.msk [vmem:[#allocation3 + $0x170] sm:$0xff] %vm827, %v1268
      %1325 = vst.msk [vmem:[#allocation3 + $0x188] sm:$0xff] %vm827, %v1270
      %1326 = vst.msk [vmem:[#allocation3 + $0x1a0] sm:$0xff] %vm827, %v1272
      %1327 = vst.msk [vmem:[#allocation3 + $0x1b8] sm:$0xff] %vm827, %v1274
      %1328 = vst.msk [vmem:[#allocation3 + $0x1d0] sm:$0xff] %vm827, %v1276
      %1329 = vst.msk [vmem:[#allocation3 + $0x1e8] sm:$0xff] %vm827, %v1278
      %1330 = vst.msk [vmem:[#allocation3 + $0x200] sm:$0xff] %vm827, %v1280
      %1331 = vst.msk [vmem:[#allocation3 + $0x218] sm:$0xff] %vm827, %v1282
      %1332 = vst.msk [vmem:[#allocation3 + $0x230] sm:$0xff] %vm827, %v1284
      %v1333 = vld [vmem:[%s1044 + $0x2] sm:$0xff]
      %v1334 = vld [vmem:[%s1044 + $0xa] sm:$0xff]
      %v1335 = vld [vmem:[%s1044 + $0x1a] sm:$0xff]
      %v1336 = vld [vmem:[%s1044 + $0x22] sm:$0xff]
      %v1337 = vld [vmem:[%s1044 + $0x32] sm:$0xff]
      %v1338 = vld [vmem:[%s1044 + $0x3a] sm:$0xff]
      %v1339 = vld [vmem:[%s1044 + $0x4a] sm:$0xff]
      %v1340 = vld [vmem:[%s1044 + $0x52] sm:$0xff]
      %v1341 = vld [vmem:[%s1044 + $0x62] sm:$0xff]
      %v1342 = vld [vmem:[%s1044 + $0x6a] sm:$0xff]
      %v1343 = vld [vmem:[%s1044 + $0x7a] sm:$0xff]
      %v1344 = vld [vmem:[%s1044 + $0x82] sm:$0xff]
      %v1345 = vld [vmem:[%s1044 + $0x92] sm:$0xff]
      %v1346 = vld [vmem:[%s1044 + $0x9a] sm:$0xff]
      %v1347 = vld [vmem:[%s1044 + $0xaa] sm:$0xff]
      %v1348 = vld [vmem:[%s1044 + $0xb2] sm:$0xff]
      %v1349 = vld [vmem:[%s1044 + $0xc2] sm:$0xff]
      %v1350 = vld [vmem:[%s1044 + $0xca] sm:$0xff]
      %v1351 = vld [vmem:[%s1044 + $0xda] sm:$0xff]
      %v1352 = vld [vmem:[%s1044 + $0xe2] sm:$0xff]
      %v1353 = vld [vmem:[%s1044 + $0xf2] sm:$0xff]
      %v1354 = vld [vmem:[%s1044 + $0xfa] sm:$0xff]
      %v1355 = vld [vmem:[%s1044 + $0x10a] sm:$0xff]
      %v1356 = vld [vmem:[%s1044 + $0x112] sm:$0xff]
      %1357 = vst.msk [vmem:[#allocation3 + $0x10] sm:$0xff] %vm260, %v1333
      %1358 = vst.msk [vmem:[#allocation3 + $0x28] sm:$0xff] %vm260, %v1334
      %1359 = vst.msk [vmem:[#allocation3 + $0x40] sm:$0xff] %vm260, %v1335
      %1360 = vst.msk [vmem:[#allocation3 + $0x58] sm:$0xff] %vm260, %v1336
      %1361 = vst.msk [vmem:[#allocation3 + $0x70] sm:$0xff] %vm260, %v1337
      %1362 = vst.msk [vmem:[#allocation3 + $0x88] sm:$0xff] %vm260, %v1338
      %1363 = vst.msk [vmem:[#allocation3 + $0xa0] sm:$0xff] %vm260, %v1339
      %1364 = vst.msk [vmem:[#allocation3 + $0xb8] sm:$0xff] %vm260, %v1340
      %1365 = vst.msk [vmem:[#allocation3 + $0xd0] sm:$0xff] %vm260, %v1341
      %1366 = vst.msk [vmem:[#allocation3 + $0xe8] sm:$0xff] %vm260, %v1342
      %1367 = vst.msk [vmem:[#allocation3 + $0x100] sm:$0xff] %vm260, %v1343
      %1368 = vst.msk [vmem:[#allocation3 + $0x118] sm:$0xff] %vm260, %v1344
      %1369 = vst.msk [vmem:[#allocation3 + $0x130] sm:$0xff] %vm260, %v1345
      %1370 = vst.msk [vmem:[#allocation3 + $0x148] sm:$0xff] %vm260, %v1346
      %1371 = vst.msk [vmem:[#allocation3 + $0x160] sm:$0xff] %vm260, %v1347
      %1372 = vst.msk [vmem:[#allocation3 + $0x178] sm:$0xff] %vm260, %v1348
      %1373 = vst.msk [vmem:[#allocation3 + $0x190] sm:$0xff] %vm260, %v1349
      %1374 = vst.msk [vmem:[#allocation3 + $0x1a8] sm:$0xff] %vm260, %v1350
      %1375 = vst.msk [vmem:[#allocation3 + $0x1c0] sm:$0xff] %vm260, %v1351
      %1376 = vst.msk [vmem:[#allocation3 + $0x1d8] sm:$0xff] %vm260, %v1352
      %1377 = vst.msk [vmem:[#allocation3 + $0x1f0] sm:$0xff] %vm260, %v1353
      %1378 = vst.msk [vmem:[#allocation3 + $0x208] sm:$0xff] %vm260, %v1354
      %1379 = vst.msk [vmem:[#allocation3 + $0x220] sm:$0xff] %vm260, %v1355
      %1380 = vst.msk [vmem:[#allocation3 + $0x238] sm:$0xff] %vm260, %v1356
      %v1381 = vld [vmem:[#allocation3] sm:$0xff]
      %v1382 = vld [vmem:[#allocation3 + $0x8] sm:$0xff]
      %v1383 = vld [vmem:[#allocation3 + $0x10] sm:$0xff]
      %v1384 = vld [vmem:[#allocation3 + $0x18] sm:$0xff]
      %v1385 = vld [vmem:[#allocation3 + $0x20] sm:$0xff]
      %v1386 = vld [vmem:[#allocation3 + $0x28] sm:$0xff]
      %v1387 = vld [vmem:[#allocation3 + $0x30] sm:$0xff]
      %v1388 = vld [vmem:[#allocation3 + $0x38] sm:$0xff]
      %v1389 = vld [vmem:[#allocation3 + $0x40] sm:$0xff]
      %v1390 = vld [vmem:[#allocation3 + $0x48] sm:$0xff]
      %v1391 = vld [vmem:[#allocation3 + $0x50] sm:$0xff]
      %v1392 = vld [vmem:[#allocation3 + $0x58] sm:$0xff]
      %v1393 = vld [vmem:[#allocation3 + $0x60] sm:$0xff]
      %v1394 = vld [vmem:[#allocation3 + $0x68] sm:$0xff]
      %v1395 = vld [vmem:[#allocation3 + $0x70] sm:$0xff]
      %v1396 = vld [vmem:[#allocation3 + $0x78] sm:$0xff]
      %v1397 = vld [vmem:[#allocation3 + $0x80] sm:$0xff]
      %v1398 = vld [vmem:[#allocation3 + $0x88] sm:$0xff]
      %v1399 = vld [vmem:[#allocation3 + $0x90] sm:$0xff]
      %v1400 = vld [vmem:[#allocation3 + $0x98] sm:$0xff]
      %v1401 = vld [vmem:[#allocation3 + $0xa0] sm:$0xff]
      %v1402 = vld [vmem:[#allocation3 + $0xa8] sm:$0xff]
      %v1403 = vld [vmem:[#allocation3 + $0xb0] sm:$0xff]
      %v1404 = vld [vmem:[#allocation3 + $0xb8] sm:$0xff]
      %v1405 = vld [vmem:[#allocation3 + $0xc0] sm:$0xff]
      %v1406 = vld [vmem:[#allocation3 + $0xc8] sm:$0xff]
      %v1407 = vld [vmem:[#allocation3 + $0xd0] sm:$0xff]
      %v1408 = vld [vmem:[#allocation3 + $0xd8] sm:$0xff]
      %v1409 = vld [vmem:[#allocation3 + $0xe0] sm:$0xff]
      %v1410 = vld [vmem:[#allocation3 + $0xe8] sm:$0xff]
      %v1411 = vld [vmem:[#allocation3 + $0xf0] sm:$0xff]
      %v1412 = vld [vmem:[#allocation3 + $0xf8] sm:$0xff]
      %v1413 = vld [vmem:[#allocation3 + $0x100] sm:$0xff]
      %v1414 = vld [vmem:[#allocation3 + $0x108] sm:$0xff]
      %v1415 = vld [vmem:[#allocation3 + $0x110] sm:$0xff]
      %v1416 = vld [vmem:[#allocation3 + $0x118] sm:$0xff]
      %v1417 = vld [vmem:[#allocation3 + $0x120] sm:$0xff]
      %v1418 = vld [vmem:[#allocation3 + $0x128] sm:$0xff]
      %v1419 = vld [vmem:[#allocation3 + $0x130] sm:$0xff]
      %v1420 = vld [vmem:[#allocation3 + $0x138] sm:$0xff]
      %v1421 = vld [vmem:[#allocation3 + $0x140] sm:$0xff]
      %v1422 = vld [vmem:[#allocation3 + $0x148] sm:$0xff]
      %v1423 = vld [vmem:[#allocation3 + $0x150] sm:$0xff]
      %v1424 = vld [vmem:[#allocation3 + $0x158] sm:$0xff]
      %v1425 = vld [vmem:[#allocation3 + $0x160] sm:$0xff]
      %v1426 = vld [vmem:[#allocation3 + $0x168] sm:$0xff]
      %v1427 = vld [vmem:[#allocation3 + $0x170] sm:$0xff]
      %v1428 = vld [vmem:[#allocation3 + $0x178] sm:$0xff]
      %v1429 = vld [vmem:[#allocation3 + $0x180] sm:$0xff]
      %v1430 = vld [vmem:[#allocation3 + $0x188] sm:$0xff]
      %v1431 = vld [vmem:[#allocation3 + $0x190] sm:$0xff]
      %v1432 = vld [vmem:[#allocation3 + $0x198] sm:$0xff]
      %v1433 = vld [vmem:[#allocation3 + $0x1a0] sm:$0xff]
      %v1434 = vld [vmem:[#allocation3 + $0x1a8] sm:$0xff]
      %v1435 = vld [vmem:[#allocation3 + $0x1b0] sm:$0xff]
      %v1436 = vld [vmem:[#allocation3 + $0x1b8] sm:$0xff]
      %v1437 = vld [vmem:[#allocation3 + $0x1c0] sm:$0xff]
      %v1438 = vld [vmem:[#allocation3 + $0x1c8] sm:$0xff]
      %v1439 = vld [vmem:[#allocation3 + $0x1d0] sm:$0xff]
      %v1440 = vld [vmem:[#allocation3 + $0x1d8] sm:$0xff]
      %v1441 = vld [vmem:[#allocation3 + $0x1e0] sm:$0xff]
      %v1442 = vld [vmem:[#allocation3 + $0x1e8] sm:$0xff]
      %v1443 = vld [vmem:[#allocation3 + $0x1f0] sm:$0xff]
      %v1444 = vld [vmem:[#allocation3 + $0x1f8] sm:$0xff]
      %v1445 = vld [vmem:[#allocation3 + $0x200] sm:$0xff]
      %v1446 = vld [vmem:[#allocation3 + $0x208] sm:$0xff]
      %v1447 = vld [vmem:[#allocation3 + $0x210] sm:$0xff]
      %v1448 = vld [vmem:[#allocation3 + $0x218] sm:$0xff]
      %v1449 = vld [vmem:[#allocation3 + $0x220] sm:$0xff]
      %v1450 = vld [vmem:[#allocation3 + $0x228] sm:$0xff]
      %v1451 = vld [vmem:[#allocation3 + $0x230] sm:$0xff]
      %v1452 = vld [vmem:[#allocation3 + $0x238] sm:$0xff]
      %v1453 = vpack.c.bf16 %v1384, %v1381
      %v1454 = vpack.c.bf16 %v1385, %v1382
      %v1455 = vpack.c.bf16 %v1386, %v1383
      %v1456 = vpack.c.bf16 %v1390, %v1387
      %v1457 = vpack.c.bf16 %v1391, %v1388
      %v1458 = vpack.c.bf16 %v1392, %v1389
      %v1459 = vpack.c.bf16 %v1396, %v1393
      %v1460 = vpack.c.bf16 %v1397, %v1394
      %v1461 = vpack.c.bf16 %v1398, %v1395
      %v1462 = vpack.c.bf16 %v1402, %v1399
      %v1463 = vpack.c.bf16 %v1403, %v1400
      %v1464 = vpack.c.bf16 %v1404, %v1401
      %v1465 = vpack.c.bf16 %v1408, %v1405
      %v1466 = vpack.c.bf16 %v1409, %v1406
      %v1467 = vpack.c.bf16 %v1410, %v1407
      %v1468 = vpack.c.bf16 %v1414, %v1411
      %v1469 = vpack.c.bf16 %v1415, %v1412
      %v1470 = vpack.c.bf16 %v1416, %v1413
      %v1471 = vpack.c.bf16 %v1420, %v1417
      %v1472 = vpack.c.bf16 %v1421, %v1418
      %v1473 = vpack.c.bf16 %v1422, %v1419
      %v1474 = vpack.c.bf16 %v1426, %v1423
      %v1475 = vpack.c.bf16 %v1427, %v1424
      %v1476 = vpack.c.bf16 %v1428, %v1425
      %v1477 = vpack.c.bf16 %v1432, %v1429
      %v1478 = vpack.c.bf16 %v1433, %v1430
      %v1479 = vpack.c.bf16 %v1434, %v1431
      %v1480 = vpack.c.bf16 %v1438, %v1435
      %v1481 = vpack.c.bf16 %v1439, %v1436
      %v1482 = vpack.c.bf16 %v1440, %v1437
      %v1483 = vpack.c.bf16 %v1444, %v1441
      %v1484 = vpack.c.bf16 %v1445, %v1442
      %v1485 = vpack.c.bf16 %v1446, %v1443
      %v1486 = vpack.c.bf16 %v1450, %v1447
      %v1487 = vpack.c.bf16 %v1451, %v1448
      %v1488 = vpack.c.bf16 %v1452, %v1449
      %v1489 = vld [vmem:[%s1] sm:$0xf]
      %v1490 = vld [vmem:[%s1 + $0x4] sm:$0xf]
      %v1491 = vld [vmem:[%s1 + $0x8] sm:$0xf]
      %v1492 = vld [vmem:[%s1 + $0xc] sm:$0xf]
      %v1493 = vld [vmem:[%s1 + $0x10] sm:$0xf]
      %v1494 = vld [vmem:[%s1 + $0x14] sm:$0xf]
      %v1495 = vld [vmem:[%s1 + $0x18] sm:$0xf]
      %v1496 = vld [vmem:[%s1 + $0x1c] sm:$0xf]
      %v1497 = vld [vmem:[%s1 + $0x20] sm:$0xf]
      %v1498 = vld [vmem:[%s1 + $0x24] sm:$0xf]
      %v1499 = vld [vmem:[%s1 + $0x28] sm:$0xf]
      %v1500 = vld [vmem:[%s1 + $0x2c] sm:$0xf]
      %v1501 = vld [vmem:[%s1 + $0x30] sm:$0xf]
      %v1502 = vld [vmem:[%s1 + $0x34] sm:$0xf]
      %v1503 = vld [vmem:[%s1 + $0x38] sm:$0xf]
      %v1504 = vld [vmem:[%s1 + $0x3c] sm:$0xf]
      %v1505 = vld [vmem:[%s1 + $0x40] sm:$0xf]
      %v1506 = vld [vmem:[%s1 + $0x44] sm:$0xf]
      %v1507 = vld [vmem:[%s1 + $0x48] sm:$0xf]
      %v1508 = vld [vmem:[%s1 + $0x4c] sm:$0xf]
      %v1509 = vld [vmem:[%s1 + $0x50] sm:$0xf]
      %v1510 = vld [vmem:[%s1 + $0x54] sm:$0xf]
      %v1511 = vld [vmem:[%s1 + $0x58] sm:$0xf]
      %v1512 = vld [vmem:[%s1 + $0x5c] sm:$0xf]
      %v1513 = vld [vmem:[%s1 + $0x60] sm:$0xf]
      %v1514 = vld [vmem:[%s1 + $0x64] sm:$0xf]
      %v1515 = vld [vmem:[%s1 + $0x68] sm:$0xf]
      %v1516 = vld [vmem:[%s1 + $0x6c] sm:$0xf]
      %v1517 = vld [vmem:[%s1 + $0x70] sm:$0xf]
      %v1518 = vld [vmem:[%s1 + $0x74] sm:$0xf]
      %v1519 = vld [vmem:[%s1 + $0x78] sm:$0xf]
      %v1520 = vld [vmem:[%s1 + $0x7c] sm:$0xf]
      %v1521 = vld [vmem:[%s1 + $0x80] sm:$0xf]
      %v1522 = vld [vmem:[%s1 + $0x84] sm:$0xf]
      %v1523 = vld [vmem:[%s1 + $0x88] sm:$0xf]
      %v1524 = vld [vmem:[%s1 + $0x8c] sm:$0xf]
      %v1525 = vld [vmem:[%s2] sm:$0x1]
      %v1527 = vlaneseq
      %v1528 = vshrl.u32 %v1527, 7
      %v1529 = vsub.s32 0, %v1528
      %v1530 = vrot.slane %v1525, %v1529
      %v1568 = vunpack.c.l.b16 %v1489
      %v1569 = vunpack.c.l.b16 %v1490
      %v1570 = vunpack.c.l.b16 %v1491
      %v1571 = vunpack.c.l.b16 %v1492
      %v1572 = vunpack.c.l.b16 %v1493
      %v1573 = vunpack.c.l.b16 %v1494
      %v1574 = vunpack.c.l.b16 %v1495
      %v1575 = vunpack.c.l.b16 %v1496
      %v1576 = vunpack.c.l.b16 %v1497
      %v1577 = vunpack.c.l.b16 %v1498
      %v1578 = vunpack.c.l.b16 %v1499
      %v1579 = vunpack.c.l.b16 %v1500
      %v1580 = vunpack.c.l.b16 %v1501
      %v1581 = vunpack.c.l.b16 %v1502
      %v1582 = vunpack.c.l.b16 %v1503
      %v1583 = vunpack.c.l.b16 %v1504
      %v1584 = vunpack.c.l.b16 %v1505
      %v1585 = vunpack.c.l.b16 %v1506
      %v1586 = vunpack.c.l.b16 %v1507
      %v1587 = vunpack.c.l.b16 %v1508
      %v1588 = vunpack.c.l.b16 %v1509
      %v1589 = vunpack.c.l.b16 %v1510
      %v1590 = vunpack.c.l.b16 %v1511
      %v1591 = vunpack.c.l.b16 %v1512
      %v1592 = vunpack.c.l.b16 %v1513
      %v1593 = vunpack.c.l.b16 %v1514
      %v1594 = vunpack.c.l.b16 %v1515
      %v1595 = vunpack.c.l.b16 %v1516
      %v1596 = vunpack.c.l.b16 %v1517
      %v1597 = vunpack.c.l.b16 %v1518
      %v1598 = vunpack.c.l.b16 %v1519
      %v1599 = vunpack.c.l.b16 %v1520
      %v1600 = vunpack.c.l.b16 %v1521
      %v1601 = vunpack.c.l.b16 %v1522
      %v1602 = vunpack.c.l.b16 %v1523
      %v1603 = vunpack.c.l.b16 %v1524
      %v1604 = vpack.c.b16 %v1569, %v1568
      %v1605 = vpack.c.b16 %v1571, %v1570
      %v1606 = vpack.c.b16 %v1573, %v1572
      %v1607 = vpack.c.b16 %v1575, %v1574
      %v1608 = vpack.c.b16 %v1577, %v1576
      %v1609 = vpack.c.b16 %v1579, %v1578
      %v1610 = vpack.c.b16 %v1581, %v1580
      %v1611 = vpack.c.b16 %v1583, %v1582
      %v1612 = vpack.c.b16 %v1585, %v1584
      %v1613 = vpack.c.b16 %v1587, %v1586
      %v1614 = vpack.c.b16 %v1589, %v1588
      %v1615 = vpack.c.b16 %v1591, %v1590
      %v1616 = vpack.c.b16 %v1593, %v1592
      %v1617 = vpack.c.b16 %v1595, %v1594
      %v1618 = vpack.c.b16 %v1597, %v1596
      %v1619 = vpack.c.b16 %v1599, %v1598
      %v1620 = vpack.c.b16 %v1601, %v1600
      %v1621 = vpack.c.b16 %v1603, %v1602
      %v1641 = vsel %vm260, %v1455, 0
      %v1644 = vsel %vm260, %v1458, 0
      %v1647 = vsel %vm260, %v1461, 0
      %v1650 = vsel %vm260, %v1464, 0
      %v1653 = vsel %vm260, %v1467, 0
      %v1656 = vsel %vm260, %v1470, 0
      %v1659 = vsel %vm260, %v1473, 0
      %v1662 = vsel %vm260, %v1476, 0
      %v1665 = vsel %vm260, %v1479, 0
      %v1668 = vsel %vm260, %v1482, 0
      %v1671 = vsel %vm260, %v1485, 0
      %v1674 = vsel %vm260, %v1488, 0
      %1676 = vmatprep.subr.bf16.mxu0 0
      %1677 = vmatpush1.bf16.msra.mxu0 %v1604
      %1678 = vmatprep.subr.bf16.mxu0 0
      %1679 = vmatpush1.bf16.msra.mxu0 %v1605
      %1680 = vmatprep.subr.bf16.mxu0 0
      %1681 = vmatpush1.bf16.msra.mxu0 %v1606
      %1682 = vmatprep.subr.bf16.mxu0 0
      %1683 = vmatpush1.bf16.msra.mxu0 %v1607
      %1684 = vmatprep.subr.bf16.mxu0 0
      %1685 = vmatpush1.bf16.msra.mxu0 %v1608
      %1686 = vmatprep.subr.bf16.mxu0 0
      %1687 = vmatpush1.bf16.msra.mxu0 %v1609
      %1688 = vmatprep.subr.bf16.mxu0 0
      %1689 = vmatpush1.bf16.msra.mxu0 %v1610
      %1690 = vmatprep.subr.bf16.mxu0 0
      %1691 = vmatpush1.bf16.msra.mxu0 %v1611
      %1692 = vmatprep.subr.bf16.mxu0 0
      %1693 = vmatpush1.bf16.msra.mxu0 %v1612
      %1694 = vmatprep.subr.bf16.mxu0 0
      %1695 = vmatpush1.bf16.msra.mxu0 %v1613
      %1696 = vmatprep.subr.bf16.mxu0 0
      %1697 = vmatpush1.bf16.msra.mxu0 %v1614
      %1698 = vmatprep.subr.bf16.mxu0 0
      %1699 = vmatpush1.bf16.msra.mxu0 %v1615
      %1700 = vmatprep.subr.bf16.mxu0 0
      %1701 = vmatpush1.bf16.msra.mxu0 %v1616
      %1702 = vmatprep.subr.bf16.mxu0 0
      %1703 = vmatpush1.bf16.msra.mxu0 %v1617
      %1704 = vmatprep.subr.bf16.mxu0 0
      %1705 = vmatpush1.bf16.msra.mxu0 %v1618
      %1706 = vmatprep.subr.bf16.mxu0 0
      %1707 = vmatpush1.bf16.msra.mxu0 %v1619
      %1708 = vmatprep.mubr.bf16.mxu0 %v1454
      %1709 = vmatmul.mubr.bf16.gmra.mrb[0].mxu0 %v1453
      %v1710 = vpop.f32.mrb[0].mxu0
      %v1711 = vadd.f32 %v1530, %v1710
      %v1712 = vpop.f32.mrb[0].mxu0
      %v1713 = vpop.f32.mrb[0].mxu0
      %v1714 = vadd.f32 %v1530, %v1713
      %v1715 = vpop.f32.mrb[0].mxu0
      %1716 = vmatprep.mubr.bf16.mxu0 %v1457
      %1717 = vmatmul.mubr.bf16.gmra.mrb[0].mxu0 %v1456
      %v1718 = vpop.f32.mrb[0].mxu0
      %v1719 = vadd.f32 %v1530, %v1718
      %v1720 = vpop.f32.mrb[0].mxu0
      %v1721 = vpop.f32.mrb[0].mxu0
      %v1722 = vadd.f32 %v1530, %v1721
      %v1723 = vpop.f32.mrb[0].mxu0
      %1724 = vmatprep.mubr.bf16.mxu0 %v1460
      %1725 = vmatmul.mubr.bf16.gmra.mrb[0].mxu0 %v1459
      %v1726 = vpop.f32.mrb[0].mxu0
      %v1727 = vadd.f32 %v1530, %v1726
      %v1728 = vpop.f32.mrb[0].mxu0
      %v1729 = vpop.f32.mrb[0].mxu0
      %v1730 = vadd.f32 %v1530, %v1729
      %v1731 = vpop.f32.mrb[0].mxu0
      %1732 = vmatprep.mubr.bf16.mxu0 %v1463
      %1733 = vmatmul.mubr.bf16.gmra.mrb[0].mxu0 %v1462
      %v1734 = vpop.f32.mrb[0].mxu0
      %v1735 = vadd.f32 %v1530, %v1734
      %v1736 = vpop.f32.mrb[0].mxu0
      %v1737 = vpop.f32.mrb[0].mxu0
      %v1738 = vadd.f32 %v1530, %v1737
      %v1739 = vpop.f32.mrb[0].mxu0
      %1740 = vmatprep.mubr.bf16.mxu0 %v1466
      %1741 = vmatmul.mubr.bf16.gmra.mrb[0].mxu0 %v1465
      %v1742 = vpop.f32.mrb[0].mxu0
      %v1743 = vadd.f32 %v1530, %v1742
      %v1744 = vpop.f32.mrb[0].mxu0
      %v1745 = vpop.f32.mrb[0].mxu0
      %v1746 = vadd.f32 %v1530, %v1745
      %v1747 = vpop.f32.mrb[0].mxu0
      %1748 = vmatprep.mubr.bf16.mxu0 %v1469
      %1749 = vmatmul.mubr.bf16.gmra.mrb[0].mxu0 %v1468
      %v1750 = vpop.f32.mrb[0].mxu0
      %v1751 = vadd.f32 %v1530, %v1750
      %v1752 = vpop.f32.mrb[0].mxu0
      %v1753 = vpop.f32.mrb[0].mxu0
      %v1754 = vadd.f32 %v1530, %v1753
      %v1755 = vpop.f32.mrb[0].mxu0
      %1756 = vmatprep.mubr.bf16.mxu0 %v1472
      %1757 = vmatmul.mubr.bf16.gmra.mrb[0].mxu0 %v1471
      %v1758 = vpop.f32.mrb[0].mxu0
      %v1759 = vadd.f32 %v1530, %v1758
      %v1760 = vpop.f32.mrb[0].mxu0
      %v1761 = vpop.f32.mrb[0].mxu0
      %v1762 = vadd.f32 %v1530, %v1761
      %v1763 = vpop.f32.mrb[0].mxu0
      %1764 = vmatprep.mubr.bf16.mxu0 %v1475
      %1765 = vmatmul.mubr.bf16.gmra.mrb[0].mxu0 %v1474
      %v1766 = vpop.f32.mrb[0].mxu0
      %v1767 = vadd.f32 %v1530, %v1766
      %v1768 = vpop.f32.mrb[0].mxu0
      %v1769 = vpop.f32.mrb[0].mxu0
      %v1770 = vadd.f32 %v1530, %v1769
      %v1771 = vpop.f32.mrb[0].mxu0
      %1772 = vmatprep.mubr.bf16.mxu0 %v1478
      %1773 = vmatmul.mubr.bf16.gmra.mrb[0].mxu0 %v1477
      %v1774 = vpop.f32.mrb[0].mxu0
      %v1775 = vadd.f32 %v1530, %v1774
      %v1776 = vpop.f32.mrb[0].mxu0
      %v1777 = vpop.f32.mrb[0].mxu0
      %v1778 = vadd.f32 %v1530, %v1777
      %v1779 = vpop.f32.mrb[0].mxu0
      %1780 = vmatprep.mubr.bf16.mxu0 %v1481
      %1781 = vmatmul.mubr.bf16.gmra.mrb[0].mxu0 %v1480
      %v1782 = vpop.f32.mrb[0].mxu0
      %v1783 = vadd.f32 %v1530, %v1782
      %v1784 = vpop.f32.mrb[0].mxu0
      %v1785 = vpop.f32.mrb[0].mxu0
      %v1786 = vadd.f32 %v1530, %v1785
      %v1787 = vpop.f32.mrb[0].mxu0
      %1788 = vmatprep.mubr.bf16.mxu0 %v1484
      %1789 = vmatmul.mubr.bf16.gmra.mrb[0].mxu0 %v1483
      %v1790 = vpop.f32.mrb[0].mxu0
      %v1791 = vadd.f32 %v1530, %v1790
      %v1792 = vpop.f32.mrb[0].mxu0
      %v1793 = vpop.f32.mrb[0].mxu0
      %v1794 = vadd.f32 %v1530, %v1793
      %v1795 = vpop.f32.mrb[0].mxu0
      %1796 = vmatprep.mubr.bf16.mxu0 %v1487
      %1797 = vmatmul.mubr.bf16.gmra.mrb[0].mxu0 %v1486
      %v1798 = vpop.f32.mrb[0].mxu0
      %v1799 = vadd.f32 %v1530, %v1798
      %v1800 = vpop.f32.mrb[0].mxu0
      %v1801 = vpop.f32.mrb[0].mxu0
      %v1802 = vadd.f32 %v1530, %v1801
      %v1803 = vpop.f32.mrb[0].mxu0
      %1804 = vdwg.mxu0
      %1805 = vmatprep.subr.bf16.mxu0 0
      %1806 = vmatpush1.bf16.msra.mxu0 %v1620
      %1807 = vmatprep.subr.bf16.mxu0 0
      %1808 = vmatpush1.bf16.msra.mxu0 %v1621
      %1809 = vmatprep.subr.bf16.mxu0 0
      %1810 = vmatpush1.bf16.msra.mxu0 0
      %1811 = vmatprep.subr.bf16.mxu0 0
      %1812 = vmatpush1.bf16.msra.mxu0 0
      %1813 = vmatprep.subr.bf16.mxu0 0
      %1814 = vmatpush1.bf16.msra.mxu0 0
      %1815 = vmatprep.subr.bf16.mxu0 0
      %1816 = vmatpush1.bf16.msra.mxu0 0
      %1817 = vmatprep.subr.bf16.mxu0 0
      %1818 = vmatpush1.bf16.msra.mxu0 0
      %1819 = vmatprep.subr.bf16.mxu0 0
      %1820 = vmatpush1.bf16.msra.mxu0 0
      %1821 = vmatprep.subr.bf16.mxu0 0
      %1822 = vmatpush1.bf16.msra.mxu0 0
      %1823 = vmatprep.subr.bf16.mxu0 0
      %1824 = vmatpush1.bf16.msra.mxu0 0
      %1825 = vmatprep.subr.bf16.mxu0 0
      %1826 = vmatpush1.bf16.msra.mxu0 0
      %1827 = vmatprep.subr.bf16.mxu0 0
      %1828 = vmatpush1.bf16.msra.mxu0 0
      %1829 = vmatprep.subr.bf16.mxu0 0
      %1830 = vmatpush1.bf16.msra.mxu0 0
      %1831 = vmatprep.subr.bf16.mxu0 0
      %1832 = vmatpush1.bf16.msra.mxu0 0
      %1833 = vmatprep.subr.bf16.mxu0 0
      %1834 = vmatpush1.bf16.msra.mxu0 0
      %1835 = vmatprep.subr.bf16.mxu0 0
      %1836 = vmatpush1.bf16.msra.mxu0 0
      %1837 = vmatprep.mubr.bf16.mxu0 0
      %1838 = vmatmul.mubr.bf16.gmra.mrb[0].mxu0 %v1641
      %v1839 = vpop.f32.mrb[0].mxu0
      %v1840 = vadd.f32 %v1711, %v1839
      %v1841 = vpop.f32.mrb[0].mxu0
      %v1842 = vpop.f32.mrb[0].mxu0
      %v1843 = vadd.f32 %v1714, %v1842
      %v1844 = vpop.f32.mrb[0].mxu0
      %1845 = vmatprep.mubr.bf16.mxu0 0
      %1846 = vmatmul.mubr.bf16.gmra.mrb[0].mxu0 %v1644
      %v1847 = vpop.f32.mrb[0].mxu0
      %v1848 = vadd.f32 %v1719, %v1847
      %v1849 = vpop.f32.mrb[0].mxu0
      %v1850 = vpop.f32.mrb[0].mxu0
      %v1851 = vadd.f32 %v1722, %v1850
      %v1852 = vpop.f32.mrb[0].mxu0
      %1853 = vmatprep.mubr.bf16.mxu0 0
      %1854 = vmatmul.mubr.bf16.gmra.mrb[0].mxu0 %v1647
      %v1855 = vpop.f32.mrb[0].mxu0
      %v1856 = vadd.f32 %v1727, %v1855
      %v1857 = vpop.f32.mrb[0].mxu0
      %v1858 = vpop.f32.mrb[0].mxu0
      %v1859 = vadd.f32 %v1730, %v1858
      %v1860 = vpop.f32.mrb[0].mxu0
      %1861 = vmatprep.mubr.bf16.mxu0 0
      %1862 = vmatmul.mubr.bf16.gmra.mrb[0].mxu0 %v1650
      %v1863 = vpop.f32.mrb[0].mxu0
      %v1864 = vadd.f32 %v1735, %v1863
      %v1865 = vpop.f32.mrb[0].mxu0
      %v1866 = vpop.f32.mrb[0].mxu0
      %v1867 = vadd.f32 %v1738, %v1866
      %v1868 = vpop.f32.mrb[0].mxu0
      %1869 = vmatprep.mubr.bf16.mxu0 0
      %1870 = vmatmul.mubr.bf16.gmra.mrb[0].mxu0 %v1653
      %v1871 = vpop.f32.mrb[0].mxu0
      %v1872 = vadd.f32 %v1743, %v1871
      %v1873 = vpop.f32.mrb[0].mxu0
      %v1874 = vpop.f32.mrb[0].mxu0
      %v1875 = vadd.f32 %v1746, %v1874
      %v1876 = vpop.f32.mrb[0].mxu0
      %1877 = vmatprep.mubr.bf16.mxu0 0
      %1878 = vmatmul.mubr.bf16.gmra.mrb[0].mxu0 %v1656
      %v1879 = vpop.f32.mrb[0].mxu0
      %v1880 = vadd.f32 %v1751, %v1879
      %v1881 = vpop.f32.mrb[0].mxu0
      %v1882 = vpop.f32.mrb[0].mxu0
      %v1883 = vadd.f32 %v1754, %v1882
      %v1884 = vpop.f32.mrb[0].mxu0
      %1885 = vmatprep.mubr.bf16.mxu0 0
      %1886 = vmatmul.mubr.bf16.gmra.mrb[0].mxu0 %v1659
      %v1887 = vpop.f32.mrb[0].mxu0
      %v1888 = vadd.f32 %v1759, %v1887
      %v1889 = vpop.f32.mrb[0].mxu0
      %v1890 = vpop.f32.mrb[0].mxu0
      %v1891 = vadd.f32 %v1762, %v1890
      %v1892 = vpop.f32.mrb[0].mxu0
      %1893 = vmatprep.mubr.bf16.mxu0 0
      %1894 = vmatmul.mubr.bf16.gmra.mrb[0].mxu0 %v1662
      %v1895 = vpop.f32.mrb[0].mxu0
      %v1896 = vadd.f32 %v1767, %v1895
      %v1897 = vpop.f32.mrb[0].mxu0
      %v1898 = vpop.f32.mrb[0].mxu0
      %v1899 = vadd.f32 %v1770, %v1898
      %v1900 = vpop.f32.mrb[0].mxu0
      %1901 = vmatprep.mubr.bf16.mxu0 0
      %1902 = vmatmul.mubr.bf16.gmra.mrb[0].mxu0 %v1665
      %v1903 = vpop.f32.mrb[0].mxu0
      %v1904 = vadd.f32 %v1775, %v1903
      %v1905 = vpop.f32.mrb[0].mxu0
      %v1906 = vpop.f32.mrb[0].mxu0
      %v1907 = vadd.f32 %v1778, %v1906
      %v1908 = vpop.f32.mrb[0].mxu0
      %1909 = vmatprep.mubr.bf16.mxu0 0
      %1910 = vmatmul.mubr.bf16.gmra.mrb[0].mxu0 %v1668
      %v1911 = vpop.f32.mrb[0].mxu0
      %v1912 = vadd.f32 %v1783, %v1911
      %v1913 = vpop.f32.mrb[0].mxu0
      %v1914 = vpop.f32.mrb[0].mxu0
      %v1915 = vadd.f32 %v1786, %v1914
      %v1916 = vpop.f32.mrb[0].mxu0
      %1917 = vmatprep.mubr.bf16.mxu0 0
      %1918 = vmatmul.mubr.bf16.gmra.mrb[0].mxu0 %v1671
      %v1919 = vpop.f32.mrb[0].mxu0
      %v1920 = vadd.f32 %v1791, %v1919
      %v1921 = vpop.f32.mrb[0].mxu0
      %v1922 = vpop.f32.mrb[0].mxu0
      %v1923 = vadd.f32 %v1794, %v1922
      %v1924 = vpop.f32.mrb[0].mxu0
      %1925 = vmatprep.mubr.bf16.mxu0 0
      %1926 = vmatmul.mubr.bf16.gmra.mrb[0].mxu0 %v1674
      %v1927 = vpop.f32.mrb[0].mxu0
      %v1928 = vadd.f32 %v1799, %v1927
      %v1929 = vpop.f32.mrb[0].mxu0
      %v1930 = vpop.f32.mrb[0].mxu0
      %v1931 = vadd.f32 %v1802, %v1930
      %v1932 = vpop.f32.mrb[0].mxu0
      %1933 = vdwg.mxu0
      %v1934 = vmax.f32 %v1840, 0.0
      %v1935 = vmax.f32 %v1843, 0.0
      %v1936 = vmax.f32 %v1848, 0.0
      %v1937 = vmax.f32 %v1851, 0.0
      %v1938 = vmax.f32 %v1856, 0.0
      %v1939 = vmax.f32 %v1859, 0.0
      %v1940 = vmax.f32 %v1864, 0.0
      %v1941 = vmax.f32 %v1867, 0.0
      %v1942 = vmax.f32 %v1872, 0.0
      %v1943 = vmax.f32 %v1875, 0.0
      %v1944 = vmax.f32 %v1880, 0.0
      %v1945 = vmax.f32 %v1883, 0.0
      %v1946 = vmax.f32 %v1888, 0.0
      %v1947 = vmax.f32 %v1891, 0.0
      %v1948 = vmax.f32 %v1896, 0.0
      %v1949 = vmax.f32 %v1899, 0.0
      %v1950 = vmax.f32 %v1904, 0.0
      %v1951 = vmax.f32 %v1907, 0.0
      %v1952 = vmax.f32 %v1912, 0.0
      %v1953 = vmax.f32 %v1915, 0.0
      %v1954 = vmax.f32 %v1920, 0.0
      %v1955 = vmax.f32 %v1923, 0.0
      %v1956 = vmax.f32 %v1928, 0.0
      %v1957 = vmax.f32 %v1931, 0.0
      %1958 = vst.msk [vmem:[%s269 + $0x1] sm:$0xff] %vm260, %v1934
      %1959 = vst.msk [vmem:[%s269 + $0x9] sm:$0xff] %vm260, %v1935
      %1960 = vst.msk [vmem:[%s269 + $0x19] sm:$0xff] %vm260, %v1936
      %1961 = vst.msk [vmem:[%s269 + $0x21] sm:$0xff] %vm260, %v1937
      %1962 = vst.msk [vmem:[%s269 + $0x31] sm:$0xff] %vm260, %v1938
      %1963 = vst.msk [vmem:[%s269 + $0x39] sm:$0xff] %vm260, %v1939
      %1964 = vst.msk [vmem:[%s269 + $0x49] sm:$0xff] %vm260, %v1940
      %1965 = vst.msk [vmem:[%s269 + $0x51] sm:$0xff] %vm260, %v1941
      %1966 = vst.msk [vmem:[%s269 + $0x61] sm:$0xff] %vm260, %v1942
      %1967 = vst.msk [vmem:[%s269 + $0x69] sm:$0xff] %vm260, %v1943
      %1968 = vst.msk [vmem:[%s269 + $0x79] sm:$0xff] %vm260, %v1944
      %1969 = vst.msk [vmem:[%s269 + $0x81] sm:$0xff] %vm260, %v1945
      %1970 = vst.msk [vmem:[%s269 + $0x91] sm:$0xff] %vm260, %v1946
      %1971 = vst.msk [vmem:[%s269 + $0x99] sm:$0xff] %vm260, %v1947
      %1972 = vst.msk [vmem:[%s269 + $0xa9] sm:$0xff] %vm260, %v1948
      %1973 = vst.msk [vmem:[%s269 + $0xb1] sm:$0xff] %vm260, %v1949
      %1974 = vst.msk [vmem:[%s269 + $0xc1] sm:$0xff] %vm260, %v1950
      %1975 = vst.msk [vmem:[%s269 + $0xc9] sm:$0xff] %vm260, %v1951
      %1976 = vst.msk [vmem:[%s269 + $0xd9] sm:$0xff] %vm260, %v1952
      %1977 = vst.msk [vmem:[%s269 + $0xe1] sm:$0xff] %vm260, %v1953
      %1978 = vst.msk [vmem:[%s269 + $0xf1] sm:$0xff] %vm260, %v1954
      %1979 = vst.msk [vmem:[%s269 + $0xf9] sm:$0xff] %vm260, %v1955
      %1980 = vst.msk [vmem:[%s269 + $0x109] sm:$0xff] %vm260, %v1956
      %1981 = vst.msk [vmem:[%s269 + $0x111] sm:$0xff] %vm260, %v1957
      %v1982 = vld [vmem:[#allocation2] sm:$0xff]
      %v1983 = vld [vmem:[#allocation2 + $0x8] sm:$0xff]
      %v1984 = vld [vmem:[#allocation2 + $0x18] sm:$0xff]
      %v1985 = vld [vmem:[#allocation2 + $0x20] sm:$0xff]
      %v1986 = vld [vmem:[#allocation2 + $0x30] sm:$0xff]
      %v1987 = vld [vmem:[#allocation2 + $0x38] sm:$0xff]
      %v1988 = vld [vmem:[#allocation2 + $0x48] sm:$0xff]
      %v1989 = vld [vmem:[#allocation2 + $0x50] sm:$0xff]
      %v1990 = vld [vmem:[#allocation2 + $0x60] sm:$0xff]
      %v1991 = vld [vmem:[#allocation2 + $0x68] sm:$0xff]
      %v1992 = vld [vmem:[#allocation2 + $0x78] sm:$0xff]
      %v1993 = vld [vmem:[#allocation2 + $0x80] sm:$0xff]
      %v1994 = vld [vmem:[#allocation2 + $0x90] sm:$0xff]
      %v1995 = vld [vmem:[#allocation2 + $0x98] sm:$0xff]
      %v1996 = vld [vmem:[#allocation2 + $0xa8] sm:$0xff]
      %v1997 = vld [vmem:[#allocation2 + $0xb0] sm:$0xff]
      %v1998 = vld [vmem:[#allocation2 + $0xc0] sm:$0xff]
      %v1999 = vld [vmem:[#allocation2 + $0xc8] sm:$0xff]
      %v2000 = vld [vmem:[#allocation2 + $0xd8] sm:$0xff]
      %v2001 = vld [vmem:[#allocation2 + $0xe0] sm:$0xff]
      %v2002 = vld [vmem:[#allocation2 + $0xf0] sm:$0xff]
      %v2003 = vld [vmem:[#allocation2 + $0xf8] sm:$0xff]
      %v2004 = vld [vmem:[#allocation2 + $0x108] sm:$0xff]
      %v2005 = vld [vmem:[#allocation2 + $0x110] sm:$0xff]
      %2006 = vst.msk [vmem:[#allocation3] sm:$0xff] %vm260, %v1982
      %2007 = vst.msk [vmem:[#allocation3 + $0x18] sm:$0xff] %vm260, %v1983
      %2008 = vst.msk [vmem:[#allocation3 + $0x30] sm:$0xff] %vm260, %v1984
      %2009 = vst.msk [vmem:[#allocation3 + $0x48] sm:$0xff] %vm260, %v1985
      %2010 = vst.msk [vmem:[#allocation3 + $0x60] sm:$0xff] %vm260, %v1986
      %2011 = vst.msk [vmem:[#allocation3 + $0x78] sm:$0xff] %vm260, %v1987
      %2012 = vst.msk [vmem:[#allocation3 + $0x90] sm:$0xff] %vm260, %v1988
      %2013 = vst.msk [vmem:[#allocation3 + $0xa8] sm:$0xff] %vm260, %v1989
      %2014 = vst.msk [vmem:[#allocation3 + $0xc0] sm:$0xff] %vm260, %v1990
      %2015 = vst.msk [vmem:[#allocation3 + $0xd8] sm:$0xff] %vm260, %v1991
      %2016 = vst.msk [vmem:[#allocation3 + $0xf0] sm:$0xff] %vm260, %v1992
      %2017 = vst.msk [vmem:[#allocation3 + $0x108] sm:$0xff] %vm260, %v1993
      %2018 = vst.msk [vmem:[#allocation3 + $0x120] sm:$0xff] %vm260, %v1994
      %2019 = vst.msk [vmem:[#allocation3 + $0x138] sm:$0xff] %vm260, %v1995
      %2020 = vst.msk [vmem:[#allocation3 + $0x150] sm:$0xff] %vm260, %v1996
      %2021 = vst.msk [vmem:[#allocation3 + $0x168] sm:$0xff] %vm260, %v1997
      %2022 = vst.msk [vmem:[#allocation3 + $0x180] sm:$0xff] %vm260, %v1998
      %2023 = vst.msk [vmem:[#allocation3 + $0x198] sm:$0xff] %vm260, %v1999
      %2024 = vst.msk [vmem:[#allocation3 + $0x1b0] sm:$0xff] %vm260, %v2000
      %2025 = vst.msk [vmem:[#allocation3 + $0x1c8] sm:$0xff] %vm260, %v2001
      %2026 = vst.msk [vmem:[#allocation3 + $0x1e0] sm:$0xff] %vm260, %v2002
      %2027 = vst.msk [vmem:[#allocation3 + $0x1f8] sm:$0xff] %vm260, %v2003
      %2028 = vst.msk [vmem:[#allocation3 + $0x210] sm:$0xff] %vm260, %v2004
      %2029 = vst.msk [vmem:[#allocation3 + $0x228] sm:$0xff] %vm260, %v2005
      %v2030 = vld [vmem:[#allocation2 + $0x1] sm:$0xff]
      %v2031 = vld [vmem:[#allocation2 + $0x9] sm:$0xff]
      %v2032 = vld [vmem:[#allocation2 + $0x19] sm:$0xff]
      %v2033 = vld [vmem:[#allocation2 + $0x21] sm:$0xff]
      %v2034 = vld [vmem:[#allocation2 + $0x31] sm:$0xff]
      %v2035 = vld [vmem:[#allocation2 + $0x39] sm:$0xff]
      %v2036 = vld [vmem:[#allocation2 + $0x49] sm:$0xff]
      %v2037 = vld [vmem:[#allocation2 + $0x51] sm:$0xff]
      %v2038 = vld [vmem:[#allocation2 + $0x61] sm:$0xff]
      %v2039 = vld [vmem:[#allocation2 + $0x69] sm:$0xff]
      %v2040 = vld [vmem:[#allocation2 + $0x79] sm:$0xff]
      %v2041 = vld [vmem:[#allocation2 + $0x81] sm:$0xff]
      %v2042 = vld [vmem:[#allocation2 + $0x91] sm:$0xff]
      %v2043 = vld [vmem:[#allocation2 + $0x99] sm:$0xff]
      %v2044 = vld [vmem:[#allocation2 + $0xa9] sm:$0xff]
      %v2045 = vld [vmem:[#allocation2 + $0xb1] sm:$0xff]
      %v2046 = vld [vmem:[#allocation2 + $0xc1] sm:$0xff]
      %v2047 = vld [vmem:[#allocation2 + $0xc9] sm:$0xff]
      %v2048 = vld [vmem:[#allocation2 + $0xd9] sm:$0xff]
      %v2049 = vld [vmem:[#allocation2 + $0xe1] sm:$0xff]
      %v2050 = vld [vmem:[#allocation2 + $0xf1] sm:$0xff]
      %v2051 = vld [vmem:[#allocation2 + $0xf9] sm:$0xff]
      %v2052 = vld [vmem:[#allocation2 + $0x109] sm:$0xff]
      %v2053 = vld [vmem:[#allocation2 + $0x111] sm:$0xff]
      %2078 = vrot.lane.b32.xlu0 %v2030, 32
      %v2079 = vpop.permute.xlu0 %2078
      %2080 = vrot.lane.b32.xlu0 %v2031, 32
      %v2081 = vpop.permute.xlu0 %2080
      %2082 = vrot.lane.b32.xlu0 %v2032, 32
      %v2083 = vpop.permute.xlu0 %2082
      %2084 = vrot.lane.b32.xlu0 %v2033, 32
      %v2085 = vpop.permute.xlu0 %2084
      %2086 = vrot.lane.b32.xlu0 %v2034, 32
      %v2087 = vpop.permute.xlu0 %2086
      %2088 = vrot.lane.b32.xlu0 %v2035, 32
      %v2089 = vpop.permute.xlu0 %2088
      %2090 = vrot.lane.b32.xlu0 %v2036, 32
      %v2091 = vpop.permute.xlu0 %2090
      %2092 = vrot.lane.b32.xlu0 %v2037, 32
      %v2093 = vpop.permute.xlu0 %2092
      %2094 = vrot.lane.b32.xlu0 %v2038, 32
      %v2095 = vpop.permute.xlu0 %2094
      %2096 = vrot.lane.b32.xlu0 %v2039, 32
      %v2097 = vpop.permute.xlu0 %2096
      %2098 = vrot.lane.b32.xlu0 %v2040, 32
      %v2099 = vpop.permute.xlu0 %2098
      %2100 = vrot.lane.b32.xlu0 %v2041, 32
      %v2101 = vpop.permute.xlu0 %2100
      %2102 = vrot.lane.b32.xlu0 %v2042, 32
      %v2103 = vpop.permute.xlu0 %2102
      %2104 = vrot.lane.b32.xlu0 %v2043, 32
      %v2105 = vpop.permute.xlu0 %2104
      %2106 = vrot.lane.b32.xlu0 %v2044, 32
      %v2107 = vpop.permute.xlu0 %2106
      %2108 = vrot.lane.b32.xlu0 %v2045, 32
      %v2109 = vpop.permute.xlu0 %2108
      %2110 = vrot.lane.b32.xlu0 %v2046, 32
      %v2111 = vpop.permute.xlu0 %2110
      %2112 = vrot.lane.b32.xlu0 %v2047, 32
      %v2113 = vpop.permute.xlu0 %2112
      %2114 = vrot.lane.b32.xlu0 %v2048, 32
      %v2115 = vpop.permute.xlu0 %2114
      %2116 = vrot.lane.b32.xlu0 %v2049, 32
      %v2117 = vpop.permute.xlu0 %2116
      %2118 = vrot.lane.b32.xlu0 %v2050, 32
      %v2119 = vpop.permute.xlu0 %2118
      %2120 = vrot.lane.b32.xlu0 %v2051, 32
      %v2121 = vpop.permute.xlu0 %2120
      %2122 = vrot.lane.b32.xlu0 %v2052, 32
      %v2123 = vpop.permute.xlu0 %2122
      %2124 = vrot.lane.b32.xlu0 %v2053, 32
      %v2125 = vpop.permute.xlu0 %2124
      %2150 = vst.msk [vmem:[#allocation3] sm:$0xff] %vm537, %v2079
      %2151 = vst.msk [vmem:[#allocation3 + $0x18] sm:$0xff] %vm537, %v2081
      %2152 = vst.msk [vmem:[#allocation3 + $0x30] sm:$0xff] %vm537, %v2083
      %2153 = vst.msk [vmem:[#allocation3 + $0x48] sm:$0xff] %vm537, %v2085
      %2154 = vst.msk [vmem:[#allocation3 + $0x60] sm:$0xff] %vm537, %v2087
      %2155 = vst.msk [vmem:[#allocation3 + $0x78] sm:$0xff] %vm537, %v2089
      %2156 = vst.msk [vmem:[#allocation3 + $0x90] sm:$0xff] %vm537, %v2091
      %2157 = vst.msk [vmem:[#allocation3 + $0xa8] sm:$0xff] %vm537, %v2093
      %2158 = vst.msk [vmem:[#allocation3 + $0xc0] sm:$0xff] %vm537, %v2095
      %2159 = vst.msk [vmem:[#allocation3 + $0xd8] sm:$0xff] %vm537, %v2097
      %2160 = vst.msk [vmem:[#allocation3 + $0xf0] sm:$0xff] %vm537, %v2099
      %2161 = vst.msk [vmem:[#allocation3 + $0x108] sm:$0xff] %vm537, %v2101
      %2162 = vst.msk [vmem:[#allocation3 + $0x120] sm:$0xff] %vm537, %v2103
      %2163 = vst.msk [vmem:[#allocation3 + $0x138] sm:$0xff] %vm537, %v2105
      %2164 = vst.msk [vmem:[#allocation3 + $0x150] sm:$0xff] %vm537, %v2107
      %2165 = vst.msk [vmem:[#allocation3 + $0x168] sm:$0xff] %vm537, %v2109
      %2166 = vst.msk [vmem:[#allocation3 + $0x180] sm:$0xff] %vm537, %v2111
      %2167 = vst.msk [vmem:[#allocation3 + $0x198] sm:$0xff] %vm537, %v2113
      %2168 = vst.msk [vmem:[#allocation3 + $0x1b0] sm:$0xff] %vm537, %v2115
      %2169 = vst.msk [vmem:[#allocation3 + $0x1c8] sm:$0xff] %vm537, %v2117
      %2170 = vst.msk [vmem:[#allocation3 + $0x1e0] sm:$0xff] %vm537, %v2119
      %2171 = vst.msk [vmem:[#allocation3 + $0x1f8] sm:$0xff] %vm537, %v2121
      %2172 = vst.msk [vmem:[#allocation3 + $0x210] sm:$0xff] %vm537, %v2123
      %2173 = vst.msk [vmem:[#allocation3 + $0x228] sm:$0xff] %vm537, %v2125
      %v2174 = vld [vmem:[#allocation2 + $0x2] sm:$0xff]
      %v2175 = vld [vmem:[#allocation2 + $0xa] sm:$0xff]
      %v2176 = vld [vmem:[#allocation2 + $0x1a] sm:$0xff]
      %v2177 = vld [vmem:[#allocation2 + $0x22] sm:$0xff]
      %v2178 = vld [vmem:[#allocation2 + $0x32] sm:$0xff]
      %v2179 = vld [vmem:[#allocation2 + $0x3a] sm:$0xff]
      %v2180 = vld [vmem:[#allocation2 + $0x4a] sm:$0xff]
      %v2181 = vld [vmem:[#allocation2 + $0x52] sm:$0xff]
      %v2182 = vld [vmem:[#allocation2 + $0x62] sm:$0xff]
      %v2183 = vld [vmem:[#allocation2 + $0x6a] sm:$0xff]
      %v2184 = vld [vmem:[#allocation2 + $0x7a] sm:$0xff]
      %v2185 = vld [vmem:[#allocation2 + $0x82] sm:$0xff]
      %v2186 = vld [vmem:[#allocation2 + $0x92] sm:$0xff]
      %v2187 = vld [vmem:[#allocation2 + $0x9a] sm:$0xff]
      %v2188 = vld [vmem:[#allocation2 + $0xaa] sm:$0xff]
      %v2189 = vld [vmem:[#allocation2 + $0xb2] sm:$0xff]
      %v2190 = vld [vmem:[#allocation2 + $0xc2] sm:$0xff]
      %v2191 = vld [vmem:[#allocation2 + $0xca] sm:$0xff]
      %v2192 = vld [vmem:[#allocation2 + $0xda] sm:$0xff]
      %v2193 = vld [vmem:[#allocation2 + $0xe2] sm:$0xff]
      %v2194 = vld [vmem:[#allocation2 + $0xf2] sm:$0xff]
      %v2195 = vld [vmem:[#allocation2 + $0xfa] sm:$0xff]
      %v2196 = vld [vmem:[#allocation2 + $0x10a] sm:$0xff]
      %v2197 = vld [vmem:[#allocation2 + $0x112] sm:$0xff]
      %2222 = vrot.lane.b32.xlu0 %v2174, 64
      %v2223 = vpop.permute.xlu0 %2222
      %2224 = vrot.lane.b32.xlu0 %v2175, 64
      %v2225 = vpop.permute.xlu0 %2224
      %2226 = vrot.lane.b32.xlu0 %v2176, 64
      %v2227 = vpop.permute.xlu0 %2226
      %2228 = vrot.lane.b32.xlu0 %v2177, 64
      %v2229 = vpop.permute.xlu0 %2228
      %2230 = vrot.lane.b32.xlu0 %v2178, 64
      %v2231 = vpop.permute.xlu0 %2230
      %2232 = vrot.lane.b32.xlu0 %v2179, 64
      %v2233 = vpop.permute.xlu0 %2232
      %2234 = vrot.lane.b32.xlu0 %v2180, 64
      %v2235 = vpop.permute.xlu0 %2234
      %2236 = vrot.lane.b32.xlu0 %v2181, 64
      %v2237 = vpop.permute.xlu0 %2236
      %2238 = vrot.lane.b32.xlu0 %v2182, 64
      %v2239 = vpop.permute.xlu0 %2238
      %2240 = vrot.lane.b32.xlu0 %v2183, 64
      %v2241 = vpop.permute.xlu0 %2240
      %2242 = vrot.lane.b32.xlu0 %v2184, 64
      %v2243 = vpop.permute.xlu0 %2242
      %2244 = vrot.lane.b32.xlu0 %v2185, 64
      %v2245 = vpop.permute.xlu0 %2244
      %2246 = vrot.lane.b32.xlu0 %v2186, 64
      %v2247 = vpop.permute.xlu0 %2246
      %2248 = vrot.lane.b32.xlu0 %v2187, 64
      %v2249 = vpop.permute.xlu0 %2248
      %2250 = vrot.lane.b32.xlu0 %v2188, 64
      %v2251 = vpop.permute.xlu0 %2250
      %2252 = vrot.lane.b32.xlu0 %v2189, 64
      %v2253 = vpop.permute.xlu0 %2252
      %2254 = vrot.lane.b32.xlu0 %v2190, 64
      %v2255 = vpop.permute.xlu0 %2254
      %2256 = vrot.lane.b32.xlu0 %v2191, 64
      %v2257 = vpop.permute.xlu0 %2256
      %2258 = vrot.lane.b32.xlu0 %v2192, 64
      %v2259 = vpop.permute.xlu0 %2258
      %2260 = vrot.lane.b32.xlu0 %v2193, 64
      %v2261 = vpop.permute.xlu0 %2260
      %2262 = vrot.lane.b32.xlu0 %v2194, 64
      %v2263 = vpop.permute.xlu0 %2262
      %2264 = vrot.lane.b32.xlu0 %v2195, 64
      %v2265 = vpop.permute.xlu0 %2264
      %2266 = vrot.lane.b32.xlu0 %v2196, 64
      %v2267 = vpop.permute.xlu0 %2266
      %2268 = vrot.lane.b32.xlu0 %v2197, 64
      %v2269 = vpop.permute.xlu0 %2268
      %2294 = vst.msk [vmem:[#allocation3] sm:$0xff] %vm682, %v2223
      %2295 = vst.msk [vmem:[#allocation3 + $0x18] sm:$0xff] %vm682, %v2225
      %2296 = vst.msk [vmem:[#allocation3 + $0x30] sm:$0xff] %vm682, %v2227
      %2297 = vst.msk [vmem:[#allocation3 + $0x48] sm:$0xff] %vm682, %v2229
      %2298 = vst.msk [vmem:[#allocation3 + $0x60] sm:$0xff] %vm682, %v2231
      %2299 = vst.msk [vmem:[#allocation3 + $0x78] sm:$0xff] %vm682, %v2233
      %2300 = vst.msk [vmem:[#allocation3 + $0x90] sm:$0xff] %vm682, %v2235
      %2301 = vst.msk [vmem:[#allocation3 + $0xa8] sm:$0xff] %vm682, %v2237
      %2302 = vst.msk [vmem:[#allocation3 + $0xc0] sm:$0xff] %vm682, %v2239
      %2303 = vst.msk [vmem:[#allocation3 + $0xd8] sm:$0xff] %vm682, %v2241
      %2304 = vst.msk [vmem:[#allocation3 + $0xf0] sm:$0xff] %vm682, %v2243
      %2305 = vst.msk [vmem:[#allocation3 + $0x108] sm:$0xff] %vm682, %v2245
      %2306 = vst.msk [vmem:[#allocation3 + $0x120] sm:$0xff] %vm682, %v2247
      %2307 = vst.msk [vmem:[#allocation3 + $0x138] sm:$0xff] %vm682, %v2249
      %2308 = vst.msk [vmem:[#allocation3 + $0x150] sm:$0xff] %vm682, %v2251
      %2309 = vst.msk [vmem:[#allocation3 + $0x168] sm:$0xff] %vm682, %v2253
      %2310 = vst.msk [vmem:[#allocation3 + $0x180] sm:$0xff] %vm682, %v2255
      %2311 = vst.msk [vmem:[#allocation3 + $0x198] sm:$0xff] %vm682, %v2257
      %2312 = vst.msk [vmem:[#allocation3 + $0x1b0] sm:$0xff] %vm682, %v2259
      %2313 = vst.msk [vmem:[#allocation3 + $0x1c8] sm:$0xff] %vm682, %v2261
      %2314 = vst.msk [vmem:[#allocation3 + $0x1e0] sm:$0xff] %vm682, %v2263
      %2315 = vst.msk [vmem:[#allocation3 + $0x1f8] sm:$0xff] %vm682, %v2265
      %2316 = vst.msk [vmem:[#allocation3 + $0x210] sm:$0xff] %vm682, %v2267
      %2317 = vst.msk [vmem:[#allocation3 + $0x228] sm:$0xff] %vm682, %v2269
      %v2318 = vld [vmem:[%s269] sm:$0xff]
      %v2319 = vld [vmem:[%s269 + $0x8] sm:$0xff]
      %v2320 = vld [vmem:[%s269 + $0x18] sm:$0xff]
      %v2321 = vld [vmem:[%s269 + $0x20] sm:$0xff]
      %v2322 = vld [vmem:[%s269 + $0x30] sm:$0xff]
      %v2323 = vld [vmem:[%s269 + $0x38] sm:$0xff]
      %v2324 = vld [vmem:[%s269 + $0x48] sm:$0xff]
      %v2325 = vld [vmem:[%s269 + $0x50] sm:$0xff]
      %v2326 = vld [vmem:[%s269 + $0x60] sm:$0xff]
      %v2327 = vld [vmem:[%s269 + $0x68] sm:$0xff]
      %v2328 = vld [vmem:[%s269 + $0x78] sm:$0xff]
      %v2329 = vld [vmem:[%s269 + $0x80] sm:$0xff]
      %v2330 = vld [vmem:[%s269 + $0x90] sm:$0xff]
      %v2331 = vld [vmem:[%s269 + $0x98] sm:$0xff]
      %v2332 = vld [vmem:[%s269 + $0xa8] sm:$0xff]
      %v2333 = vld [vmem:[%s269 + $0xb0] sm:$0xff]
      %v2334 = vld [vmem:[%s269 + $0xc0] sm:$0xff]
      %v2335 = vld [vmem:[%s269 + $0xc8] sm:$0xff]
      %v2336 = vld [vmem:[%s269 + $0xd8] sm:$0xff]
      %v2337 = vld [vmem:[%s269 + $0xe0] sm:$0xff]
      %v2338 = vld [vmem:[%s269 + $0xf0] sm:$0xff]
      %v2339 = vld [vmem:[%s269 + $0xf8] sm:$0xff]
      %v2340 = vld [vmem:[%s269 + $0x108] sm:$0xff]
      %v2341 = vld [vmem:[%s269 + $0x110] sm:$0xff]
      %2366 = vrot.lane.b32.xlu0 %v2318, 96
      %v2367 = vpop.permute.xlu0 %2366
      %2368 = vrot.lane.b32.xlu0 %v2319, 96
      %v2369 = vpop.permute.xlu0 %2368
      %2370 = vrot.lane.b32.xlu0 %v2320, 96
      %v2371 = vpop.permute.xlu0 %2370
      %2372 = vrot.lane.b32.xlu0 %v2321, 96
      %v2373 = vpop.permute.xlu0 %2372
      %2374 = vrot.lane.b32.xlu0 %v2322, 96
      %v2375 = vpop.permute.xlu0 %2374
      %2376 = vrot.lane.b32.xlu0 %v2323, 96
      %v2377 = vpop.permute.xlu0 %2376
      %2378 = vrot.lane.b32.xlu0 %v2324, 96
      %v2379 = vpop.permute.xlu0 %2378
      %2380 = vrot.lane.b32.xlu0 %v2325, 96
      %v2381 = vpop.permute.xlu0 %2380
      %2382 = vrot.lane.b32.xlu0 %v2326, 96
      %v2383 = vpop.permute.xlu0 %2382
      %2384 = vrot.lane.b32.xlu0 %v2327, 96
      %v2385 = vpop.permute.xlu0 %2384
      %2386 = vrot.lane.b32.xlu0 %v2328, 96
      %v2387 = vpop.permute.xlu0 %2386
      %2388 = vrot.lane.b32.xlu0 %v2329, 96
      %v2389 = vpop.permute.xlu0 %2388
      %2390 = vrot.lane.b32.xlu0 %v2330, 96
      %v2391 = vpop.permute.xlu0 %2390
      %2392 = vrot.lane.b32.xlu0 %v2331, 96
      %v2393 = vpop.permute.xlu0 %2392
      %2394 = vrot.lane.b32.xlu0 %v2332, 96
      %v2395 = vpop.permute.xlu0 %2394
      %2396 = vrot.lane.b32.xlu0 %v2333, 96
      %v2397 = vpop.permute.xlu0 %2396
      %2398 = vrot.lane.b32.xlu0 %v2334, 96
      %v2399 = vpop.permute.xlu0 %2398
      %2400 = vrot.lane.b32.xlu0 %v2335, 96
      %v2401 = vpop.permute.xlu0 %2400
      %2402 = vrot.lane.b32.xlu0 %v2336, 96
      %v2403 = vpop.permute.xlu0 %2402
      %2404 = vrot.lane.b32.xlu0 %v2337, 96
      %v2405 = vpop.permute.xlu0 %2404
      %2406 = vrot.lane.b32.xlu0 %v2338, 96
      %v2407 = vpop.permute.xlu0 %2406
      %2408 = vrot.lane.b32.xlu0 %v2339, 96
      %v2409 = vpop.permute.xlu0 %2408
      %2410 = vrot.lane.b32.xlu0 %v2340, 96
      %v2411 = vpop.permute.xlu0 %2410
      %2412 = vrot.lane.b32.xlu0 %v2341, 96
      %v2413 = vpop.permute.xlu0 %2412
      %2438 = vst.msk [vmem:[#allocation3] sm:$0xff] %vm827, %v2367
      %2439 = vst.msk [vmem:[#allocation3 + $0x18] sm:$0xff] %vm827, %v2369
      %2440 = vst.msk [vmem:[#allocation3 + $0x30] sm:$0xff] %vm827, %v2371
      %2441 = vst.msk [vmem:[#allocation3 + $0x48] sm:$0xff] %vm827, %v2373
      %2442 = vst.msk [vmem:[#allocation3 + $0x60] sm:$0xff] %vm827, %v2375
      %2443 = vst.msk [vmem:[#allocation3 + $0x78] sm:$0xff] %vm827, %v2377
      %2444 = vst.msk [vmem:[#allocation3 + $0x90] sm:$0xff] %vm827, %v2379
      %2445 = vst.msk [vmem:[#allocation3 + $0xa8] sm:$0xff] %vm827, %v2381
      %2446 = vst.msk [vmem:[#allocation3 + $0xc0] sm:$0xff] %vm827, %v2383
      %2447 = vst.msk [vmem:[#allocation3 + $0xd8] sm:$0xff] %vm827, %v2385
      %2448 = vst.msk [vmem:[#allocation3 + $0xf0] sm:$0xff] %vm827, %v2387
      %2449 = vst.msk [vmem:[#allocation3 + $0x108] sm:$0xff] %vm827, %v2389
      %2450 = vst.msk [vmem:[#allocation3 + $0x120] sm:$0xff] %vm827, %v2391
      %2451 = vst.msk [vmem:[#allocation3 + $0x138] sm:$0xff] %vm827, %v2393
      %2452 = vst.msk [vmem:[#allocation3 + $0x150] sm:$0xff] %vm827, %v2395
      %2453 = vst.msk [vmem:[#allocation3 + $0x168] sm:$0xff] %vm827, %v2397
      %2454 = vst.msk [vmem:[#allocation3 + $0x180] sm:$0xff] %vm827, %v2399
      %2455 = vst.msk [vmem:[#allocation3 + $0x198] sm:$0xff] %vm827, %v2401
      %2456 = vst.msk [vmem:[#allocation3 + $0x1b0] sm:$0xff] %vm827, %v2403
      %2457 = vst.msk [vmem:[#allocation3 + $0x1c8] sm:$0xff] %vm827, %v2405
      %2458 = vst.msk [vmem:[#allocation3 + $0x1e0] sm:$0xff] %vm827, %v2407
      %2459 = vst.msk [vmem:[#allocation3 + $0x1f8] sm:$0xff] %vm827, %v2409
      %2460 = vst.msk [vmem:[#allocation3 + $0x210] sm:$0xff] %vm827, %v2411
      %2461 = vst.msk [vmem:[#allocation3 + $0x228] sm:$0xff] %vm827, %v2413
      %v2462 = vld [vmem:[%s269 + $0x1] sm:$0xff]
      %v2463 = vld [vmem:[%s269 + $0x9] sm:$0xff]
      %v2464 = vld [vmem:[%s269 + $0x19] sm:$0xff]
      %v2465 = vld [vmem:[%s269 + $0x21] sm:$0xff]
      %v2466 = vld [vmem:[%s269 + $0x31] sm:$0xff]
      %v2467 = vld [vmem:[%s269 + $0x39] sm:$0xff]
      %v2468 = vld [vmem:[%s269 + $0x49] sm:$0xff]
      %v2469 = vld [vmem:[%s269 + $0x51] sm:$0xff]
      %v2470 = vld [vmem:[%s269 + $0x61] sm:$0xff]
      %v2471 = vld [vmem:[%s269 + $0x69] sm:$0xff]
      %v2472 = vld [vmem:[%s269 + $0x79] sm:$0xff]
      %v2473 = vld [vmem:[%s269 + $0x81] sm:$0xff]
      %v2474 = vld [vmem:[%s269 + $0x91] sm:$0xff]
      %v2475 = vld [vmem:[%s269 + $0x99] sm:$0xff]
      %v2476 = vld [vmem:[%s269 + $0xa9] sm:$0xff]
      %v2477 = vld [vmem:[%s269 + $0xb1] sm:$0xff]
      %v2478 = vld [vmem:[%s269 + $0xc1] sm:$0xff]
      %v2479 = vld [vmem:[%s269 + $0xc9] sm:$0xff]
      %v2480 = vld [vmem:[%s269 + $0xd9] sm:$0xff]
      %v2481 = vld [vmem:[%s269 + $0xe1] sm:$0xff]
      %v2482 = vld [vmem:[%s269 + $0xf1] sm:$0xff]
      %v2483 = vld [vmem:[%s269 + $0xf9] sm:$0xff]
      %v2484 = vld [vmem:[%s269 + $0x109] sm:$0xff]
      %v2485 = vld [vmem:[%s269 + $0x111] sm:$0xff]
      %2486 = vst.msk [vmem:[#allocation3 + $0x8] sm:$0xff] %vm260, %v2462
      %2487 = vst.msk [vmem:[#allocation3 + $0x20] sm:$0xff] %vm260, %v2463
      %2488 = vst.msk [vmem:[#allocation3 + $0x38] sm:$0xff] %vm260, %v2464
      %2489 = vst.msk [vmem:[#allocation3 + $0x50] sm:$0xff] %vm260, %v2465
      %2490 = vst.msk [vmem:[#allocation3 + $0x68] sm:$0xff] %vm260, %v2466
      %2491 = vst.msk [vmem:[#allocation3 + $0x80] sm:$0xff] %vm260, %v2467
      %2492 = vst.msk [vmem:[#allocation3 + $0x98] sm:$0xff] %vm260, %v2468
      %2493 = vst.msk [vmem:[#allocation3 + $0xb0] sm:$0xff] %vm260, %v2469
      %2494 = vst.msk [vmem:[#allocation3 + $0xc8] sm:$0xff] %vm260, %v2470
      %2495 = vst.msk [vmem:[#allocation3 + $0xe0] sm:$0xff] %vm260, %v2471
      %2496 = vst.msk [vmem:[#allocation3 + $0xf8] sm:$0xff] %vm260, %v2472
      %2497 = vst.msk [vmem:[#allocation3 + $0x110] sm:$0xff] %vm260, %v2473
      %2498 = vst.msk [vmem:[#allocation3 + $0x128] sm:$0xff] %vm260, %v2474
      %2499 = vst.msk [vmem:[#allocation3 + $0x140] sm:$0xff] %vm260, %v2475
      %2500 = vst.msk [vmem:[#allocation3 + $0x158] sm:$0xff] %vm260, %v2476
      %2501 = vst.msk [vmem:[#allocation3 + $0x170] sm:$0xff] %vm260, %v2477
      %2502 = vst.msk [vmem:[#allocation3 + $0x188] sm:$0xff] %vm260, %v2478
      %2503 = vst.msk [vmem:[#allocation3 + $0x1a0] sm:$0xff] %vm260, %v2479
      %2504 = vst.msk [vmem:[#allocation3 + $0x1b8] sm:$0xff] %vm260, %v2480
      %2505 = vst.msk [vmem:[#allocation3 + $0x1d0] sm:$0xff] %vm260, %v2481
      %2506 = vst.msk [vmem:[#allocation3 + $0x1e8] sm:$0xff] %vm260, %v2482
      %2507 = vst.msk [vmem:[#allocation3 + $0x200] sm:$0xff] %vm260, %v2483
      %2508 = vst.msk [vmem:[#allocation3 + $0x218] sm:$0xff] %vm260, %v2484
      %2509 = vst.msk [vmem:[#allocation3 + $0x230] sm:$0xff] %vm260, %v2485
      %v2510 = vld [vmem:[%s269 + $0x2] sm:$0xff]
      %v2511 = vld [vmem:[%s269 + $0xa] sm:$0xff]
      %v2512 = vld [vmem:[%s269 + $0x1a] sm:$0xff]
      %v2513 = vld [vmem:[%s269 + $0x22] sm:$0xff]
      %v2514 = vld [vmem:[%s269 + $0x32] sm:$0xff]
      %v2515 = vld [vmem:[%s269 + $0x3a] sm:$0xff]
      %v2516 = vld [vmem:[%s269 + $0x4a] sm:$0xff]
      %v2517 = vld [vmem:[%s269 + $0x52] sm:$0xff]
      %v2518 = vld [vmem:[%s269 + $0x62] sm:$0xff]
      %v2519 = vld [vmem:[%s269 + $0x6a] sm:$0xff]
      %v2520 = vld [vmem:[%s269 + $0x7a] sm:$0xff]
      %v2521 = vld [vmem:[%s269 + $0x82] sm:$0xff]
      %v2522 = vld [vmem:[%s269 + $0x92] sm:$0xff]
      %v2523 = vld [vmem:[%s269 + $0x9a] sm:$0xff]
      %v2524 = vld [vmem:[%s269 + $0xaa] sm:$0xff]
      %v2525 = vld [vmem:[%s269 + $0xb2] sm:$0xff]
      %v2526 = vld [vmem:[%s269 + $0xc2] sm:$0xff]
      %v2527 = vld [vmem:[%s269 + $0xca] sm:$0xff]
      %v2528 = vld [vmem:[%s269 + $0xda] sm:$0xff]
      %v2529 = vld [vmem:[%s269 + $0xe2] sm:$0xff]
      %v2530 = vld [vmem:[%s269 + $0xf2] sm:$0xff]
      %v2531 = vld [vmem:[%s269 + $0xfa] sm:$0xff]
      %v2532 = vld [vmem:[%s269 + $0x10a] sm:$0xff]
      %v2533 = vld [vmem:[%s269 + $0x112] sm:$0xff]
      %2558 = vrot.lane.b32.xlu0 %v2510, 32
      %v2559 = vpop.permute.xlu0 %2558
      %2560 = vrot.lane.b32.xlu0 %v2511, 32
      %v2561 = vpop.permute.xlu0 %2560
      %2562 = vrot.lane.b32.xlu0 %v2512, 32
      %v2563 = vpop.permute.xlu0 %2562
      %2564 = vrot.lane.b32.xlu0 %v2513, 32
      %v2565 = vpop.permute.xlu0 %2564
      %2566 = vrot.lane.b32.xlu0 %v2514, 32
      %v2567 = vpop.permute.xlu0 %2566
      %2568 = vrot.lane.b32.xlu0 %v2515, 32
      %v2569 = vpop.permute.xlu0 %2568
      %2570 = vrot.lane.b32.xlu0 %v2516, 32
      %v2571 = vpop.permute.xlu0 %2570
      %2572 = vrot.lane.b32.xlu0 %v2517, 32
      %v2573 = vpop.permute.xlu0 %2572
      %2574 = vrot.lane.b32.xlu0 %v2518, 32
      %v2575 = vpop.permute.xlu0 %2574
      %2576 = vrot.lane.b32.xlu0 %v2519, 32
      %v2577 = vpop.permute.xlu0 %2576
      %2578 = vrot.lane.b32.xlu0 %v2520, 32
      %v2579 = vpop.permute.xlu0 %2578
      %2580 = vrot.lane.b32.xlu0 %v2521, 32
      %v2581 = vpop.permute.xlu0 %2580
      %2582 = vrot.lane.b32.xlu0 %v2522, 32
      %v2583 = vpop.permute.xlu0 %2582
      %2584 = vrot.lane.b32.xlu0 %v2523, 32
      %v2585 = vpop.permute.xlu0 %2584
      %2586 = vrot.lane.b32.xlu0 %v2524, 32
      %v2587 = vpop.permute.xlu0 %2586
      %2588 = vrot.lane.b32.xlu0 %v2525, 32
      %v2589 = vpop.permute.xlu0 %2588
      %2590 = vrot.lane.b32.xlu0 %v2526, 32
      %v2591 = vpop.permute.xlu0 %2590
      %2592 = vrot.lane.b32.xlu0 %v2527, 32
      %v2593 = vpop.permute.xlu0 %2592
      %2594 = vrot.lane.b32.xlu0 %v2528, 32
      %v2595 = vpop.permute.xlu0 %2594
      %2596 = vrot.lane.b32.xlu0 %v2529, 32
      %v2597 = vpop.permute.xlu0 %2596
      %2598 = vrot.lane.b32.xlu0 %v2530, 32
      %v2599 = vpop.permute.xlu0 %2598
      %2600 = vrot.lane.b32.xlu0 %v2531, 32
      %v2601 = vpop.permute.xlu0 %2600
      %2602 = vrot.lane.b32.xlu0 %v2532, 32
      %v2603 = vpop.permute.xlu0 %2602
      %2604 = vrot.lane.b32.xlu0 %v2533, 32
      %v2605 = vpop.permute.xlu0 %2604
      %2630 = vst.msk [vmem:[#allocation3 + $0x8] sm:$0xff] %vm537, %v2559
      %2631 = vst.msk [vmem:[#allocation3 + $0x20] sm:$0xff] %vm537, %v2561
      %2632 = vst.msk [vmem:[#allocation3 + $0x38] sm:$0xff] %vm537, %v2563
      %2633 = vst.msk [vmem:[#allocation3 + $0x50] sm:$0xff] %vm537, %v2565
      %2634 = vst.msk [vmem:[#allocation3 + $0x68] sm:$0xff] %vm537, %v2567
      %2635 = vst.msk [vmem:[#allocation3 + $0x80] sm:$0xff] %vm537, %v2569
      %2636 = vst.msk [vmem:[#allocation3 + $0x98] sm:$0xff] %vm537, %v2571
      %2637 = vst.msk [vmem:[#allocation3 + $0xb0] sm:$0xff] %vm537, %v2573
      %2638 = vst.msk [vmem:[#allocation3 + $0xc8] sm:$0xff] %vm537, %v2575
      %2639 = vst.msk [vmem:[#allocation3 + $0xe0] sm:$0xff] %vm537, %v2577
      %2640 = vst.msk [vmem:[#allocation3 + $0xf8] sm:$0xff] %vm537, %v2579
      %2641 = vst.msk [vmem:[#allocation3 + $0x110] sm:$0xff] %vm537, %v2581
      %2642 = vst.msk [vmem:[#allocation3 + $0x128] sm:$0xff] %vm537, %v2583
      %2643 = vst.msk [vmem:[#allocation3 + $0x140] sm:$0xff] %vm537, %v2585
      %2644 = vst.msk [vmem:[#allocation3 + $0x158] sm:$0xff] %vm537, %v2587
      %2645 = vst.msk [vmem:[#allocation3 + $0x170] sm:$0xff] %vm537, %v2589
      %2646 = vst.msk [vmem:[#allocation3 + $0x188] sm:$0xff] %vm537, %v2591
      %2647 = vst.msk [vmem:[#allocation3 + $0x1a0] sm:$0xff] %vm537, %v2593
      %2648 = vst.msk [vmem:[#allocation3 + $0x1b8] sm:$0xff] %vm537, %v2595
      %2649 = vst.msk [vmem:[#allocation3 + $0x1d0] sm:$0xff] %vm537, %v2597
      %2650 = vst.msk [vmem:[#allocation3 + $0x1e8] sm:$0xff] %vm537, %v2599
      %2651 = vst.msk [vmem:[#allocation3 + $0x200] sm:$0xff] %vm537, %v2601
      %2652 = vst.msk [vmem:[#allocation3 + $0x218] sm:$0xff] %vm537, %v2603
      %2653 = vst.msk [vmem:[#allocation3 + $0x230] sm:$0xff] %vm537, %v2605
      %v2654 = vld [vmem:[%s1044] sm:$0xff]
      %v2655 = vld [vmem:[%s1044 + $0x8] sm:$0xff]
      %v2656 = vld [vmem:[%s1044 + $0x18] sm:$0xff]
      %v2657 = vld [vmem:[%s1044 + $0x20] sm:$0xff]
      %v2658 = vld [vmem:[%s1044 + $0x30] sm:$0xff]
      %v2659 = vld [vmem:[%s1044 + $0x38] sm:$0xff]
      %v2660 = vld [vmem:[%s1044 + $0x48] sm:$0xff]
      %v2661 = vld [vmem:[%s1044 + $0x50] sm:$0xff]
      %v2662 = vld [vmem:[%s1044 + $0x60] sm:$0xff]
      %v2663 = vld [vmem:[%s1044 + $0x68] sm:$0xff]
      %v2664 = vld [vmem:[%s1044 + $0x78] sm:$0xff]
      %v2665 = vld [vmem:[%s1044 + $0x80] sm:$0xff]
      %v2666 = vld [vmem:[%s1044 + $0x90] sm:$0xff]
      %v2667 = vld [vmem:[%s1044 + $0x98] sm:$0xff]
      %v2668 = vld [vmem:[%s1044 + $0xa8] sm:$0xff]
      %v2669 = vld [vmem:[%s1044 + $0xb0] sm:$0xff]
      %v2670 = vld [vmem:[%s1044 + $0xc0] sm:$0xff]
      %v2671 = vld [vmem:[%s1044 + $0xc8] sm:$0xff]
      %v2672 = vld [vmem:[%s1044 + $0xd8] sm:$0xff]
      %v2673 = vld [vmem:[%s1044 + $0xe0] sm:$0xff]
      %v2674 = vld [vmem:[%s1044 + $0xf0] sm:$0xff]
      %v2675 = vld [vmem:[%s1044 + $0xf8] sm:$0xff]
      %v2676 = vld [vmem:[%s1044 + $0x108] sm:$0xff]
      %v2677 = vld [vmem:[%s1044 + $0x110] sm:$0xff]
      %2702 = vrot.lane.b32.xlu0 %v2654, 64
      %v2703 = vpop.permute.xlu0 %2702
      %2704 = vrot.lane.b32.xlu0 %v2655, 64
      %v2705 = vpop.permute.xlu0 %2704
      %2706 = vrot.lane.b32.xlu0 %v2656, 64
      %v2707 = vpop.permute.xlu0 %2706
      %2708 = vrot.lane.b32.xlu0 %v2657, 64
      %v2709 = vpop.permute.xlu0 %2708
      %2710 = vrot.lane.b32.xlu0 %v2658, 64
      %v2711 = vpop.permute.xlu0 %2710
      %2712 = vrot.lane.b32.xlu0 %v2659, 64
      %v2713 = vpop.permute.xlu0 %2712
      %2714 = vrot.lane.b32.xlu0 %v2660, 64
      %v2715 = vpop.permute.xlu0 %2714
      %2716 = vrot.lane.b32.xlu0 %v2661, 64
      %v2717 = vpop.permute.xlu0 %2716
      %2718 = vrot.lane.b32.xlu0 %v2662, 64
      %v2719 = vpop.permute.xlu0 %2718
      %2720 = vrot.lane.b32.xlu0 %v2663, 64
      %v2721 = vpop.permute.xlu0 %2720
      %2722 = vrot.lane.b32.xlu0 %v2664, 64
      %v2723 = vpop.permute.xlu0 %2722
      %2724 = vrot.lane.b32.xlu0 %v2665, 64
      %v2725 = vpop.permute.xlu0 %2724
      %2726 = vrot.lane.b32.xlu0 %v2666, 64
      %v2727 = vpop.permute.xlu0 %2726
      %2728 = vrot.lane.b32.xlu0 %v2667, 64
      %v2729 = vpop.permute.xlu0 %2728
      %2730 = vrot.lane.b32.xlu0 %v2668, 64
      %v2731 = vpop.permute.xlu0 %2730
      %2732 = vrot.lane.b32.xlu0 %v2669, 64
      %v2733 = vpop.permute.xlu0 %2732
      %2734 = vrot.lane.b32.xlu0 %v2670, 64
      %v2735 = vpop.permute.xlu0 %2734
      %2736 = vrot.lane.b32.xlu0 %v2671, 64
      %v2737 = vpop.permute.xlu0 %2736
      %2738 = vrot.lane.b32.xlu0 %v2672, 64
      %v2739 = vpop.permute.xlu0 %2738
      %2740 = vrot.lane.b32.xlu0 %v2673, 64
      %v2741 = vpop.permute.xlu0 %2740
      %2742 = vrot.lane.b32.xlu0 %v2674, 64
      %v2743 = vpop.permute.xlu0 %2742
      %2744 = vrot.lane.b32.xlu0 %v2675, 64
      %v2745 = vpop.permute.xlu0 %2744
      %2746 = vrot.lane.b32.xlu0 %v2676, 64
      %v2747 = vpop.permute.xlu0 %2746
      %2748 = vrot.lane.b32.xlu0 %v2677, 64
      %v2749 = vpop.permute.xlu0 %2748
      %2774 = vst.msk [vmem:[#allocation3 + $0x8] sm:$0xff] %vm682, %v2703
      %2775 = vst.msk [vmem:[#allocation3 + $0x20] sm:$0xff] %vm682, %v2705
      %2776 = vst.msk [vmem:[#allocation3 + $0x38] sm:$0xff] %vm682, %v2707
      %2777 = vst.msk [vmem:[#allocation3 + $0x50] sm:$0xff] %vm682, %v2709
      %2778 = vst.msk [vmem:[#allocation3 + $0x68] sm:$0xff] %vm682, %v2711
      %2779 = vst.msk [vmem:[#allocation3 + $0x80] sm:$0xff] %vm682, %v2713
      %2780 = vst.msk [vmem:[#allocation3 + $0x98] sm:$0xff] %vm682, %v2715
      %2781 = vst.msk [vmem:[#allocation3 + $0xb0] sm:$0xff] %vm682, %v2717
      %2782 = vst.msk [vmem:[#allocation3 + $0xc8] sm:$0xff] %vm682, %v2719
      %2783 = vst.msk [vmem:[#allocation3 + $0xe0] sm:$0xff] %vm682, %v2721
      %2784 = vst.msk [vmem:[#allocation3 + $0xf8] sm:$0xff] %vm682, %v2723
      %2785 = vst.msk [vmem:[#allocation3 + $0x110] sm:$0xff] %vm682, %v2725
      %2786 = vst.msk [vmem:[#allocation3 + $0x128] sm:$0xff] %vm682, %v2727
      %2787 = vst.msk [vmem:[#allocation3 + $0x140] sm:$0xff] %vm682, %v2729
      %2788 = vst.msk [vmem:[#allocation3 + $0x158] sm:$0xff] %vm682, %v2731
      %2789 = vst.msk [vmem:[#allocation3 + $0x170] sm:$0xff] %vm682, %v2733
      %2790 = vst.msk [vmem:[#allocation3 + $0x188] sm:$0xff] %vm682, %v2735
      %2791 = vst.msk [vmem:[#allocation3 + $0x1a0] sm:$0xff] %vm682, %v2737
      %2792 = vst.msk [vmem:[#allocation3 + $0x1b8] sm:$0xff] %vm682, %v2739
      %2793 = vst.msk [vmem:[#allocation3 + $0x1d0] sm:$0xff] %vm682, %v2741
      %2794 = vst.msk [vmem:[#allocation3 + $0x1e8] sm:$0xff] %vm682, %v2743
      %2795 = vst.msk [vmem:[#allocation3 + $0x200] sm:$0xff] %vm682, %v2745
      %2796 = vst.msk [vmem:[#allocation3 + $0x218] sm:$0xff] %vm682, %v2747
      %2797 = vst.msk [vmem:[#allocation3 + $0x230] sm:$0xff] %vm682, %v2749
      %v2798 = vld [vmem:[%s1044 + $0x1] sm:$0xff]
      %v2799 = vld [vmem:[%s1044 + $0x9] sm:$0xff]
      %v2800 = vld [vmem:[%s1044 + $0x19] sm:$0xff]
      %v2801 = vld [vmem:[%s1044 + $0x21] sm:$0xff]
      %v2802 = vld [vmem:[%s1044 + $0x31] sm:$0xff]
      %v2803 = vld [vmem:[%s1044 + $0x39] sm:$0xff]
      %v2804 = vld [vmem:[%s1044 + $0x49] sm:$0xff]
      %v2805 = vld [vmem:[%s1044 + $0x51] sm:$0xff]
      %v2806 = vld [vmem:[%s1044 + $0x61] sm:$0xff]
      %v2807 = vld [vmem:[%s1044 + $0x69] sm:$0xff]
      %v2808 = vld [vmem:[%s1044 + $0x79] sm:$0xff]
      %v2809 = vld [vmem:[%s1044 + $0x81] sm:$0xff]
      %v2810 = vld [vmem:[%s1044 + $0x91] sm:$0xff]
      %v2811 = vld [vmem:[%s1044 + $0x99] sm:$0xff]
      %v2812 = vld [vmem:[%s1044 + $0xa9] sm:$0xff]
      %v2813 = vld [vmem:[%s1044 + $0xb1] sm:$0xff]
      %v2814 = vld [vmem:[%s1044 + $0xc1] sm:$0xff]
      %v2815 = vld [vmem:[%s1044 + $0xc9] sm:$0xff]
      %v2816 = vld [vmem:[%s1044 + $0xd9] sm:$0xff]
      %v2817 = vld [vmem:[%s1044 + $0xe1] sm:$0xff]
      %v2818 = vld [vmem:[%s1044 + $0xf1] sm:$0xff]
      %v2819 = vld [vmem:[%s1044 + $0xf9] sm:$0xff]
      %v2820 = vld [vmem:[%s1044 + $0x109] sm:$0xff]
      %v2821 = vld [vmem:[%s1044 + $0x111] sm:$0xff]
      %2846 = vrot.lane.b32.xlu0 %v2798, 96
      %v2847 = vpop.permute.xlu0 %2846
      %2848 = vrot.lane.b32.xlu0 %v2799, 96
      %v2849 = vpop.permute.xlu0 %2848
      %2850 = vrot.lane.b32.xlu0 %v2800, 96
      %v2851 = vpop.permute.xlu0 %2850
      %2852 = vrot.lane.b32.xlu0 %v2801, 96
      %v2853 = vpop.permute.xlu0 %2852
      %2854 = vrot.lane.b32.xlu0 %v2802, 96
      %v2855 = vpop.permute.xlu0 %2854
      %2856 = vrot.lane.b32.xlu0 %v2803, 96
      %v2857 = vpop.permute.xlu0 %2856
      %2858 = vrot.lane.b32.xlu0 %v2804, 96
      %v2859 = vpop.permute.xlu0 %2858
      %2860 = vrot.lane.b32.xlu0 %v2805, 96
      %v2861 = vpop.permute.xlu0 %2860
      %2862 = vrot.lane.b32.xlu0 %v2806, 96
      %v2863 = vpop.permute.xlu0 %2862
      %2864 = vrot.lane.b32.xlu0 %v2807, 96
      %v2865 = vpop.permute.xlu0 %2864
      %2866 = vrot.lane.b32.xlu0 %v2808, 96
      %v2867 = vpop.permute.xlu0 %2866
      %2868 = vrot.lane.b32.xlu0 %v2809, 96
      %v2869 = vpop.permute.xlu0 %2868
      %2870 = vrot.lane.b32.xlu0 %v2810, 96
      %v2871 = vpop.permute.xlu0 %2870
      %2872 = vrot.lane.b32.xlu0 %v2811, 96
      %v2873 = vpop.permute.xlu0 %2872
      %2874 = vrot.lane.b32.xlu0 %v2812, 96
      %v2875 = vpop.permute.xlu0 %2874
      %2876 = vrot.lane.b32.xlu0 %v2813, 96
      %v2877 = vpop.permute.xlu0 %2876
      %2878 = vrot.lane.b32.xlu0 %v2814, 96
      %v2879 = vpop.permute.xlu0 %2878
      %2880 = vrot.lane.b32.xlu0 %v2815, 96
      %v2881 = vpop.permute.xlu0 %2880
      %2882 = vrot.lane.b32.xlu0 %v2816, 96
      %v2883 = vpop.permute.xlu0 %2882
      %2884 = vrot.lane.b32.xlu0 %v2817, 96
      %v2885 = vpop.permute.xlu0 %2884
      %2886 = vrot.lane.b32.xlu0 %v2818, 96
      %v2887 = vpop.permute.xlu0 %2886
      %2888 = vrot.lane.b32.xlu0 %v2819, 96
      %v2889 = vpop.permute.xlu0 %2888
      %2890 = vrot.lane.b32.xlu0 %v2820, 96
      %v2891 = vpop.permute.xlu0 %2890
      %2892 = vrot.lane.b32.xlu0 %v2821, 96
      %v2893 = vpop.permute.xlu0 %2892
      %2918 = vst.msk [vmem:[#allocation3 + $0x8] sm:$0xff] %vm827, %v2847
      %2919 = vst.msk [vmem:[#allocation3 + $0x20] sm:$0xff] %vm827, %v2849
      %2920 = vst.msk [vmem:[#allocation3 + $0x38] sm:$0xff] %vm827, %v2851
      %2921 = vst.msk [vmem:[#allocation3 + $0x50] sm:$0xff] %vm827, %v2853
      %2922 = vst.msk [vmem:[#allocation3 + $0x68] sm:$0xff] %vm827, %v2855
      %2923 = vst.msk [vmem:[#allocation3 + $0x80] sm:$0xff] %vm827, %v2857
      %2924 = vst.msk [vmem:[#allocation3 + $0x98] sm:$0xff] %vm827, %v2859
      %2925 = vst.msk [vmem:[#allocation3 + $0xb0] sm:$0xff] %vm827, %v2861
      %2926 = vst.msk [vmem:[#allocation3 + $0xc8] sm:$0xff] %vm827, %v2863
      %2927 = vst.msk [vmem:[#allocation3 + $0xe0] sm:$0xff] %vm827, %v2865
      %2928 = vst.msk [vmem:[#allocation3 + $0xf8] sm:$0xff] %vm827, %v2867
      %2929 = vst.msk [vmem:[#allocation3 + $0x110] sm:$0xff] %vm827, %v2869
      %2930 = vst.msk [vmem:[#allocation3 + $0x128] sm:$0xff] %vm827, %v2871
      %2931 = vst.msk [vmem:[#allocation3 + $0x140] sm:$0xff] %vm827, %v2873
      %2932 = vst.msk [vmem:[#allocation3 + $0x158] sm:$0xff] %vm827, %v2875
      %2933 = vst.msk [vmem:[#allocation3 + $0x170] sm:$0xff] %vm827, %v2877
      %2934 = vst.msk [vmem:[#allocation3 + $0x188] sm:$0xff] %vm827, %v2879
      %2935 = vst.msk [vmem:[#allocation3 + $0x1a0] sm:$0xff] %vm827, %v2881
      %2936 = vst.msk [vmem:[#allocation3 + $0x1b8] sm:$0xff] %vm827, %v2883
      %2937 = vst.msk [vmem:[#allocation3 + $0x1d0] sm:$0xff] %vm827, %v2885
      %2938 = vst.msk [vmem:[#allocation3 + $0x1e8] sm:$0xff] %vm827, %v2887
      %2939 = vst.msk [vmem:[#allocation3 + $0x200] sm:$0xff] %vm827, %v2889
      %2940 = vst.msk [vmem:[#allocation3 + $0x218] sm:$0xff] %vm827, %v2891
      %2941 = vst.msk [vmem:[#allocation3 + $0x230] sm:$0xff] %vm827, %v2893
      %v2942 = vld [vmem:[%s1044 + $0x2] sm:$0xff]
      %v2943 = vld [vmem:[%s1044 + $0xa] sm:$0xff]
      %v2944 = vld [vmem:[%s1044 + $0x1a] sm:$0xff]
      %v2945 = vld [vmem:[%s1044 + $0x22] sm:$0xff]
      %v2946 = vld [vmem:[%s1044 + $0x32] sm:$0xff]
      %v2947 = vld [vmem:[%s1044 + $0x3a] sm:$0xff]
      %v2948 = vld [vmem:[%s1044 + $0x4a] sm:$0xff]
      %v2949 = vld [vmem:[%s1044 + $0x52] sm:$0xff]
      %v2950 = vld [vmem:[%s1044 + $0x62] sm:$0xff]
      %v2951 = vld [vmem:[%s1044 + $0x6a] sm:$0xff]
      %v2952 = vld [vmem:[%s1044 + $0x7a] sm:$0xff]
      %v2953 = vld [vmem:[%s1044 + $0x82] sm:$0xff]
      %v2954 = vld [vmem:[%s1044 + $0x92] sm:$0xff]
      %v2955 = vld [vmem:[%s1044 + $0x9a] sm:$0xff]
      %v2956 = vld [vmem:[%s1044 + $0xaa] sm:$0xff]
      %v2957 = vld [vmem:[%s1044 + $0xb2] sm:$0xff]
      %v2958 = vld [vmem:[%s1044 + $0xc2] sm:$0xff]
      %v2959 = vld [vmem:[%s1044 + $0xca] sm:$0xff]
      %v2960 = vld [vmem:[%s1044 + $0xda] sm:$0xff]
      %v2961 = vld [vmem:[%s1044 + $0xe2] sm:$0xff]
      %v2962 = vld [vmem:[%s1044 + $0xf2] sm:$0xff]
      %v2963 = vld [vmem:[%s1044 + $0xfa] sm:$0xff]
      %v2964 = vld [vmem:[%s1044 + $0x10a] sm:$0xff]
      %v2965 = vld [vmem:[%s1044 + $0x112] sm:$0xff]
      %2966 = vst.msk [vmem:[#allocation3 + $0x10] sm:$0xff] %vm260, %v2942
      %2967 = vst.msk [vmem:[#allocation3 + $0x28] sm:$0xff] %vm260, %v2943
      %2968 = vst.msk [vmem:[#allocation3 + $0x40] sm:$0xff] %vm260, %v2944
      %2969 = vst.msk [vmem:[#allocation3 + $0x58] sm:$0xff] %vm260, %v2945
      %2970 = vst.msk [vmem:[#allocation3 + $0x70] sm:$0xff] %vm260, %v2946
      %2971 = vst.msk [vmem:[#allocation3 + $0x88] sm:$0xff] %vm260, %v2947
      %2972 = vst.msk [vmem:[#allocation3 + $0xa0] sm:$0xff] %vm260, %v2948
      %2973 = vst.msk [vmem:[#allocation3 + $0xb8] sm:$0xff] %vm260, %v2949
      %2974 = vst.msk [vmem:[#allocation3 + $0xd0] sm:$0xff] %vm260, %v2950
      %2975 = vst.msk [vmem:[#allocation3 + $0xe8] sm:$0xff] %vm260, %v2951
      %2976 = vst.msk [vmem:[#allocation3 + $0x100] sm:$0xff] %vm260, %v2952
      %2977 = vst.msk [vmem:[#allocation3 + $0x118] sm:$0xff] %vm260, %v2953
      %2978 = vst.msk [vmem:[#allocation3 + $0x130] sm:$0xff] %vm260, %v2954
      %2979 = vst.msk [vmem:[#allocation3 + $0x148] sm:$0xff] %vm260, %v2955
      %2980 = vst.msk [vmem:[#allocation3 + $0x160] sm:$0xff] %vm260, %v2956
      %2981 = vst.msk [vmem:[#allocation3 + $0x178] sm:$0xff] %vm260, %v2957
      %2982 = vst.msk [vmem:[#allocation3 + $0x190] sm:$0xff] %vm260, %v2958
      %2983 = vst.msk [vmem:[#allocation3 + $0x1a8] sm:$0xff] %vm260, %v2959
      %2984 = vst.msk [vmem:[#allocation3 + $0x1c0] sm:$0xff] %vm260, %v2960
      %2985 = vst.msk [vmem:[#allocation3 + $0x1d8] sm:$0xff] %vm260, %v2961
      %2986 = vst.msk [vmem:[#allocation3 + $0x1f0] sm:$0xff] %vm260, %v2962
      %2987 = vst.msk [vmem:[#allocation3 + $0x208] sm:$0xff] %vm260, %v2963
      %2988 = vst.msk [vmem:[#allocation3 + $0x220] sm:$0xff] %vm260, %v2964
      %2989 = vst.msk [vmem:[#allocation3 + $0x238] sm:$0xff] %vm260, %v2965
      %v2990 = vld [vmem:[#allocation3] sm:$0xff]
      %v2991 = vld [vmem:[#allocation3 + $0x8] sm:$0xff]
      %v2992 = vld [vmem:[#allocation3 + $0x10] sm:$0xff]
      %v2993 = vld [vmem:[#allocation3 + $0x18] sm:$0xff]
      %v2994 = vld [vmem:[#allocation3 + $0x20] sm:$0xff]
      %v2995 = vld [vmem:[#allocation3 + $0x28] sm:$0xff]
      %v2996 = vld [vmem:[#allocation3 + $0x30] sm:$0xff]
      %v2997 = vld [vmem:[#allocation3 + $0x38] sm:$0xff]
      %v2998 = vld [vmem:[#allocation3 + $0x40] sm:$0xff]
      %v2999 = vld [vmem:[#allocation3 + $0x48] sm:$0xff]
      %v3000 = vld [vmem:[#allocation3 + $0x50] sm:$0xff]
      %v3001 = vld [vmem:[#allocation3 + $0x58] sm:$0xff]
      %v3002 = vld [vmem:[#allocation3 + $0x60] sm:$0xff]
      %v3003 = vld [vmem:[#allocation3 + $0x68] sm:$0xff]
      %v3004 = vld [vmem:[#allocation3 + $0x70] sm:$0xff]
      %v3005 = vld [vmem:[#allocation3 + $0x78] sm:$0xff]
      %v3006 = vld [vmem:[#allocation3 + $0x80] sm:$0xff]
      %v3007 = vld [vmem:[#allocation3 + $0x88] sm:$0xff]
      %v3008 = vld [vmem:[#allocation3 + $0x90] sm:$0xff]
      %v3009 = vld [vmem:[#allocation3 + $0x98] sm:$0xff]
      %v3010 = vld [vmem:[#allocation3 + $0xa0] sm:$0xff]
      %v3011 = vld [vmem:[#allocation3 + $0xa8] sm:$0xff]
      %v3012 = vld [vmem:[#allocation3 + $0xb0] sm:$0xff]
      %v3013 = vld [vmem:[#allocation3 + $0xb8] sm:$0xff]
      %v3014 = vld [vmem:[#allocation3 + $0xc0] sm:$0xff]
      %v3015 = vld [vmem:[#allocation3 + $0xc8] sm:$0xff]
      %v3016 = vld [vmem:[#allocation3 + $0xd0] sm:$0xff]
      %v3017 = vld [vmem:[#allocation3 + $0xd8] sm:$0xff]
      %v3018 = vld [vmem:[#allocation3 + $0xe0] sm:$0xff]
      %v3019 = vld [vmem:[#allocation3 + $0xe8] sm:$0xff]
      %v3020 = vld [vmem:[#allocation3 + $0xf0] sm:$0xff]
      %v3021 = vld [vmem:[#allocation3 + $0xf8] sm:$0xff]
      %v3022 = vld [vmem:[#allocation3 + $0x100] sm:$0xff]
      %v3023 = vld [vmem:[#allocation3 + $0x108] sm:$0xff]
      %v3024 = vld [vmem:[#allocation3 + $0x110] sm:$0xff]
      %v3025 = vld [vmem:[#allocation3 + $0x118] sm:$0xff]
      %v3026 = vld [vmem:[#allocation3 + $0x120] sm:$0xff]
      %v3027 = vld [vmem:[#allocation3 + $0x128] sm:$0xff]
      %v3028 = vld [vmem:[#allocation3 + $0x130] sm:$0xff]
      %v3029 = vld [vmem:[#allocation3 + $0x138] sm:$0xff]
      %v3030 = vld [vmem:[#allocation3 + $0x140] sm:$0xff]
      %v3031 = vld [vmem:[#allocation3 + $0x148] sm:$0xff]
      %v3032 = vld [vmem:[#allocation3 + $0x150] sm:$0xff]
      %v3033 = vld [vmem:[#allocation3 + $0x158] sm:$0xff]
      %v3034 = vld [vmem:[#allocation3 + $0x160] sm:$0xff]
      %v3035 = vld [vmem:[#allocation3 + $0x168] sm:$0xff]
      %v3036 = vld [vmem:[#allocation3 + $0x170] sm:$0xff]
      %v3037 = vld [vmem:[#allocation3 + $0x178] sm:$0xff]
      %v3038 = vld [vmem:[#allocation3 + $0x180] sm:$0xff]
      %v3039 = vld [vmem:[#allocation3 + $0x188] sm:$0xff]
      %v3040 = vld [vmem:[#allocation3 + $0x190] sm:$0xff]
      %v3041 = vld [vmem:[#allocation3 + $0x198] sm:$0xff]
      %v3042 = vld [vmem:[#allocation3 + $0x1a0] sm:$0xff]
      %v3043 = vld [vmem:[#allocation3 + $0x1a8] sm:$0xff]
      %v3044 = vld [vmem:[#allocation3 + $0x1b0] sm:$0xff]
      %v3045 = vld [vmem:[#allocation3 + $0x1b8] sm:$0xff]
      %v3046 = vld [vmem:[#allocation3 + $0x1c0] sm:$0xff]
      %v3047 = vld [vmem:[#allocation3 + $0x1c8] sm:$0xff]
      %v3048 = vld [vmem:[#allocation3 + $0x1d0] sm:$0xff]
      %v3049 = vld [vmem:[#allocation3 + $0x1d8] sm:$0xff]
      %v3050 = vld [vmem:[#allocation3 + $0x1e0] sm:$0xff]
      %v3051 = vld [vmem:[#allocation3 + $0x1e8] sm:$0xff]
      %v3052 = vld [vmem:[#allocation3 + $0x1f0] sm:$0xff]
      %v3053 = vld [vmem:[#allocation3 + $0x1f8] sm:$0xff]
      %v3054 = vld [vmem:[#allocation3 + $0x200] sm:$0xff]
      %v3055 = vld [vmem:[#allocation3 + $0x208] sm:$0xff]
      %v3056 = vld [vmem:[#allocation3 + $0x210] sm:$0xff]
      %v3057 = vld [vmem:[#allocation3 + $0x218] sm:$0xff]
      %v3058 = vld [vmem:[#allocation3 + $0x220] sm:$0xff]
      %v3059 = vld [vmem:[#allocation3 + $0x228] sm:$0xff]
      %v3060 = vld [vmem:[#allocation3 + $0x230] sm:$0xff]
      %v3061 = vld [vmem:[#allocation3 + $0x238] sm:$0xff]
      %v3062 = vpack.c.bf16 %v2993, %v2990
      %v3063 = vpack.c.bf16 %v2994, %v2991
      %v3064 = vpack.c.bf16 %v2995, %v2992
      %v3065 = vpack.c.bf16 %v2999, %v2996
      %v3066 = vpack.c.bf16 %v3000, %v2997
      %v3067 = vpack.c.bf16 %v3001, %v2998
      %v3068 = vpack.c.bf16 %v3005, %v3002
      %v3069 = vpack.c.bf16 %v3006, %v3003
      %v3070 = vpack.c.bf16 %v3007, %v3004
      %v3071 = vpack.c.bf16 %v3011, %v3008
      %v3072 = vpack.c.bf16 %v3012, %v3009
      %v3073 = vpack.c.bf16 %v3013, %v3010
      %v3074 = vpack.c.bf16 %v3017, %v3014
      %v3075 = vpack.c.bf16 %v3018, %v3015
      %v3076 = vpack.c.bf16 %v3019, %v3016
      %v3077 = vpack.c.bf16 %v3023, %v3020
      %v3078 = vpack.c.bf16 %v3024, %v3021
      %v3079 = vpack.c.bf16 %v3025, %v3022
      %v3080 = vpack.c.bf16 %v3029, %v3026
      %v3081 = vpack.c.bf16 %v3030, %v3027
      %v3082 = vpack.c.bf16 %v3031, %v3028
      %v3083 = vpack.c.bf16 %v3035, %v3032
      %v3084 = vpack.c.bf16 %v3036, %v3033
      %v3085 = vpack.c.bf16 %v3037, %v3034
      %v3086 = vpack.c.bf16 %v3041, %v3038
      %v3087 = vpack.c.bf16 %v3042, %v3039
      %v3088 = vpack.c.bf16 %v3043, %v3040
      %v3089 = vpack.c.bf16 %v3047, %v3044
      %v3090 = vpack.c.bf16 %v3048, %v3045
      %v3091 = vpack.c.bf16 %v3049, %v3046
      %v3092 = vpack.c.bf16 %v3053, %v3050
      %v3093 = vpack.c.bf16 %v3054, %v3051
      %v3094 = vpack.c.bf16 %v3055, %v3052
      %v3095 = vpack.c.bf16 %v3059, %v3056
      %v3096 = vpack.c.bf16 %v3060, %v3057
      %v3097 = vpack.c.bf16 %v3061, %v3058
      %s3098 = scalar_lea.vmem %s1, 144
      %v3099 = vld [vmem:[%s3098] sm:$0xf]
      %v3100 = vld [vmem:[%s3098 + $0x4] sm:$0xf]
      %v3101 = vld [vmem:[%s3098 + $0x8] sm:$0xf]
      %v3102 = vld [vmem:[%s3098 + $0xc] sm:$0xf]
      %v3103 = vld [vmem:[%s3098 + $0x10] sm:$0xf]
      %v3104 = vld [vmem:[%s3098 + $0x14] sm:$0xf]
      %v3105 = vld [vmem:[%s3098 + $0x18] sm:$0xf]
      %v3106 = vld [vmem:[%s3098 + $0x1c] sm:$0xf]
      %v3107 = vld [vmem:[%s3098 + $0x20] sm:$0xf]
      %v3108 = vld [vmem:[%s3098 + $0x24] sm:$0xf]
      %v3109 = vld [vmem:[%s3098 + $0x28] sm:$0xf]
      %v3110 = vld [vmem:[%s3098 + $0x2c] sm:$0xf]
      %v3111 = vld [vmem:[%s3098 + $0x30] sm:$0xf]
      %v3112 = vld [vmem:[%s3098 + $0x34] sm:$0xf]
      %v3113 = vld [vmem:[%s3098 + $0x38] sm:$0xf]
      %v3114 = vld [vmem:[%s3098 + $0x3c] sm:$0xf]
      %v3115 = vld [vmem:[%s3098 + $0x40] sm:$0xf]
      %v3116 = vld [vmem:[%s3098 + $0x44] sm:$0xf]
      %v3117 = vld [vmem:[%s3098 + $0x48] sm:$0xf]
      %v3118 = vld [vmem:[%s3098 + $0x4c] sm:$0xf]
      %v3119 = vld [vmem:[%s3098 + $0x50] sm:$0xf]
      %v3120 = vld [vmem:[%s3098 + $0x54] sm:$0xf]
      %v3121 = vld [vmem:[%s3098 + $0x58] sm:$0xf]
      %v3122 = vld [vmem:[%s3098 + $0x5c] sm:$0xf]
      %v3123 = vld [vmem:[%s3098 + $0x60] sm:$0xf]
      %v3124 = vld [vmem:[%s3098 + $0x64] sm:$0xf]
      %v3125 = vld [vmem:[%s3098 + $0x68] sm:$0xf]
      %v3126 = vld [vmem:[%s3098 + $0x6c] sm:$0xf]
      %v3127 = vld [vmem:[%s3098 + $0x70] sm:$0xf]
      %v3128 = vld [vmem:[%s3098 + $0x74] sm:$0xf]
      %v3129 = vld [vmem:[%s3098 + $0x78] sm:$0xf]
      %v3130 = vld [vmem:[%s3098 + $0x7c] sm:$0xf]
      %v3131 = vld [vmem:[%s3098 + $0x80] sm:$0xf]
      %v3132 = vld [vmem:[%s3098 + $0x84] sm:$0xf]
      %v3133 = vld [vmem:[%s3098 + $0x88] sm:$0xf]
      %v3134 = vld [vmem:[%s3098 + $0x8c] sm:$0xf]
      %s3135 = scalar_lea.vmem %s2, 1
      %v3136 = vld [vmem:[%s3135] sm:$0x1]
      %v3138 = vlaneseq
      %v3139 = vshrl.u32 %v3138, 7
      %v3140 = vsub.s32 0, %v3139
      %v3141 = vrot.slane %v3136, %v3140
      %v3179 = vunpack.c.l.b16 %v3099
      %v3180 = vunpack.c.l.b16 %v3100
      %v3181 = vunpack.c.l.b16 %v3101
      %v3182 = vunpack.c.l.b16 %v3102
      %v3183 = vunpack.c.l.b16 %v3103
      %v3184 = vunpack.c.l.b16 %v3104
      %v3185 = vunpack.c.l.b16 %v3105
      %v3186 = vunpack.c.l.b16 %v3106
      %v3187 = vunpack.c.l.b16 %v3107
      %v3188 = vunpack.c.l.b16 %v3108
      %v3189 = vunpack.c.l.b16 %v3109
      %v3190 = vunpack.c.l.b16 %v3110
      %v3191 = vunpack.c.l.b16 %v3111
      %v3192 = vunpack.c.l.b16 %v3112
      %v3193 = vunpack.c.l.b16 %v3113
      %v3194 = vunpack.c.l.b16 %v3114
      %v3195 = vunpack.c.l.b16 %v3115
      %v3196 = vunpack.c.l.b16 %v3116
      %v3197 = vunpack.c.l.b16 %v3117
      %v3198 = vunpack.c.l.b16 %v3118
      %v3199 = vunpack.c.l.b16 %v3119
      %v3200 = vunpack.c.l.b16 %v3120
      %v3201 = vunpack.c.l.b16 %v3121
      %v3202 = vunpack.c.l.b16 %v3122
      %v3203 = vunpack.c.l.b16 %v3123
      %v3204 = vunpack.c.l.b16 %v3124
      %v3205 = vunpack.c.l.b16 %v3125
      %v3206 = vunpack.c.l.b16 %v3126
      %v3207 = vunpack.c.l.b16 %v3127
      %v3208 = vunpack.c.l.b16 %v3128
      %v3209 = vunpack.c.l.b16 %v3129
      %v3210 = vunpack.c.l.b16 %v3130
      %v3211 = vunpack.c.l.b16 %v3131
      %v3212 = vunpack.c.l.b16 %v3132
      %v3213 = vunpack.c.l.b16 %v3133
      %v3214 = vunpack.c.l.b16 %v3134
      %v3215 = vpack.c.b16 %v3180, %v3179
      %v3216 = vpack.c.b16 %v3182, %v3181
      %v3217 = vpack.c.b16 %v3184, %v3183
      %v3218 = vpack.c.b16 %v3186, %v3185
      %v3219 = vpack.c.b16 %v3188, %v3187
      %v3220 = vpack.c.b16 %v3190, %v3189
      %v3221 = vpack.c.b16 %v3192, %v3191
      %v3222 = vpack.c.b16 %v3194, %v3193
      %v3223 = vpack.c.b16 %v3196, %v3195
      %v3224 = vpack.c.b16 %v3198, %v3197
      %v3225 = vpack.c.b16 %v3200, %v3199
      %v3226 = vpack.c.b16 %v3202, %v3201
      %v3227 = vpack.c.b16 %v3204, %v3203
      %v3228 = vpack.c.b16 %v3206, %v3205
      %v3229 = vpack.c.b16 %v3208, %v3207
      %v3230 = vpack.c.b16 %v3210, %v3209
      %v3231 = vpack.c.b16 %v3212, %v3211
      %v3232 = vpack.c.b16 %v3214, %v3213
      %v3252 = vsel %vm260, %v3064, 0
      %v3255 = vsel %vm260, %v3067, 0
      %v3258 = vsel %vm260, %v3070, 0
      %v3261 = vsel %vm260, %v3073, 0
      %v3264 = vsel %vm260, %v3076, 0
      %v3267 = vsel %vm260, %v3079, 0
      %v3270 = vsel %vm260, %v3082, 0
      %v3273 = vsel %vm260, %v3085, 0
      %v3276 = vsel %vm260, %v3088, 0
      %v3279 = vsel %vm260, %v3091, 0
      %v3282 = vsel %vm260, %v3094, 0
      %v3285 = vsel %vm260, %v3097, 0
      %3287 = vmatprep.subr.bf16.mxu0 0
      %3288 = vmatpush1.bf16.msra.mxu0 %v3215
      %3289 = vmatprep.subr.bf16.mxu0 0
      %3290 = vmatpush1.bf16.msra.mxu0 %v3216
      %3291 = vmatprep.subr.bf16.mxu0 0
      %3292 = vmatpush1.bf16.msra.mxu0 %v3217
      %3293 = vmatprep.subr.bf16.mxu0 0
      %3294 = vmatpush1.bf16.msra.mxu0 %v3218
      %3295 = vmatprep.subr.bf16.mxu0 0
      %3296 = vmatpush1.bf16.msra.mxu0 %v3219
      %3297 = vmatprep.subr.bf16.mxu0 0
      %3298 = vmatpush1.bf16.msra.mxu0 %v3220
      %3299 = vmatprep.subr.bf16.mxu0 0
      %3300 = vmatpush1.bf16.msra.mxu0 %v3221
      %3301 = vmatprep.subr.bf16.mxu0 0
      %3302 = vmatpush1.bf16.msra.mxu0 %v3222
      %3303 = vmatprep.subr.bf16.mxu0 0
      %3304 = vmatpush1.bf16.msra.mxu0 %v3223
      %3305 = vmatprep.subr.bf16.mxu0 0
      %3306 = vmatpush1.bf16.msra.mxu0 %v3224
      %3307 = vmatprep.subr.bf16.mxu0 0
      %3308 = vmatpush1.bf16.msra.mxu0 %v3225
      %3309 = vmatprep.subr.bf16.mxu0 0
      %3310 = vmatpush1.bf16.msra.mxu0 %v3226
      %3311 = vmatprep.subr.bf16.mxu0 0
      %3312 = vmatpush1.bf16.msra.mxu0 %v3227
      %3313 = vmatprep.subr.bf16.mxu0 0
      %3314 = vmatpush1.bf16.msra.mxu0 %v3228
      %3315 = vmatprep.subr.bf16.mxu0 0
      %3316 = vmatpush1.bf16.msra.mxu0 %v3229
      %3317 = vmatprep.subr.bf16.mxu0 0
      %3318 = vmatpush1.bf16.msra.mxu0 %v3230
      %3319 = vmatprep.mubr.bf16.mxu0 %v3063
      %3320 = vmatmul.mubr.bf16.gmra.mrb[0].mxu0 %v3062
      %v3321 = vpop.f32.mrb[0].mxu0
      %v3322 = vadd.f32 %v3141, %v3321
      %v3323 = vpop.f32.mrb[0].mxu0
      %v3324 = vpop.f32.mrb[0].mxu0
      %v3325 = vadd.f32 %v3141, %v3324
      %v3326 = vpop.f32.mrb[0].mxu0
      %3327 = vmatprep.mubr.bf16.mxu0 %v3066
      %3328 = vmatmul.mubr.bf16.gmra.mrb[0].mxu0 %v3065
      %v3329 = vpop.f32.mrb[0].mxu0
      %v3330 = vadd.f32 %v3141, %v3329
      %v3331 = vpop.f32.mrb[0].mxu0
      %v3332 = vpop.f32.mrb[0].mxu0
      %v3333 = vadd.f32 %v3141, %v3332
      %v3334 = vpop.f32.mrb[0].mxu0
      %3335 = vmatprep.mubr.bf16.mxu0 %v3069
      %3336 = vmatmul.mubr.bf16.gmra.mrb[0].mxu0 %v3068
      %v3337 = vpop.f32.mrb[0].mxu0
      %v3338 = vadd.f32 %v3141, %v3337
      %v3339 = vpop.f32.mrb[0].mxu0
      %v3340 = vpop.f32.mrb[0].mxu0
      %v3341 = vadd.f32 %v3141, %v3340
      %v3342 = vpop.f32.mrb[0].mxu0
      %3343 = vmatprep.mubr.bf16.mxu0 %v3072
      %3344 = vmatmul.mubr.bf16.gmra.mrb[0].mxu0 %v3071
      %v3345 = vpop.f32.mrb[0].mxu0
      %v3346 = vadd.f32 %v3141, %v3345
      %v3347 = vpop.f32.mrb[0].mxu0
      %v3348 = vpop.f32.mrb[0].mxu0
      %v3349 = vadd.f32 %v3141, %v3348
      %v3350 = vpop.f32.mrb[0].mxu0
      %3351 = vmatprep.mubr.bf16.mxu0 %v3075
      %3352 = vmatmul.mubr.bf16.gmra.mrb[0].mxu0 %v3074
      %v3353 = vpop.f32.mrb[0].mxu0
      %v3354 = vadd.f32 %v3141, %v3353
      %v3355 = vpop.f32.mrb[0].mxu0
      %v3356 = vpop.f32.mrb[0].mxu0
      %v3357 = vadd.f32 %v3141, %v3356
      %v3358 = vpop.f32.mrb[0].mxu0
      %3359 = vmatprep.mubr.bf16.mxu0 %v3078
      %3360 = vmatmul.mubr.bf16.gmra.mrb[0].mxu0 %v3077
      %v3361 = vpop.f32.mrb[0].mxu0
      %v3362 = vadd.f32 %v3141, %v3361
      %v3363 = vpop.f32.mrb[0].mxu0
      %v3364 = vpop.f32.mrb[0].mxu0
      %v3365 = vadd.f32 %v3141, %v3364
      %v3366 = vpop.f32.mrb[0].mxu0
      %3367 = vmatprep.mubr.bf16.mxu0 %v3081
      %3368 = vmatmul.mubr.bf16.gmra.mrb[0].mxu0 %v3080
      %v3369 = vpop.f32.mrb[0].mxu0
      %v3370 = vadd.f32 %v3141, %v3369
      %v3371 = vpop.f32.mrb[0].mxu0
      %v3372 = vpop.f32.mrb[0].mxu0
      %v3373 = vadd.f32 %v3141, %v3372
      %v3374 = vpop.f32.mrb[0].mxu0
      %3375 = vmatprep.mubr.bf16.mxu0 %v3084
      %3376 = vmatmul.mubr.bf16.gmra.mrb[0].mxu0 %v3083
      %v3377 = vpop.f32.mrb[0].mxu0
      %v3378 = vadd.f32 %v3141, %v3377
      %v3379 = vpop.f32.mrb[0].mxu0
      %v3380 = vpop.f32.mrb[0].mxu0
      %v3381 = vadd.f32 %v3141, %v3380
      %v3382 = vpop.f32.mrb[0].mxu0
      %3383 = vmatprep.mubr.bf16.mxu0 %v3087
      %3384 = vmatmul.mubr.bf16.gmra.mrb[0].mxu0 %v3086
      %v3385 = vpop.f32.mrb[0].mxu0
      %v3386 = vadd.f32 %v3141, %v3385
      %v3387 = vpop.f32.mrb[0].mxu0
      %v3388 = vpop.f32.mrb[0].mxu0
      %v3389 = vadd.f32 %v3141, %v3388
      %v3390 = vpop.f32.mrb[0].mxu0
      %3391 = vmatprep.mubr.bf16.mxu0 %v3090
      %3392 = vmatmul.mubr.bf16.gmra.mrb[0].mxu0 %v3089
      %v3393 = vpop.f32.mrb[0].mxu0
      %v3394 = vadd.f32 %v3141, %v3393
      %v3395 = vpop.f32.mrb[0].mxu0
      %v3396 = vpop.f32.mrb[0].mxu0
      %v3397 = vadd.f32 %v3141, %v3396
      %v3398 = vpop.f32.mrb[0].mxu0
      %3399 = vmatprep.mubr.bf16.mxu0 %v3093
      %3400 = vmatmul.mubr.bf16.gmra.mrb[0].mxu0 %v3092
      %v3401 = vpop.f32.mrb[0].mxu0
      %v3402 = vadd.f32 %v3141, %v3401
      %v3403 = vpop.f32.mrb[0].mxu0
      %v3404 = vpop.f32.mrb[0].mxu0
      %v3405 = vadd.f32 %v3141, %v3404
      %v3406 = vpop.f32.mrb[0].mxu0
      %3407 = vmatprep.mubr.bf16.mxu0 %v3096
      %3408 = vmatmul.mubr.bf16.gmra.mrb[0].mxu0 %v3095
      %v3409 = vpop.f32.mrb[0].mxu0
      %v3410 = vadd.f32 %v3141, %v3409
      %v3411 = vpop.f32.mrb[0].mxu0
      %v3412 = vpop.f32.mrb[0].mxu0
      %v3413 = vadd.f32 %v3141, %v3412
      %v3414 = vpop.f32.mrb[0].mxu0
      %3415 = vdwg.mxu0
      %3416 = vmatprep.subr.bf16.mxu0 0
      %3417 = vmatpush1.bf16.msra.mxu0 %v3231
      %3418 = vmatprep.subr.bf16.mxu0 0
      %3419 = vmatpush1.bf16.msra.mxu0 %v3232
      %3420 = vmatprep.subr.bf16.mxu0 0
      %3421 = vmatpush1.bf16.msra.mxu0 0
      %3422 = vmatprep.subr.bf16.mxu0 0
      %3423 = vmatpush1.bf16.msra.mxu0 0
      %3424 = vmatprep.subr.bf16.mxu0 0
      %3425 = vmatpush1.bf16.msra.mxu0 0
      %3426 = vmatprep.subr.bf16.mxu0 0
      %3427 = vmatpush1.bf16.msra.mxu0 0
      %3428 = vmatprep.subr.bf16.mxu0 0
      %3429 = vmatpush1.bf16.msra.mxu0 0
      %3430 = vmatprep.subr.bf16.mxu0 0
      %3431 = vmatpush1.bf16.msra.mxu0 0
      %3432 = vmatprep.subr.bf16.mxu0 0
      %3433 = vmatpush1.bf16.msra.mxu0 0
      %3434 = vmatprep.subr.bf16.mxu0 0
      %3435 = vmatpush1.bf16.msra.mxu0 0
      %3436 = vmatprep.subr.bf16.mxu0 0
      %3437 = vmatpush1.bf16.msra.mxu0 0
      %3438 = vmatprep.subr.bf16.mxu0 0
      %3439 = vmatpush1.bf16.msra.mxu0 0
      %3440 = vmatprep.subr.bf16.mxu0 0
      %3441 = vmatpush1.bf16.msra.mxu0 0
      %3442 = vmatprep.subr.bf16.mxu0 0
      %3443 = vmatpush1.bf16.msra.mxu0 0
      %3444 = vmatprep.subr.bf16.mxu0 0
      %3445 = vmatpush1.bf16.msra.mxu0 0
      %3446 = vmatprep.subr.bf16.mxu0 0
      %3447 = vmatpush1.bf16.msra.mxu0 0
      %3448 = vmatprep.mubr.bf16.mxu0 0
      %3449 = vmatmul.mubr.bf16.gmra.mrb[0].mxu0 %v3252
      %v3450 = vpop.f32.mrb[0].mxu0
      %v3451 = vadd.f32 %v3322, %v3450
      %v3452 = vpop.f32.mrb[0].mxu0
      %v3453 = vpop.f32.mrb[0].mxu0
      %v3454 = vadd.f32 %v3325, %v3453
      %v3455 = vpop.f32.mrb[0].mxu0
      %3456 = vmatprep.mubr.bf16.mxu0 0
      %3457 = vmatmul.mubr.bf16.gmra.mrb[0].mxu0 %v3255
      %v3458 = vpop.f32.mrb[0].mxu0
      %v3459 = vadd.f32 %v3330, %v3458
      %v3460 = vpop.f32.mrb[0].mxu0
      %v3461 = vpop.f32.mrb[0].mxu0
      %v3462 = vadd.f32 %v3333, %v3461
      %v3463 = vpop.f32.mrb[0].mxu0
      %3464 = vmatprep.mubr.bf16.mxu0 0
      %3465 = vmatmul.mubr.bf16.gmra.mrb[0].mxu0 %v3258
      %v3466 = vpop.f32.mrb[0].mxu0
      %v3467 = vadd.f32 %v3338, %v3466
      %v3468 = vpop.f32.mrb[0].mxu0
      %v3469 = vpop.f32.mrb[0].mxu0
      %v3470 = vadd.f32 %v3341, %v3469
      %v3471 = vpop.f32.mrb[0].mxu0
      %3472 = vmatprep.mubr.bf16.mxu0 0
      %3473 = vmatmul.mubr.bf16.gmra.mrb[0].mxu0 %v3261
      %v3474 = vpop.f32.mrb[0].mxu0
      %v3475 = vadd.f32 %v3346, %v3474
      %v3476 = vpop.f32.mrb[0].mxu0
      %v3477 = vpop.f32.mrb[0].mxu0
      %v3478 = vadd.f32 %v3349, %v3477
      %v3479 = vpop.f32.mrb[0].mxu0
      %3480 = vmatprep.mubr.bf16.mxu0 0
      %3481 = vmatmul.mubr.bf16.gmra.mrb[0].mxu0 %v3264
      %v3482 = vpop.f32.mrb[0].mxu0
      %v3483 = vadd.f32 %v3354, %v3482
      %v3484 = vpop.f32.mrb[0].mxu0
      %v3485 = vpop.f32.mrb[0].mxu0
      %v3486 = vadd.f32 %v3357, %v3485
      %v3487 = vpop.f32.mrb[0].mxu0
      %3488 = vmatprep.mubr.bf16.mxu0 0
      %3489 = vmatmul.mubr.bf16.gmra.mrb[0].mxu0 %v3267
      %v3490 = vpop.f32.mrb[0].mxu0
      %v3491 = vadd.f32 %v3362, %v3490
      %v3492 = vpop.f32.mrb[0].mxu0
      %v3493 = vpop.f32.mrb[0].mxu0
      %v3494 = vadd.f32 %v3365, %v3493
      %v3495 = vpop.f32.mrb[0].mxu0
      %3496 = vmatprep.mubr.bf16.mxu0 0
      %3497 = vmatmul.mubr.bf16.gmra.mrb[0].mxu0 %v3270
      %v3498 = vpop.f32.mrb[0].mxu0
      %v3499 = vadd.f32 %v3370, %v3498
      %v3500 = vpop.f32.mrb[0].mxu0
      %v3501 = vpop.f32.mrb[0].mxu0
      %v3502 = vadd.f32 %v3373, %v3501
      %v3503 = vpop.f32.mrb[0].mxu0
      %3504 = vmatprep.mubr.bf16.mxu0 0
      %3505 = vmatmul.mubr.bf16.gmra.mrb[0].mxu0 %v3273
      %v3506 = vpop.f32.mrb[0].mxu0
      %v3507 = vadd.f32 %v3378, %v3506
      %v3508 = vpop.f32.mrb[0].mxu0
      %v3509 = vpop.f32.mrb[0].mxu0
      %v3510 = vadd.f32 %v3381, %v3509
      %v3511 = vpop.f32.mrb[0].mxu0
      %3512 = vmatprep.mubr.bf16.mxu0 0
      %3513 = vmatmul.mubr.bf16.gmra.mrb[0].mxu0 %v3276
      %v3514 = vpop.f32.mrb[0].mxu0
      %v3515 = vadd.f32 %v3386, %v3514
      %v3516 = vpop.f32.mrb[0].mxu0
      %v3517 = vpop.f32.mrb[0].mxu0
      %v3518 = vadd.f32 %v3389, %v3517
      %v3519 = vpop.f32.mrb[0].mxu0
      %3520 = vmatprep.mubr.bf16.mxu0 0
      %3521 = vmatmul.mubr.bf16.gmra.mrb[0].mxu0 %v3279
      %v3522 = vpop.f32.mrb[0].mxu0
      %v3523 = vadd.f32 %v3394, %v3522
      %v3524 = vpop.f32.mrb[0].mxu0
      %v3525 = vpop.f32.mrb[0].mxu0
      %v3526 = vadd.f32 %v3397, %v3525
      %v3527 = vpop.f32.mrb[0].mxu0
      %3528 = vmatprep.mubr.bf16.mxu0 0
      %3529 = vmatmul.mubr.bf16.gmra.mrb[0].mxu0 %v3282
      %v3530 = vpop.f32.mrb[0].mxu0
      %v3531 = vadd.f32 %v3402, %v3530
      %v3532 = vpop.f32.mrb[0].mxu0
      %v3533 = vpop.f32.mrb[0].mxu0
      %v3534 = vadd.f32 %v3405, %v3533
      %v3535 = vpop.f32.mrb[0].mxu0
      %3536 = vmatprep.mubr.bf16.mxu0 0
      %3537 = vmatmul.mubr.bf16.gmra.mrb[0].mxu0 %v3285
      %v3538 = vpop.f32.mrb[0].mxu0
      %v3539 = vadd.f32 %v3410, %v3538
      %v3540 = vpop.f32.mrb[0].mxu0
      %v3541 = vpop.f32.mrb[0].mxu0
      %v3542 = vadd.f32 %v3413, %v3541
      %v3543 = vpop.f32.mrb[0].mxu0
      %3544 = vdwg.mxu0
      %v3545 = vmax.f32 %v3451, 0.0
      %v3546 = vmax.f32 %v3454, 0.0
      %v3547 = vmax.f32 %v3459, 0.0
      %v3548 = vmax.f32 %v3462, 0.0
      %v3549 = vmax.f32 %v3467, 0.0
      %v3550 = vmax.f32 %v3470, 0.0
      %v3551 = vmax.f32 %v3475, 0.0
      %v3552 = vmax.f32 %v3478, 0.0
      %v3553 = vmax.f32 %v3483, 0.0
      %v3554 = vmax.f32 %v3486, 0.0
      %v3555 = vmax.f32 %v3491, 0.0
      %v3556 = vmax.f32 %v3494, 0.0
      %v3557 = vmax.f32 %v3499, 0.0
      %v3558 = vmax.f32 %v3502, 0.0
      %v3559 = vmax.f32 %v3507, 0.0
      %v3560 = vmax.f32 %v3510, 0.0
      %v3561 = vmax.f32 %v3515, 0.0
      %v3562 = vmax.f32 %v3518, 0.0
      %v3563 = vmax.f32 %v3523, 0.0
      %v3564 = vmax.f32 %v3526, 0.0
      %v3565 = vmax.f32 %v3531, 0.0
      %v3566 = vmax.f32 %v3534, 0.0
      %v3567 = vmax.f32 %v3539, 0.0
      %v3568 = vmax.f32 %v3542, 0.0
      %3569 = vst.msk [vmem:[%s269 + $0x1] sm:$0xff] %vm260, %v3545
      %3570 = vst.msk [vmem:[%s269 + $0x9] sm:$0xff] %vm260, %v3546
      %3571 = vst.msk [vmem:[%s269 + $0x19] sm:$0xff] %vm260, %v3547
      %3572 = vst.msk [vmem:[%s269 + $0x21] sm:$0xff] %vm260, %v3548
      %3573 = vst.msk [vmem:[%s269 + $0x31] sm:$0xff] %vm260, %v3549
      %3574 = vst.msk [vmem:[%s269 + $0x39] sm:$0xff] %vm260, %v3550
      %3575 = vst.msk [vmem:[%s269 + $0x49] sm:$0xff] %vm260, %v3551
      %3576 = vst.msk [vmem:[%s269 + $0x51] sm:$0xff] %vm260, %v3552
      %3577 = vst.msk [vmem:[%s269 + $0x61] sm:$0xff] %vm260, %v3553
      %3578 = vst.msk [vmem:[%s269 + $0x69] sm:$0xff] %vm260, %v3554
      %3579 = vst.msk [vmem:[%s269 + $0x79] sm:$0xff] %vm260, %v3555
      %3580 = vst.msk [vmem:[%s269 + $0x81] sm:$0xff] %vm260, %v3556
      %3581 = vst.msk [vmem:[%s269 + $0x91] sm:$0xff] %vm260, %v3557
      %3582 = vst.msk [vmem:[%s269 + $0x99] sm:$0xff] %vm260, %v3558
      %3583 = vst.msk [vmem:[%s269 + $0xa9] sm:$0xff] %vm260, %v3559
      %3584 = vst.msk [vmem:[%s269 + $0xb1] sm:$0xff] %vm260, %v3560
      %3585 = vst.msk [vmem:[%s269 + $0xc1] sm:$0xff] %vm260, %v3561
      %3586 = vst.msk [vmem:[%s269 + $0xc9] sm:$0xff] %vm260, %v3562
      %3587 = vst.msk [vmem:[%s269 + $0xd9] sm:$0xff] %vm260, %v3563
      %3588 = vst.msk [vmem:[%s269 + $0xe1] sm:$0xff] %vm260, %v3564
      %3589 = vst.msk [vmem:[%s269 + $0xf1] sm:$0xff] %vm260, %v3565
      %3590 = vst.msk [vmem:[%s269 + $0xf9] sm:$0xff] %vm260, %v3566
      %3591 = vst.msk [vmem:[%s269 + $0x109] sm:$0xff] %vm260, %v3567
      %3592 = vst.msk [vmem:[%s269 + $0x111] sm:$0xff] %vm260, %v3568
      %v3593 = vld [vmem:[#allocation2] sm:$0xff]
      %v3594 = vld [vmem:[#allocation2 + $0x8] sm:$0xff]
      %v3595 = vld [vmem:[#allocation2 + $0x18] sm:$0xff]
      %v3596 = vld [vmem:[#allocation2 + $0x20] sm:$0xff]
      %v3597 = vld [vmem:[#allocation2 + $0x30] sm:$0xff]
      %v3598 = vld [vmem:[#allocation2 + $0x38] sm:$0xff]
      %v3599 = vld [vmem:[#allocation2 + $0x48] sm:$0xff]
      %v3600 = vld [vmem:[#allocation2 + $0x50] sm:$0xff]
      %v3601 = vld [vmem:[#allocation2 + $0x60] sm:$0xff]
      %v3602 = vld [vmem:[#allocation2 + $0x68] sm:$0xff]
      %v3603 = vld [vmem:[#allocation2 + $0x78] sm:$0xff]
      %v3604 = vld [vmem:[#allocation2 + $0x80] sm:$0xff]
      %v3605 = vld [vmem:[#allocation2 + $0x90] sm:$0xff]
      %v3606 = vld [vmem:[#allocation2 + $0x98] sm:$0xff]
      %v3607 = vld [vmem:[#allocation2 + $0xa8] sm:$0xff]
      %v3608 = vld [vmem:[#allocation2 + $0xb0] sm:$0xff]
      %v3609 = vld [vmem:[#allocation2 + $0xc0] sm:$0xff]
      %v3610 = vld [vmem:[#allocation2 + $0xc8] sm:$0xff]
      %v3611 = vld [vmem:[#allocation2 + $0xd8] sm:$0xff]
      %v3612 = vld [vmem:[#allocation2 + $0xe0] sm:$0xff]
      %v3613 = vld [vmem:[#allocation2 + $0xf0] sm:$0xff]
      %v3614 = vld [vmem:[#allocation2 + $0xf8] sm:$0xff]
      %v3615 = vld [vmem:[#allocation2 + $0x108] sm:$0xff]
      %v3616 = vld [vmem:[#allocation2 + $0x110] sm:$0xff]
      %3617 = vst.msk [vmem:[#allocation3] sm:$0xff] %vm260, %v3593
      %3618 = vst.msk [vmem:[#allocation3 + $0x18] sm:$0xff] %vm260, %v3594
      %3619 = vst.msk [vmem:[#allocation3 + $0x30] sm:$0xff] %vm260, %v3595
      %3620 = vst.msk [vmem:[#allocation3 + $0x48] sm:$0xff] %vm260, %v3596
      %3621 = vst.msk [vmem:[#allocation3 + $0x60] sm:$0xff] %vm260, %v3597
      %3622 = vst.msk [vmem:[#allocation3 + $0x78] sm:$0xff] %vm260, %v3598
      %3623 = vst.msk [vmem:[#allocation3 + $0x90] sm:$0xff] %vm260, %v3599
      %3624 = vst.msk [vmem:[#allocation3 + $0xa8] sm:$0xff] %vm260, %v3600
      %3625 = vst.msk [vmem:[#allocation3 + $0xc0] sm:$0xff] %vm260, %v3601
      %3626 = vst.msk [vmem:[#allocation3 + $0xd8] sm:$0xff] %vm260, %v3602
      %3627 = vst.msk [vmem:[#allocation3 + $0xf0] sm:$0xff] %vm260, %v3603
      %3628 = vst.msk [vmem:[#allocation3 + $0x108] sm:$0xff] %vm260, %v3604
      %3629 = vst.msk [vmem:[#allocation3 + $0x120] sm:$0xff] %vm260, %v3605
      %3630 = vst.msk [vmem:[#allocation3 + $0x138] sm:$0xff] %vm260, %v3606
      %3631 = vst.msk [vmem:[#allocation3 + $0x150] sm:$0xff] %vm260, %v3607
      %3632 = vst.msk [vmem:[#allocation3 + $0x168] sm:$0xff] %vm260, %v3608
      %3633 = vst.msk [vmem:[#allocation3 + $0x180] sm:$0xff] %vm260, %v3609
      %3634 = vst.msk [vmem:[#allocation3 + $0x198] sm:$0xff] %vm260, %v3610
      %3635 = vst.msk [vmem:[#allocation3 + $0x1b0] sm:$0xff] %vm260, %v3611
      %3636 = vst.msk [vmem:[#allocation3 + $0x1c8] sm:$0xff] %vm260, %v3612
      %3637 = vst.msk [vmem:[#allocation3 + $0x1e0] sm:$0xff] %vm260, %v3613
      %3638 = vst.msk [vmem:[#allocation3 + $0x1f8] sm:$0xff] %vm260, %v3614
      %3639 = vst.msk [vmem:[#allocation3 + $0x210] sm:$0xff] %vm260, %v3615
      %3640 = vst.msk [vmem:[#allocation3 + $0x228] sm:$0xff] %vm260, %v3616
      %v3641 = vld [vmem:[#allocation2 + $0x1] sm:$0xff]
      %v3642 = vld [vmem:[#allocation2 + $0x9] sm:$0xff]
      %v3643 = vld [vmem:[#allocation2 + $0x19] sm:$0xff]
      %v3644 = vld [vmem:[#allocation2 + $0x21] sm:$0xff]
      %v3645 = vld [vmem:[#allocation2 + $0x31] sm:$0xff]
      %v3646 = vld [vmem:[#allocation2 + $0x39] sm:$0xff]
      %v3647 = vld [vmem:[#allocation2 + $0x49] sm:$0xff]
      %v3648 = vld [vmem:[#allocation2 + $0x51] sm:$0xff]
      %v3649 = vld [vmem:[#allocation2 + $0x61] sm:$0xff]
      %v3650 = vld [vmem:[#allocation2 + $0x69] sm:$0xff]
      %v3651 = vld [vmem:[#allocation2 + $0x79] sm:$0xff]
      %v3652 = vld [vmem:[#allocation2 + $0x81] sm:$0xff]
      %v3653 = vld [vmem:[#allocation2 + $0x91] sm:$0xff]
      %v3654 = vld [vmem:[#allocation2 + $0x99] sm:$0xff]
      %v3655 = vld [vmem:[#allocation2 + $0xa9] sm:$0xff]
      %v3656 = vld [vmem:[#allocation2 + $0xb1] sm:$0xff]
      %v3657 = vld [vmem:[#allocation2 + $0xc1] sm:$0xff]
      %v3658 = vld [vmem:[#allocation2 + $0xc9] sm:$0xff]
      %v3659 = vld [vmem:[#allocation2 + $0xd9] sm:$0xff]
      %v3660 = vld [vmem:[#allocation2 + $0xe1] sm:$0xff]
      %v3661 = vld [vmem:[#allocation2 + $0xf1] sm:$0xff]
      %v3662 = vld [vmem:[#allocation2 + $0xf9] sm:$0xff]
      %v3663 = vld [vmem:[#allocation2 + $0x109] sm:$0xff]
      %v3664 = vld [vmem:[#allocation2 + $0x111] sm:$0xff]
      %3689 = vrot.lane.b32.xlu0 %v3641, 32
      %v3690 = vpop.permute.xlu0 %3689
      %3691 = vrot.lane.b32.xlu0 %v3642, 32
      %v3692 = vpop.permute.xlu0 %3691
      %3693 = vrot.lane.b32.xlu0 %v3643, 32
      %v3694 = vpop.permute.xlu0 %3693
      %3695 = vrot.lane.b32.xlu0 %v3644, 32
      %v3696 = vpop.permute.xlu0 %3695
      %3697 = vrot.lane.b32.xlu0 %v3645, 32
      %v3698 = vpop.permute.xlu0 %3697
      %3699 = vrot.lane.b32.xlu0 %v3646, 32
      %v3700 = vpop.permute.xlu0 %3699
      %3701 = vrot.lane.b32.xlu0 %v3647, 32
      %v3702 = vpop.permute.xlu0 %3701
      %3703 = vrot.lane.b32.xlu0 %v3648, 32
      %v3704 = vpop.permute.xlu0 %3703
      %3705 = vrot.lane.b32.xlu0 %v3649, 32
      %v3706 = vpop.permute.xlu0 %3705
      %3707 = vrot.lane.b32.xlu0 %v3650, 32
      %v3708 = vpop.permute.xlu0 %3707
      %3709 = vrot.lane.b32.xlu0 %v3651, 32
      %v3710 = vpop.permute.xlu0 %3709
      %3711 = vrot.lane.b32.xlu0 %v3652, 32
      %v3712 = vpop.permute.xlu0 %3711
      %3713 = vrot.lane.b32.xlu0 %v3653, 32
      %v3714 = vpop.permute.xlu0 %3713
      %3715 = vrot.lane.b32.xlu0 %v3654, 32
      %v3716 = vpop.permute.xlu0 %3715
      %3717 = vrot.lane.b32.xlu0 %v3655, 32
      %v3718 = vpop.permute.xlu0 %3717
      %3719 = vrot.lane.b32.xlu0 %v3656, 32
      %v3720 = vpop.permute.xlu0 %3719
      %3721 = vrot.lane.b32.xlu0 %v3657, 32
      %v3722 = vpop.permute.xlu0 %3721
      %3723 = vrot.lane.b32.xlu0 %v3658, 32
      %v3724 = vpop.permute.xlu0 %3723
      %3725 = vrot.lane.b32.xlu0 %v3659, 32
      %v3726 = vpop.permute.xlu0 %3725
      %3727 = vrot.lane.b32.xlu0 %v3660, 32
      %v3728 = vpop.permute.xlu0 %3727
      %3729 = vrot.lane.b32.xlu0 %v3661, 32
      %v3730 = vpop.permute.xlu0 %3729
      %3731 = vrot.lane.b32.xlu0 %v3662, 32
      %v3732 = vpop.permute.xlu0 %3731
      %3733 = vrot.lane.b32.xlu0 %v3663, 32
      %v3734 = vpop.permute.xlu0 %3733
      %3735 = vrot.lane.b32.xlu0 %v3664, 32
      %v3736 = vpop.permute.xlu0 %3735
      %3761 = vst.msk [vmem:[#allocation3] sm:$0xff] %vm537, %v3690
      %3762 = vst.msk [vmem:[#allocation3 + $0x18] sm:$0xff] %vm537, %v3692
      %3763 = vst.msk [vmem:[#allocation3 + $0x30] sm:$0xff] %vm537, %v3694
      %3764 = vst.msk [vmem:[#allocation3 + $0x48] sm:$0xff] %vm537, %v3696
      %3765 = vst.msk [vmem:[#allocation3 + $0x60] sm:$0xff] %vm537, %v3698
      %3766 = vst.msk [vmem:[#allocation3 + $0x78] sm:$0xff] %vm537, %v3700
      %3767 = vst.msk [vmem:[#allocation3 + $0x90] sm:$0xff] %vm537, %v3702
      %3768 = vst.msk [vmem:[#allocation3 + $0xa8] sm:$0xff] %vm537, %v3704
      %3769 = vst.msk [vmem:[#allocation3 + $0xc0] sm:$0xff] %vm537, %v3706
      %3770 = vst.msk [vmem:[#allocation3 + $0xd8] sm:$0xff] %vm537, %v3708
      %3771 = vst.msk [vmem:[#allocation3 + $0xf0] sm:$0xff] %vm537, %v3710
      %3772 = vst.msk [vmem:[#allocation3 + $0x108] sm:$0xff] %vm537, %v3712
      %3773 = vst.msk [vmem:[#allocation3 + $0x120] sm:$0xff] %vm537, %v3714
      %3774 = vst.msk [vmem:[#allocation3 + $0x138] sm:$0xff] %vm537, %v3716
      %3775 = vst.msk [vmem:[#allocation3 + $0x150] sm:$0xff] %vm537, %v3718
      %3776 = vst.msk [vmem:[#allocation3 + $0x168] sm:$0xff] %vm537, %v3720
      %3777 = vst.msk [vmem:[#allocation3 + $0x180] sm:$0xff] %vm537, %v3722
      %3778 = vst.msk [vmem:[#allocation3 + $0x198] sm:$0xff] %vm537, %v3724
      %3779 = vst.msk [vmem:[#allocation3 + $0x1b0] sm:$0xff] %vm537, %v3726
      %3780 = vst.msk [vmem:[#allocation3 + $0x1c8] sm:$0xff] %vm537, %v3728
      %3781 = vst.msk [vmem:[#allocation3 + $0x1e0] sm:$0xff] %vm537, %v3730
      %3782 = vst.msk [vmem:[#allocation3 + $0x1f8] sm:$0xff] %vm537, %v3732
      %3783 = vst.msk [vmem:[#allocation3 + $0x210] sm:$0xff] %vm537, %v3734
      %3784 = vst.msk [vmem:[#allocation3 + $0x228] sm:$0xff] %vm537, %v3736
      %v3785 = vld [vmem:[#allocation2 + $0x2] sm:$0xff]
      %v3786 = vld [vmem:[#allocation2 + $0xa] sm:$0xff]
      %v3787 = vld [vmem:[#allocation2 + $0x1a] sm:$0xff]
      %v3788 = vld [vmem:[#allocation2 + $0x22] sm:$0xff]
      %v3789 = vld [vmem:[#allocation2 + $0x32] sm:$0xff]
      %v3790 = vld [vmem:[#allocation2 + $0x3a] sm:$0xff]
      %v3791 = vld [vmem:[#allocation2 + $0x4a] sm:$0xff]
      %v3792 = vld [vmem:[#allocation2 + $0x52] sm:$0xff]
      %v3793 = vld [vmem:[#allocation2 + $0x62] sm:$0xff]
      %v3794 = vld [vmem:[#allocation2 + $0x6a] sm:$0xff]
      %v3795 = vld [vmem:[#allocation2 + $0x7a] sm:$0xff]
      %v3796 = vld [vmem:[#allocation2 + $0x82] sm:$0xff]
      %v3797 = vld [vmem:[#allocation2 + $0x92] sm:$0xff]
      %v3798 = vld [vmem:[#allocation2 + $0x9a] sm:$0xff]
      %v3799 = vld [vmem:[#allocation2 + $0xaa] sm:$0xff]
      %v3800 = vld [vmem:[#allocation2 + $0xb2] sm:$0xff]
      %v3801 = vld [vmem:[#allocation2 + $0xc2] sm:$0xff]
      %v3802 = vld [vmem:[#allocation2 + $0xca] sm:$0xff]
      %v3803 = vld [vmem:[#allocation2 + $0xda] sm:$0xff]
      %v3804 = vld [vmem:[#allocation2 + $0xe2] sm:$0xff]
      %v3805 = vld [vmem:[#allocation2 + $0xf2] sm:$0xff]
      %v3806 = vld [vmem:[#allocation2 + $0xfa] sm:$0xff]
      %v3807 = vld [vmem:[#allocation2 + $0x10a] sm:$0xff]
      %v3808 = vld [vmem:[#allocation2 + $0x112] sm:$0xff]
      %3833 = vrot.lane.b32.xlu0 %v3785, 64
      %v3834 = vpop.permute.xlu0 %3833
      %3835 = vrot.lane.b32.xlu0 %v3786, 64
      %v3836 = vpop.permute.xlu0 %3835
      %3837 = vrot.lane.b32.xlu0 %v3787, 64
      %v3838 = vpop.permute.xlu0 %3837
      %3839 = vrot.lane.b32.xlu0 %v3788, 64
      %v3840 = vpop.permute.xlu0 %3839
      %3841 = vrot.lane.b32.xlu0 %v3789, 64
      %v3842 = vpop.permute.xlu0 %3841
      %3843 = vrot.lane.b32.xlu0 %v3790, 64
      %v3844 = vpop.permute.xlu0 %3843
      %3845 = vrot.lane.b32.xlu0 %v3791, 64
      %v3846 = vpop.permute.xlu0 %3845
      %3847 = vrot.lane.b32.xlu0 %v3792, 64
      %v3848 = vpop.permute.xlu0 %3847
      %3849 = vrot.lane.b32.xlu0 %v3793, 64
      %v3850 = vpop.permute.xlu0 %3849
      %3851 = vrot.lane.b32.xlu0 %v3794, 64
      %v3852 = vpop.permute.xlu0 %3851
      %3853 = vrot.lane.b32.xlu0 %v3795, 64
      %v3854 = vpop.permute.xlu0 %3853
      %3855 = vrot.lane.b32.xlu0 %v3796, 64
      %v3856 = vpop.permute.xlu0 %3855
      %3857 = vrot.lane.b32.xlu0 %v3797, 64
      %v3858 = vpop.permute.xlu0 %3857
      %3859 = vrot.lane.b32.xlu0 %v3798, 64
      %v3860 = vpop.permute.xlu0 %3859
      %3861 = vrot.lane.b32.xlu0 %v3799, 64
      %v3862 = vpop.permute.xlu0 %3861
      %3863 = vrot.lane.b32.xlu0 %v3800, 64
      %v3864 = vpop.permute.xlu0 %3863
      %3865 = vrot.lane.b32.xlu0 %v3801, 64
      %v3866 = vpop.permute.xlu0 %3865
      %3867 = vrot.lane.b32.xlu0 %v3802, 64
      %v3868 = vpop.permute.xlu0 %3867
      %3869 = vrot.lane.b32.xlu0 %v3803, 64
      %v3870 = vpop.permute.xlu0 %3869
      %3871 = vrot.lane.b32.xlu0 %v3804, 64
      %v3872 = vpop.permute.xlu0 %3871
      %3873 = vrot.lane.b32.xlu0 %v3805, 64
      %v3874 = vpop.permute.xlu0 %3873
      %3875 = vrot.lane.b32.xlu0 %v3806, 64
      %v3876 = vpop.permute.xlu0 %3875
      %3877 = vrot.lane.b32.xlu0 %v3807, 64
      %v3878 = vpop.permute.xlu0 %3877
      %3879 = vrot.lane.b32.xlu0 %v3808, 64
      %v3880 = vpop.permute.xlu0 %3879
      %3905 = vst.msk [vmem:[#allocation3] sm:$0xff] %vm682, %v3834
      %3906 = vst.msk [vmem:[#allocation3 + $0x18] sm:$0xff] %vm682, %v3836
      %3907 = vst.msk [vmem:[#allocation3 + $0x30] sm:$0xff] %vm682, %v3838
      %3908 = vst.msk [vmem:[#allocation3 + $0x48] sm:$0xff] %vm682, %v3840
      %3909 = vst.msk [vmem:[#allocation3 + $0x60] sm:$0xff] %vm682, %v3842
      %3910 = vst.msk [vmem:[#allocation3 + $0x78] sm:$0xff] %vm682, %v3844
      %3911 = vst.msk [vmem:[#allocation3 + $0x90] sm:$0xff] %vm682, %v3846
      %3912 = vst.msk [vmem:[#allocation3 + $0xa8] sm:$0xff] %vm682, %v3848
      %3913 = vst.msk [vmem:[#allocation3 + $0xc0] sm:$0xff] %vm682, %v3850
      %3914 = vst.msk [vmem:[#allocation3 + $0xd8] sm:$0xff] %vm682, %v3852
      %3915 = vst.msk [vmem:[#allocation3 + $0xf0] sm:$0xff] %vm682, %v3854
      %3916 = vst.msk [vmem:[#allocation3 + $0x108] sm:$0xff] %vm682, %v3856
      %3917 = vst.msk [vmem:[#allocation3 + $0x120] sm:$0xff] %vm682, %v3858
      %3918 = vst.msk [vmem:[#allocation3 + $0x138] sm:$0xff] %vm682, %v3860
      %3919 = vst.msk [vmem:[#allocation3 + $0x150] sm:$0xff] %vm682, %v3862
      %3920 = vst.msk [vmem:[#allocation3 + $0x168] sm:$0xff] %vm682, %v3864
      %3921 = vst.msk [vmem:[#allocation3 + $0x180] sm:$0xff] %vm682, %v3866
      %3922 = vst.msk [vmem:[#allocation3 + $0x198] sm:$0xff] %vm682, %v3868
      %3923 = vst.msk [vmem:[#allocation3 + $0x1b0] sm:$0xff] %vm682, %v3870
      %3924 = vst.msk [vmem:[#allocation3 + $0x1c8] sm:$0xff] %vm682, %v3872
      %3925 = vst.msk [vmem:[#allocation3 + $0x1e0] sm:$0xff] %vm682, %v3874
      %3926 = vst.msk [vmem:[#allocation3 + $0x1f8] sm:$0xff] %vm682, %v3876
      %3927 = vst.msk [vmem:[#allocation3 + $0x210] sm:$0xff] %vm682, %v3878
      %3928 = vst.msk [vmem:[#allocation3 + $0x228] sm:$0xff] %vm682, %v3880
      %v3929 = vld [vmem:[%s269] sm:$0xff]
      %v3930 = vld [vmem:[%s269 + $0x8] sm:$0xff]
      %v3931 = vld [vmem:[%s269 + $0x18] sm:$0xff]
      %v3932 = vld [vmem:[%s269 + $0x20] sm:$0xff]
      %v3933 = vld [vmem:[%s269 + $0x30] sm:$0xff]
      %v3934 = vld [vmem:[%s269 + $0x38] sm:$0xff]
      %v3935 = vld [vmem:[%s269 + $0x48] sm:$0xff]
      %v3936 = vld [vmem:[%s269 + $0x50] sm:$0xff]
      %v3937 = vld [vmem:[%s269 + $0x60] sm:$0xff]
      %v3938 = vld [vmem:[%s269 + $0x68] sm:$0xff]
      %v3939 = vld [vmem:[%s269 + $0x78] sm:$0xff]
      %v3940 = vld [vmem:[%s269 + $0x80] sm:$0xff]
      %v3941 = vld [vmem:[%s269 + $0x90] sm:$0xff]
      %v3942 = vld [vmem:[%s269 + $0x98] sm:$0xff]
      %v3943 = vld [vmem:[%s269 + $0xa8] sm:$0xff]
      %v3944 = vld [vmem:[%s269 + $0xb0] sm:$0xff]
      %v3945 = vld [vmem:[%s269 + $0xc0] sm:$0xff]
      %v3946 = vld [vmem:[%s269 + $0xc8] sm:$0xff]
      %v3947 = vld [vmem:[%s269 + $0xd8] sm:$0xff]
      %v3948 = vld [vmem:[%s269 + $0xe0] sm:$0xff]
      %v3949 = vld [vmem:[%s269 + $0xf0] sm:$0xff]
      %v3950 = vld [vmem:[%s269 + $0xf8] sm:$0xff]
      %v3951 = vld [vmem:[%s269 + $0x108] sm:$0xff]
      %v3952 = vld [vmem:[%s269 + $0x110] sm:$0xff]
      %3977 = vrot.lane.b32.xlu0 %v3929, 96
      %v3978 = vpop.permute.xlu0 %3977
      %3979 = vrot.lane.b32.xlu0 %v3930, 96
      %v3980 = vpop.permute.xlu0 %3979
      %3981 = vrot.lane.b32.xlu0 %v3931, 96
      %v3982 = vpop.permute.xlu0 %3981
      %3983 = vrot.lane.b32.xlu0 %v3932, 96
      %v3984 = vpop.permute.xlu0 %3983
      %3985 = vrot.lane.b32.xlu0 %v3933, 96
      %v3986 = vpop.permute.xlu0 %3985
      %3987 = vrot.lane.b32.xlu0 %v3934, 96
      %v3988 = vpop.permute.xlu0 %3987
      %3989 = vrot.lane.b32.xlu0 %v3935, 96
      %v3990 = vpop.permute.xlu0 %3989
      %3991 = vrot.lane.b32.xlu0 %v3936, 96
      %v3992 = vpop.permute.xlu0 %3991
      %3993 = vrot.lane.b32.xlu0 %v3937, 96
      %v3994 = vpop.permute.xlu0 %3993
      %3995 = vrot.lane.b32.xlu0 %v3938, 96
      %v3996 = vpop.permute.xlu0 %3995
      %3997 = vrot.lane.b32.xlu0 %v3939, 96
      %v3998 = vpop.permute.xlu0 %3997
      %3999 = vrot.lane.b32.xlu0 %v3940, 96
      %v4000 = vpop.permute.xlu0 %3999
      %4001 = vrot.lane.b32.xlu0 %v3941, 96
      %v4002 = vpop.permute.xlu0 %4001
      %4003 = vrot.lane.b32.xlu0 %v3942, 96
      %v4004 = vpop.permute.xlu0 %4003
      %4005 = vrot.lane.b32.xlu0 %v3943, 96
      %v4006 = vpop.permute.xlu0 %4005
      %4007 = vrot.lane.b32.xlu0 %v3944, 96
      %v4008 = vpop.permute.xlu0 %4007
      %4009 = vrot.lane.b32.xlu0 %v3945, 96
      %v4010 = vpop.permute.xlu0 %4009
      %4011 = vrot.lane.b32.xlu0 %v3946, 96
      %v4012 = vpop.permute.xlu0 %4011
      %4013 = vrot.lane.b32.xlu0 %v3947, 96
      %v4014 = vpop.permute.xlu0 %4013
      %4015 = vrot.lane.b32.xlu0 %v3948, 96
      %v4016 = vpop.permute.xlu0 %4015
      %4017 = vrot.lane.b32.xlu0 %v3949, 96
      %v4018 = vpop.permute.xlu0 %4017
      %4019 = vrot.lane.b32.xlu0 %v3950, 96
      %v4020 = vpop.permute.xlu0 %4019
      %4021 = vrot.lane.b32.xlu0 %v3951, 96
      %v4022 = vpop.permute.xlu0 %4021
      %4023 = vrot.lane.b32.xlu0 %v3952, 96
      %v4024 = vpop.permute.xlu0 %4023
      %4049 = vst.msk [vmem:[#allocation3] sm:$0xff] %vm827, %v3978
      %4050 = vst.msk [vmem:[#allocation3 + $0x18] sm:$0xff] %vm827, %v3980
      %4051 = vst.msk [vmem:[#allocation3 + $0x30] sm:$0xff] %vm827, %v3982
      %4052 = vst.msk [vmem:[#allocation3 + $0x48] sm:$0xff] %vm827, %v3984
      %4053 = vst.msk [vmem:[#allocation3 + $0x60] sm:$0xff] %vm827, %v3986
      %4054 = vst.msk [vmem:[#allocation3 + $0x78] sm:$0xff] %vm827, %v3988
      %4055 = vst.msk [vmem:[#allocation3 + $0x90] sm:$0xff] %vm827, %v3990
      %4056 = vst.msk [vmem:[#allocation3 + $0xa8] sm:$0xff] %vm827, %v3992
      %4057 = vst.msk [vmem:[#allocation3 + $0xc0] sm:$0xff] %vm827, %v3994
      %4058 = vst.msk [vmem:[#allocation3 + $0xd8] sm:$0xff] %vm827, %v3996
      %4059 = vst.msk [vmem:[#allocation3 + $0xf0] sm:$0xff] %vm827, %v3998
      %4060 = vst.msk [vmem:[#allocation3 + $0x108] sm:$0xff] %vm827, %v4000
      %4061 = vst.msk [vmem:[#allocation3 + $0x120] sm:$0xff] %vm827, %v4002
      %4062 = vst.msk [vmem:[#allocation3 + $0x138] sm:$0xff] %vm827, %v4004
      %4063 = vst.msk [vmem:[#allocation3 + $0x150] sm:$0xff] %vm827, %v4006
      %4064 = vst.msk [vmem:[#allocation3 + $0x168] sm:$0xff] %vm827, %v4008
      %4065 = vst.msk [vmem:[#allocation3 + $0x180] sm:$0xff] %vm827, %v4010
      %4066 = vst.msk [vmem:[#allocation3 + $0x198] sm:$0xff] %vm827, %v4012
      %4067 = vst.msk [vmem:[#allocation3 + $0x1b0] sm:$0xff] %vm827, %v4014
      %4068 = vst.msk [vmem:[#allocation3 + $0x1c8] sm:$0xff] %vm827, %v4016
      %4069 = vst.msk [vmem:[#allocation3 + $0x1e0] sm:$0xff] %vm827, %v4018
      %4070 = vst.msk [vmem:[#allocation3 + $0x1f8] sm:$0xff] %vm827, %v4020
      %4071 = vst.msk [vmem:[#allocation3 + $0x210] sm:$0xff] %vm827, %v4022
      %4072 = vst.msk [vmem:[#allocation3 + $0x228] sm:$0xff] %vm827, %v4024
      %v4073 = vld [vmem:[%s269 + $0x1] sm:$0xff]
      %v4074 = vld [vmem:[%s269 + $0x9] sm:$0xff]
      %v4075 = vld [vmem:[%s269 + $0x19] sm:$0xff]
      %v4076 = vld [vmem:[%s269 + $0x21] sm:$0xff]
      %v4077 = vld [vmem:[%s269 + $0x31] sm:$0xff]
      %v4078 = vld [vmem:[%s269 + $0x39] sm:$0xff]
      %v4079 = vld [vmem:[%s269 + $0x49] sm:$0xff]
      %v4080 = vld [vmem:[%s269 + $0x51] sm:$0xff]
      %v4081 = vld [vmem:[%s269 + $0x61] sm:$0xff]
      %v4082 = vld [vmem:[%s269 + $0x69] sm:$0xff]
      %v4083 = vld [vmem:[%s269 + $0x79] sm:$0xff]
      %v4084 = vld [vmem:[%s269 + $0x81] sm:$0xff]
      %v4085 = vld [vmem:[%s269 + $0x91] sm:$0xff]
      %v4086 = vld [vmem:[%s269 + $0x99] sm:$0xff]
      %v4087 = vld [vmem:[%s269 + $0xa9] sm:$0xff]
      %v4088 = vld [vmem:[%s269 + $0xb1] sm:$0xff]
      %v4089 = vld [vmem:[%s269 + $0xc1] sm:$0xff]
      %v4090 = vld [vmem:[%s269 + $0xc9] sm:$0xff]
      %v4091 = vld [vmem:[%s269 + $0xd9] sm:$0xff]
      %v4092 = vld [vmem:[%s269 + $0xe1] sm:$0xff]
      %v4093 = vld [vmem:[%s269 + $0xf1] sm:$0xff]
      %v4094 = vld [vmem:[%s269 + $0xf9] sm:$0xff]
      %v4095 = vld [vmem:[%s269 + $0x109] sm:$0xff]
      %v4096 = vld [vmem:[%s269 + $0x111] sm:$0xff]
      %4097 = vst.msk [vmem:[#allocation3 + $0x8] sm:$0xff] %vm260, %v4073
      %4098 = vst.msk [vmem:[#allocation3 + $0x20] sm:$0xff] %vm260, %v4074
      %4099 = vst.msk [vmem:[#allocation3 + $0x38] sm:$0xff] %vm260, %v4075
      %4100 = vst.msk [vmem:[#allocation3 + $0x50] sm:$0xff] %vm260, %v4076
      %4101 = vst.msk [vmem:[#allocation3 + $0x68] sm:$0xff] %vm260, %v4077
      %4102 = vst.msk [vmem:[#allocation3 + $0x80] sm:$0xff] %vm260, %v4078
      %4103 = vst.msk [vmem:[#allocation3 + $0x98] sm:$0xff] %vm260, %v4079
      %4104 = vst.msk [vmem:[#allocation3 + $0xb0] sm:$0xff] %vm260, %v4080
      %4105 = vst.msk [vmem:[#allocation3 + $0xc8] sm:$0xff] %vm260, %v4081
      %4106 = vst.msk [vmem:[#allocation3 + $0xe0] sm:$0xff] %vm260, %v4082
      %4107 = vst.msk [vmem:[#allocation3 + $0xf8] sm:$0xff] %vm260, %v4083
      %4108 = vst.msk [vmem:[#allocation3 + $0x110] sm:$0xff] %vm260, %v4084
      %4109 = vst.msk [vmem:[#allocation3 + $0x128] sm:$0xff] %vm260, %v4085
      %4110 = vst.msk [vmem:[#allocation3 + $0x140] sm:$0xff] %vm260, %v4086
      %4111 = vst.msk [vmem:[#allocation3 + $0x158] sm:$0xff] %vm260, %v4087
      %4112 = vst.msk [vmem:[#allocation3 + $0x170] sm:$0xff] %vm260, %v4088
      %4113 = vst.msk [vmem:[#allocation3 + $0x188] sm:$0xff] %vm260, %v4089
      %4114 = vst.msk [vmem:[#allocation3 + $0x1a0] sm:$0xff] %vm260, %v4090
      %4115 = vst.msk [vmem:[#allocation3 + $0x1b8] sm:$0xff] %vm260, %v4091
      %4116 = vst.msk [vmem:[#allocation3 + $0x1d0] sm:$0xff] %vm260, %v4092
      %4117 = vst.msk [vmem:[#allocation3 + $0x1e8] sm:$0xff] %vm260, %v4093
      %4118 = vst.msk [vmem:[#allocation3 + $0x200] sm:$0xff] %vm260, %v4094
      %4119 = vst.msk [vmem:[#allocation3 + $0x218] sm:$0xff] %vm260, %v4095
      %4120 = vst.msk [vmem:[#allocation3 + $0x230] sm:$0xff] %vm260, %v4096
      %v4121 = vld [vmem:[%s269 + $0x2] sm:$0xff]
      %v4122 = vld [vmem:[%s269 + $0xa] sm:$0xff]
      %v4123 = vld [vmem:[%s269 + $0x1a] sm:$0xff]
      %v4124 = vld [vmem:[%s269 + $0x22] sm:$0xff]
      %v4125 = vld [vmem:[%s269 + $0x32] sm:$0xff]
      %v4126 = vld [vmem:[%s269 + $0x3a] sm:$0xff]
      %v4127 = vld [vmem:[%s269 + $0x4a] sm:$0xff]
      %v4128 = vld [vmem:[%s269 + $0x52] sm:$0xff]
      %v4129 = vld [vmem:[%s269 + $0x62] sm:$0xff]
      %v4130 = vld [vmem:[%s269 + $0x6a] sm:$0xff]
      %v4131 = vld [vmem:[%s269 + $0x7a] sm:$0xff]
      %v4132 = vld [vmem:[%s269 + $0x82] sm:$0xff]
      %v4133 = vld [vmem:[%s269 + $0x92] sm:$0xff]
      %v4134 = vld [vmem:[%s269 + $0x9a] sm:$0xff]
      %v4135 = vld [vmem:[%s269 + $0xaa] sm:$0xff]
      %v4136 = vld [vmem:[%s269 + $0xb2] sm:$0xff]
      %v4137 = vld [vmem:[%s269 + $0xc2] sm:$0xff]
      %v4138 = vld [vmem:[%s269 + $0xca] sm:$0xff]
      %v4139 = vld [vmem:[%s269 + $0xda] sm:$0xff]
      %v4140 = vld [vmem:[%s269 + $0xe2] sm:$0xff]
      %v4141 = vld [vmem:[%s269 + $0xf2] sm:$0xff]
      %v4142 = vld [vmem:[%s269 + $0xfa] sm:$0xff]
      %v4143 = vld [vmem:[%s269 + $0x10a] sm:$0xff]
      %v4144 = vld [vmem:[%s269 + $0x112] sm:$0xff]
      %4169 = vrot.lane.b32.xlu0 %v4121, 32
      %v4170 = vpop.permute.xlu0 %4169
      %4171 = vrot.lane.b32.xlu0 %v4122, 32
      %v4172 = vpop.permute.xlu0 %4171
      %4173 = vrot.lane.b32.xlu0 %v4123, 32
      %v4174 = vpop.permute.xlu0 %4173
      %4175 = vrot.lane.b32.xlu0 %v4124, 32
      %v4176 = vpop.permute.xlu0 %4175
      %4177 = vrot.lane.b32.xlu0 %v4125, 32
      %v4178 = vpop.permute.xlu0 %4177
      %4179 = vrot.lane.b32.xlu0 %v4126, 32
      %v4180 = vpop.permute.xlu0 %4179
      %4181 = vrot.lane.b32.xlu0 %v4127, 32
      %v4182 = vpop.permute.xlu0 %4181
      %4183 = vrot.lane.b32.xlu0 %v4128, 32
      %v4184 = vpop.permute.xlu0 %4183
      %4185 = vrot.lane.b32.xlu0 %v4129, 32
      %v4186 = vpop.permute.xlu0 %4185
      %4187 = vrot.lane.b32.xlu0 %v4130, 32
      %v4188 = vpop.permute.xlu0 %4187
      %4189 = vrot.lane.b32.xlu0 %v4131, 32
      %v4190 = vpop.permute.xlu0 %4189
      %4191 = vrot.lane.b32.xlu0 %v4132, 32
      %v4192 = vpop.permute.xlu0 %4191
      %4193 = vrot.lane.b32.xlu0 %v4133, 32
      %v4194 = vpop.permute.xlu0 %4193
      %4195 = vrot.lane.b32.xlu0 %v4134, 32
      %v4196 = vpop.permute.xlu0 %4195
      %4197 = vrot.lane.b32.xlu0 %v4135, 32
      %v4198 = vpop.permute.xlu0 %4197
      %4199 = vrot.lane.b32.xlu0 %v4136, 32
      %v4200 = vpop.permute.xlu0 %4199
      %4201 = vrot.lane.b32.xlu0 %v4137, 32
      %v4202 = vpop.permute.xlu0 %4201
      %4203 = vrot.lane.b32.xlu0 %v4138, 32
      %v4204 = vpop.permute.xlu0 %4203
      %4205 = vrot.lane.b32.xlu0 %v4139, 32
      %v4206 = vpop.permute.xlu0 %4205
      %4207 = vrot.lane.b32.xlu0 %v4140, 32
      %v4208 = vpop.permute.xlu0 %4207
      %4209 = vrot.lane.b32.xlu0 %v4141, 32
      %v4210 = vpop.permute.xlu0 %4209
      %4211 = vrot.lane.b32.xlu0 %v4142, 32
      %v4212 = vpop.permute.xlu0 %4211
      %4213 = vrot.lane.b32.xlu0 %v4143, 32
      %v4214 = vpop.permute.xlu0 %4213
      %4215 = vrot.lane.b32.xlu0 %v4144, 32
      %v4216 = vpop.permute.xlu0 %4215
      %4241 = vst.msk [vmem:[#allocation3 + $0x8] sm:$0xff] %vm537, %v4170
      %4242 = vst.msk [vmem:[#allocation3 + $0x20] sm:$0xff] %vm537, %v4172
      %4243 = vst.msk [vmem:[#allocation3 + $0x38] sm:$0xff] %vm537, %v4174
      %4244 = vst.msk [vmem:[#allocation3 + $0x50] sm:$0xff] %vm537, %v4176
      %4245 = vst.msk [vmem:[#allocation3 + $0x68] sm:$0xff] %vm537, %v4178
      %4246 = vst.msk [vmem:[#allocation3 + $0x80] sm:$0xff] %vm537, %v4180
      %4247 = vst.msk [vmem:[#allocation3 + $0x98] sm:$0xff] %vm537, %v4182
      %4248 = vst.msk [vmem:[#allocation3 + $0xb0] sm:$0xff] %vm537, %v4184
      %4249 = vst.msk [vmem:[#allocation3 + $0xc8] sm:$0xff] %vm537, %v4186
      %4250 = vst.msk [vmem:[#allocation3 + $0xe0] sm:$0xff] %vm537, %v4188
      %4251 = vst.msk [vmem:[#allocation3 + $0xf8] sm:$0xff] %vm537, %v4190
      %4252 = vst.msk [vmem:[#allocation3 + $0x110] sm:$0xff] %vm537, %v4192
      %4253 = vst.msk [vmem:[#allocation3 + $0x128] sm:$0xff] %vm537, %v4194
      %4254 = vst.msk [vmem:[#allocation3 + $0x140] sm:$0xff] %vm537, %v4196
      %4255 = vst.msk [vmem:[#allocation3 + $0x158] sm:$0xff] %vm537, %v4198
      %4256 = vst.msk [vmem:[#allocation3 + $0x170] sm:$0xff] %vm537, %v4200
      %4257 = vst.msk [vmem:[#allocation3 + $0x188] sm:$0xff] %vm537, %v4202
      %4258 = vst.msk [vmem:[#allocation3 + $0x1a0] sm:$0xff] %vm537, %v4204
      %4259 = vst.msk [vmem:[#allocation3 + $0x1b8] sm:$0xff] %vm537, %v4206
      %4260 = vst.msk [vmem:[#allocation3 + $0x1d0] sm:$0xff] %vm537, %v4208
      %4261 = vst.msk [vmem:[#allocation3 + $0x1e8] sm:$0xff] %vm537, %v4210
      %4262 = vst.msk [vmem:[#allocation3 + $0x200] sm:$0xff] %vm537, %v4212
      %4263 = vst.msk [vmem:[#allocation3 + $0x218] sm:$0xff] %vm537, %v4214
      %4264 = vst.msk [vmem:[#allocation3 + $0x230] sm:$0xff] %vm537, %v4216
      %v4265 = vld [vmem:[%s1044] sm:$0xff]
      %v4266 = vld [vmem:[%s1044 + $0x8] sm:$0xff]
      %v4267 = vld [vmem:[%s1044 + $0x18] sm:$0xff]
      %v4268 = vld [vmem:[%s1044 + $0x20] sm:$0xff]
      %v4269 = vld [vmem:[%s1044 + $0x30] sm:$0xff]
      %v4270 = vld [vmem:[%s1044 + $0x38] sm:$0xff]
      %v4271 = vld [vmem:[%s1044 + $0x48] sm:$0xff]
      %v4272 = vld [vmem:[%s1044 + $0x50] sm:$0xff]
      %v4273 = vld [vmem:[%s1044 + $0x60] sm:$0xff]
      %v4274 = vld [vmem:[%s1044 + $0x68] sm:$0xff]
      %v4275 = vld [vmem:[%s1044 + $0x78] sm:$0xff]
      %v4276 = vld [vmem:[%s1044 + $0x80] sm:$0xff]
      %v4277 = vld [vmem:[%s1044 + $0x90] sm:$0xff]
      %v4278 = vld [vmem:[%s1044 + $0x98] sm:$0xff]
      %v4279 = vld [vmem:[%s1044 + $0xa8] sm:$0xff]
      %v4280 = vld [vmem:[%s1044 + $0xb0] sm:$0xff]
      %v4281 = vld [vmem:[%s1044 + $0xc0] sm:$0xff]
      %v4282 = vld [vmem:[%s1044 + $0xc8] sm:$0xff]
      %v4283 = vld [vmem:[%s1044 + $0xd8] sm:$0xff]
      %v4284 = vld [vmem:[%s1044 + $0xe0] sm:$0xff]
      %v4285 = vld [vmem:[%s1044 + $0xf0] sm:$0xff]
      %v4286 = vld [vmem:[%s1044 + $0xf8] sm:$0xff]
      %v4287 = vld [vmem:[%s1044 + $0x108] sm:$0xff]
      %v4288 = vld [vmem:[%s1044 + $0x110] sm:$0xff]
      %4313 = vrot.lane.b32.xlu0 %v4265, 64
      %v4314 = vpop.permute.xlu0 %4313
      %4315 = vrot.lane.b32.xlu0 %v4266, 64
      %v4316 = vpop.permute.xlu0 %4315
      %4317 = vrot.lane.b32.xlu0 %v4267, 64
      %v4318 = vpop.permute.xlu0 %4317
      %4319 = vrot.lane.b32.xlu0 %v4268, 64
      %v4320 = vpop.permute.xlu0 %4319
      %4321 = vrot.lane.b32.xlu0 %v4269, 64
      %v4322 = vpop.permute.xlu0 %4321
      %4323 = vrot.lane.b32.xlu0 %v4270, 64
      %v4324 = vpop.permute.xlu0 %4323
      %4325 = vrot.lane.b32.xlu0 %v4271, 64
      %v4326 = vpop.permute.xlu0 %4325
      %4327 = vrot.lane.b32.xlu0 %v4272, 64
      %v4328 = vpop.permute.xlu0 %4327
      %4329 = vrot.lane.b32.xlu0 %v4273, 64
      %v4330 = vpop.permute.xlu0 %4329
      %4331 = vrot.lane.b32.xlu0 %v4274, 64
      %v4332 = vpop.permute.xlu0 %4331
      %4333 = vrot.lane.b32.xlu0 %v4275, 64
      %v4334 = vpop.permute.xlu0 %4333
      %4335 = vrot.lane.b32.xlu0 %v4276, 64
      %v4336 = vpop.permute.xlu0 %4335
      %4337 = vrot.lane.b32.xlu0 %v4277, 64
      %v4338 = vpop.permute.xlu0 %4337
      %4339 = vrot.lane.b32.xlu0 %v4278, 64
      %v4340 = vpop.permute.xlu0 %4339
      %4341 = vrot.lane.b32.xlu0 %v4279, 64
      %v4342 = vpop.permute.xlu0 %4341
      %4343 = vrot.lane.b32.xlu0 %v4280, 64
      %v4344 = vpop.permute.xlu0 %4343
      %4345 = vrot.lane.b32.xlu0 %v4281, 64
      %v4346 = vpop.permute.xlu0 %4345
      %4347 = vrot.lane.b32.xlu0 %v4282, 64
      %v4348 = vpop.permute.xlu0 %4347
      %4349 = vrot.lane.b32.xlu0 %v4283, 64
      %v4350 = vpop.permute.xlu0 %4349
      %4351 = vrot.lane.b32.xlu0 %v4284, 64
      %v4352 = vpop.permute.xlu0 %4351
      %4353 = vrot.lane.b32.xlu0 %v4285, 64
      %v4354 = vpop.permute.xlu0 %4353
      %4355 = vrot.lane.b32.xlu0 %v4286, 64
      %v4356 = vpop.permute.xlu0 %4355
      %4357 = vrot.lane.b32.xlu0 %v4287, 64
      %v4358 = vpop.permute.xlu0 %4357
      %4359 = vrot.lane.b32.xlu0 %v4288, 64
      %v4360 = vpop.permute.xlu0 %4359
      %4385 = vst.msk [vmem:[#allocation3 + $0x8] sm:$0xff] %vm682, %v4314
      %4386 = vst.msk [vmem:[#allocation3 + $0x20] sm:$0xff] %vm682, %v4316
      %4387 = vst.msk [vmem:[#allocation3 + $0x38] sm:$0xff] %vm682, %v4318
      %4388 = vst.msk [vmem:[#allocation3 + $0x50] sm:$0xff] %vm682, %v4320
      %4389 = vst.msk [vmem:[#allocation3 + $0x68] sm:$0xff] %vm682, %v4322
      %4390 = vst.msk [vmem:[#allocation3 + $0x80] sm:$0xff] %vm682, %v4324
      %4391 = vst.msk [vmem:[#allocation3 + $0x98] sm:$0xff] %vm682, %v4326
      %4392 = vst.msk [vmem:[#allocation3 + $0xb0] sm:$0xff] %vm682, %v4328
      %4393 = vst.msk [vmem:[#allocation3 + $0xc8] sm:$0xff] %vm682, %v4330
      %4394 = vst.msk [vmem:[#allocation3 + $0xe0] sm:$0xff] %vm682, %v4332
      %4395 = vst.msk [vmem:[#allocation3 + $0xf8] sm:$0xff] %vm682, %v4334
      %4396 = vst.msk [vmem:[#allocation3 + $0x110] sm:$0xff] %vm682, %v4336
      %4397 = vst.msk [vmem:[#allocation3 + $0x128] sm:$0xff] %vm682, %v4338
      %4398 = vst.msk [vmem:[#allocation3 + $0x140] sm:$0xff] %vm682, %v4340
      %4399 = vst.msk [vmem:[#allocation3 + $0x158] sm:$0xff] %vm682, %v4342
      %4400 = vst.msk [vmem:[#allocation3 + $0x170] sm:$0xff] %vm682, %v4344
      %4401 = vst.msk [vmem:[#allocation3 + $0x188] sm:$0xff] %vm682, %v4346
      %4402 = vst.msk [vmem:[#allocation3 + $0x1a0] sm:$0xff] %vm682, %v4348
      %4403 = vst.msk [vmem:[#allocation3 + $0x1b8] sm:$0xff] %vm682, %v4350
      %4404 = vst.msk [vmem:[#allocation3 + $0x1d0] sm:$0xff] %vm682, %v4352
      %4405 = vst.msk [vmem:[#allocation3 + $0x1e8] sm:$0xff] %vm682, %v4354
      %4406 = vst.msk [vmem:[#allocation3 + $0x200] sm:$0xff] %vm682, %v4356
      %4407 = vst.msk [vmem:[#allocation3 + $0x218] sm:$0xff] %vm682, %v4358
      %4408 = vst.msk [vmem:[#allocation3 + $0x230] sm:$0xff] %vm682, %v4360
      %v4409 = vld [vmem:[%s1044 + $0x1] sm:$0xff]
      %v4410 = vld [vmem:[%s1044 + $0x9] sm:$0xff]
      %v4411 = vld [vmem:[%s1044 + $0x19] sm:$0xff]
      %v4412 = vld [vmem:[%s1044 + $0x21] sm:$0xff]
      %v4413 = vld [vmem:[%s1044 + $0x31] sm:$0xff]
      %v4414 = vld [vmem:[%s1044 + $0x39] sm:$0xff]
      %v4415 = vld [vmem:[%s1044 + $0x49] sm:$0xff]
      %v4416 = vld [vmem:[%s1044 + $0x51] sm:$0xff]
      %v4417 = vld [vmem:[%s1044 + $0x61] sm:$0xff]
      %v4418 = vld [vmem:[%s1044 + $0x69] sm:$0xff]
      %v4419 = vld [vmem:[%s1044 + $0x79] sm:$0xff]
      %v4420 = vld [vmem:[%s1044 + $0x81] sm:$0xff]
      %v4421 = vld [vmem:[%s1044 + $0x91] sm:$0xff]
      %v4422 = vld [vmem:[%s1044 + $0x99] sm:$0xff]
      %v4423 = vld [vmem:[%s1044 + $0xa9] sm:$0xff]
      %v4424 = vld [vmem:[%s1044 + $0xb1] sm:$0xff]
      %v4425 = vld [vmem:[%s1044 + $0xc1] sm:$0xff]
      %v4426 = vld [vmem:[%s1044 + $0xc9] sm:$0xff]
      %v4427 = vld [vmem:[%s1044 + $0xd9] sm:$0xff]
      %v4428 = vld [vmem:[%s1044 + $0xe1] sm:$0xff]
      %v4429 = vld [vmem:[%s1044 + $0xf1] sm:$0xff]
      %v4430 = vld [vmem:[%s1044 + $0xf9] sm:$0xff]
      %v4431 = vld [vmem:[%s1044 + $0x109] sm:$0xff]
      %v4432 = vld [vmem:[%s1044 + $0x111] sm:$0xff]
      %4457 = vrot.lane.b32.xlu0 %v4409, 96
      %v4458 = vpop.permute.xlu0 %4457
      %4459 = vrot.lane.b32.xlu0 %v4410, 96
      %v4460 = vpop.permute.xlu0 %4459
      %4461 = vrot.lane.b32.xlu0 %v4411, 96
      %v4462 = vpop.permute.xlu0 %4461
      %4463 = vrot.lane.b32.xlu0 %v4412, 96
      %v4464 = vpop.permute.xlu0 %4463
      %4465 = vrot.lane.b32.xlu0 %v4413, 96
      %v4466 = vpop.permute.xlu0 %4465
      %4467 = vrot.lane.b32.xlu0 %v4414, 96
      %v4468 = vpop.permute.xlu0 %4467
      %4469 = vrot.lane.b32.xlu0 %v4415, 96
      %v4470 = vpop.permute.xlu0 %4469
      %4471 = vrot.lane.b32.xlu0 %v4416, 96
      %v4472 = vpop.permute.xlu0 %4471
      %4473 = vrot.lane.b32.xlu0 %v4417, 96
      %v4474 = vpop.permute.xlu0 %4473
      %4475 = vrot.lane.b32.xlu0 %v4418, 96
      %v4476 = vpop.permute.xlu0 %4475
      %4477 = vrot.lane.b32.xlu0 %v4419, 96
      %v4478 = vpop.permute.xlu0 %4477
      %4479 = vrot.lane.b32.xlu0 %v4420, 96
      %v4480 = vpop.permute.xlu0 %4479
      %4481 = vrot.lane.b32.xlu0 %v4421, 96
      %v4482 = vpop.permute.xlu0 %4481
      %4483 = vrot.lane.b32.xlu0 %v4422, 96
      %v4484 = vpop.permute.xlu0 %4483
      %4485 = vrot.lane.b32.xlu0 %v4423, 96
      %v4486 = vpop.permute.xlu0 %4485
      %4487 = vrot.lane.b32.xlu0 %v4424, 96
      %v4488 = vpop.permute.xlu0 %4487
      %4489 = vrot.lane.b32.xlu0 %v4425, 96
      %v4490 = vpop.permute.xlu0 %4489
      %4491 = vrot.lane.b32.xlu0 %v4426, 96
      %v4492 = vpop.permute.xlu0 %4491
      %4493 = vrot.lane.b32.xlu0 %v4427, 96
      %v4494 = vpop.permute.xlu0 %4493
      %4495 = vrot.lane.b32.xlu0 %v4428, 96
      %v4496 = vpop.permute.xlu0 %4495
      %4497 = vrot.lane.b32.xlu0 %v4429, 96
      %v4498 = vpop.permute.xlu0 %4497
      %4499 = vrot.lane.b32.xlu0 %v4430, 96
      %v4500 = vpop.permute.xlu0 %4499
      %4501 = vrot.lane.b32.xlu0 %v4431, 96
      %v4502 = vpop.permute.xlu0 %4501
      %4503 = vrot.lane.b32.xlu0 %v4432, 96
      %v4504 = vpop.permute.xlu0 %4503
      %4529 = vst.msk [vmem:[#allocation3 + $0x8] sm:$0xff] %vm827, %v4458
      %4530 = vst.msk [vmem:[#allocation3 + $0x20] sm:$0xff] %vm827, %v4460
      %4531 = vst.msk [vmem:[#allocation3 + $0x38] sm:$0xff] %vm827, %v4462
      %4532 = vst.msk [vmem:[#allocation3 + $0x50] sm:$0xff] %vm827, %v4464
      %4533 = vst.msk [vmem:[#allocation3 + $0x68] sm:$0xff] %vm827, %v4466
      %4534 = vst.msk [vmem:[#allocation3 + $0x80] sm:$0xff] %vm827, %v4468
      %4535 = vst.msk [vmem:[#allocation3 + $0x98] sm:$0xff] %vm827, %v4470
      %4536 = vst.msk [vmem:[#allocation3 + $0xb0] sm:$0xff] %vm827, %v4472
      %4537 = vst.msk [vmem:[#allocation3 + $0xc8] sm:$0xff] %vm827, %v4474
      %4538 = vst.msk [vmem:[#allocation3 + $0xe0] sm:$0xff] %vm827, %v4476
      %4539 = vst.msk [vmem:[#allocation3 + $0xf8] sm:$0xff] %vm827, %v4478
      %4540 = vst.msk [vmem:[#allocation3 + $0x110] sm:$0xff] %vm827, %v4480
      %4541 = vst.msk [vmem:[#allocation3 + $0x128] sm:$0xff] %vm827, %v4482
      %4542 = vst.msk [vmem:[#allocation3 + $0x140] sm:$0xff] %vm827, %v4484
      %4543 = vst.msk [vmem:[#allocation3 + $0x158] sm:$0xff] %vm827, %v4486
      %4544 = vst.msk [vmem:[#allocation3 + $0x170] sm:$0xff] %vm827, %v4488
      %4545 = vst.msk [vmem:[#allocation3 + $0x188] sm:$0xff] %vm827, %v4490
      %4546 = vst.msk [vmem:[#allocation3 + $0x1a0] sm:$0xff] %vm827, %v4492
      %4547 = vst.msk [vmem:[#allocation3 + $0x1b8] sm:$0xff] %vm827, %v4494
      %4548 = vst.msk [vmem:[#allocation3 + $0x1d0] sm:$0xff] %vm827, %v4496
      %4549 = vst.msk [vmem:[#allocation3 + $0x1e8] sm:$0xff] %vm827, %v4498
      %4550 = vst.msk [vmem:[#allocation3 + $0x200] sm:$0xff] %vm827, %v4500
      %4551 = vst.msk [vmem:[#allocation3 + $0x218] sm:$0xff] %vm827, %v4502
      %4552 = vst.msk [vmem:[#allocation3 + $0x230] sm:$0xff] %vm827, %v4504
      %v4553 = vld [vmem:[%s1044 + $0x2] sm:$0xff]
      %v4554 = vld [vmem:[%s1044 + $0xa] sm:$0xff]
      %v4555 = vld [vmem:[%s1044 + $0x1a] sm:$0xff]
      %v4556 = vld [vmem:[%s1044 + $0x22] sm:$0xff]
      %v4557 = vld [vmem:[%s1044 + $0x32] sm:$0xff]
      %v4558 = vld [vmem:[%s1044 + $0x3a] sm:$0xff]
      %v4559 = vld [vmem:[%s1044 + $0x4a] sm:$0xff]
      %v4560 = vld [vmem:[%s1044 + $0x52] sm:$0xff]
      %v4561 = vld [vmem:[%s1044 + $0x62] sm:$0xff]
      %v4562 = vld [vmem:[%s1044 + $0x6a] sm:$0xff]
      %v4563 = vld [vmem:[%s1044 + $0x7a] sm:$0xff]
      %v4564 = vld [vmem:[%s1044 + $0x82] sm:$0xff]
      %v4565 = vld [vmem:[%s1044 + $0x92] sm:$0xff]
      %v4566 = vld [vmem:[%s1044 + $0x9a] sm:$0xff]
      %v4567 = vld [vmem:[%s1044 + $0xaa] sm:$0xff]
      %v4568 = vld [vmem:[%s1044 + $0xb2] sm:$0xff]
      %v4569 = vld [vmem:[%s1044 + $0xc2] sm:$0xff]
      %v4570 = vld [vmem:[%s1044 + $0xca] sm:$0xff]
      %v4571 = vld [vmem:[%s1044 + $0xda] sm:$0xff]
      %v4572 = vld [vmem:[%s1044 + $0xe2] sm:$0xff]
      %v4573 = vld [vmem:[%s1044 + $0xf2] sm:$0xff]
      %v4574 = vld [vmem:[%s1044 + $0xfa] sm:$0xff]
      %v4575 = vld [vmem:[%s1044 + $0x10a] sm:$0xff]
      %v4576 = vld [vmem:[%s1044 + $0x112] sm:$0xff]
      %4577 = vst.msk [vmem:[#allocation3 + $0x10] sm:$0xff] %vm260, %v4553
      %4578 = vst.msk [vmem:[#allocation3 + $0x28] sm:$0xff] %vm260, %v4554
      %4579 = vst.msk [vmem:[#allocation3 + $0x40] sm:$0xff] %vm260, %v4555
      %4580 = vst.msk [vmem:[#allocation3 + $0x58] sm:$0xff] %vm260, %v4556
      %4581 = vst.msk [vmem:[#allocation3 + $0x70] sm:$0xff] %vm260, %v4557
      %4582 = vst.msk [vmem:[#allocation3 + $0x88] sm:$0xff] %vm260, %v4558
      %4583 = vst.msk [vmem:[#allocation3 + $0xa0] sm:$0xff] %vm260, %v4559
      %4584 = vst.msk [vmem:[#allocation3 + $0xb8] sm:$0xff] %vm260, %v4560
      %4585 = vst.msk [vmem:[#allocation3 + $0xd0] sm:$0xff] %vm260, %v4561
      %4586 = vst.msk [vmem:[#allocation3 + $0xe8] sm:$0xff] %vm260, %v4562
      %4587 = vst.msk [vmem:[#allocation3 + $0x100] sm:$0xff] %vm260, %v4563
      %4588 = vst.msk [vmem:[#allocation3 + $0x118] sm:$0xff] %vm260, %v4564
      %4589 = vst.msk [vmem:[#allocation3 + $0x130] sm:$0xff] %vm260, %v4565
      %4590 = vst.msk [vmem:[#allocation3 + $0x148] sm:$0xff] %vm260, %v4566
      %4591 = vst.msk [vmem:[#allocation3 + $0x160] sm:$0xff] %vm260, %v4567
      %4592 = vst.msk [vmem:[#allocation3 + $0x178] sm:$0xff] %vm260, %v4568
      %4593 = vst.msk [vmem:[#allocation3 + $0x190] sm:$0xff] %vm260, %v4569
      %4594 = vst.msk [vmem:[#allocation3 + $0x1a8] sm:$0xff] %vm260, %v4570
      %4595 = vst.msk [vmem:[#allocation3 + $0x1c0] sm:$0xff] %vm260, %v4571
      %4596 = vst.msk [vmem:[#allocation3 + $0x1d8] sm:$0xff] %vm260, %v4572
      %4597 = vst.msk [vmem:[#allocation3 + $0x1f0] sm:$0xff] %vm260, %v4573
      %4598 = vst.msk [vmem:[#allocation3 + $0x208] sm:$0xff] %vm260, %v4574
      %4599 = vst.msk [vmem:[#allocation3 + $0x220] sm:$0xff] %vm260, %v4575
      %4600 = vst.msk [vmem:[#allocation3 + $0x238] sm:$0xff] %vm260, %v4576
      %v4601 = vld [vmem:[#allocation3] sm:$0xff]
      %v4602 = vld [vmem:[#allocation3 + $0x8] sm:$0xff]
      %v4603 = vld [vmem:[#allocation3 + $0x10] sm:$0xff]
      %v4604 = vld [vmem:[#allocation3 + $0x18] sm:$0xff]
      %v4605 = vld [vmem:[#allocation3 + $0x20] sm:$0xff]
      %v4606 = vld [vmem:[#allocation3 + $0x28] sm:$0xff]
      %v4607 = vld [vmem:[#allocation3 + $0x30] sm:$0xff]
      %v4608 = vld [vmem:[#allocation3 + $0x38] sm:$0xff]
      %v4609 = vld [vmem:[#allocation3 + $0x40] sm:$0xff]
      %v4610 = vld [vmem:[#allocation3 + $0x48] sm:$0xff]
      %v4611 = vld [vmem:[#allocation3 + $0x50] sm:$0xff]
      %v4612 = vld [vmem:[#allocation3 + $0x58] sm:$0xff]
      %v4613 = vld [vmem:[#allocation3 + $0x60] sm:$0xff]
      %v4614 = vld [vmem:[#allocation3 + $0x68] sm:$0xff]
      %v4615 = vld [vmem:[#allocation3 + $0x70] sm:$0xff]
      %v4616 = vld [vmem:[#allocation3 + $0x78] sm:$0xff]
      %v4617 = vld [vmem:[#allocation3 + $0x80] sm:$0xff]
      %v4618 = vld [vmem:[#allocation3 + $0x88] sm:$0xff]
      %v4619 = vld [vmem:[#allocation3 + $0x90] sm:$0xff]
      %v4620 = vld [vmem:[#allocation3 + $0x98] sm:$0xff]
      %v4621 = vld [vmem:[#allocation3 + $0xa0] sm:$0xff]
      %v4622 = vld [vmem:[#allocation3 + $0xa8] sm:$0xff]
      %v4623 = vld [vmem:[#allocation3 + $0xb0] sm:$0xff]
      %v4624 = vld [vmem:[#allocation3 + $0xb8] sm:$0xff]
      %v4625 = vld [vmem:[#allocation3 + $0xc0] sm:$0xff]
      %v4626 = vld [vmem:[#allocation3 + $0xc8] sm:$0xff]
      %v4627 = vld [vmem:[#allocation3 + $0xd0] sm:$0xff]
      %v4628 = vld [vmem:[#allocation3 + $0xd8] sm:$0xff]
      %v4629 = vld [vmem:[#allocation3 + $0xe0] sm:$0xff]
      %v4630 = vld [vmem:[#allocation3 + $0xe8] sm:$0xff]
      %v4631 = vld [vmem:[#allocation3 + $0xf0] sm:$0xff]
      %v4632 = vld [vmem:[#allocation3 + $0xf8] sm:$0xff]
      %v4633 = vld [vmem:[#allocation3 + $0x100] sm:$0xff]
      %v4634 = vld [vmem:[#allocation3 + $0x108] sm:$0xff]
      %v4635 = vld [vmem:[#allocation3 + $0x110] sm:$0xff]
      %v4636 = vld [vmem:[#allocation3 + $0x118] sm:$0xff]
      %v4637 = vld [vmem:[#allocation3 + $0x120] sm:$0xff]
      %v4638 = vld [vmem:[#allocation3 + $0x128] sm:$0xff]
      %v4639 = vld [vmem:[#allocation3 + $0x130] sm:$0xff]
      %v4640 = vld [vmem:[#allocation3 + $0x138] sm:$0xff]
      %v4641 = vld [vmem:[#allocation3 + $0x140] sm:$0xff]
      %v4642 = vld [vmem:[#allocation3 + $0x148] sm:$0xff]
      %v4643 = vld [vmem:[#allocation3 + $0x150] sm:$0xff]
      %v4644 = vld [vmem:[#allocation3 + $0x158] sm:$0xff]
      %v4645 = vld [vmem:[#allocation3 + $0x160] sm:$0xff]
      %v4646 = vld [vmem:[#allocation3 + $0x168] sm:$0xff]
      %v4647 = vld [vmem:[#allocation3 + $0x170] sm:$0xff]
      %v4648 = vld [vmem:[#allocation3 + $0x178] sm:$0xff]
      %v4649 = vld [vmem:[#allocation3 + $0x180] sm:$0xff]
      %v4650 = vld [vmem:[#allocation3 + $0x188] sm:$0xff]
      %v4651 = vld [vmem:[#allocation3 + $0x190] sm:$0xff]
      %v4652 = vld [vmem:[#allocation3 + $0x198] sm:$0xff]
      %v4653 = vld [vmem:[#allocation3 + $0x1a0] sm:$0xff]
      %v4654 = vld [vmem:[#allocation3 + $0x1a8] sm:$0xff]
      %v4655 = vld [vmem:[#allocation3 + $0x1b0] sm:$0xff]
      %v4656 = vld [vmem:[#allocation3 + $0x1b8] sm:$0xff]
      %v4657 = vld [vmem:[#allocation3 + $0x1c0] sm:$0xff]
      %v4658 = vld [vmem:[#allocation3 + $0x1c8] sm:$0xff]
      %v4659 = vld [vmem:[#allocation3 + $0x1d0] sm:$0xff]
      %v4660 = vld [vmem:[#allocation3 + $0x1d8] sm:$0xff]
      %v4661 = vld [vmem:[#allocation3 + $0x1e0] sm:$0xff]
      %v4662 = vld [vmem:[#allocation3 + $0x1e8] sm:$0xff]
      %v4663 = vld [vmem:[#allocation3 + $0x1f0] sm:$0xff]
      %v4664 = vld [vmem:[#allocation3 + $0x1f8] sm:$0xff]
      %v4665 = vld [vmem:[#allocation3 + $0x200] sm:$0xff]
      %v4666 = vld [vmem:[#allocation3 + $0x208] sm:$0xff]
      %v4667 = vld [vmem:[#allocation3 + $0x210] sm:$0xff]
      %v4668 = vld [vmem:[#allocation3 + $0x218] sm:$0xff]
      %v4669 = vld [vmem:[#allocation3 + $0x220] sm:$0xff]
      %v4670 = vld [vmem:[#allocation3 + $0x228] sm:$0xff]
      %v4671 = vld [vmem:[#allocation3 + $0x230] sm:$0xff]
      %v4672 = vld [vmem:[#allocation3 + $0x238] sm:$0xff]
      %v4673 = vpack.c.bf16 %v4604, %v4601
      %v4674 = vpack.c.bf16 %v4605, %v4602
      %v4675 = vpack.c.bf16 %v4606, %v4603
      %v4676 = vpack.c.bf16 %v4610, %v4607
      %v4677 = vpack.c.bf16 %v4611, %v4608
      %v4678 = vpack.c.bf16 %v4612, %v4609
      %v4679 = vpack.c.bf16 %v4616, %v4613
      %v4680 = vpack.c.bf16 %v4617, %v4614
      %v4681 = vpack.c.bf16 %v4618, %v4615
      %v4682 = vpack.c.bf16 %v4622, %v4619
      %v4683 = vpack.c.bf16 %v4623, %v4620
      %v4684 = vpack.c.bf16 %v4624, %v4621
      %v4685 = vpack.c.bf16 %v4628, %v4625
      %v4686 = vpack.c.bf16 %v4629, %v4626
      %v4687 = vpack.c.bf16 %v4630, %v4627
      %v4688 = vpack.c.bf16 %v4634, %v4631
      %v4689 = vpack.c.bf16 %v4635, %v4632
      %v4690 = vpack.c.bf16 %v4636, %v4633
      %v4691 = vpack.c.bf16 %v4640, %v4637
      %v4692 = vpack.c.bf16 %v4641, %v4638
      %v4693 = vpack.c.bf16 %v4642, %v4639
      %v4694 = vpack.c.bf16 %v4646, %v4643
      %v4695 = vpack.c.bf16 %v4647, %v4644
      %v4696 = vpack.c.bf16 %v4648, %v4645
      %v4697 = vpack.c.bf16 %v4652, %v4649
      %v4698 = vpack.c.bf16 %v4653, %v4650
      %v4699 = vpack.c.bf16 %v4654, %v4651
      %v4700 = vpack.c.bf16 %v4658, %v4655
      %v4701 = vpack.c.bf16 %v4659, %v4656
      %v4702 = vpack.c.bf16 %v4660, %v4657
      %v4703 = vpack.c.bf16 %v4664, %v4661
      %v4704 = vpack.c.bf16 %v4665, %v4662
      %v4705 = vpack.c.bf16 %v4666, %v4663
      %v4706 = vpack.c.bf16 %v4670, %v4667
      %v4707 = vpack.c.bf16 %v4671, %v4668
      %v4708 = vpack.c.bf16 %v4672, %v4669
      %s4709 = scalar_lea.vmem %s1, 288
      %v4710 = vld [vmem:[%s4709] sm:$0xf]
      %v4711 = vld [vmem:[%s4709 + $0x4] sm:$0xf]
      %v4712 = vld [vmem:[%s4709 + $0x8] sm:$0xf]
      %v4713 = vld [vmem:[%s4709 + $0xc] sm:$0xf]
      %v4714 = vld [vmem:[%s4709 + $0x10] sm:$0xf]
      %v4715 = vld [vmem:[%s4709 + $0x14] sm:$0xf]
      %v4716 = vld [vmem:[%s4709 + $0x18] sm:$0xf]
      %v4717 = vld [vmem:[%s4709 + $0x1c] sm:$0xf]
      %v4718 = vld [vmem:[%s4709 + $0x20] sm:$0xf]
      %v4719 = vld [vmem:[%s4709 + $0x24] sm:$0xf]
      %v4720 = vld [vmem:[%s4709 + $0x28] sm:$0xf]
      %v4721 = vld [vmem:[%s4709 + $0x2c] sm:$0xf]
      %v4722 = vld [vmem:[%s4709 + $0x30] sm:$0xf]
      %v4723 = vld [vmem:[%s4709 + $0x34] sm:$0xf]
      %v4724 = vld [vmem:[%s4709 + $0x38] sm:$0xf]
      %v4725 = vld [vmem:[%s4709 + $0x3c] sm:$0xf]
      %v4726 = vld [vmem:[%s4709 + $0x40] sm:$0xf]
      %v4727 = vld [vmem:[%s4709 + $0x44] sm:$0xf]
      %v4728 = vld [vmem:[%s4709 + $0x48] sm:$0xf]
      %v4729 = vld [vmem:[%s4709 + $0x4c] sm:$0xf]
      %v4730 = vld [vmem:[%s4709 + $0x50] sm:$0xf]
      %v4731 = vld [vmem:[%s4709 + $0x54] sm:$0xf]
      %v4732 = vld [vmem:[%s4709 + $0x58] sm:$0xf]
      %v4733 = vld [vmem:[%s4709 + $0x5c] sm:$0xf]
      %v4734 = vld [vmem:[%s4709 + $0x60] sm:$0xf]
      %v4735 = vld [vmem:[%s4709 + $0x64] sm:$0xf]
      %v4736 = vld [vmem:[%s4709 + $0x68] sm:$0xf]
      %v4737 = vld [vmem:[%s4709 + $0x6c] sm:$0xf]
      %v4738 = vld [vmem:[%s4709 + $0x70] sm:$0xf]
      %v4739 = vld [vmem:[%s4709 + $0x74] sm:$0xf]
      %v4740 = vld [vmem:[%s4709 + $0x78] sm:$0xf]
      %v4741 = vld [vmem:[%s4709 + $0x7c] sm:$0xf]
      %v4742 = vld [vmem:[%s4709 + $0x80] sm:$0xf]
      %v4743 = vld [vmem:[%s4709 + $0x84] sm:$0xf]
      %v4744 = vld [vmem:[%s4709 + $0x88] sm:$0xf]
      %v4745 = vld [vmem:[%s4709 + $0x8c] sm:$0xf]
      %s4746 = scalar_lea.vmem %s2, 2
      %v4747 = vld [vmem:[%s4746] sm:$0x1]
      %v4749 = vlaneseq
      %v4750 = vshrl.u32 %v4749, 7
      %v4751 = vsub.s32 0, %v4750
      %v4752 = vrot.slane %v4747, %v4751
      %v4790 = vunpack.c.l.b16 %v4710
      %v4791 = vunpack.c.l.b16 %v4711
      %v4792 = vunpack.c.l.b16 %v4712
      %v4793 = vunpack.c.l.b16 %v4713
      %v4794 = vunpack.c.l.b16 %v4714
      %v4795 = vunpack.c.l.b16 %v4715
      %v4796 = vunpack.c.l.b16 %v4716
      %v4797 = vunpack.c.l.b16 %v4717
      %v4798 = vunpack.c.l.b16 %v4718
      %v4799 = vunpack.c.l.b16 %v4719
      %v4800 = vunpack.c.l.b16 %v4720
      %v4801 = vunpack.c.l.b16 %v4721
      %v4802 = vunpack.c.l.b16 %v4722
      %v4803 = vunpack.c.l.b16 %v4723
      %v4804 = vunpack.c.l.b16 %v4724
      %v4805 = vunpack.c.l.b16 %v4725
      %v4806 = vunpack.c.l.b16 %v4726
      %v4807 = vunpack.c.l.b16 %v4727
      %v4808 = vunpack.c.l.b16 %v4728
      %v4809 = vunpack.c.l.b16 %v4729
      %v4810 = vunpack.c.l.b16 %v4730
      %v4811 = vunpack.c.l.b16 %v4731
      %v4812 = vunpack.c.l.b16 %v4732
      %v4813 = vunpack.c.l.b16 %v4733
      %v4814 = vunpack.c.l.b16 %v4734
      %v4815 = vunpack.c.l.b16 %v4735
      %v4816 = vunpack.c.l.b16 %v4736
      %v4817 = vunpack.c.l.b16 %v4737
      %v4818 = vunpack.c.l.b16 %v4738
      %v4819 = vunpack.c.l.b16 %v4739
      %v4820 = vunpack.c.l.b16 %v4740
      %v4821 = vunpack.c.l.b16 %v4741
      %v4822 = vunpack.c.l.b16 %v4742
      %v4823 = vunpack.c.l.b16 %v4743
      %v4824 = vunpack.c.l.b16 %v4744
      %v4825 = vunpack.c.l.b16 %v4745
      %v4826 = vpack.c.b16 %v4791, %v4790
      %v4827 = vpack.c.b16 %v4793, %v4792
      %v4828 = vpack.c.b16 %v4795, %v4794
      %v4829 = vpack.c.b16 %v4797, %v4796
      %v4830 = vpack.c.b16 %v4799, %v4798
      %v4831 = vpack.c.b16 %v4801, %v4800
      %v4832 = vpack.c.b16 %v4803, %v4802
      %v4833 = vpack.c.b16 %v4805, %v4804
      %v4834 = vpack.c.b16 %v4807, %v4806
      %v4835 = vpack.c.b16 %v4809, %v4808
      %v4836 = vpack.c.b16 %v4811, %v4810
      %v4837 = vpack.c.b16 %v4813, %v4812
      %v4838 = vpack.c.b16 %v4815, %v4814
      %v4839 = vpack.c.b16 %v4817, %v4816
      %v4840 = vpack.c.b16 %v4819, %v4818
      %v4841 = vpack.c.b16 %v4821, %v4820
      %v4842 = vpack.c.b16 %v4823, %v4822
      %v4843 = vpack.c.b16 %v4825, %v4824
      %v4863 = vsel %vm260, %v4675, 0
      %v4866 = vsel %vm260, %v4678, 0
      %v4869 = vsel %vm260, %v4681, 0
      %v4872 = vsel %vm260, %v4684, 0
      %v4875 = vsel %vm260, %v4687, 0
      %v4878 = vsel %vm260, %v4690, 0
      %v4881 = vsel %vm260, %v4693, 0
      %v4884 = vsel %vm260, %v4696, 0
      %v4887 = vsel %vm260, %v4699, 0
      %v4890 = vsel %vm260, %v4702, 0
      %v4893 = vsel %vm260, %v4705, 0
      %v4896 = vsel %vm260, %v4708, 0
      %4898 = vmatprep.subr.bf16.mxu0 0
      %4899 = vmatpush1.bf16.msra.mxu0 %v4826
      %4900 = vmatprep.subr.bf16.mxu0 0
      %4901 = vmatpush1.bf16.msra.mxu0 %v4827
      %4902 = vmatprep.subr.bf16.mxu0 0
      %4903 = vmatpush1.bf16.msra.mxu0 %v4828
      %4904 = vmatprep.subr.bf16.mxu0 0
      %4905 = vmatpush1.bf16.msra.mxu0 %v4829
      %4906 = vmatprep.subr.bf16.mxu0 0
      %4907 = vmatpush1.bf16.msra.mxu0 %v4830
      %4908 = vmatprep.subr.bf16.mxu0 0
      %4909 = vmatpush1.bf16.msra.mxu0 %v4831
      %4910 = vmatprep.subr.bf16.mxu0 0
      %4911 = vmatpush1.bf16.msra.mxu0 %v4832
      %4912 = vmatprep.subr.bf16.mxu0 0
      %4913 = vmatpush1.bf16.msra.mxu0 %v4833
      %4914 = vmatprep.subr.bf16.mxu0 0
      %4915 = vmatpush1.bf16.msra.mxu0 %v4834
      %4916 = vmatprep.subr.bf16.mxu0 0
      %4917 = vmatpush1.bf16.msra.mxu0 %v4835
      %4918 = vmatprep.subr.bf16.mxu0 0
      %4919 = vmatpush1.bf16.msra.mxu0 %v4836
      %4920 = vmatprep.subr.bf16.mxu0 0
      %4921 = vmatpush1.bf16.msra.mxu0 %v4837
      %4922 = vmatprep.subr.bf16.mxu0 0
      %4923 = vmatpush1.bf16.msra.mxu0 %v4838
      %4924 = vmatprep.subr.bf16.mxu0 0
      %4925 = vmatpush1.bf16.msra.mxu0 %v4839
      %4926 = vmatprep.subr.bf16.mxu0 0
      %4927 = vmatpush1.bf16.msra.mxu0 %v4840
      %4928 = vmatprep.subr.bf16.mxu0 0
      %4929 = vmatpush1.bf16.msra.mxu0 %v4841
      %4930 = vmatprep.mubr.bf16.mxu0 %v4674
      %4931 = vmatmul.mubr.bf16.gmra.mrb[0].mxu0 %v4673
      %v4932 = vpop.f32.mrb[0].mxu0
      %v4933 = vadd.f32 %v4752, %v4932
      %v4934 = vpop.f32.mrb[0].mxu0
      %v4935 = vpop.f32.mrb[0].mxu0
      %v4936 = vadd.f32 %v4752, %v4935
      %v4937 = vpop.f32.mrb[0].mxu0
      %4938 = vmatprep.mubr.bf16.mxu0 %v4677
      %4939 = vmatmul.mubr.bf16.gmra.mrb[0].mxu0 %v4676
      %v4940 = vpop.f32.mrb[0].mxu0
      %v4941 = vadd.f32 %v4752, %v4940
      %v4942 = vpop.f32.mrb[0].mxu0
      %v4943 = vpop.f32.mrb[0].mxu0
      %v4944 = vadd.f32 %v4752, %v4943
      %v4945 = vpop.f32.mrb[0].mxu0
      %4946 = vmatprep.mubr.bf16.mxu0 %v4680
      %4947 = vmatmul.mubr.bf16.gmra.mrb[0].mxu0 %v4679
      %v4948 = vpop.f32.mrb[0].mxu0
      %v4949 = vadd.f32 %v4752, %v4948
      %v4950 = vpop.f32.mrb[0].mxu0
      %v4951 = vpop.f32.mrb[0].mxu0
      %v4952 = vadd.f32 %v4752, %v4951
      %v4953 = vpop.f32.mrb[0].mxu0
      %4954 = vmatprep.mubr.bf16.mxu0 %v4683
      %4955 = vmatmul.mubr.bf16.gmra.mrb[0].mxu0 %v4682
      %v4956 = vpop.f32.mrb[0].mxu0
      %v4957 = vadd.f32 %v4752, %v4956
      %v4958 = vpop.f32.mrb[0].mxu0
      %v4959 = vpop.f32.mrb[0].mxu0
      %v4960 = vadd.f32 %v4752, %v4959
      %v4961 = vpop.f32.mrb[0].mxu0
      %4962 = vmatprep.mubr.bf16.mxu0 %v4686
      %4963 = vmatmul.mubr.bf16.gmra.mrb[0].mxu0 %v4685
      %v4964 = vpop.f32.mrb[0].mxu0
      %v4965 = vadd.f32 %v4752, %v4964
      %v4966 = vpop.f32.mrb[0].mxu0
      %v4967 = vpop.f32.mrb[0].mxu0
      %v4968 = vadd.f32 %v4752, %v4967
      %v4969 = vpop.f32.mrb[0].mxu0
      %4970 = vmatprep.mubr.bf16.mxu0 %v4689
      %4971 = vmatmul.mubr.bf16.gmra.mrb[0].mxu0 %v4688
      %v4972 = vpop.f32.mrb[0].mxu0
      %v4973 = vadd.f32 %v4752, %v4972
      %v4974 = vpop.f32.mrb[0].mxu0
      %v4975 = vpop.f32.mrb[0].mxu0
      %v4976 = vadd.f32 %v4752, %v4975
      %v4977 = vpop.f32.mrb[0].mxu0
      %4978 = vmatprep.mubr.bf16.mxu0 %v4692
      %4979 = vmatmul.mubr.bf16.gmra.mrb[0].mxu0 %v4691
      %v4980 = vpop.f32.mrb[0].mxu0
      %v4981 = vadd.f32 %v4752, %v4980
      %v4982 = vpop.f32.mrb[0].mxu0
      %v4983 = vpop.f32.mrb[0].mxu0
      %v4984 = vadd.f32 %v4752, %v4983
      %v4985 = vpop.f32.mrb[0].mxu0
      %4986 = vmatprep.mubr.bf16.mxu0 %v4695
      %4987 = vmatmul.mubr.bf16.gmra.mrb[0].mxu0 %v4694
      %v4988 = vpop.f32.mrb[0].mxu0
      %v4989 = vadd.f32 %v4752, %v4988
      %v4990 = vpop.f32.mrb[0].mxu0
      %v4991 = vpop.f32.mrb[0].mxu0
      %v4992 = vadd.f32 %v4752, %v4991
      %v4993 = vpop.f32.mrb[0].mxu0
      %4994 = vmatprep.mubr.bf16.mxu0 %v4698
      %4995 = vmatmul.mubr.bf16.gmra.mrb[0].mxu0 %v4697
      %v4996 = vpop.f32.mrb[0].mxu0
      %v4997 = vadd.f32 %v4752, %v4996
      %v4998 = vpop.f32.mrb[0].mxu0
      %v4999 = vpop.f32.mrb[0].mxu0
      %v5000 = vadd.f32 %v4752, %v4999
      %v5001 = vpop.f32.mrb[0].mxu0
      %5002 = vmatprep.mubr.bf16.mxu0 %v4701
      %5003 = vmatmul.mubr.bf16.gmra.mrb[0].mxu0 %v4700
      %v5004 = vpop.f32.mrb[0].mxu0
      %v5005 = vadd.f32 %v4752, %v5004
      %v5006 = vpop.f32.mrb[0].mxu0
      %v5007 = vpop.f32.mrb[0].mxu0
      %v5008 = vadd.f32 %v4752, %v5007
      %v5009 = vpop.f32.mrb[0].mxu0
      %5010 = vmatprep.mubr.bf16.mxu0 %v4704
      %5011 = vmatmul.mubr.bf16.gmra.mrb[0].mxu0 %v4703
      %v5012 = vpop.f32.mrb[0].mxu0
      %v5013 = vadd.f32 %v4752, %v5012
      %v5014 = vpop.f32.mrb[0].mxu0
      %v5015 = vpop.f32.mrb[0].mxu0
      %v5016 = vadd.f32 %v4752, %v5015
      %v5017 = vpop.f32.mrb[0].mxu0
      %5018 = vmatprep.mubr.bf16.mxu0 %v4707
      %5019 = vmatmul.mubr.bf16.gmra.mrb[0].mxu0 %v4706
      %v5020 = vpop.f32.mrb[0].mxu0
      %v5021 = vadd.f32 %v4752, %v5020
      %v5022 = vpop.f32.mrb[0].mxu0
      %v5023 = vpop.f32.mrb[0].mxu0
      %v5024 = vadd.f32 %v4752, %v5023
      %v5025 = vpop.f32.mrb[0].mxu0
      %5026 = vdwg.mxu0
      %5027 = vmatprep.subr.bf16.mxu0 0
      %5028 = vmatpush1.bf16.msra.mxu0 %v4842
      %5029 = vmatprep.subr.bf16.mxu0 0
      %5030 = vmatpush1.bf16.msra.mxu0 %v4843
      %5031 = vmatprep.subr.bf16.mxu0 0
      %5032 = vmatpush1.bf16.msra.mxu0 0
      %5033 = vmatprep.subr.bf16.mxu0 0
      %5034 = vmatpush1.bf16.msra.mxu0 0
      %5035 = vmatprep.subr.bf16.mxu0 0
      %5036 = vmatpush1.bf16.msra.mxu0 0
      %5037 = vmatprep.subr.bf16.mxu0 0
      %5038 = vmatpush1.bf16.msra.mxu0 0
      %5039 = vmatprep.subr.bf16.mxu0 0
      %5040 = vmatpush1.bf16.msra.mxu0 0
      %5041 = vmatprep.subr.bf16.mxu0 0
      %5042 = vmatpush1.bf16.msra.mxu0 0
      %5043 = vmatprep.subr.bf16.mxu0 0
      %5044 = vmatpush1.bf16.msra.mxu0 0
      %5045 = vmatprep.subr.bf16.mxu0 0
      %5046 = vmatpush1.bf16.msra.mxu0 0
      %5047 = vmatprep.subr.bf16.mxu0 0
      %5048 = vmatpush1.bf16.msra.mxu0 0
      %5049 = vmatprep.subr.bf16.mxu0 0
      %5050 = vmatpush1.bf16.msra.mxu0 0
      %5051 = vmatprep.subr.bf16.mxu0 0
      %5052 = vmatpush1.bf16.msra.mxu0 0
      %5053 = vmatprep.subr.bf16.mxu0 0
      %5054 = vmatpush1.bf16.msra.mxu0 0
      %5055 = vmatprep.subr.bf16.mxu0 0
      %5056 = vmatpush1.bf16.msra.mxu0 0
      %5057 = vmatprep.subr.bf16.mxu0 0
      %5058 = vmatpush1.bf16.msra.mxu0 0
      %5059 = vmatprep.mubr.bf16.mxu0 0
      %5060 = vmatmul.mubr.bf16.gmra.mrb[0].mxu0 %v4863
      %v5061 = vpop.f32.mrb[0].mxu0
      %v5062 = vadd.f32 %v4933, %v5061
      %v5063 = vpop.f32.mrb[0].mxu0
      %v5064 = vpop.f32.mrb[0].mxu0
      %v5065 = vadd.f32 %v4936, %v5064
      %v5066 = vpop.f32.mrb[0].mxu0
      %5067 = vmatprep.mubr.bf16.mxu0 0
      %5068 = vmatmul.mubr.bf16.gmra.mrb[0].mxu0 %v4866
      %v5069 = vpop.f32.mrb[0].mxu0
      %v5070 = vadd.f32 %v4941, %v5069
      %v5071 = vpop.f32.mrb[0].mxu0
      %v5072 = vpop.f32.mrb[0].mxu0
      %v5073 = vadd.f32 %v4944, %v5072
      %v5074 = vpop.f32.mrb[0].mxu0
      %5075 = vmatprep.mubr.bf16.mxu0 0
      %5076 = vmatmul.mubr.bf16.gmra.mrb[0].mxu0 %v4869
      %v5077 = vpop.f32.mrb[0].mxu0
      %v5078 = vadd.f32 %v4949, %v5077
      %v5079 = vpop.f32.mrb[0].mxu0
      %v5080 = vpop.f32.mrb[0].mxu0
      %v5081 = vadd.f32 %v4952, %v5080
      %v5082 = vpop.f32.mrb[0].mxu0
      %5083 = vmatprep.mubr.bf16.mxu0 0
      %5084 = vmatmul.mubr.bf16.gmra.mrb[0].mxu0 %v4872
      %v5085 = vpop.f32.mrb[0].mxu0
      %v5086 = vadd.f32 %v4957, %v5085
      %v5087 = vpop.f32.mrb[0].mxu0
      %v5088 = vpop.f32.mrb[0].mxu0
      %v5089 = vadd.f32 %v4960, %v5088
      %v5090 = vpop.f32.mrb[0].mxu0
      %5091 = vmatprep.mubr.bf16.mxu0 0
      %5092 = vmatmul.mubr.bf16.gmra.mrb[0].mxu0 %v4875
      %v5093 = vpop.f32.mrb[0].mxu0
      %v5094 = vadd.f32 %v4965, %v5093
      %v5095 = vpop.f32.mrb[0].mxu0
      %v5096 = vpop.f32.mrb[0].mxu0
      %v5097 = vadd.f32 %v4968, %v5096
      %v5098 = vpop.f32.mrb[0].mxu0
      %5099 = vmatprep.mubr.bf16.mxu0 0
      %5100 = vmatmul.mubr.bf16.gmra.mrb[0].mxu0 %v4878
      %v5101 = vpop.f32.mrb[0].mxu0
      %v5102 = vadd.f32 %v4973, %v5101
      %v5103 = vpop.f32.mrb[0].mxu0
      %v5104 = vpop.f32.mrb[0].mxu0
      %v5105 = vadd.f32 %v4976, %v5104
      %v5106 = vpop.f32.mrb[0].mxu0
      %5107 = vmatprep.mubr.bf16.mxu0 0
      %5108 = vmatmul.mubr.bf16.gmra.mrb[0].mxu0 %v4881
      %v5109 = vpop.f32.mrb[0].mxu0
      %v5110 = vadd.f32 %v4981, %v5109
      %v5111 = vpop.f32.mrb[0].mxu0
      %v5112 = vpop.f32.mrb[0].mxu0
      %v5113 = vadd.f32 %v4984, %v5112
      %v5114 = vpop.f32.mrb[0].mxu0
      %5115 = vmatprep.mubr.bf16.mxu0 0
      %5116 = vmatmul.mubr.bf16.gmra.mrb[0].mxu0 %v4884
      %v5117 = vpop.f32.mrb[0].mxu0
      %v5118 = vadd.f32 %v4989, %v5117
      %v5119 = vpop.f32.mrb[0].mxu0
      %v5120 = vpop.f32.mrb[0].mxu0
      %v5121 = vadd.f32 %v4992, %v5120
      %v5122 = vpop.f32.mrb[0].mxu0
      %5123 = vmatprep.mubr.bf16.mxu0 0
      %5124 = vmatmul.mubr.bf16.gmra.mrb[0].mxu0 %v4887
      %v5125 = vpop.f32.mrb[0].mxu0
      %v5126 = vadd.f32 %v4997, %v5125
      %v5127 = vpop.f32.mrb[0].mxu0
      %v5128 = vpop.f32.mrb[0].mxu0
      %v5129 = vadd.f32 %v5000, %v5128
      %v5130 = vpop.f32.mrb[0].mxu0
      %5131 = vmatprep.mubr.bf16.mxu0 0
      %5132 = vmatmul.mubr.bf16.gmra.mrb[0].mxu0 %v4890
      %v5133 = vpop.f32.mrb[0].mxu0
      %v5134 = vadd.f32 %v5005, %v5133
      %v5135 = vpop.f32.mrb[0].mxu0
      %v5136 = vpop.f32.mrb[0].mxu0
      %v5137 = vadd.f32 %v5008, %v5136
      %v5138 = vpop.f32.mrb[0].mxu0
      %5139 = vmatprep.mubr.bf16.mxu0 0
      %5140 = vmatmul.mubr.bf16.gmra.mrb[0].mxu0 %v4893
      %v5141 = vpop.f32.mrb[0].mxu0
      %v5142 = vadd.f32 %v5013, %v5141
      %v5143 = vpop.f32.mrb[0].mxu0
      %v5144 = vpop.f32.mrb[0].mxu0
      %v5145 = vadd.f32 %v5016, %v5144
      %v5146 = vpop.f32.mrb[0].mxu0
      %5147 = vmatprep.mubr.bf16.mxu0 0
      %5148 = vmatmul.mubr.bf16.gmra.mrb[0].mxu0 %v4896
      %v5149 = vpop.f32.mrb[0].mxu0
      %v5150 = vadd.f32 %v5021, %v5149
      %v5151 = vpop.f32.mrb[0].mxu0
      %v5152 = vpop.f32.mrb[0].mxu0
      %v5153 = vadd.f32 %v5024, %v5152
      %v5154 = vpop.f32.mrb[0].mxu0
      %5155 = vdwg.mxu0
      %v5156 = vmax.f32 %v5062, 0.0
      %v5157 = vmax.f32 %v5065, 0.0
      %v5158 = vmax.f32 %v5070, 0.0
      %v5159 = vmax.f32 %v5073, 0.0
      %v5160 = vmax.f32 %v5078, 0.0
      %v5161 = vmax.f32 %v5081, 0.0
      %v5162 = vmax.f32 %v5086, 0.0
      %v5163 = vmax.f32 %v5089, 0.0
      %v5164 = vmax.f32 %v5094, 0.0
      %v5165 = vmax.f32 %v5097, 0.0
      %v5166 = vmax.f32 %v5102, 0.0
      %v5167 = vmax.f32 %v5105, 0.0
      %v5168 = vmax.f32 %v5110, 0.0
      %v5169 = vmax.f32 %v5113, 0.0
      %v5170 = vmax.f32 %v5118, 0.0
      %v5171 = vmax.f32 %v5121, 0.0
      %v5172 = vmax.f32 %v5126, 0.0
      %v5173 = vmax.f32 %v5129, 0.0
      %v5174 = vmax.f32 %v5134, 0.0
      %v5175 = vmax.f32 %v5137, 0.0
      %v5176 = vmax.f32 %v5142, 0.0
      %v5177 = vmax.f32 %v5145, 0.0
      %v5178 = vmax.f32 %v5150, 0.0
      %v5179 = vmax.f32 %v5153, 0.0
      %5180 = vst.msk [vmem:[%s269 + $0x1] sm:$0xff] %vm260, %v5156
      %5181 = vst.msk [vmem:[%s269 + $0x9] sm:$0xff] %vm260, %v5157
      %5182 = vst.msk [vmem:[%s269 + $0x19] sm:$0xff] %vm260, %v5158
      %5183 = vst.msk [vmem:[%s269 + $0x21] sm:$0xff] %vm260, %v5159
      %5184 = vst.msk [vmem:[%s269 + $0x31] sm:$0xff] %vm260, %v5160
      %5185 = vst.msk [vmem:[%s269 + $0x39] sm:$0xff] %vm260, %v5161
      %5186 = vst.msk [vmem:[%s269 + $0x49] sm:$0xff] %vm260, %v5162
      %5187 = vst.msk [vmem:[%s269 + $0x51] sm:$0xff] %vm260, %v5163
      %5188 = vst.msk [vmem:[%s269 + $0x61] sm:$0xff] %vm260, %v5164
      %5189 = vst.msk [vmem:[%s269 + $0x69] sm:$0xff] %vm260, %v5165
      %5190 = vst.msk [vmem:[%s269 + $0x79] sm:$0xff] %vm260, %v5166
      %5191 = vst.msk [vmem:[%s269 + $0x81] sm:$0xff] %vm260, %v5167
      %5192 = vst.msk [vmem:[%s269 + $0x91] sm:$0xff] %vm260, %v5168
      %5193 = vst.msk [vmem:[%s269 + $0x99] sm:$0xff] %vm260, %v5169
      %5194 = vst.msk [vmem:[%s269 + $0xa9] sm:$0xff] %vm260, %v5170
      %5195 = vst.msk [vmem:[%s269 + $0xb1] sm:$0xff] %vm260, %v5171
      %5196 = vst.msk [vmem:[%s269 + $0xc1] sm:$0xff] %vm260, %v5172
      %5197 = vst.msk [vmem:[%s269 + $0xc9] sm:$0xff] %vm260, %v5173
      %5198 = vst.msk [vmem:[%s269 + $0xd9] sm:$0xff] %vm260, %v5174
      %5199 = vst.msk [vmem:[%s269 + $0xe1] sm:$0xff] %vm260, %v5175
      %5200 = vst.msk [vmem:[%s269 + $0xf1] sm:$0xff] %vm260, %v5176
      %5201 = vst.msk [vmem:[%s269 + $0xf9] sm:$0xff] %vm260, %v5177
      %5202 = vst.msk [vmem:[%s269 + $0x109] sm:$0xff] %vm260, %v5178
      %5203 = vst.msk [vmem:[%s269 + $0x111] sm:$0xff] %vm260, %v5179
      %v5204 = vld [vmem:[#allocation2] sm:$0xff]
      %v5205 = vld [vmem:[#allocation2 + $0x8] sm:$0xff]
      %v5206 = vld [vmem:[#allocation2 + $0x18] sm:$0xff]
      %v5207 = vld [vmem:[#allocation2 + $0x20] sm:$0xff]
      %v5208 = vld [vmem:[#allocation2 + $0x30] sm:$0xff]
      %v5209 = vld [vmem:[#allocation2 + $0x38] sm:$0xff]
      %v5210 = vld [vmem:[#allocation2 + $0x48] sm:$0xff]
      %v5211 = vld [vmem:[#allocation2 + $0x50] sm:$0xff]
      %v5212 = vld [vmem:[#allocation2 + $0x60] sm:$0xff]
      %v5213 = vld [vmem:[#allocation2 + $0x68] sm:$0xff]
      %v5214 = vld [vmem:[#allocation2 + $0x78] sm:$0xff]
      %v5215 = vld [vmem:[#allocation2 + $0x80] sm:$0xff]
      %v5216 = vld [vmem:[#allocation2 + $0x90] sm:$0xff]
      %v5217 = vld [vmem:[#allocation2 + $0x98] sm:$0xff]
      %v5218 = vld [vmem:[#allocation2 + $0xa8] sm:$0xff]
      %v5219 = vld [vmem:[#allocation2 + $0xb0] sm:$0xff]
      %v5220 = vld [vmem:[#allocation2 + $0xc0] sm:$0xff]
      %v5221 = vld [vmem:[#allocation2 + $0xc8] sm:$0xff]
      %v5222 = vld [vmem:[#allocation2 + $0xd8] sm:$0xff]
      %v5223 = vld [vmem:[#allocation2 + $0xe0] sm:$0xff]
      %v5224 = vld [vmem:[#allocation2 + $0xf0] sm:$0xff]
      %v5225 = vld [vmem:[#allocation2 + $0xf8] sm:$0xff]
      %v5226 = vld [vmem:[#allocation2 + $0x108] sm:$0xff]
      %v5227 = vld [vmem:[#allocation2 + $0x110] sm:$0xff]
      %5228 = vst.msk [vmem:[#allocation3] sm:$0xff] %vm260, %v5204
      %5229 = vst.msk [vmem:[#allocation3 + $0x18] sm:$0xff] %vm260, %v5205
      %5230 = vst.msk [vmem:[#allocation3 + $0x30] sm:$0xff] %vm260, %v5206
      %5231 = vst.msk [vmem:[#allocation3 + $0x48] sm:$0xff] %vm260, %v5207
      %5232 = vst.msk [vmem:[#allocation3 + $0x60] sm:$0xff] %vm260, %v5208
      %5233 = vst.msk [vmem:[#allocation3 + $0x78] sm:$0xff] %vm260, %v5209
      %5234 = vst.msk [vmem:[#allocation3 + $0x90] sm:$0xff] %vm260, %v5210
      %5235 = vst.msk [vmem:[#allocation3 + $0xa8] sm:$0xff] %vm260, %v5211
      %5236 = vst.msk [vmem:[#allocation3 + $0xc0] sm:$0xff] %vm260, %v5212
      %5237 = vst.msk [vmem:[#allocation3 + $0xd8] sm:$0xff] %vm260, %v5213
      %5238 = vst.msk [vmem:[#allocation3 + $0xf0] sm:$0xff] %vm260, %v5214
      %5239 = vst.msk [vmem:[#allocation3 + $0x108] sm:$0xff] %vm260, %v5215
      %5240 = vst.msk [vmem:[#allocation3 + $0x120] sm:$0xff] %vm260, %v5216
      %5241 = vst.msk [vmem:[#allocation3 + $0x138] sm:$0xff] %vm260, %v5217
      %5242 = vst.msk [vmem:[#allocation3 + $0x150] sm:$0xff] %vm260, %v5218
      %5243 = vst.msk [vmem:[#allocation3 + $0x168] sm:$0xff] %vm260, %v5219
      %5244 = vst.msk [vmem:[#allocation3 + $0x180] sm:$0xff] %vm260, %v5220
      %5245 = vst.msk [vmem:[#allocation3 + $0x198] sm:$0xff] %vm260, %v5221
      %5246 = vst.msk [vmem:[#allocation3 + $0x1b0] sm:$0xff] %vm260, %v5222
      %5247 = vst.msk [vmem:[#allocation3 + $0x1c8] sm:$0xff] %vm260, %v5223
      %5248 = vst.msk [vmem:[#allocation3 + $0x1e0] sm:$0xff] %vm260, %v5224
      %5249 = vst.msk [vmem:[#allocation3 + $0x1f8] sm:$0xff] %vm260, %v5225
      %5250 = vst.msk [vmem:[#allocation3 + $0x210] sm:$0xff] %vm260, %v5226
      %5251 = vst.msk [vmem:[#allocation3 + $0x228] sm:$0xff] %vm260, %v5227
      %v5252 = vld [vmem:[#allocation2 + $0x1] sm:$0xff]
      %v5253 = vld [vmem:[#allocation2 + $0x9] sm:$0xff]
      %v5254 = vld [vmem:[#allocation2 + $0x19] sm:$0xff]
      %v5255 = vld [vmem:[#allocation2 + $0x21] sm:$0xff]
      %v5256 = vld [vmem:[#allocation2 + $0x31] sm:$0xff]
      %v5257 = vld [vmem:[#allocation2 + $0x39] sm:$0xff]
      %v5258 = vld [vmem:[#allocation2 + $0x49] sm:$0xff]
      %v5259 = vld [vmem:[#allocation2 + $0x51] sm:$0xff]
      %v5260 = vld [vmem:[#allocation2 + $0x61] sm:$0xff]
      %v5261 = vld [vmem:[#allocation2 + $0x69] sm:$0xff]
      %v5262 = vld [vmem:[#allocation2 + $0x79] sm:$0xff]
      %v5263 = vld [vmem:[#allocation2 + $0x81] sm:$0xff]
      %v5264 = vld [vmem:[#allocation2 + $0x91] sm:$0xff]
      %v5265 = vld [vmem:[#allocation2 + $0x99] sm:$0xff]
      %v5266 = vld [vmem:[#allocation2 + $0xa9] sm:$0xff]
      %v5267 = vld [vmem:[#allocation2 + $0xb1] sm:$0xff]
      %v5268 = vld [vmem:[#allocation2 + $0xc1] sm:$0xff]
      %v5269 = vld [vmem:[#allocation2 + $0xc9] sm:$0xff]
      %v5270 = vld [vmem:[#allocation2 + $0xd9] sm:$0xff]
      %v5271 = vld [vmem:[#allocation2 + $0xe1] sm:$0xff]
      %v5272 = vld [vmem:[#allocation2 + $0xf1] sm:$0xff]
      %v5273 = vld [vmem:[#allocation2 + $0xf9] sm:$0xff]
      %v5274 = vld [vmem:[#allocation2 + $0x109] sm:$0xff]
      %v5275 = vld [vmem:[#allocation2 + $0x111] sm:$0xff]
      %5300 = vrot.lane.b32.xlu0 %v5252, 32
      %v5301 = vpop.permute.xlu0 %5300
      %5302 = vrot.lane.b32.xlu0 %v5253, 32
      %v5303 = vpop.permute.xlu0 %5302
      %5304 = vrot.lane.b32.xlu0 %v5254, 32
      %v5305 = vpop.permute.xlu0 %5304
      %5306 = vrot.lane.b32.xlu0 %v5255, 32
      %v5307 = vpop.permute.xlu0 %5306
      %5308 = vrot.lane.b32.xlu0 %v5256, 32
      %v5309 = vpop.permute.xlu0 %5308
      %5310 = vrot.lane.b32.xlu0 %v5257, 32
      %v5311 = vpop.permute.xlu0 %5310
      %5312 = vrot.lane.b32.xlu0 %v5258, 32
      %v5313 = vpop.permute.xlu0 %5312
      %5314 = vrot.lane.b32.xlu0 %v5259, 32
      %v5315 = vpop.permute.xlu0 %5314
      %5316 = vrot.lane.b32.xlu0 %v5260, 32
      %v5317 = vpop.permute.xlu0 %5316
      %5318 = vrot.lane.b32.xlu0 %v5261, 32
      %v5319 = vpop.permute.xlu0 %5318
      %5320 = vrot.lane.b32.xlu0 %v5262, 32
      %v5321 = vpop.permute.xlu0 %5320
      %5322 = vrot.lane.b32.xlu0 %v5263, 32
      %v5323 = vpop.permute.xlu0 %5322
      %5324 = vrot.lane.b32.xlu0 %v5264, 32
      %v5325 = vpop.permute.xlu0 %5324
      %5326 = vrot.lane.b32.xlu0 %v5265, 32
      %v5327 = vpop.permute.xlu0 %5326
      %5328 = vrot.lane.b32.xlu0 %v5266, 32
      %v5329 = vpop.permute.xlu0 %5328
      %5330 = vrot.lane.b32.xlu0 %v5267, 32
      %v5331 = vpop.permute.xlu0 %5330
      %5332 = vrot.lane.b32.xlu0 %v5268, 32
      %v5333 = vpop.permute.xlu0 %5332
      %5334 = vrot.lane.b32.xlu0 %v5269, 32
      %v5335 = vpop.permute.xlu0 %5334
      %5336 = vrot.lane.b32.xlu0 %v5270, 32
      %v5337 = vpop.permute.xlu0 %5336
      %5338 = vrot.lane.b32.xlu0 %v5271, 32
      %v5339 = vpop.permute.xlu0 %5338
      %5340 = vrot.lane.b32.xlu0 %v5272, 32
      %v5341 = vpop.permute.xlu0 %5340
      %5342 = vrot.lane.b32.xlu0 %v5273, 32
      %v5343 = vpop.permute.xlu0 %5342
      %5344 = vrot.lane.b32.xlu0 %v5274, 32
      %v5345 = vpop.permute.xlu0 %5344
      %5346 = vrot.lane.b32.xlu0 %v5275, 32
      %v5347 = vpop.permute.xlu0 %5346
      %5372 = vst.msk [vmem:[#allocation3] sm:$0xff] %vm537, %v5301
      %5373 = vst.msk [vmem:[#allocation3 + $0x18] sm:$0xff] %vm537, %v5303
      %5374 = vst.msk [vmem:[#allocation3 + $0x30] sm:$0xff] %vm537, %v5305
      %5375 = vst.msk [vmem:[#allocation3 + $0x48] sm:$0xff] %vm537, %v5307
      %5376 = vst.msk [vmem:[#allocation3 + $0x60] sm:$0xff] %vm537, %v5309
      %5377 = vst.msk [vmem:[#allocation3 + $0x78] sm:$0xff] %vm537, %v5311
      %5378 = vst.msk [vmem:[#allocation3 + $0x90] sm:$0xff] %vm537, %v5313
      %5379 = vst.msk [vmem:[#allocation3 + $0xa8] sm:$0xff] %vm537, %v5315
      %5380 = vst.msk [vmem:[#allocation3 + $0xc0] sm:$0xff] %vm537, %v5317
      %5381 = vst.msk [vmem:[#allocation3 + $0xd8] sm:$0xff] %vm537, %v5319
      %5382 = vst.msk [vmem:[#allocation3 + $0xf0] sm:$0xff] %vm537, %v5321
      %5383 = vst.msk [vmem:[#allocation3 + $0x108] sm:$0xff] %vm537, %v5323
      %5384 = vst.msk [vmem:[#allocation3 + $0x120] sm:$0xff] %vm537, %v5325
      %5385 = vst.msk [vmem:[#allocation3 + $0x138] sm:$0xff] %vm537, %v5327
      %5386 = vst.msk [vmem:[#allocation3 + $0x150] sm:$0xff] %vm537, %v5329
      %5387 = vst.msk [vmem:[#allocation3 + $0x168] sm:$0xff] %vm537, %v5331
      %5388 = vst.msk [vmem:[#allocation3 + $0x180] sm:$0xff] %vm537, %v5333
      %5389 = vst.msk [vmem:[#allocation3 + $0x198] sm:$0xff] %vm537, %v5335
      %5390 = vst.msk [vmem:[#allocation3 + $0x1b0] sm:$0xff] %vm537, %v5337
      %5391 = vst.msk [vmem:[#allocation3 + $0x1c8] sm:$0xff] %vm537, %v5339
      %5392 = vst.msk [vmem:[#allocation3 + $0x1e0] sm:$0xff] %vm537, %v5341
      %5393 = vst.msk [vmem:[#allocation3 + $0x1f8] sm:$0xff] %vm537, %v5343
      %5394 = vst.msk [vmem:[#allocation3 + $0x210] sm:$0xff] %vm537, %v5345
      %5395 = vst.msk [vmem:[#allocation3 + $0x228] sm:$0xff] %vm537, %v5347
      %v5396 = vld [vmem:[#allocation2 + $0x2] sm:$0xff]
      %v5397 = vld [vmem:[#allocation2 + $0xa] sm:$0xff]
      %v5398 = vld [vmem:[#allocation2 + $0x1a] sm:$0xff]
      %v5399 = vld [vmem:[#allocation2 + $0x22] sm:$0xff]
      %v5400 = vld [vmem:[#allocation2 + $0x32] sm:$0xff]
      %v5401 = vld [vmem:[#allocation2 + $0x3a] sm:$0xff]
      %v5402 = vld [vmem:[#allocation2 + $0x4a] sm:$0xff]
      %v5403 = vld [vmem:[#allocation2 + $0x52] sm:$0xff]
      %v5404 = vld [vmem:[#allocation2 + $0x62] sm:$0xff]
      %v5405 = vld [vmem:[#allocation2 + $0x6a] sm:$0xff]
      %v5406 = vld [vmem:[#allocation2 + $0x7a] sm:$0xff]
      %v5407 = vld [vmem:[#allocation2 + $0x82] sm:$0xff]
      %v5408 = vld [vmem:[#allocation2 + $0x92] sm:$0xff]
      %v5409 = vld [vmem:[#allocation2 + $0x9a] sm:$0xff]
      %v5410 = vld [vmem:[#allocation2 + $0xaa] sm:$0xff]
      %v5411 = vld [vmem:[#allocation2 + $0xb2] sm:$0xff]
      %v5412 = vld [vmem:[#allocation2 + $0xc2] sm:$0xff]
      %v5413 = vld [vmem:[#allocation2 + $0xca] sm:$0xff]
      %v5414 = vld [vmem:[#allocation2 + $0xda] sm:$0xff]
      %v5415 = vld [vmem:[#allocation2 + $0xe2] sm:$0xff]
      %v5416 = vld [vmem:[#allocation2 + $0xf2] sm:$0xff]
      %v5417 = vld [vmem:[#allocation2 + $0xfa] sm:$0xff]
      %v5418 = vld [vmem:[#allocation2 + $0x10a] sm:$0xff]
      %v5419 = vld [vmem:[#allocation2 + $0x112] sm:$0xff]
      %5444 = vrot.lane.b32.xlu0 %v5396, 64
      %v5445 = vpop.permute.xlu0 %5444
      %5446 = vrot.lane.b32.xlu0 %v5397, 64
      %v5447 = vpop.permute.xlu0 %5446
      %5448 = vrot.lane.b32.xlu0 %v5398, 64
      %v5449 = vpop.permute.xlu0 %5448
      %5450 = vrot.lane.b32.xlu0 %v5399, 64
      %v5451 = vpop.permute.xlu0 %5450
      %5452 = vrot.lane.b32.xlu0 %v5400, 64
      %v5453 = vpop.permute.xlu0 %5452
      %5454 = vrot.lane.b32.xlu0 %v5401, 64
      %v5455 = vpop.permute.xlu0 %5454
      %5456 = vrot.lane.b32.xlu0 %v5402, 64
      %v5457 = vpop.permute.xlu0 %5456
      %5458 = vrot.lane.b32.xlu0 %v5403, 64
      %v5459 = vpop.permute.xlu0 %5458
      %5460 = vrot.lane.b32.xlu0 %v5404, 64
      %v5461 = vpop.permute.xlu0 %5460
      %5462 = vrot.lane.b32.xlu0 %v5405, 64
      %v5463 = vpop.permute.xlu0 %5462
      %5464 = vrot.lane.b32.xlu0 %v5406, 64
      %v5465 = vpop.permute.xlu0 %5464
      %5466 = vrot.lane.b32.xlu0 %v5407, 64
      %v5467 = vpop.permute.xlu0 %5466
      %5468 = vrot.lane.b32.xlu0 %v5408, 64
      %v5469 = vpop.permute.xlu0 %5468
      %5470 = vrot.lane.b32.xlu0 %v5409, 64
      %v5471 = vpop.permute.xlu0 %5470
      %5472 = vrot.lane.b32.xlu0 %v5410, 64
      %v5473 = vpop.permute.xlu0 %5472
      %5474 = vrot.lane.b32.xlu0 %v5411, 64
      %v5475 = vpop.permute.xlu0 %5474
      %5476 = vrot.lane.b32.xlu0 %v5412, 64
      %v5477 = vpop.permute.xlu0 %5476
      %5478 = vrot.lane.b32.xlu0 %v5413, 64
      %v5479 = vpop.permute.xlu0 %5478
      %5480 = vrot.lane.b32.xlu0 %v5414, 64
      %v5481 = vpop.permute.xlu0 %5480
      %5482 = vrot.lane.b32.xlu0 %v5415, 64
      %v5483 = vpop.permute.xlu0 %5482
      %5484 = vrot.lane.b32.xlu0 %v5416, 64
      %v5485 = vpop.permute.xlu0 %5484
      %5486 = vrot.lane.b32.xlu0 %v5417, 64
      %v5487 = vpop.permute.xlu0 %5486
      %5488 = vrot.lane.b32.xlu0 %v5418, 64
      %v5489 = vpop.permute.xlu0 %5488
      %5490 = vrot.lane.b32.xlu0 %v5419, 64
      %v5491 = vpop.permute.xlu0 %5490
      %5516 = vst.msk [vmem:[#allocation3] sm:$0xff] %vm682, %v5445
      %5517 = vst.msk [vmem:[#allocation3 + $0x18] sm:$0xff] %vm682, %v5447
      %5518 = vst.msk [vmem:[#allocation3 + $0x30] sm:$0xff] %vm682, %v5449
      %5519 = vst.msk [vmem:[#allocation3 + $0x48] sm:$0xff] %vm682, %v5451
      %5520 = vst.msk [vmem:[#allocation3 + $0x60] sm:$0xff] %vm682, %v5453
      %5521 = vst.msk [vmem:[#allocation3 + $0x78] sm:$0xff] %vm682, %v5455
      %5522 = vst.msk [vmem:[#allocation3 + $0x90] sm:$0xff] %vm682, %v5457
      %5523 = vst.msk [vmem:[#allocation3 + $0xa8] sm:$0xff] %vm682, %v5459
      %5524 = vst.msk [vmem:[#allocation3 + $0xc0] sm:$0xff] %vm682, %v5461
      %5525 = vst.msk [vmem:[#allocation3 + $0xd8] sm:$0xff] %vm682, %v5463
      %5526 = vst.msk [vmem:[#allocation3 + $0xf0] sm:$0xff] %vm682, %v5465
      %5527 = vst.msk [vmem:[#allocation3 + $0x108] sm:$0xff] %vm682, %v5467
      %5528 = vst.msk [vmem:[#allocation3 + $0x120] sm:$0xff] %vm682, %v5469
      %5529 = vst.msk [vmem:[#allocation3 + $0x138] sm:$0xff] %vm682, %v5471
      %5530 = vst.msk [vmem:[#allocation3 + $0x150] sm:$0xff] %vm682, %v5473
      %5531 = vst.msk [vmem:[#allocation3 + $0x168] sm:$0xff] %vm682, %v5475
      %5532 = vst.msk [vmem:[#allocation3 + $0x180] sm:$0xff] %vm682, %v5477
      %5533 = vst.msk [vmem:[#allocation3 + $0x198] sm:$0xff] %vm682, %v5479
      %5534 = vst.msk [vmem:[#allocation3 + $0x1b0] sm:$0xff] %vm682, %v5481
      %5535 = vst.msk [vmem:[#allocation3 + $0x1c8] sm:$0xff] %vm682, %v5483
      %5536 = vst.msk [vmem:[#allocation3 + $0x1e0] sm:$0xff] %vm682, %v5485
      %5537 = vst.msk [vmem:[#allocation3 + $0x1f8] sm:$0xff] %vm682, %v5487
      %5538 = vst.msk [vmem:[#allocation3 + $0x210] sm:$0xff] %vm682, %v5489
      %5539 = vst.msk [vmem:[#allocation3 + $0x228] sm:$0xff] %vm682, %v5491
      %v5540 = vld [vmem:[%s269] sm:$0xff]
      %v5541 = vld [vmem:[%s269 + $0x8] sm:$0xff]
      %v5542 = vld [vmem:[%s269 + $0x18] sm:$0xff]
      %v5543 = vld [vmem:[%s269 + $0x20] sm:$0xff]
      %v5544 = vld [vmem:[%s269 + $0x30] sm:$0xff]
      %v5545 = vld [vmem:[%s269 + $0x38] sm:$0xff]
      %v5546 = vld [vmem:[%s269 + $0x48] sm:$0xff]
      %v5547 = vld [vmem:[%s269 + $0x50] sm:$0xff]
      %v5548 = vld [vmem:[%s269 + $0x60] sm:$0xff]
      %v5549 = vld [vmem:[%s269 + $0x68] sm:$0xff]
      %v5550 = vld [vmem:[%s269 + $0x78] sm:$0xff]
      %v5551 = vld [vmem:[%s269 + $0x80] sm:$0xff]
      %v5552 = vld [vmem:[%s269 + $0x90] sm:$0xff]
      %v5553 = vld [vmem:[%s269 + $0x98] sm:$0xff]
      %v5554 = vld [vmem:[%s269 + $0xa8] sm:$0xff]
      %v5555 = vld [vmem:[%s269 + $0xb0] sm:$0xff]
      %v5556 = vld [vmem:[%s269 + $0xc0] sm:$0xff]
      %v5557 = vld [vmem:[%s269 + $0xc8] sm:$0xff]
      %v5558 = vld [vmem:[%s269 + $0xd8] sm:$0xff]
      %v5559 = vld [vmem:[%s269 + $0xe0] sm:$0xff]
      %v5560 = vld [vmem:[%s269 + $0xf0] sm:$0xff]
      %v5561 = vld [vmem:[%s269 + $0xf8] sm:$0xff]
      %v5562 = vld [vmem:[%s269 + $0x108] sm:$0xff]
      %v5563 = vld [vmem:[%s269 + $0x110] sm:$0xff]
      %5588 = vrot.lane.b32.xlu0 %v5540, 96
      %v5589 = vpop.permute.xlu0 %5588
      %5590 = vrot.lane.b32.xlu0 %v5541, 96
      %v5591 = vpop.permute.xlu0 %5590
      %5592 = vrot.lane.b32.xlu0 %v5542, 96
      %v5593 = vpop.permute.xlu0 %5592
      %5594 = vrot.lane.b32.xlu0 %v5543, 96
      %v5595 = vpop.permute.xlu0 %5594
      %5596 = vrot.lane.b32.xlu0 %v5544, 96
      %v5597 = vpop.permute.xlu0 %5596
      %5598 = vrot.lane.b32.xlu0 %v5545, 96
      %v5599 = vpop.permute.xlu0 %5598
      %5600 = vrot.lane.b32.xlu0 %v5546, 96
      %v5601 = vpop.permute.xlu0 %5600
      %5602 = vrot.lane.b32.xlu0 %v5547, 96
      %v5603 = vpop.permute.xlu0 %5602
      %5604 = vrot.lane.b32.xlu0 %v5548, 96
      %v5605 = vpop.permute.xlu0 %5604
      %5606 = vrot.lane.b32.xlu0 %v5549, 96
      %v5607 = vpop.permute.xlu0 %5606
      %5608 = vrot.lane.b32.xlu0 %v5550, 96
      %v5609 = vpop.permute.xlu0 %5608
      %5610 = vrot.lane.b32.xlu0 %v5551, 96
      %v5611 = vpop.permute.xlu0 %5610
      %5612 = vrot.lane.b32.xlu0 %v5552, 96
      %v5613 = vpop.permute.xlu0 %5612
      %5614 = vrot.lane.b32.xlu0 %v5553, 96
      %v5615 = vpop.permute.xlu0 %5614
      %5616 = vrot.lane.b32.xlu0 %v5554, 96
      %v5617 = vpop.permute.xlu0 %5616
      %5618 = vrot.lane.b32.xlu0 %v5555, 96
      %v5619 = vpop.permute.xlu0 %5618
      %5620 = vrot.lane.b32.xlu0 %v5556, 96
      %v5621 = vpop.permute.xlu0 %5620
      %5622 = vrot.lane.b32.xlu0 %v5557, 96
      %v5623 = vpop.permute.xlu0 %5622
      %5624 = vrot.lane.b32.xlu0 %v5558, 96
      %v5625 = vpop.permute.xlu0 %5624
      %5626 = vrot.lane.b32.xlu0 %v5559, 96
      %v5627 = vpop.permute.xlu0 %5626
      %5628 = vrot.lane.b32.xlu0 %v5560, 96
      %v5629 = vpop.permute.xlu0 %5628
      %5630 = vrot.lane.b32.xlu0 %v5561, 96
      %v5631 = vpop.permute.xlu0 %5630
      %5632 = vrot.lane.b32.xlu0 %v5562, 96
      %v5633 = vpop.permute.xlu0 %5632
      %5634 = vrot.lane.b32.xlu0 %v5563, 96
      %v5635 = vpop.permute.xlu0 %5634
      %5660 = vst.msk [vmem:[#allocation3] sm:$0xff] %vm827, %v5589
      %5661 = vst.msk [vmem:[#allocation3 + $0x18] sm:$0xff] %vm827, %v5591
      %5662 = vst.msk [vmem:[#allocation3 + $0x30] sm:$0xff] %vm827, %v5593
      %5663 = vst.msk [vmem:[#allocation3 + $0x48] sm:$0xff] %vm827, %v5595
      %5664 = vst.msk [vmem:[#allocation3 + $0x60] sm:$0xff] %vm827, %v5597
      %5665 = vst.msk [vmem:[#allocation3 + $0x78] sm:$0xff] %vm827, %v5599
      %5666 = vst.msk [vmem:[#allocation3 + $0x90] sm:$0xff] %vm827, %v5601
      %5667 = vst.msk [vmem:[#allocation3 + $0xa8] sm:$0xff] %vm827, %v5603
      %5668 = vst.msk [vmem:[#allocation3 + $0xc0] sm:$0xff] %vm827, %v5605
      %5669 = vst.msk [vmem:[#allocation3 + $0xd8] sm:$0xff] %vm827, %v5607
      %5670 = vst.msk [vmem:[#allocation3 + $0xf0] sm:$0xff] %vm827, %v5609
      %5671 = vst.msk [vmem:[#allocation3 + $0x108] sm:$0xff] %vm827, %v5611
      %5672 = vst.msk [vmem:[#allocation3 + $0x120] sm:$0xff] %vm827, %v5613
      %5673 = vst.msk [vmem:[#allocation3 + $0x138] sm:$0xff] %vm827, %v5615
      %5674 = vst.msk [vmem:[#allocation3 + $0x150] sm:$0xff] %vm827, %v5617
      %5675 = vst.msk [vmem:[#allocation3 + $0x168] sm:$0xff] %vm827, %v5619
      %5676 = vst.msk [vmem:[#allocation3 + $0x180] sm:$0xff] %vm827, %v5621
      %5677 = vst.msk [vmem:[#allocation3 + $0x198] sm:$0xff] %vm827, %v5623
      %5678 = vst.msk [vmem:[#allocation3 + $0x1b0] sm:$0xff] %vm827, %v5625
      %5679 = vst.msk [vmem:[#allocation3 + $0x1c8] sm:$0xff] %vm827, %v5627
      %5680 = vst.msk [vmem:[#allocation3 + $0x1e0] sm:$0xff] %vm827, %v5629
      %5681 = vst.msk [vmem:[#allocation3 + $0x1f8] sm:$0xff] %vm827, %v5631
      %5682 = vst.msk [vmem:[#allocation3 + $0x210] sm:$0xff] %vm827, %v5633
      %5683 = vst.msk [vmem:[#allocation3 + $0x228] sm:$0xff] %vm827, %v5635
      %v5684 = vld [vmem:[%s269 + $0x1] sm:$0xff]
      %v5685 = vld [vmem:[%s269 + $0x9] sm:$0xff]
      %v5686 = vld [vmem:[%s269 + $0x19] sm:$0xff]
      %v5687 = vld [vmem:[%s269 + $0x21] sm:$0xff]
      %v5688 = vld [vmem:[%s269 + $0x31] sm:$0xff]
      %v5689 = vld [vmem:[%s269 + $0x39] sm:$0xff]
      %v5690 = vld [vmem:[%s269 + $0x49] sm:$0xff]
      %v5691 = vld [vmem:[%s269 + $0x51] sm:$0xff]
      %v5692 = vld [vmem:[%s269 + $0x61] sm:$0xff]
      %v5693 = vld [vmem:[%s269 + $0x69] sm:$0xff]
      %v5694 = vld [vmem:[%s269 + $0x79] sm:$0xff]
      %v5695 = vld [vmem:[%s269 + $0x81] sm:$0xff]
      %v5696 = vld [vmem:[%s269 + $0x91] sm:$0xff]
      %v5697 = vld [vmem:[%s269 + $0x99] sm:$0xff]
      %v5698 = vld [vmem:[%s269 + $0xa9] sm:$0xff]
      %v5699 = vld [vmem:[%s269 + $0xb1] sm:$0xff]
      %v5700 = vld [vmem:[%s269 + $0xc1] sm:$0xff]
      %v5701 = vld [vmem:[%s269 + $0xc9] sm:$0xff]
      %v5702 = vld [vmem:[%s269 + $0xd9] sm:$0xff]
      %v5703 = vld [vmem:[%s269 + $0xe1] sm:$0xff]
      %v5704 = vld [vmem:[%s269 + $0xf1] sm:$0xff]
      %v5705 = vld [vmem:[%s269 + $0xf9] sm:$0xff]
      %v5706 = vld [vmem:[%s269 + $0x109] sm:$0xff]
      %v5707 = vld [vmem:[%s269 + $0x111] sm:$0xff]
      %5708 = vst.msk [vmem:[#allocation3 + $0x8] sm:$0xff] %vm260, %v5684
      %5709 = vst.msk [vmem:[#allocation3 + $0x20] sm:$0xff] %vm260, %v5685
      %5710 = vst.msk [vmem:[#allocation3 + $0x38] sm:$0xff] %vm260, %v5686
      %5711 = vst.msk [vmem:[#allocation3 + $0x50] sm:$0xff] %vm260, %v5687
      %5712 = vst.msk [vmem:[#allocation3 + $0x68] sm:$0xff] %vm260, %v5688
      %5713 = vst.msk [vmem:[#allocation3 + $0x80] sm:$0xff] %vm260, %v5689
      %5714 = vst.msk [vmem:[#allocation3 + $0x98] sm:$0xff] %vm260, %v5690
      %5715 = vst.msk [vmem:[#allocation3 + $0xb0] sm:$0xff] %vm260, %v5691
      %5716 = vst.msk [vmem:[#allocation3 + $0xc8] sm:$0xff] %vm260, %v5692
      %5717 = vst.msk [vmem:[#allocation3 + $0xe0] sm:$0xff] %vm260, %v5693
      %5718 = vst.msk [vmem:[#allocation3 + $0xf8] sm:$0xff] %vm260, %v5694
      %5719 = vst.msk [vmem:[#allocation3 + $0x110] sm:$0xff] %vm260, %v5695
      %5720 = vst.msk [vmem:[#allocation3 + $0x128] sm:$0xff] %vm260, %v5696
      %5721 = vst.msk [vmem:[#allocation3 + $0x140] sm:$0xff] %vm260, %v5697
      %5722 = vst.msk [vmem:[#allocation3 + $0x158] sm:$0xff] %vm260, %v5698
      %5723 = vst.msk [vmem:[#allocation3 + $0x170] sm:$0xff] %vm260, %v5699
      %5724 = vst.msk [vmem:[#allocation3 + $0x188] sm:$0xff] %vm260, %v5700
      %5725 = vst.msk [vmem:[#allocation3 + $0x1a0] sm:$0xff] %vm260, %v5701
      %5726 = vst.msk [vmem:[#allocation3 + $0x1b8] sm:$0xff] %vm260, %v5702
      %5727 = vst.msk [vmem:[#allocation3 + $0x1d0] sm:$0xff] %vm260, %v5703
      %5728 = vst.msk [vmem:[#allocation3 + $0x1e8] sm:$0xff] %vm260, %v5704
      %5729 = vst.msk [vmem:[#allocation3 + $0x200] sm:$0xff] %vm260, %v5705
      %5730 = vst.msk [vmem:[#allocation3 + $0x218] sm:$0xff] %vm260, %v5706
      %5731 = vst.msk [vmem:[#allocation3 + $0x230] sm:$0xff] %vm260, %v5707
      %v5732 = vld [vmem:[%s269 + $0x2] sm:$0xff]
      %v5733 = vld [vmem:[%s269 + $0xa] sm:$0xff]
      %v5734 = vld [vmem:[%s269 + $0x1a] sm:$0xff]
      %v5735 = vld [vmem:[%s269 + $0x22] sm:$0xff]
      %v5736 = vld [vmem:[%s269 + $0x32] sm:$0xff]
      %v5737 = vld [vmem:[%s269 + $0x3a] sm:$0xff]
      %v5738 = vld [vmem:[%s269 + $0x4a] sm:$0xff]
      %v5739 = vld [vmem:[%s269 + $0x52] sm:$0xff]
      %v5740 = vld [vmem:[%s269 + $0x62] sm:$0xff]
      %v5741 = vld [vmem:[%s269 + $0x6a] sm:$0xff]
      %v5742 = vld [vmem:[%s269 + $0x7a] sm:$0xff]
      %v5743 = vld [vmem:[%s269 + $0x82] sm:$0xff]
      %v5744 = vld [vmem:[%s269 + $0x92] sm:$0xff]
      %v5745 = vld [vmem:[%s269 + $0x9a] sm:$0xff]
      %v5746 = vld [vmem:[%s269 + $0xaa] sm:$0xff]
      %v5747 = vld [vmem:[%s269 + $0xb2] sm:$0xff]
      %v5748 = vld [vmem:[%s269 + $0xc2] sm:$0xff]
      %v5749 = vld [vmem:[%s269 + $0xca] sm:$0xff]
      %v5750 = vld [vmem:[%s269 + $0xda] sm:$0xff]
      %v5751 = vld [vmem:[%s269 + $0xe2] sm:$0xff]
      %v5752 = vld [vmem:[%s269 + $0xf2] sm:$0xff]
      %v5753 = vld [vmem:[%s269 + $0xfa] sm:$0xff]
      %v5754 = vld [vmem:[%s269 + $0x10a] sm:$0xff]
      %v5755 = vld [vmem:[%s269 + $0x112] sm:$0xff]
      %5780 = vrot.lane.b32.xlu0 %v5732, 32
      %v5781 = vpop.permute.xlu0 %5780
      %5782 = vrot.lane.b32.xlu0 %v5733, 32
      %v5783 = vpop.permute.xlu0 %5782
      %5784 = vrot.lane.b32.xlu0 %v5734, 32
      %v5785 = vpop.permute.xlu0 %5784
      %5786 = vrot.lane.b32.xlu0 %v5735, 32
      %v5787 = vpop.permute.xlu0 %5786
      %5788 = vrot.lane.b32.xlu0 %v5736, 32
      %v5789 = vpop.permute.xlu0 %5788
      %5790 = vrot.lane.b32.xlu0 %v5737, 32
      %v5791 = vpop.permute.xlu0 %5790
      %5792 = vrot.lane.b32.xlu0 %v5738, 32
      %v5793 = vpop.permute.xlu0 %5792
      %5794 = vrot.lane.b32.xlu0 %v5739, 32
      %v5795 = vpop.permute.xlu0 %5794
      %5796 = vrot.lane.b32.xlu0 %v5740, 32
      %v5797 = vpop.permute.xlu0 %5796
      %5798 = vrot.lane.b32.xlu0 %v5741, 32
      %v5799 = vpop.permute.xlu0 %5798
      %5800 = vrot.lane.b32.xlu0 %v5742, 32
      %v5801 = vpop.permute.xlu0 %5800
      %5802 = vrot.lane.b32.xlu0 %v5743, 32
      %v5803 = vpop.permute.xlu0 %5802
      %5804 = vrot.lane.b32.xlu0 %v5744, 32
      %v5805 = vpop.permute.xlu0 %5804
      %5806 = vrot.lane.b32.xlu0 %v5745, 32
      %v5807 = vpop.permute.xlu0 %5806
      %5808 = vrot.lane.b32.xlu0 %v5746, 32
      %v5809 = vpop.permute.xlu0 %5808
      %5810 = vrot.lane.b32.xlu0 %v5747, 32
      %v5811 = vpop.permute.xlu0 %5810
      %5812 = vrot.lane.b32.xlu0 %v5748, 32
      %v5813 = vpop.permute.xlu0 %5812
      %5814 = vrot.lane.b32.xlu0 %v5749, 32
      %v5815 = vpop.permute.xlu0 %5814
      %5816 = vrot.lane.b32.xlu0 %v5750, 32
      %v5817 = vpop.permute.xlu0 %5816
      %5818 = vrot.lane.b32.xlu0 %v5751, 32
      %v5819 = vpop.permute.xlu0 %5818
      %5820 = vrot.lane.b32.xlu0 %v5752, 32
      %v5821 = vpop.permute.xlu0 %5820
      %5822 = vrot.lane.b32.xlu0 %v5753, 32
      %v5823 = vpop.permute.xlu0 %5822
      %5824 = vrot.lane.b32.xlu0 %v5754, 32
      %v5825 = vpop.permute.xlu0 %5824
      %5826 = vrot.lane.b32.xlu0 %v5755, 32
      %v5827 = vpop.permute.xlu0 %5826
      %5852 = vst.msk [vmem:[#allocation3 + $0x8] sm:$0xff] %vm537, %v5781
      %5853 = vst.msk [vmem:[#allocation3 + $0x20] sm:$0xff] %vm537, %v5783
      %5854 = vst.msk [vmem:[#allocation3 + $0x38] sm:$0xff] %vm537, %v5785
      %5855 = vst.msk [vmem:[#allocation3 + $0x50] sm:$0xff] %vm537, %v5787
      %5856 = vst.msk [vmem:[#allocation3 + $0x68] sm:$0xff] %vm537, %v5789
      %5857 = vst.msk [vmem:[#allocation3 + $0x80] sm:$0xff] %vm537, %v5791
      %5858 = vst.msk [vmem:[#allocation3 + $0x98] sm:$0xff] %vm537, %v5793
      %5859 = vst.msk [vmem:[#allocation3 + $0xb0] sm:$0xff] %vm537, %v5795
      %5860 = vst.msk [vmem:[#allocation3 + $0xc8] sm:$0xff] %vm537, %v5797
      %5861 = vst.msk [vmem:[#allocation3 + $0xe0] sm:$0xff] %vm537, %v5799
      %5862 = vst.msk [vmem:[#allocation3 + $0xf8] sm:$0xff] %vm537, %v5801
      %5863 = vst.msk [vmem:[#allocation3 + $0x110] sm:$0xff] %vm537, %v5803
      %5864 = vst.msk [vmem:[#allocation3 + $0x128] sm:$0xff] %vm537, %v5805
      %5865 = vst.msk [vmem:[#allocation3 + $0x140] sm:$0xff] %vm537, %v5807
      %5866 = vst.msk [vmem:[#allocation3 + $0x158] sm:$0xff] %vm537, %v5809
      %5867 = vst.msk [vmem:[#allocation3 + $0x170] sm:$0xff] %vm537, %v5811
      %5868 = vst.msk [vmem:[#allocation3 + $0x188] sm:$0xff] %vm537, %v5813
      %5869 = vst.msk [vmem:[#allocation3 + $0x1a0] sm:$0xff] %vm537, %v5815
      %5870 = vst.msk [vmem:[#allocation3 + $0x1b8] sm:$0xff] %vm537, %v5817
      %5871 = vst.msk [vmem:[#allocation3 + $0x1d0] sm:$0xff] %vm537, %v5819
      %5872 = vst.msk [vmem:[#allocation3 + $0x1e8] sm:$0xff] %vm537, %v5821
      %5873 = vst.msk [vmem:[#allocation3 + $0x200] sm:$0xff] %vm537, %v5823
      %5874 = vst.msk [vmem:[#allocation3 + $0x218] sm:$0xff] %vm537, %v5825
      %5875 = vst.msk [vmem:[#allocation3 + $0x230] sm:$0xff] %vm537, %v5827
      %v5876 = vld [vmem:[%s1044] sm:$0xff]
      %v5877 = vld [vmem:[%s1044 + $0x8] sm:$0xff]
      %v5878 = vld [vmem:[%s1044 + $0x18] sm:$0xff]
      %v5879 = vld [vmem:[%s1044 + $0x20] sm:$0xff]
      %v5880 = vld [vmem:[%s1044 + $0x30] sm:$0xff]
      %v5881 = vld [vmem:[%s1044 + $0x38] sm:$0xff]
      %v5882 = vld [vmem:[%s1044 + $0x48] sm:$0xff]
      %v5883 = vld [vmem:[%s1044 + $0x50] sm:$0xff]
      %v5884 = vld [vmem:[%s1044 + $0x60] sm:$0xff]
      %v5885 = vld [vmem:[%s1044 + $0x68] sm:$0xff]
      %v5886 = vld [vmem:[%s1044 + $0x78] sm:$0xff]
      %v5887 = vld [vmem:[%s1044 + $0x80] sm:$0xff]
      %v5888 = vld [vmem:[%s1044 + $0x90] sm:$0xff]
      %v5889 = vld [vmem:[%s1044 + $0x98] sm:$0xff]
      %v5890 = vld [vmem:[%s1044 + $0xa8] sm:$0xff]
      %v5891 = vld [vmem:[%s1044 + $0xb0] sm:$0xff]
      %v5892 = vld [vmem:[%s1044 + $0xc0] sm:$0xff]
      %v5893 = vld [vmem:[%s1044 + $0xc8] sm:$0xff]
      %v5894 = vld [vmem:[%s1044 + $0xd8] sm:$0xff]
      %v5895 = vld [vmem:[%s1044 + $0xe0] sm:$0xff]
      %v5896 = vld [vmem:[%s1044 + $0xf0] sm:$0xff]
      %v5897 = vld [vmem:[%s1044 + $0xf8] sm:$0xff]
      %v5898 = vld [vmem:[%s1044 + $0x108] sm:$0xff]
      %v5899 = vld [vmem:[%s1044 + $0x110] sm:$0xff]
      %5924 = vrot.lane.b32.xlu0 %v5876, 64
      %v5925 = vpop.permute.xlu0 %5924
      %5926 = vrot.lane.b32.xlu0 %v5877, 64
      %v5927 = vpop.permute.xlu0 %5926
      %5928 = vrot.lane.b32.xlu0 %v5878, 64
      %v5929 = vpop.permute.xlu0 %5928
      %5930 = vrot.lane.b32.xlu0 %v5879, 64
      %v5931 = vpop.permute.xlu0 %5930
      %5932 = vrot.lane.b32.xlu0 %v5880, 64
      %v5933 = vpop.permute.xlu0 %5932
      %5934 = vrot.lane.b32.xlu0 %v5881, 64
      %v5935 = vpop.permute.xlu0 %5934
      %5936 = vrot.lane.b32.xlu0 %v5882, 64
      %v5937 = vpop.permute.xlu0 %5936
      %5938 = vrot.lane.b32.xlu0 %v5883, 64
      %v5939 = vpop.permute.xlu0 %5938
      %5940 = vrot.lane.b32.xlu0 %v5884, 64
      %v5941 = vpop.permute.xlu0 %5940
      %5942 = vrot.lane.b32.xlu0 %v5885, 64
      %v5943 = vpop.permute.xlu0 %5942
      %5944 = vrot.lane.b32.xlu0 %v5886, 64
      %v5945 = vpop.permute.xlu0 %5944
      %5946 = vrot.lane.b32.xlu0 %v5887, 64
      %v5947 = vpop.permute.xlu0 %5946
      %5948 = vrot.lane.b32.xlu0 %v5888, 64
      %v5949 = vpop.permute.xlu0 %5948
      %5950 = vrot.lane.b32.xlu0 %v5889, 64
      %v5951 = vpop.permute.xlu0 %5950
      %5952 = vrot.lane.b32.xlu0 %v5890, 64
      %v5953 = vpop.permute.xlu0 %5952
      %5954 = vrot.lane.b32.xlu0 %v5891, 64
      %v5955 = vpop.permute.xlu0 %5954
      %5956 = vrot.lane.b32.xlu0 %v5892, 64
      %v5957 = vpop.permute.xlu0 %5956
      %5958 = vrot.lane.b32.xlu0 %v5893, 64
      %v5959 = vpop.permute.xlu0 %5958
      %5960 = vrot.lane.b32.xlu0 %v5894, 64
      %v5961 = vpop.permute.xlu0 %5960
      %5962 = vrot.lane.b32.xlu0 %v5895, 64
      %v5963 = vpop.permute.xlu0 %5962
      %5964 = vrot.lane.b32.xlu0 %v5896, 64
      %v5965 = vpop.permute.xlu0 %5964
      %5966 = vrot.lane.b32.xlu0 %v5897, 64
      %v5967 = vpop.permute.xlu0 %5966
      %5968 = vrot.lane.b32.xlu0 %v5898, 64
      %v5969 = vpop.permute.xlu0 %5968
      %5970 = vrot.lane.b32.xlu0 %v5899, 64
      %v5971 = vpop.permute.xlu0 %5970
      %5996 = vst.msk [vmem:[#allocation3 + $0x8] sm:$0xff] %vm682, %v5925
      %5997 = vst.msk [vmem:[#allocation3 + $0x20] sm:$0xff] %vm682, %v5927
      %5998 = vst.msk [vmem:[#allocation3 + $0x38] sm:$0xff] %vm682, %v5929
      %5999 = vst.msk [vmem:[#allocation3 + $0x50] sm:$0xff] %vm682, %v5931
      %6000 = vst.msk [vmem:[#allocation3 + $0x68] sm:$0xff] %vm682, %v5933
      %6001 = vst.msk [vmem:[#allocation3 + $0x80] sm:$0xff] %vm682, %v5935
      %6002 = vst.msk [vmem:[#allocation3 + $0x98] sm:$0xff] %vm682, %v5937
      %6003 = vst.msk [vmem:[#allocation3 + $0xb0] sm:$0xff] %vm682, %v5939
      %6004 = vst.msk [vmem:[#allocation3 + $0xc8] sm:$0xff] %vm682, %v5941
      %6005 = vst.msk [vmem:[#allocation3 + $0xe0] sm:$0xff] %vm682, %v5943
      %6006 = vst.msk [vmem:[#allocation3 + $0xf8] sm:$0xff] %vm682, %v5945
      %6007 = vst.msk [vmem:[#allocation3 + $0x110] sm:$0xff] %vm682, %v5947
      %6008 = vst.msk [vmem:[#allocation3 + $0x128] sm:$0xff] %vm682, %v5949
      %6009 = vst.msk [vmem:[#allocation3 + $0x140] sm:$0xff] %vm682, %v5951
      %6010 = vst.msk [vmem:[#allocation3 + $0x158] sm:$0xff] %vm682, %v5953
      %6011 = vst.msk [vmem:[#allocation3 + $0x170] sm:$0xff] %vm682, %v5955
      %6012 = vst.msk [vmem:[#allocation3 + $0x188] sm:$0xff] %vm682, %v5957
      %6013 = vst.msk [vmem:[#allocation3 + $0x1a0] sm:$0xff] %vm682, %v5959
      %6014 = vst.msk [vmem:[#allocation3 + $0x1b8] sm:$0xff] %vm682, %v5961
      %6015 = vst.msk [vmem:[#allocation3 + $0x1d0] sm:$0xff] %vm682, %v5963
      %6016 = vst.msk [vmem:[#allocation3 + $0x1e8] sm:$0xff] %vm682, %v5965
      %6017 = vst.msk [vmem:[#allocation3 + $0x200] sm:$0xff] %vm682, %v5967
      %6018 = vst.msk [vmem:[#allocation3 + $0x218] sm:$0xff] %vm682, %v5969
      %6019 = vst.msk [vmem:[#allocation3 + $0x230] sm:$0xff] %vm682, %v5971
      %v6020 = vld [vmem:[%s1044 + $0x1] sm:$0xff]
      %v6021 = vld [vmem:[%s1044 + $0x9] sm:$0xff]
      %v6022 = vld [vmem:[%s1044 + $0x19] sm:$0xff]
      %v6023 = vld [vmem:[%s1044 + $0x21] sm:$0xff]
      %v6024 = vld [vmem:[%s1044 + $0x31] sm:$0xff]
      %v6025 = vld [vmem:[%s1044 + $0x39] sm:$0xff]
      %v6026 = vld [vmem:[%s1044 + $0x49] sm:$0xff]
      %v6027 = vld [vmem:[%s1044 + $0x51] sm:$0xff]
      %v6028 = vld [vmem:[%s1044 + $0x61] sm:$0xff]
      %v6029 = vld [vmem:[%s1044 + $0x69] sm:$0xff]
      %v6030 = vld [vmem:[%s1044 + $0x79] sm:$0xff]
      %v6031 = vld [vmem:[%s1044 + $0x81] sm:$0xff]
      %v6032 = vld [vmem:[%s1044 + $0x91] sm:$0xff]
      %v6033 = vld [vmem:[%s1044 + $0x99] sm:$0xff]
      %v6034 = vld [vmem:[%s1044 + $0xa9] sm:$0xff]
      %v6035 = vld [vmem:[%s1044 + $0xb1] sm:$0xff]
      %v6036 = vld [vmem:[%s1044 + $0xc1] sm:$0xff]
      %v6037 = vld [vmem:[%s1044 + $0xc9] sm:$0xff]
      %v6038 = vld [vmem:[%s1044 + $0xd9] sm:$0xff]
      %v6039 = vld [vmem:[%s1044 + $0xe1] sm:$0xff]
      %v6040 = vld [vmem:[%s1044 + $0xf1] sm:$0xff]
      %v6041 = vld [vmem:[%s1044 + $0xf9] sm:$0xff]
      %v6042 = vld [vmem:[%s1044 + $0x109] sm:$0xff]
      %v6043 = vld [vmem:[%s1044 + $0x111] sm:$0xff]
      %6068 = vrot.lane.b32.xlu0 %v6020, 96
      %v6069 = vpop.permute.xlu0 %6068
      %6070 = vrot.lane.b32.xlu0 %v6021, 96
      %v6071 = vpop.permute.xlu0 %6070
      %6072 = vrot.lane.b32.xlu0 %v6022, 96
      %v6073 = vpop.permute.xlu0 %6072
      %6074 = vrot.lane.b32.xlu0 %v6023, 96
      %v6075 = vpop.permute.xlu0 %6074
      %6076 = vrot.lane.b32.xlu0 %v6024, 96
      %v6077 = vpop.permute.xlu0 %6076
      %6078 = vrot.lane.b32.xlu0 %v6025, 96
      %v6079 = vpop.permute.xlu0 %6078
      %6080 = vrot.lane.b32.xlu0 %v6026, 96
      %v6081 = vpop.permute.xlu0 %6080
      %6082 = vrot.lane.b32.xlu0 %v6027, 96
      %v6083 = vpop.permute.xlu0 %6082
      %6084 = vrot.lane.b32.xlu0 %v6028, 96
      %v6085 = vpop.permute.xlu0 %6084
      %6086 = vrot.lane.b32.xlu0 %v6029, 96
      %v6087 = vpop.permute.xlu0 %6086
      %6088 = vrot.lane.b32.xlu0 %v6030, 96
      %v6089 = vpop.permute.xlu0 %6088
      %6090 = vrot.lane.b32.xlu0 %v6031, 96
      %v6091 = vpop.permute.xlu0 %6090
      %6092 = vrot.lane.b32.xlu0 %v6032, 96
      %v6093 = vpop.permute.xlu0 %6092
      %6094 = vrot.lane.b32.xlu0 %v6033, 96
      %v6095 = vpop.permute.xlu0 %6094
      %6096 = vrot.lane.b32.xlu0 %v6034, 96
      %v6097 = vpop.permute.xlu0 %6096
      %6098 = vrot.lane.b32.xlu0 %v6035, 96
      %v6099 = vpop.permute.xlu0 %6098
      %6100 = vrot.lane.b32.xlu0 %v6036, 96
      %v6101 = vpop.permute.xlu0 %6100
      %6102 = vrot.lane.b32.xlu0 %v6037, 96
      %v6103 = vpop.permute.xlu0 %6102
      %6104 = vrot.lane.b32.xlu0 %v6038, 96
      %v6105 = vpop.permute.xlu0 %6104
      %6106 = vrot.lane.b32.xlu0 %v6039, 96
      %v6107 = vpop.permute.xlu0 %6106
      %6108 = vrot.lane.b32.xlu0 %v6040, 96
      %v6109 = vpop.permute.xlu0 %6108
      %6110 = vrot.lane.b32.xlu0 %v6041, 96
      %v6111 = vpop.permute.xlu0 %6110
      %6112 = vrot.lane.b32.xlu0 %v6042, 96
      %v6113 = vpop.permute.xlu0 %6112
      %6114 = vrot.lane.b32.xlu0 %v6043, 96
      %v6115 = vpop.permute.xlu0 %6114
      %6140 = vst.msk [vmem:[#allocation3 + $0x8] sm:$0xff] %vm827, %v6069
      %6141 = vst.msk [vmem:[#allocation3 + $0x20] sm:$0xff] %vm827, %v6071
      %6142 = vst.msk [vmem:[#allocation3 + $0x38] sm:$0xff] %vm827, %v6073
      %6143 = vst.msk [vmem:[#allocation3 + $0x50] sm:$0xff] %vm827, %v6075
      %6144 = vst.msk [vmem:[#allocation3 + $0x68] sm:$0xff] %vm827, %v6077
      %6145 = vst.msk [vmem:[#allocation3 + $0x80] sm:$0xff] %vm827, %v6079
      %6146 = vst.msk [vmem:[#allocation3 + $0x98] sm:$0xff] %vm827, %v6081
      %6147 = vst.msk [vmem:[#allocation3 + $0xb0] sm:$0xff] %vm827, %v6083
      %6148 = vst.msk [vmem:[#allocation3 + $0xc8] sm:$0xff] %vm827, %v6085
      %6149 = vst.msk [vmem:[#allocation3 + $0xe0] sm:$0xff] %vm827, %v6087
      %6150 = vst.msk [vmem:[#allocation3 + $0xf8] sm:$0xff] %vm827, %v6089
      %6151 = vst.msk [vmem:[#allocation3 + $0x110] sm:$0xff] %vm827, %v6091
      %6152 = vst.msk [vmem:[#allocation3 + $0x128] sm:$0xff] %vm827, %v6093
      %6153 = vst.msk [vmem:[#allocation3 + $0x140] sm:$0xff] %vm827, %v6095
      %6154 = vst.msk [vmem:[#allocation3 + $0x158] sm:$0xff] %vm827, %v6097
      %6155 = vst.msk [vmem:[#allocation3 + $0x170] sm:$0xff] %vm827, %v6099
      %6156 = vst.msk [vmem:[#allocation3 + $0x188] sm:$0xff] %vm827, %v6101
      %6157 = vst.msk [vmem:[#allocation3 + $0x1a0] sm:$0xff] %vm827, %v6103
      %6158 = vst.msk [vmem:[#allocation3 + $0x1b8] sm:$0xff] %vm827, %v6105
      %6159 = vst.msk [vmem:[#allocation3 + $0x1d0] sm:$0xff] %vm827, %v6107
      %6160 = vst.msk [vmem:[#allocation3 + $0x1e8] sm:$0xff] %vm827, %v6109
      %6161 = vst.msk [vmem:[#allocation3 + $0x200] sm:$0xff] %vm827, %v6111
      %6162 = vst.msk [vmem:[#allocation3 + $0x218] sm:$0xff] %vm827, %v6113
      %6163 = vst.msk [vmem:[#allocation3 + $0x230] sm:$0xff] %vm827, %v6115
      %v6164 = vld [vmem:[%s1044 + $0x2] sm:$0xff]
      %v6165 = vld [vmem:[%s1044 + $0xa] sm:$0xff]
      %v6166 = vld [vmem:[%s1044 + $0x1a] sm:$0xff]
      %v6167 = vld [vmem:[%s1044 + $0x22] sm:$0xff]
      %v6168 = vld [vmem:[%s1044 + $0x32] sm:$0xff]
      %v6169 = vld [vmem:[%s1044 + $0x3a] sm:$0xff]
      %v6170 = vld [vmem:[%s1044 + $0x4a] sm:$0xff]
      %v6171 = vld [vmem:[%s1044 + $0x52] sm:$0xff]
      %v6172 = vld [vmem:[%s1044 + $0x62] sm:$0xff]
      %v6173 = vld [vmem:[%s1044 + $0x6a] sm:$0xff]
      %v6174 = vld [vmem:[%s1044 + $0x7a] sm:$0xff]
      %v6175 = vld [vmem:[%s1044 + $0x82] sm:$0xff]
      %v6176 = vld [vmem:[%s1044 + $0x92] sm:$0xff]
      %v6177 = vld [vmem:[%s1044 + $0x9a] sm:$0xff]
      %v6178 = vld [vmem:[%s1044 + $0xaa] sm:$0xff]
      %v6179 = vld [vmem:[%s1044 + $0xb2] sm:$0xff]
      %v6180 = vld [vmem:[%s1044 + $0xc2] sm:$0xff]
      %v6181 = vld [vmem:[%s1044 + $0xca] sm:$0xff]
      %v6182 = vld [vmem:[%s1044 + $0xda] sm:$0xff]
      %v6183 = vld [vmem:[%s1044 + $0xe2] sm:$0xff]
      %v6184 = vld [vmem:[%s1044 + $0xf2] sm:$0xff]
      %v6185 = vld [vmem:[%s1044 + $0xfa] sm:$0xff]
      %v6186 = vld [vmem:[%s1044 + $0x10a] sm:$0xff]
      %v6187 = vld [vmem:[%s1044 + $0x112] sm:$0xff]
      %6188 = vst.msk [vmem:[#allocation3 + $0x10] sm:$0xff] %vm260, %v6164
      %6189 = vst.msk [vmem:[#allocation3 + $0x28] sm:$0xff] %vm260, %v6165
      %6190 = vst.msk [vmem:[#allocation3 + $0x40] sm:$0xff] %vm260, %v6166
      %6191 = vst.msk [vmem:[#allocation3 + $0x58] sm:$0xff] %vm260, %v6167
      %6192 = vst.msk [vmem:[#allocation3 + $0x70] sm:$0xff] %vm260, %v6168
      %6193 = vst.msk [vmem:[#allocation3 + $0x88] sm:$0xff] %vm260, %v6169
      %6194 = vst.msk [vmem:[#allocation3 + $0xa0] sm:$0xff] %vm260, %v6170
      %6195 = vst.msk [vmem:[#allocation3 + $0xb8] sm:$0xff] %vm260, %v6171
      %6196 = vst.msk [vmem:[#allocation3 + $0xd0] sm:$0xff] %vm260, %v6172
      %6197 = vst.msk [vmem:[#allocation3 + $0xe8] sm:$0xff] %vm260, %v6173
      %6198 = vst.msk [vmem:[#allocation3 + $0x100] sm:$0xff] %vm260, %v6174
      %6199 = vst.msk [vmem:[#allocation3 + $0x118] sm:$0xff] %vm260, %v6175
      %6200 = vst.msk [vmem:[#allocation3 + $0x130] sm:$0xff] %vm260, %v6176
      %6201 = vst.msk [vmem:[#allocation3 + $0x148] sm:$0xff] %vm260, %v6177
      %6202 = vst.msk [vmem:[#allocation3 + $0x160] sm:$0xff] %vm260, %v6178
      %6203 = vst.msk [vmem:[#allocation3 + $0x178] sm:$0xff] %vm260, %v6179
      %6204 = vst.msk [vmem:[#allocation3 + $0x190] sm:$0xff] %vm260, %v6180
      %6205 = vst.msk [vmem:[#allocation3 + $0x1a8] sm:$0xff] %vm260, %v6181
      %6206 = vst.msk [vmem:[#allocation3 + $0x1c0] sm:$0xff] %vm260, %v6182
      %6207 = vst.msk [vmem:[#allocation3 + $0x1d8] sm:$0xff] %vm260, %v6183
      %6208 = vst.msk [vmem:[#allocation3 + $0x1f0] sm:$0xff] %vm260, %v6184
      %6209 = vst.msk [vmem:[#allocation3 + $0x208] sm:$0xff] %vm260, %v6185
      %6210 = vst.msk [vmem:[#allocation3 + $0x220] sm:$0xff] %vm260, %v6186
      %6211 = vst.msk [vmem:[#allocation3 + $0x238] sm:$0xff] %vm260, %v6187
      %v6212 = vld [vmem:[#allocation3] sm:$0xff]
      %v6213 = vld [vmem:[#allocation3 + $0x8] sm:$0xff]
      %v6214 = vld [vmem:[#allocation3 + $0x10] sm:$0xff]
      %v6215 = vld [vmem:[#allocation3 + $0x18] sm:$0xff]
      %v6216 = vld [vmem:[#allocation3 + $0x20] sm:$0xff]
      %v6217 = vld [vmem:[#allocation3 + $0x28] sm:$0xff]
      %v6218 = vld [vmem:[#allocation3 + $0x30] sm:$0xff]
      %v6219 = vld [vmem:[#allocation3 + $0x38] sm:$0xff]
      %v6220 = vld [vmem:[#allocation3 + $0x40] sm:$0xff]
      %v6221 = vld [vmem:[#allocation3 + $0x48] sm:$0xff]
      %v6222 = vld [vmem:[#allocation3 + $0x50] sm:$0xff]
      %v6223 = vld [vmem:[#allocation3 + $0x58] sm:$0xff]
      %v6224 = vld [vmem:[#allocation3 + $0x60] sm:$0xff]
      %v6225 = vld [vmem:[#allocation3 + $0x68] sm:$0xff]
      %v6226 = vld [vmem:[#allocation3 + $0x70] sm:$0xff]
      %v6227 = vld [vmem:[#allocation3 + $0x78] sm:$0xff]
      %v6228 = vld [vmem:[#allocation3 + $0x80] sm:$0xff]
      %v6229 = vld [vmem:[#allocation3 + $0x88] sm:$0xff]
      %v6230 = vld [vmem:[#allocation3 + $0x90] sm:$0xff]
      %v6231 = vld [vmem:[#allocation3 + $0x98] sm:$0xff]
      %v6232 = vld [vmem:[#allocation3 + $0xa0] sm:$0xff]
      %v6233 = vld [vmem:[#allocation3 + $0xa8] sm:$0xff]
      %v6234 = vld [vmem:[#allocation3 + $0xb0] sm:$0xff]
      %v6235 = vld [vmem:[#allocation3 + $0xb8] sm:$0xff]
      %v6236 = vld [vmem:[#allocation3 + $0xc0] sm:$0xff]
      %v6237 = vld [vmem:[#allocation3 + $0xc8] sm:$0xff]
      %v6238 = vld [vmem:[#allocation3 + $0xd0] sm:$0xff]
      %v6239 = vld [vmem:[#allocation3 + $0xd8] sm:$0xff]
      %v6240 = vld [vmem:[#allocation3 + $0xe0] sm:$0xff]
      %v6241 = vld [vmem:[#allocation3 + $0xe8] sm:$0xff]
      %v6242 = vld [vmem:[#allocation3 + $0xf0] sm:$0xff]
      %v6243 = vld [vmem:[#allocation3 + $0xf8] sm:$0xff]
      %v6244 = vld [vmem:[#allocation3 + $0x100] sm:$0xff]
      %v6245 = vld [vmem:[#allocation3 + $0x108] sm:$0xff]
      %v6246 = vld [vmem:[#allocation3 + $0x110] sm:$0xff]
      %v6247 = vld [vmem:[#allocation3 + $0x118] sm:$0xff]
      %v6248 = vld [vmem:[#allocation3 + $0x120] sm:$0xff]
      %v6249 = vld [vmem:[#allocation3 + $0x128] sm:$0xff]
      %v6250 = vld [vmem:[#allocation3 + $0x130] sm:$0xff]
      %v6251 = vld [vmem:[#allocation3 + $0x138] sm:$0xff]
      %v6252 = vld [vmem:[#allocation3 + $0x140] sm:$0xff]
      %v6253 = vld [vmem:[#allocation3 + $0x148] sm:$0xff]
      %v6254 = vld [vmem:[#allocation3 + $0x150] sm:$0xff]
      %v6255 = vld [vmem:[#allocation3 + $0x158] sm:$0xff]
      %v6256 = vld [vmem:[#allocation3 + $0x160] sm:$0xff]
      %v6257 = vld [vmem:[#allocation3 + $0x168] sm:$0xff]
      %v6258 = vld [vmem:[#allocation3 + $0x170] sm:$0xff]
      %v6259 = vld [vmem:[#allocation3 + $0x178] sm:$0xff]
      %v6260 = vld [vmem:[#allocation3 + $0x180] sm:$0xff]
      %v6261 = vld [vmem:[#allocation3 + $0x188] sm:$0xff]
      %v6262 = vld [vmem:[#allocation3 + $0x190] sm:$0xff]
      %v6263 = vld [vmem:[#allocation3 + $0x198] sm:$0xff]
      %v6264 = vld [vmem:[#allocation3 + $0x1a0] sm:$0xff]
      %v6265 = vld [vmem:[#allocation3 + $0x1a8] sm:$0xff]
      %v6266 = vld [vmem:[#allocation3 + $0x1b0] sm:$0xff]
      %v6267 = vld [vmem:[#allocation3 + $0x1b8] sm:$0xff]
      %v6268 = vld [vmem:[#allocation3 + $0x1c0] sm:$0xff]
      %v6269 = vld [vmem:[#allocation3 + $0x1c8] sm:$0xff]
      %v6270 = vld [vmem:[#allocation3 + $0x1d0] sm:$0xff]
      %v6271 = vld [vmem:[#allocation3 + $0x1d8] sm:$0xff]
      %v6272 = vld [vmem:[#allocation3 + $0x1e0] sm:$0xff]
      %v6273 = vld [vmem:[#allocation3 + $0x1e8] sm:$0xff]
      %v6274 = vld [vmem:[#allocation3 + $0x1f0] sm:$0xff]
      %v6275 = vld [vmem:[#allocation3 + $0x1f8] sm:$0xff]
      %v6276 = vld [vmem:[#allocation3 + $0x200] sm:$0xff]
      %v6277 = vld [vmem:[#allocation3 + $0x208] sm:$0xff]
      %v6278 = vld [vmem:[#allocation3 + $0x210] sm:$0xff]
      %v6279 = vld [vmem:[#allocation3 + $0x218] sm:$0xff]
      %v6280 = vld [vmem:[#allocation3 + $0x220] sm:$0xff]
      %v6281 = vld [vmem:[#allocation3 + $0x228] sm:$0xff]
      %v6282 = vld [vmem:[#allocation3 + $0x230] sm:$0xff]
      %v6283 = vld [vmem:[#allocation3 + $0x238] sm:$0xff]
      %v6284 = vpack.c.bf16 %v6215, %v6212
      %v6285 = vpack.c.bf16 %v6216, %v6213
      %v6286 = vpack.c.bf16 %v6217, %v6214
      %v6287 = vpack.c.bf16 %v6221, %v6218
      %v6288 = vpack.c.bf16 %v6222, %v6219
      %v6289 = vpack.c.bf16 %v6223, %v6220
      %v6290 = vpack.c.bf16 %v6227, %v6224
      %v6291 = vpack.c.bf16 %v6228, %v6225
      %v6292 = vpack.c.bf16 %v6229, %v6226
      %v6293 = vpack.c.bf16 %v6233, %v6230
      %v6294 = vpack.c.bf16 %v6234, %v6231
      %v6295 = vpack.c.bf16 %v6235, %v6232
      %v6296 = vpack.c.bf16 %v6239, %v6236
      %v6297 = vpack.c.bf16 %v6240, %v6237
      %v6298 = vpack.c.bf16 %v6241, %v6238
      %v6299 = vpack.c.bf16 %v6245, %v6242
      %v6300 = vpack.c.bf16 %v6246, %v6243
      %v6301 = vpack.c.bf16 %v6247, %v6244
      %v6302 = vpack.c.bf16 %v6251, %v6248
      %v6303 = vpack.c.bf16 %v6252, %v6249
      %v6304 = vpack.c.bf16 %v6253, %v6250
      %v6305 = vpack.c.bf16 %v6257, %v6254
      %v6306 = vpack.c.bf16 %v6258, %v6255
      %v6307 = vpack.c.bf16 %v6259, %v6256
      %v6308 = vpack.c.bf16 %v6263, %v6260
      %v6309 = vpack.c.bf16 %v6264, %v6261
      %v6310 = vpack.c.bf16 %v6265, %v6262
      %v6311 = vpack.c.bf16 %v6269, %v6266
      %v6312 = vpack.c.bf16 %v6270, %v6267
      %v6313 = vpack.c.bf16 %v6271, %v6268
      %v6314 = vpack.c.bf16 %v6275, %v6272
      %v6315 = vpack.c.bf16 %v6276, %v6273
      %v6316 = vpack.c.bf16 %v6277, %v6274
      %v6317 = vpack.c.bf16 %v6281, %v6278
      %v6318 = vpack.c.bf16 %v6282, %v6279
      %v6319 = vpack.c.bf16 %v6283, %v6280
      %s6320 = scalar_lea.vmem %s1, 432
      %v6321 = vld [vmem:[%s6320] sm:$0xf]
      %v6322 = vld [vmem:[%s6320 + $0x4] sm:$0xf]
      %v6323 = vld [vmem:[%s6320 + $0x8] sm:$0xf]
      %v6324 = vld [vmem:[%s6320 + $0xc] sm:$0xf]
      %v6325 = vld [vmem:[%s6320 + $0x10] sm:$0xf]
      %v6326 = vld [vmem:[%s6320 + $0x14] sm:$0xf]
      %v6327 = vld [vmem:[%s6320 + $0x18] sm:$0xf]
      %v6328 = vld [vmem:[%s6320 + $0x1c] sm:$0xf]
      %v6329 = vld [vmem:[%s6320 + $0x20] sm:$0xf]
      %v6330 = vld [vmem:[%s6320 + $0x24] sm:$0xf]
      %v6331 = vld [vmem:[%s6320 + $0x28] sm:$0xf]
      %v6332 = vld [vmem:[%s6320 + $0x2c] sm:$0xf]
      %v6333 = vld [vmem:[%s6320 + $0x30] sm:$0xf]
      %v6334 = vld [vmem:[%s6320 + $0x34] sm:$0xf]
      %v6335 = vld [vmem:[%s6320 + $0x38] sm:$0xf]
      %v6336 = vld [vmem:[%s6320 + $0x3c] sm:$0xf]
      %v6337 = vld [vmem:[%s6320 + $0x40] sm:$0xf]
      %v6338 = vld [vmem:[%s6320 + $0x44] sm:$0xf]
      %v6339 = vld [vmem:[%s6320 + $0x48] sm:$0xf]
      %v6340 = vld [vmem:[%s6320 + $0x4c] sm:$0xf]
      %v6341 = vld [vmem:[%s6320 + $0x50] sm:$0xf]
      %v6342 = vld [vmem:[%s6320 + $0x54] sm:$0xf]
      %v6343 = vld [vmem:[%s6320 + $0x58] sm:$0xf]
      %v6344 = vld [vmem:[%s6320 + $0x5c] sm:$0xf]
      %v6345 = vld [vmem:[%s6320 + $0x60] sm:$0xf]
      %v6346 = vld [vmem:[%s6320 + $0x64] sm:$0xf]
      %v6347 = vld [vmem:[%s6320 + $0x68] sm:$0xf]
      %v6348 = vld [vmem:[%s6320 + $0x6c] sm:$0xf]
      %v6349 = vld [vmem:[%s6320 + $0x70] sm:$0xf]
      %v6350 = vld [vmem:[%s6320 + $0x74] sm:$0xf]
      %v6351 = vld [vmem:[%s6320 + $0x78] sm:$0xf]
      %v6352 = vld [vmem:[%s6320 + $0x7c] sm:$0xf]
      %v6353 = vld [vmem:[%s6320 + $0x80] sm:$0xf]
      %v6354 = vld [vmem:[%s6320 + $0x84] sm:$0xf]
      %v6355 = vld [vmem:[%s6320 + $0x88] sm:$0xf]
      %v6356 = vld [vmem:[%s6320 + $0x8c] sm:$0xf]
      %s6357 = scalar_lea.vmem %s2, 3
      %v6358 = vld [vmem:[%s6357] sm:$0x1]
      %v6360 = vlaneseq
      %v6361 = vshrl.u32 %v6360, 7
      %v6362 = vsub.s32 0, %v6361
      %v6363 = vrot.slane %v6358, %v6362
      %v6401 = vunpack.c.l.b16 %v6321
      %v6402 = vunpack.c.l.b16 %v6322
      %v6403 = vunpack.c.l.b16 %v6323
      %v6404 = vunpack.c.l.b16 %v6324
      %v6405 = vunpack.c.l.b16 %v6325
      %v6406 = vunpack.c.l.b16 %v6326
      %v6407 = vunpack.c.l.b16 %v6327
      %v6408 = vunpack.c.l.b16 %v6328
      %v6409 = vunpack.c.l.b16 %v6329
      %v6410 = vunpack.c.l.b16 %v6330
      %v6411 = vunpack.c.l.b16 %v6331
      %v6412 = vunpack.c.l.b16 %v6332
      %v6413 = vunpack.c.l.b16 %v6333
      %v6414 = vunpack.c.l.b16 %v6334
      %v6415 = vunpack.c.l.b16 %v6335
      %v6416 = vunpack.c.l.b16 %v6336
      %v6417 = vunpack.c.l.b16 %v6337
      %v6418 = vunpack.c.l.b16 %v6338
      %v6419 = vunpack.c.l.b16 %v6339
      %v6420 = vunpack.c.l.b16 %v6340
      %v6421 = vunpack.c.l.b16 %v6341
      %v6422 = vunpack.c.l.b16 %v6342
      %v6423 = vunpack.c.l.b16 %v6343
      %v6424 = vunpack.c.l.b16 %v6344
      %v6425 = vunpack.c.l.b16 %v6345
      %v6426 = vunpack.c.l.b16 %v6346
      %v6427 = vunpack.c.l.b16 %v6347
      %v6428 = vunpack.c.l.b16 %v6348
      %v6429 = vunpack.c.l.b16 %v6349
      %v6430 = vunpack.c.l.b16 %v6350
      %v6431 = vunpack.c.l.b16 %v6351
      %v6432 = vunpack.c.l.b16 %v6352
      %v6433 = vunpack.c.l.b16 %v6353
      %v6434 = vunpack.c.l.b16 %v6354
      %v6435 = vunpack.c.l.b16 %v6355
      %v6436 = vunpack.c.l.b16 %v6356
      %v6437 = vpack.c.b16 %v6402, %v6401
      %v6438 = vpack.c.b16 %v6404, %v6403
      %v6439 = vpack.c.b16 %v6406, %v6405
      %v6440 = vpack.c.b16 %v6408, %v6407
      %v6441 = vpack.c.b16 %v6410, %v6409
      %v6442 = vpack.c.b16 %v6412, %v6411
      %v6443 = vpack.c.b16 %v6414, %v6413
      %v6444 = vpack.c.b16 %v6416, %v6415
      %v6445 = vpack.c.b16 %v6418, %v6417
      %v6446 = vpack.c.b16 %v6420, %v6419
      %v6447 = vpack.c.b16 %v6422, %v6421
      %v6448 = vpack.c.b16 %v6424, %v6423
      %v6449 = vpack.c.b16 %v6426, %v6425
      %v6450 = vpack.c.b16 %v6428, %v6427
      %v6451 = vpack.c.b16 %v6430, %v6429
      %v6452 = vpack.c.b16 %v6432, %v6431
      %v6453 = vpack.c.b16 %v6434, %v6433
      %v6454 = vpack.c.b16 %v6436, %v6435
      %v6474 = vsel %vm260, %v6286, 0
      %v6477 = vsel %vm260, %v6289, 0
      %v6480 = vsel %vm260, %v6292, 0
      %v6483 = vsel %vm260, %v6295, 0
      %v6486 = vsel %vm260, %v6298, 0
      %v6489 = vsel %vm260, %v6301, 0
      %v6492 = vsel %vm260, %v6304, 0
      %v6495 = vsel %vm260, %v6307, 0
      %v6498 = vsel %vm260, %v6310, 0
      %v6501 = vsel %vm260, %v6313, 0
      %v6504 = vsel %vm260, %v6316, 0
      %v6507 = vsel %vm260, %v6319, 0
      %6509 = vmatprep.subr.bf16.mxu0 0
      %6510 = vmatpush1.bf16.msra.mxu0 %v6437
      %6511 = vmatprep.subr.bf16.mxu0 0
      %6512 = vmatpush1.bf16.msra.mxu0 %v6438
      %6513 = vmatprep.subr.bf16.mxu0 0
      %6514 = vmatpush1.bf16.msra.mxu0 %v6439
      %6515 = vmatprep.subr.bf16.mxu0 0
      %6516 = vmatpush1.bf16.msra.mxu0 %v6440
      %6517 = vmatprep.subr.bf16.mxu0 0
      %6518 = vmatpush1.bf16.msra.mxu0 %v6441
      %6519 = vmatprep.subr.bf16.mxu0 0
      %6520 = vmatpush1.bf16.msra.mxu0 %v6442
      %6521 = vmatprep.subr.bf16.mxu0 0
      %6522 = vmatpush1.bf16.msra.mxu0 %v6443
      %6523 = vmatprep.subr.bf16.mxu0 0
      %6524 = vmatpush1.bf16.msra.mxu0 %v6444
      %6525 = vmatprep.subr.bf16.mxu0 0
      %6526 = vmatpush1.bf16.msra.mxu0 %v6445
      %6527 = vmatprep.subr.bf16.mxu0 0
      %6528 = vmatpush1.bf16.msra.mxu0 %v6446
      %6529 = vmatprep.subr.bf16.mxu0 0
      %6530 = vmatpush1.bf16.msra.mxu0 %v6447
      %6531 = vmatprep.subr.bf16.mxu0 0
      %6532 = vmatpush1.bf16.msra.mxu0 %v6448
      %6533 = vmatprep.subr.bf16.mxu0 0
      %6534 = vmatpush1.bf16.msra.mxu0 %v6449
      %6535 = vmatprep.subr.bf16.mxu0 0
      %6536 = vmatpush1.bf16.msra.mxu0 %v6450
      %6537 = vmatprep.subr.bf16.mxu0 0
      %6538 = vmatpush1.bf16.msra.mxu0 %v6451
      %6539 = vmatprep.subr.bf16.mxu0 0
      %6540 = vmatpush1.bf16.msra.mxu0 %v6452
      %6541 = vmatprep.mubr.bf16.mxu0 %v6285
      %6542 = vmatmul.mubr.bf16.gmra.mrb[0].mxu0 %v6284
      %v6543 = vpop.f32.mrb[0].mxu0
      %v6544 = vadd.f32 %v6363, %v6543
      %v6545 = vpop.f32.mrb[0].mxu0
      %v6546 = vpop.f32.mrb[0].mxu0
      %v6547 = vadd.f32 %v6363, %v6546
      %v6548 = vpop.f32.mrb[0].mxu0
      %6549 = vmatprep.mubr.bf16.mxu0 %v6288
      %6550 = vmatmul.mubr.bf16.gmra.mrb[0].mxu0 %v6287
      %v6551 = vpop.f32.mrb[0].mxu0
      %v6552 = vadd.f32 %v6363, %v6551
      %v6553 = vpop.f32.mrb[0].mxu0
      %v6554 = vpop.f32.mrb[0].mxu0
      %v6555 = vadd.f32 %v6363, %v6554
      %v6556 = vpop.f32.mrb[0].mxu0
      %6557 = vmatprep.mubr.bf16.mxu0 %v6291
      %6558 = vmatmul.mubr.bf16.gmra.mrb[0].mxu0 %v6290
      %v6559 = vpop.f32.mrb[0].mxu0
      %v6560 = vadd.f32 %v6363, %v6559
      %v6561 = vpop.f32.mrb[0].mxu0
      %v6562 = vpop.f32.mrb[0].mxu0
      %v6563 = vadd.f32 %v6363, %v6562
      %v6564 = vpop.f32.mrb[0].mxu0
      %6565 = vmatprep.mubr.bf16.mxu0 %v6294
      %6566 = vmatmul.mubr.bf16.gmra.mrb[0].mxu0 %v6293
      %v6567 = vpop.f32.mrb[0].mxu0
      %v6568 = vadd.f32 %v6363, %v6567
      %v6569 = vpop.f32.mrb[0].mxu0
      %v6570 = vpop.f32.mrb[0].mxu0
      %v6571 = vadd.f32 %v6363, %v6570
      %v6572 = vpop.f32.mrb[0].mxu0
      %6573 = vmatprep.mubr.bf16.mxu0 %v6297
      %6574 = vmatmul.mubr.bf16.gmra.mrb[0].mxu0 %v6296
      %v6575 = vpop.f32.mrb[0].mxu0
      %v6576 = vadd.f32 %v6363, %v6575
      %v6577 = vpop.f32.mrb[0].mxu0
      %v6578 = vpop.f32.mrb[0].mxu0
      %v6579 = vadd.f32 %v6363, %v6578
      %v6580 = vpop.f32.mrb[0].mxu0
      %6581 = vmatprep.mubr.bf16.mxu0 %v6300
      %6582 = vmatmul.mubr.bf16.gmra.mrb[0].mxu0 %v6299
      %v6583 = vpop.f32.mrb[0].mxu0
      %v6584 = vadd.f32 %v6363, %v6583
      %v6585 = vpop.f32.mrb[0].mxu0
      %v6586 = vpop.f32.mrb[0].mxu0
      %v6587 = vadd.f32 %v6363, %v6586
      %v6588 = vpop.f32.mrb[0].mxu0
      %6589 = vmatprep.mubr.bf16.mxu0 %v6303
      %6590 = vmatmul.mubr.bf16.gmra.mrb[0].mxu0 %v6302
      %v6591 = vpop.f32.mrb[0].mxu0
      %v6592 = vadd.f32 %v6363, %v6591
      %v6593 = vpop.f32.mrb[0].mxu0
      %v6594 = vpop.f32.mrb[0].mxu0
      %v6595 = vadd.f32 %v6363, %v6594
      %v6596 = vpop.f32.mrb[0].mxu0
      %6597 = vmatprep.mubr.bf16.mxu0 %v6306
      %6598 = vmatmul.mubr.bf16.gmra.mrb[0].mxu0 %v6305
      %v6599 = vpop.f32.mrb[0].mxu0
      %v6600 = vadd.f32 %v6363, %v6599
      %v6601 = vpop.f32.mrb[0].mxu0
      %v6602 = vpop.f32.mrb[0].mxu0
      %v6603 = vadd.f32 %v6363, %v6602
      %v6604 = vpop.f32.mrb[0].mxu0
      %6605 = vmatprep.mubr.bf16.mxu0 %v6309
      %6606 = vmatmul.mubr.bf16.gmra.mrb[0].mxu0 %v6308
      %v6607 = vpop.f32.mrb[0].mxu0
      %v6608 = vadd.f32 %v6363, %v6607
      %v6609 = vpop.f32.mrb[0].mxu0
      %v6610 = vpop.f32.mrb[0].mxu0
      %v6611 = vadd.f32 %v6363, %v6610
      %v6612 = vpop.f32.mrb[0].mxu0
      %6613 = vmatprep.mubr.bf16.mxu0 %v6312
      %6614 = vmatmul.mubr.bf16.gmra.mrb[0].mxu0 %v6311
      %v6615 = vpop.f32.mrb[0].mxu0
      %v6616 = vadd.f32 %v6363, %v6615
      %v6617 = vpop.f32.mrb[0].mxu0
      %v6618 = vpop.f32.mrb[0].mxu0
      %v6619 = vadd.f32 %v6363, %v6618
      %v6620 = vpop.f32.mrb[0].mxu0
      %6621 = vmatprep.mubr.bf16.mxu0 %v6315
      %6622 = vmatmul.mubr.bf16.gmra.mrb[0].mxu0 %v6314
      %v6623 = vpop.f32.mrb[0].mxu0
      %v6624 = vadd.f32 %v6363, %v6623
      %v6625 = vpop.f32.mrb[0].mxu0
      %v6626 = vpop.f32.mrb[0].mxu0
      %v6627 = vadd.f32 %v6363, %v6626
      %v6628 = vpop.f32.mrb[0].mxu0
      %6629 = vmatprep.mubr.bf16.mxu0 %v6318
      %6630 = vmatmul.mubr.bf16.gmra.mrb[0].mxu0 %v6317
      %v6631 = vpop.f32.mrb[0].mxu0
      %v6632 = vadd.f32 %v6363, %v6631
      %v6633 = vpop.f32.mrb[0].mxu0
      %v6634 = vpop.f32.mrb[0].mxu0
      %v6635 = vadd.f32 %v6363, %v6634
      %v6636 = vpop.f32.mrb[0].mxu0
      %6637 = vdwg.mxu0
      %6638 = vmatprep.subr.bf16.mxu0 0
      %6639 = vmatpush1.bf16.msra.mxu0 %v6453
      %6640 = vmatprep.subr.bf16.mxu0 0
      %6641 = vmatpush1.bf16.msra.mxu0 %v6454
      %6642 = vmatprep.subr.bf16.mxu0 0
      %6643 = vmatpush1.bf16.msra.mxu0 0
      %6644 = vmatprep.subr.bf16.mxu0 0
      %6645 = vmatpush1.bf16.msra.mxu0 0
      %6646 = vmatprep.subr.bf16.mxu0 0
      %6647 = vmatpush1.bf16.msra.mxu0 0
      %6648 = vmatprep.subr.bf16.mxu0 0
      %6649 = vmatpush1.bf16.msra.mxu0 0
      %6650 = vmatprep.subr.bf16.mxu0 0
      %6651 = vmatpush1.bf16.msra.mxu0 0
      %6652 = vmatprep.subr.bf16.mxu0 0
      %6653 = vmatpush1.bf16.msra.mxu0 0
      %6654 = vmatprep.subr.bf16.mxu0 0
      %6655 = vmatpush1.bf16.msra.mxu0 0
      %6656 = vmatprep.subr.bf16.mxu0 0
      %6657 = vmatpush1.bf16.msra.mxu0 0
      %6658 = vmatprep.subr.bf16.mxu0 0
      %6659 = vmatpush1.bf16.msra.mxu0 0
      %6660 = vmatprep.subr.bf16.mxu0 0
      %6661 = vmatpush1.bf16.msra.mxu0 0
      %6662 = vmatprep.subr.bf16.mxu0 0
      %6663 = vmatpush1.bf16.msra.mxu0 0
      %6664 = vmatprep.subr.bf16.mxu0 0
      %6665 = vmatpush1.bf16.msra.mxu0 0
      %6666 = vmatprep.subr.bf16.mxu0 0
      %6667 = vmatpush1.bf16.msra.mxu0 0
      %6668 = vmatprep.subr.bf16.mxu0 0
      %6669 = vmatpush1.bf16.msra.mxu0 0
      %6670 = vmatprep.mubr.bf16.mxu0 0
      %6671 = vmatmul.mubr.bf16.gmra.mrb[0].mxu0 %v6474
      %v6672 = vpop.f32.mrb[0].mxu0
      %v6673 = vadd.f32 %v6544, %v6672
      %v6674 = vpop.f32.mrb[0].mxu0
      %v6675 = vpop.f32.mrb[0].mxu0
      %v6676 = vadd.f32 %v6547, %v6675
      %v6677 = vpop.f32.mrb[0].mxu0
      %6678 = vmatprep.mubr.bf16.mxu0 0
      %6679 = vmatmul.mubr.bf16.gmra.mrb[0].mxu0 %v6477
      %v6680 = vpop.f32.mrb[0].mxu0
      %v6681 = vadd.f32 %v6552, %v6680
      %v6682 = vpop.f32.mrb[0].mxu0
      %v6683 = vpop.f32.mrb[0].mxu0
      %v6684 = vadd.f32 %v6555, %v6683
      %v6685 = vpop.f32.mrb[0].mxu0
      %6686 = vmatprep.mubr.bf16.mxu0 0
      %6687 = vmatmul.mubr.bf16.gmra.mrb[0].mxu0 %v6480
      %v6688 = vpop.f32.mrb[0].mxu0
      %v6689 = vadd.f32 %v6560, %v6688
      %v6690 = vpop.f32.mrb[0].mxu0
      %v6691 = vpop.f32.mrb[0].mxu0
      %v6692 = vadd.f32 %v6563, %v6691
      %v6693 = vpop.f32.mrb[0].mxu0
      %6694 = vmatprep.mubr.bf16.mxu0 0
      %6695 = vmatmul.mubr.bf16.gmra.mrb[0].mxu0 %v6483
      %v6696 = vpop.f32.mrb[0].mxu0
      %v6697 = vadd.f32 %v6568, %v6696
      %v6698 = vpop.f32.mrb[0].mxu0
      %v6699 = vpop.f32.mrb[0].mxu0
      %v6700 = vadd.f32 %v6571, %v6699
      %v6701 = vpop.f32.mrb[0].mxu0
      %6702 = vmatprep.mubr.bf16.mxu0 0
      %6703 = vmatmul.mubr.bf16.gmra.mrb[0].mxu0 %v6486
      %v6704 = vpop.f32.mrb[0].mxu0
      %v6705 = vadd.f32 %v6576, %v6704
      %v6706 = vpop.f32.mrb[0].mxu0
      %v6707 = vpop.f32.mrb[0].mxu0
      %v6708 = vadd.f32 %v6579, %v6707
      %v6709 = vpop.f32.mrb[0].mxu0
      %6710 = vmatprep.mubr.bf16.mxu0 0
      %6711 = vmatmul.mubr.bf16.gmra.mrb[0].mxu0 %v6489
      %v6712 = vpop.f32.mrb[0].mxu0
      %v6713 = vadd.f32 %v6584, %v6712
      %v6714 = vpop.f32.mrb[0].mxu0
      %v6715 = vpop.f32.mrb[0].mxu0
      %v6716 = vadd.f32 %v6587, %v6715
      %v6717 = vpop.f32.mrb[0].mxu0
      %6718 = vmatprep.mubr.bf16.mxu0 0
      %6719 = vmatmul.mubr.bf16.gmra.mrb[0].mxu0 %v6492
      %v6720 = vpop.f32.mrb[0].mxu0
      %v6721 = vadd.f32 %v6592, %v6720
      %v6722 = vpop.f32.mrb[0].mxu0
      %v6723 = vpop.f32.mrb[0].mxu0
      %v6724 = vadd.f32 %v6595, %v6723
      %v6725 = vpop.f32.mrb[0].mxu0
      %6726 = vmatprep.mubr.bf16.mxu0 0
      %6727 = vmatmul.mubr.bf16.gmra.mrb[0].mxu0 %v6495
      %v6728 = vpop.f32.mrb[0].mxu0
      %v6729 = vadd.f32 %v6600, %v6728
      %v6730 = vpop.f32.mrb[0].mxu0
      %v6731 = vpop.f32.mrb[0].mxu0
      %v6732 = vadd.f32 %v6603, %v6731
      %v6733 = vpop.f32.mrb[0].mxu0
      %6734 = vmatprep.mubr.bf16.mxu0 0
      %6735 = vmatmul.mubr.bf16.gmra.mrb[0].mxu0 %v6498
      %v6736 = vpop.f32.mrb[0].mxu0
      %v6737 = vadd.f32 %v6608, %v6736
      %v6738 = vpop.f32.mrb[0].mxu0
      %v6739 = vpop.f32.mrb[0].mxu0
      %v6740 = vadd.f32 %v6611, %v6739
      %v6741 = vpop.f32.mrb[0].mxu0
      %6742 = vmatprep.mubr.bf16.mxu0 0
      %6743 = vmatmul.mubr.bf16.gmra.mrb[0].mxu0 %v6501
      %v6744 = vpop.f32.mrb[0].mxu0
      %v6745 = vadd.f32 %v6616, %v6744
      %v6746 = vpop.f32.mrb[0].mxu0
      %v6747 = vpop.f32.mrb[0].mxu0
      %v6748 = vadd.f32 %v6619, %v6747
      %v6749 = vpop.f32.mrb[0].mxu0
      %6750 = vmatprep.mubr.bf16.mxu0 0
      %6751 = vmatmul.mubr.bf16.gmra.mrb[0].mxu0 %v6504
      %v6752 = vpop.f32.mrb[0].mxu0
      %v6753 = vadd.f32 %v6624, %v6752
      %v6754 = vpop.f32.mrb[0].mxu0
      %v6755 = vpop.f32.mrb[0].mxu0
      %v6756 = vadd.f32 %v6627, %v6755
      %v6757 = vpop.f32.mrb[0].mxu0
      %6758 = vmatprep.mubr.bf16.mxu0 0
      %6759 = vmatmul.mubr.bf16.gmra.mrb[0].mxu0 %v6507
      %v6760 = vpop.f32.mrb[0].mxu0
      %v6761 = vadd.f32 %v6632, %v6760
      %v6762 = vpop.f32.mrb[0].mxu0
      %v6763 = vpop.f32.mrb[0].mxu0
      %v6764 = vadd.f32 %v6635, %v6763
      %v6765 = vpop.f32.mrb[0].mxu0
      %6766 = vdwg.mxu0
      %v6767 = vmax.f32 %v6673, 0.0
      %v6768 = vmax.f32 %v6676, 0.0
      %v6769 = vmax.f32 %v6681, 0.0
      %v6770 = vmax.f32 %v6684, 0.0
      %v6771 = vmax.f32 %v6689, 0.0
      %v6772 = vmax.f32 %v6692, 0.0
      %v6773 = vmax.f32 %v6697, 0.0
      %v6774 = vmax.f32 %v6700, 0.0
      %v6775 = vmax.f32 %v6705, 0.0
      %v6776 = vmax.f32 %v6708, 0.0
      %v6777 = vmax.f32 %v6713, 0.0
      %v6778 = vmax.f32 %v6716, 0.0
      %v6779 = vmax.f32 %v6721, 0.0
      %v6780 = vmax.f32 %v6724, 0.0
      %v6781 = vmax.f32 %v6729, 0.0
      %v6782 = vmax.f32 %v6732, 0.0
      %v6783 = vmax.f32 %v6737, 0.0
      %v6784 = vmax.f32 %v6740, 0.0
      %v6785 = vmax.f32 %v6745, 0.0
      %v6786 = vmax.f32 %v6748, 0.0
      %v6787 = vmax.f32 %v6753, 0.0
      %v6788 = vmax.f32 %v6756, 0.0
      %v6789 = vmax.f32 %v6761, 0.0
      %v6790 = vmax.f32 %v6764, 0.0
      %6791 = vst.msk [vmem:[%s269 + $0x1] sm:$0xff] %vm260, %v6767
      %6792 = vst.msk [vmem:[%s269 + $0x9] sm:$0xff] %vm260, %v6768
      %6793 = vst.msk [vmem:[%s269 + $0x19] sm:$0xff] %vm260, %v6769
      %6794 = vst.msk [vmem:[%s269 + $0x21] sm:$0xff] %vm260, %v6770
      %6795 = vst.msk [vmem:[%s269 + $0x31] sm:$0xff] %vm260, %v6771
      %6796 = vst.msk [vmem:[%s269 + $0x39] sm:$0xff] %vm260, %v6772
      %6797 = vst.msk [vmem:[%s269 + $0x49] sm:$0xff] %vm260, %v6773
      %6798 = vst.msk [vmem:[%s269 + $0x51] sm:$0xff] %vm260, %v6774
      %6799 = vst.msk [vmem:[%s269 + $0x61] sm:$0xff] %vm260, %v6775
      %6800 = vst.msk [vmem:[%s269 + $0x69] sm:$0xff] %vm260, %v6776
      %6801 = vst.msk [vmem:[%s269 + $0x79] sm:$0xff] %vm260, %v6777
      %6802 = vst.msk [vmem:[%s269 + $0x81] sm:$0xff] %vm260, %v6778
      %6803 = vst.msk [vmem:[%s269 + $0x91] sm:$0xff] %vm260, %v6779
      %6804 = vst.msk [vmem:[%s269 + $0x99] sm:$0xff] %vm260, %v6780
      %6805 = vst.msk [vmem:[%s269 + $0xa9] sm:$0xff] %vm260, %v6781
      %6806 = vst.msk [vmem:[%s269 + $0xb1] sm:$0xff] %vm260, %v6782
      %6807 = vst.msk [vmem:[%s269 + $0xc1] sm:$0xff] %vm260, %v6783
      %6808 = vst.msk [vmem:[%s269 + $0xc9] sm:$0xff] %vm260, %v6784
      %6809 = vst.msk [vmem:[%s269 + $0xd9] sm:$0xff] %vm260, %v6785
      %6810 = vst.msk [vmem:[%s269 + $0xe1] sm:$0xff] %vm260, %v6786
      %6811 = vst.msk [vmem:[%s269 + $0xf1] sm:$0xff] %vm260, %v6787
      %6812 = vst.msk [vmem:[%s269 + $0xf9] sm:$0xff] %vm260, %v6788
      %6813 = vst.msk [vmem:[%s269 + $0x109] sm:$0xff] %vm260, %v6789
      %6814 = vst.msk [vmem:[%s269 + $0x111] sm:$0xff] %vm260, %v6790
      %v6815 = vld [vmem:[%s269 + $0x1] sm:$0xff]
      %v6816 = vld [vmem:[%s269 + $0x9] sm:$0xf]
      %v6817 = vld [vmem:[%s269 + $0x19] sm:$0xff]
      %v6818 = vld [vmem:[%s269 + $0x21] sm:$0xf]
      %v6819 = vld [vmem:[%s269 + $0x31] sm:$0xff]
      %v6820 = vld [vmem:[%s269 + $0x39] sm:$0xf]
      %v6821 = vld [vmem:[%s269 + $0x49] sm:$0xff]
      %v6822 = vld [vmem:[%s269 + $0x51] sm:$0xf]
      %v6823 = vld [vmem:[%s269 + $0x61] sm:$0xff]
      %v6824 = vld [vmem:[%s269 + $0x69] sm:$0xf]
      %v6825 = vld [vmem:[%s269 + $0x79] sm:$0xff]
      %v6826 = vld [vmem:[%s269 + $0x81] sm:$0xf]
      %v6827 = vld [vmem:[%s269 + $0x91] sm:$0xff]
      %v6828 = vld [vmem:[%s269 + $0x99] sm:$0xf]
      %v6829 = vld [vmem:[%s269 + $0xa9] sm:$0xff]
      %v6830 = vld [vmem:[%s269 + $0xb1] sm:$0xf]
      %v6847 = vcombine.high %v6815, %v6815
      %v6848 = vcombine.high %v6817, %v6817
      %v6849 = vcombine.high %v6819, %v6819
      %v6850 = vcombine.high %v6821, %v6821
      %v6851 = vcombine.high %v6823, %v6823
      %v6852 = vcombine.high %v6825, %v6825
      %v6853 = vcombine.high %v6827, %v6827
      %v6854 = vcombine.high %v6829, %v6829
      %v6855 = vld [vmem:[%s3] sm:$0xf]
      %v6856 = vld [vmem:[%s4] sm:$0xf]
      %6858 = vset.pattern.permute.xlu0 0
      %6859 = vperm.xlu0 %6858, %v6856
      %v6860 = vpop.permute.xlu0 %6859
      %v6862 = vcombine.low %v6815, %v6847
      %v6863 = vcombine.low %v6816, %v6817
      %v6864 = vcombine.low %v6848, %v6818
      %v6865 = vcombine.low %v6819, %v6849
      %v6866 = vcombine.low %v6820, %v6821
      %v6867 = vcombine.low %v6850, %v6822
      %v6868 = vcombine.low %v6823, %v6851
      %v6869 = vcombine.low %v6824, %v6825
      %v6870 = vcombine.low %v6852, %v6826
      %v6871 = vcombine.low %v6827, %v6853
      %v6872 = vcombine.low %v6828, %v6829
      %v6873 = vcombine.low %v6854, %v6830
      %v6875 = vsel %vm260, %v6855, 0
      %v6877 = vsel %vm260, %v6862, 0
      %v6879 = vsel %vm260, %v6863, 0
      %v6881 = vsel %vm260, %v6864, 0
      %v6883 = vsel %vm260, %v6865, 0
      %v6885 = vsel %vm260, %v6866, 0
      %v6887 = vsel %vm260, %v6867, 0
      %v6889 = vsel %vm260, %v6868, 0
      %v6891 = vsel %vm260, %v6869, 0
      %v6893 = vsel %vm260, %v6870, 0
      %v6895 = vsel %vm260, %v6871, 0
      %v6897 = vsel %vm260, %v6872, 0
      %v6899 = vsel %vm260, %v6873, 0
      %6901 = vmatprep.subr.mxu0 0.0
      %6902 = vmatpush1.xpose.msra.mxu0 %v6877
      %6903 = vmatprep.subr.mxu0 0.0
      %6904 = vmatpush1.xpose.msra.mxu0 %v6879
      %6905 = vmatprep.subr.mxu0 0.0
      %6906 = vmatpush1.xpose.msra.mxu0 %v6881
      %6907 = vmatprep.subr.mxu0 0.0
      %6908 = vmatpush1.xpose.msra.mxu0 %v6883
      %6909 = vmatprep.subr.mxu0 0.0
      %6910 = vmatpush1.xpose.msra.mxu0 %v6885
      %6911 = vmatprep.subr.mxu0 0.0
      %6912 = vmatpush1.xpose.msra.mxu0 %v6887
      %6913 = vmatprep.subr.mxu0 0.0
      %6914 = vmatpush1.xpose.msra.mxu0 %v6889
      %6915 = vmatprep.subr.mxu0 0.0
      %6916 = vmatpush1.xpose.msra.mxu0 %v6891
      %6917 = vmatprep.subr.mxu0 0.0
      %6918 = vmatpush1.xpose.msra.mxu0 %v6893
      %6919 = vmatprep.subr.mxu0 0.0
      %6920 = vmatpush1.xpose.msra.mxu0 %v6895
      %6921 = vmatprep.subr.mxu0 0.0
      %6922 = vmatpush1.xpose.msra.mxu0 %v6897
      %6923 = vmatprep.subr.mxu0 0.0
      %6924 = vmatpush1.xpose.msra.mxu0 %v6899
      %6925 = vmatprep.subr.mxu0 0.0
      %6926 = vmatpush1.xpose.msra.mxu0 0.0
      %6927 = vmatprep.subr.mxu0 0.0
      %6928 = vmatpush1.xpose.msra.mxu0 0.0
      %6929 = vmatprep.subr.mxu0 0.0
      %6930 = vmatpush1.xpose.msra.mxu0 0.0
      %6931 = vmatprep.subr.mxu0 0.0
      %6932 = vmatpush1.xpose.msra.mxu0 0.0
      %6933 = vmatprep.subr.mxu0 0.0
      %6934 = vmatpush1.xpose.msra.mxu0 0.0
      %6935 = vmatprep.subr.mxu0 0.0
      %6936 = vmatpush1.xpose.msra.mxu0 0.0
      %6937 = vmatprep.subr.mxu0 0.0
      %6938 = vmatpush1.xpose.msra.mxu0 0.0
      %6939 = vmatprep.subr.mxu0 0.0
      %6940 = vmatpush1.xpose.msra.mxu0 0.0
      %6941 = vmatprep.subr.mxu0 0.0
      %6942 = vmatpush1.xpose.msra.mxu0 0.0
      %6943 = vmatprep.subr.mxu0 0.0
      %6944 = vmatpush1.xpose.msra.mxu0 0.0
      %6945 = vmatprep.subr.mxu0 0.0
      %6946 = vmatpush1.xpose.msra.mxu0 0.0
      %6947 = vmatprep.subr.mxu0 0.0
      %6948 = vmatpush1.xpose.msra.mxu0 0.0
      %6949 = vmatprep.subr.mxu0 0.0
      %6950 = vmatpush1.xpose.msra.mxu0 0.0
      %6951 = vmatprep.subr.mxu0 0.0
      %6952 = vmatpush1.xpose.msra.mxu0 0.0
      %6953 = vmatprep.subr.mxu0 0.0
      %6954 = vmatpush1.xpose.msra.mxu0 0.0
      %6955 = vmatprep.subr.mxu0 0.0
      %6956 = vmatpush1.xpose.msra.mxu0 0.0
      %6957 = vmatprep.subr.mxu0 0.0
      %6958 = vmatpush1.xpose.msra.mxu0 0.0
      %6959 = vmatprep.subr.mxu0 0.0
      %6960 = vmatpush1.xpose.msra.mxu0 0.0
      %6961 = vmatprep.subr.mxu0 0.0
      %6962 = vmatpush1.xpose.msra.mxu0 0.0
      %6963 = vmatprep.subr.mxu0 0.0
      %6964 = vmatpush1.xpose.msra.mxu0 0.0
      %6965 = vmatprep.mubr.f32.mxu0 0.0
      %6966 = vmatmul.mubr.f32.gmra.mrb[0].mxu0 %v6875
      %v6967 = vpop.f32.mrb[0].mxu0
      %v6968 = vadd.f32 %v6860, %v6967
      %v6969 = vpop.f32.mrb[0].mxu0
      %6970 = vdwg.mxu0
      %v6971 = vxor.u32 %v6968, 2147483648
      %v6972 = vmul.f32 %v6971, 1.442695
      %v6973 = vpow.pop %v6972
      %v6974 = vadd.f32 %v6973, 1.0
      %v6975 = vrcp.pop %v6974
      %v6976 = vmul.f32 1.0, %v6975
      %vm6977 = vcmask 779264
      %6978 = vst.msk [vmem:[%s255] sm:$0x3] %vm6977, %v6976
      %vm6979 = vcmask 781314
      %v6980 = vsel %vm6979, %v6976, 0.0
      %6981 = vadd.xlane.f32.xlu0 %v6980
      %v6982 = vpop.xlane.xlu0 %6981
      %v6983 = vrcp.pop 96.0
      %v6984 = vmul.f32 %v6982, %v6983
      %v6986 = vlaneseq
      %v6987 = vand.u32 %v6986, 127
      %v6988 = vadd.s32 %v6987, 2
      %v6989 = vlaneseq
      %v6990 = vshrl.u32 %v6989, 7
      %v6991 = vsub.s32 %v6988, %v6990
      %v6992 = vrot.slane %v6984, %v6991
      %vm6994 = vcmask 10242
      %6995 = vst.msk [vmem:[%s258 - $0x2] sm:$0x4] %vm6994, %v6992
      %p6996 = scmp.lt.s32.totalorder %s18, 1
      %s6997 = scalar_select %p6996, %s18, 1
      %s6998 = smul.addr %s6997, 2
      %s6999 = scalar_lea.vmem %s5, %s6998
      %p7000 = scmp.lt.s32.totalorder %s18, 1
      %s7001 = scalar_select %p7000, %s18, 1
      %s7002 = scalar_lea.vmem %s6, %s7001
      // Predicated region
      $region41: #{insane_boa_forward.1} parent=39 // pred_check
        %p7003 = pneg %p146
      $region42: #{insane_boa_forward.1} parent=39 // pred_check_branch
        %7005 = sbr.rel (%p7003) target = $region44
      $region43: #{insane_boa_forward.1} parent=39 // pred_region
        _
      $region44: #{insane_boa_forward.1} parent=39 // pred_fallthru
        _
      // Predicated region
      $region45: #{insane_boa_forward.1} parent=39 // pred_check
        %p7006 = pneg %p172
      $region46: #{insane_boa_forward.1} parent=39 // pred_check_branch
        %7008 = sbr.rel (%p7006) target = $region48
      $region47: #{insane_boa_forward.1} parent=39 // pred_region
        _
      $region48: #{insane_boa_forward.1} parent=39 // pred_fallthru
        _
    $region40: #{insane_boa_forward.1} parent=5 // pred_fallthru
      _
    %p7009 = scmp.le.s32.totalorder 2, %s13
    // Predicated region
    $region49: #{insane_boa_forward.1} parent=5 // pred_check
      %p7010 = pneg %p7009
    $region50: #{insane_boa_forward.1} parent=5 // pred_check_branch
      %7012 = sbr.rel (%p7010) target = $region52
    $region51: #{insane_boa_forward.1} parent=5 // pred_region
      %s7013 = ssub.s32 %s13, 2
      // Predicated region
      $region53: #{insane_boa_forward.1} parent=51 // pred_check
        %p7014 = pneg %p152
      $region54: #{insane_boa_forward.1} parent=51 // pred_check_branch
        %7016 = sbr.rel (%p7014) target = $region56
      $region55: #{insane_boa_forward.1} parent=51 // pred_region
        %p7017 = scmp.lt.s32.totalorder %s19, 1
        %s7018 = scalar_select %p7017, %s19, 1
        %s7019 = smul.addr %s7018, 2
        %s7020 = scalar_lea.vmem %s5, %s7019
      $region56: #{insane_boa_forward.1} parent=51 // pred_fallthru
        _
      // Predicated region
      $region57: #{insane_boa_forward.1} parent=51 // pred_check
        %p7021 = pneg %p178
      $region58: #{insane_boa_forward.1} parent=51 // pred_check_branch
        %7023 = sbr.rel (%p7021) target = $region60
      $region59: #{insane_boa_forward.1} parent=51 // pred_region
        %p7024 = scmp.lt.s32.totalorder %s19, 1
        %s7025 = scalar_select %p7024, %s19, 1
        %s7026 = scalar_lea.vmem %s6, %s7025
      $region60: #{insane_boa_forward.1} parent=51 // pred_fallthru
        _
    $region52: #{insane_boa_forward.1} parent=5 // pred_fallthru
      _
  $region6: #{insane_boa_forward.1} parent=0 // loop_footer
    %s17 = sadd.s32 1, %s13
  $region7: #{insane_boa_forward.1} parent=0 // loop_footer_branch
    %12 = sbr.rel target = $region3
  $region8: #{insane_boa_forward.1} parent=0 // loop_exit
    _

</llo_original>
